<compile_context>
chip_gen: v5e
topology: v5e:2x2
jax: 0.10.0
libtpu: 0.0.40
codegen_flags: <defaults>
</compile_context>

<pallas_src>
import functools
import math

import jax
import jax.numpy as jnp
from jax.experimental import pallas as pl
from jax.experimental.pallas import tpu as pltpu

# ---- shapes implied by Policy.__init__ ------------------------------------
OBS_ARRAY_DIM = 22 * 34                      # 748 (card features)
NUM_EXTRA_FEATS = 24
OBS_DIM = OBS_ARRAY_DIM + NUM_EXTRA_FEATS    # 772
OBS_PAD = 896                                # 772 padded to a multiple of 128
NUM_CARDS = 34
NUM_ACTIONS = 8
EMBED_OUTER = 1024                           # embed_dim_outer / critic input
CRITIC_HIDDEN = 2 * EMBED_OUTER              # 2048
HEAD_PAD = 128                               # lane-dense logits/probs block
TK = 512                                     # critic hidden-dim tile
NK = CRITIC_HIDDEN // TK                     # grid size (4)

HEAD_DIMS = {"play": NUM_CARDS, "action": NUM_ACTIONS, "chi_gang": NUM_CARDS}
NEG_BIG = -1e30                              # bias for padded head lanes -> prob 0


# ---------------------------------------------------------------------------
# Fused kernel: policy head (iter 0) + streamed critic (all iters)
# ---------------------------------------------------------------------------
def _fused_kernel(obs_ref, w_tok_ref, b_tok_ref, w_head_ref, b_head_ref,
                  ln_g_ref, ln_b_ref, w1_ref, b1_ref, w2_ref, b2_ref,
                  w3_ref, b3_ref,
                  probs_ref, value_ref,
                  xn_ref, acc_ref):
    k = pl.program_id(0)

    @pl.when(k == 0)
    def _():
        # obs -> outer tokens   (bf16 MXU matmul, f32 accumulate)
        obs = obs_ref[...]                                             # (B, 896) f32
        tok = jnp.dot(obs.astype(jnp.bfloat16), w_tok_ref[...],
                      preferred_element_type=jnp.float32) + b_tok_ref[...]  # (B, 1024)

        # policy head + nn.Softmax(dim=1)  (f32 VPU/EUP math, lane-dense 128)
        logits = jnp.dot(tok.astype(jnp.bfloat16), w_head_ref[...],
                         preferred_element_type=jnp.float32) + b_head_ref[...]
        m = jnp.max(logits, axis=1, keepdims=True)
        e = jnp.exp(logits - m)
        probs_ref[...] = e * pl.reciprocal(jnp.sum(e, axis=1, keepdims=True),
                                           approx=True)

        # Critic LayerNorm(1024), f32 (biased variance, eps=1e-5 == PyTorch)
        mu = jnp.mean(tok, axis=-1, keepdims=True)
        d = tok - mu
        var = jnp.mean(d * d, axis=-1, keepdims=True)
        xn_ref[...] = (d * jax.lax.rsqrt(var + 1e-5)) * ln_g_ref[...] + ln_b_ref[...]
        acc_ref[...] = jnp.zeros_like(acc_ref)

    # Streamed critic tile over the 2048 hidden dim:
    #   h1_k = relu(xn @ w1[:, tile] + b1[tile]);  acc += h1_k @ w2[tile, :]
    h1 = jnp.dot(xn_ref[...].astype(jnp.bfloat16), w1_ref[...],
                 preferred_element_type=jnp.float32) + b1_ref[...]      # (B, TK)
    h1 = jnp.maximum(h1, 0.0)
    acc_ref[...] += jnp.dot(h1.astype(jnp.bfloat16), w2_ref[...],
                            preferred_element_type=jnp.float32)         # (B, 1024)

    @pl.when(k == pl.num_programs(0) - 1)
    def _():
        h2 = jnp.maximum(acc_ref[...] + b2_ref[...], 0.0)               # (B, 1024)
        # final Linear(1024, 1) as an f32 VPU row-reduction
        v = jnp.sum(h2 * w3_ref[...], axis=-1, keepdims=True) + b3_ref[...]
        value_ref[...] = jnp.broadcast_to(v, value_ref.shape)           # lane-dense


def _fused_forward(obs_pad, w_tok, b_tok, w_head, b_head,
                   ln_g, ln_b, w1, b1, w2, b2, w3_row, b3):
    b_pad = obs_pad.shape[0]

    def const2(shape):
        return pl.BlockSpec(shape, lambda k: (0, 0))

    grid_spec = pltpu.PrefetchScalarGridSpec(
        num_scalar_prefetch=0,
        grid=(NK,),
        in_specs=[
            const2((b_pad, OBS_PAD)),                          # obs
            const2((OBS_PAD, EMBED_OUTER)),                    # w_tok (bf16)
            const2((1, EMBED_OUTER)),                          # b_tok
            const2((EMBED_OUTER, HEAD_PAD)),                   # w_head (bf16)
            const2((1, HEAD_PAD)),                             # b_head
            const2((1, EMBED_OUTER)),                          # ln_g
            const2((1, EMBED_OUTER)),                          # ln_b
            pl.BlockSpec((EMBED_OUTER, TK), lambda k: (0, k)),  # w1 tile (bf16)
            pl.BlockSpec((1, TK), lambda k: (0, k)),            # b1 tile
            pl.BlockSpec((TK, EMBED_OUTER), lambda k: (k, 0)),  # w2 tile (bf16)
            const2((1, EMBED_OUTER)),                          # b2
            const2((1, EMBED_OUTER)),                          # w3_row (f32)
            const2((1, 1)),                                    # b3
        ],
        out_specs=(const2((b_pad, HEAD_PAD)),                  # probs (padded)
                   const2((b_pad, HEAD_PAD))),                 # value (lane-dense)
        scratch_shapes=[pltpu.VMEM((b_pad, EMBED_OUTER), jnp.float32),   # xn
                        pltpu.VMEM((b_pad, EMBED_OUTER), jnp.float32)],  # acc
    )
    return pl.pallas_call(
        _fused_kernel,
        out_shape=(jax.ShapeDtypeStruct((b_pad, HEAD_PAD), jnp.float32),
                   jax.ShapeDtypeStruct((b_pad, HEAD_PAD), jnp.float32)),
        grid_spec=grid_spec,
        compiler_params=pltpu.CompilerParams(
            dimension_semantics=("arbitrary",)),
    )(obs_pad, w_tok, b_tok, w_head, b_head,
      ln_g, ln_b, w1, b1, w2, b2, w3_row, b3)


# ---------------------------------------------------------------------------
# Deterministic parameter init (PyTorch-Linear-style uniform, zero biases /
# LayerNorm gamma=1 beta=0, per Critic._init_weights). Big weights in bf16.
# ---------------------------------------------------------------------------
def _uniform_w(key, fan_in, fan_out, pad_in=0, pad_out=0, dtype=jnp.bfloat16):
    bound = 1.0 / math.sqrt(fan_in)
    w = jax.random.uniform(key, (fan_in, fan_out), jnp.float32, -bound, bound)
    if pad_in or pad_out:
        w = jnp.pad(w, ((0, pad_in), (0, pad_out)))
    return w.astype(dtype)


def init_params(key):
    ks = jax.random.split(key, 8)
    heads = {}
    for i, (name, dim) in enumerate(HEAD_DIMS.items()):
        w = _uniform_w(jax.random.fold_in(ks[1], i), EMBED_OUTER, dim,
                       pad_out=HEAD_PAD - dim)
        b = jnp.full((1, HEAD_PAD), NEG_BIG, jnp.float32).at[:, :dim].set(0.0)
        heads[name] = (w, b)
    return {
        # policy-head stand-in (TIT interface), obs dim zero-padded 772 -> 896
        "w_tok": _uniform_w(ks[0], OBS_DIM, EMBED_OUTER, pad_in=OBS_PAD - OBS_DIM),
        "b_tok": jnp.zeros((1, EMBED_OUTER), jnp.float32),
        "heads": heads,
        # Critic
        "ln_g": jnp.ones((1, EMBED_OUTER), jnp.float32),
        "ln_b": jnp.zeros((1, EMBED_OUTER), jnp.float32),
        "w1": _uniform_w(ks[2], EMBED_OUTER, CRITIC_HIDDEN),
        "b1": jnp.zeros((1, CRITIC_HIDDEN), jnp.float32),
        "w2": _uniform_w(ks[3], CRITIC_HIDDEN, EMBED_OUTER),
        "b2": jnp.zeros((1, EMBED_OUTER), jnp.float32),
        # final Linear(1024, 1), stored f32 as a (1, 1024) row for the reduction
        "w3_row": _uniform_w(ks[4], EMBED_OUTER, 1,
                             dtype=jnp.float32).reshape(1, EMBED_OUTER),
        "b3": jnp.zeros((1, 1), jnp.float32),
    }


# ---------------------------------------------------------------------------
# Policy.forward equivalent
# ---------------------------------------------------------------------------
@functools.partial(jax.jit, static_argnames=("decide_which",))
def policy_forward(params, card_feats, extra_feats, decide_which="play"):
    assert decide_which in HEAD_DIMS
    # np.concatenate((card_feats, extra_feats), axis=1) -> float32
    obs = jnp.concatenate([card_feats, extra_feats], axis=1).astype(jnp.float32)
    b = obs.shape[0]
    b_pad = max(8, -(-b // 8) * 8)                       # sublane-align batch
    obs_pad = jnp.pad(obs, ((0, b_pad - b), (0, OBS_PAD - OBS_DIM)))

    w_head, b_head = params["heads"][decide_which]
    probs_pad, value_pad = _fused_forward(
        obs_pad, params["w_tok"], params["b_tok"], w_head, b_head,
        params["ln_g"], params["ln_b"], params["w1"], params["b1"],
        params["w2"], params["b2"], params["w3_row"], params["b3"])
    return probs_pad[:b, :HEAD_DIMS[decide_which]], value_pad[:b, :1]


# Pure-JAX reference (same bf16 casts) for correctness checking.
def _ref_forward(params, obs_pad, decide_which):
    f32 = jnp.float32
    dot = lambda a, b: jnp.dot(a.astype(jnp.bfloat16), b, preferred_element_type=f32)
    tok = dot(obs_pad, params["w_tok"]) + params["b_tok"]
    w_head, b_head = params["heads"][decide_which]
    probs = jax.nn.softmax(dot(tok, w_head) + b_head, axis=1)
    mu = jnp.mean(tok, axis=-1, keepdims=True)
    var = jnp.mean((tok - mu) ** 2, axis=-1, keepdims=True)
    xn = (tok - mu) * jax.lax.rsqrt(var + 1e-5) * params["ln_g"] + params["ln_b"]
    h1 = jnp.maximum(dot(xn, params["w1"]) + params["b1"], 0.0)
    h2 = jnp.maximum(dot(h1, params["w2"]) + params["b2"], 0.0)
    v = jnp.sum(h2 * params["w3_row"], axis=-1, keepdims=True) + params["b3"]
    return probs, v


if __name__ == "__main__":
    key = jax.random.PRNGKey(0)
    pkey, k_card, k_extra = jax.random.split(key, 3)

    params = init_params(pkey)

    B = 2
    card_feats = jax.random.uniform(k_card, (B, OBS_ARRAY_DIM), jnp.float32)
    extra_feats = jax.random.uniform(k_extra, (B, NUM_EXTRA_FEATS), jnp.float32)

    probs, value = policy_forward(params, card_feats, extra_feats,
                                  decide_which="play")
    jax.block_until_ready((probs, value))

    assert probs.shape == (B, NUM_CARDS)
    assert value.shape == (B, 1)
    assert bool(jnp.all(jnp.isfinite(probs))) and bool(jnp.all(jnp.isfinite(value)))
    # softmax rows should sum to ~1 (approx reciprocal -> loose tolerance)
    assert bool(jnp.allclose(jnp.sum(probs, axis=1), 1.0, atol=1e-2))

    # cross-check against a pure-JAX reference using the same bf16 casts
    obs = jnp.concatenate([card_feats, extra_feats], axis=1)
    obs_pad = jnp.pad(obs, ((0, 0), (0, OBS_PAD - OBS_DIM)))
    ref_probs, ref_value = _ref_forward(params, obs_pad, "play")
    assert bool(jnp.allclose(probs, ref_probs[:, :NUM_CARDS], atol=1e-2, rtol=1e-2))
    assert bool(jnp.allclose(value, ref_value, atol=2e-2, rtol=2e-2))

    print("KERNEL_OK")
</pallas_src>

<mosaic_0001>
module attributes {stable_mosaic.version = 11 : i64} {
  func.func @_fused_kernel(%arg0: i32, %arg1: memref<8x896xf32, #tpu.memory_space<vmem>>, %arg2: memref<896x1024xbf16, #tpu.memory_space<vmem>>, %arg3: memref<1x1024xf32, #tpu.memory_space<vmem>>, %arg4: memref<1024x128xbf16, #tpu.memory_space<vmem>>, %arg5: memref<1x128xf32, #tpu.memory_space<vmem>>, %arg6: memref<1x1024xf32, #tpu.memory_space<vmem>>, %arg7: memref<1x1024xf32, #tpu.memory_space<vmem>>, %arg8: memref<1024x512xbf16, #tpu.memory_space<vmem>>, %arg9: memref<1x512xf32, #tpu.memory_space<vmem>>, %arg10: memref<512x1024xbf16, #tpu.memory_space<vmem>>, %arg11: memref<1x1024xf32, #tpu.memory_space<vmem>>, %arg12: memref<1x1024xf32, #tpu.memory_space<vmem>>, %arg13: memref<1x1xf32, #tpu.memory_space<vmem>>, %arg14: memref<8x128xf32, #tpu.memory_space<vmem>>, %arg15: memref<8x128xf32, #tpu.memory_space<vmem>>, %arg16: memref<8x1024xf32, #tpu.memory_space<vmem>>, %arg17: memref<8x1024xf32, #tpu.memory_space<vmem>>) attributes {dimension_semantics = [#tpu.dimension_semantics<arbitrary>], iteration_bounds = array<i64: 4>, scalar_prefetch = 0 : i64, scratch_operands = 2 : i64, tpu.core_type = #tpu.core_type<tc>, window_params = [{pipeline_mode = #tpu.pipeline_mode<synchronous>, transform_indices = @transform_0, window_bounds = array<i64: 8, 896>}, {pipeline_mode = #tpu.pipeline_mode<synchronous>, transform_indices = @transform_1, window_bounds = array<i64: 896, 1024>}, {pipeline_mode = #tpu.pipeline_mode<synchronous>, transform_indices = @transform_2, window_bounds = array<i64: 1, 1024>}, {pipeline_mode = #tpu.pipeline_mode<synchronous>, transform_indices = @transform_3, window_bounds = array<i64: 1024, 128>}, {pipeline_mode = #tpu.pipeline_mode<synchronous>, transform_indices = @transform_4, window_bounds = array<i64: 1, 128>}, {pipeline_mode = #tpu.pipeline_mode<synchronous>, transform_indices = @transform_5, window_bounds = array<i64: 1, 1024>}, {pipeline_mode = #tpu.pipeline_mode<synchronous>, transform_indices = @transform_6, window_bounds = array<i64: 1, 1024>}, {transform_indices = @transform_7, window_bounds = array<i64: 1024, 512>}, {transform_indices = @transform_8, window_bounds = array<i64: 1, 512>}, {transform_indices = @transform_9, window_bounds = array<i64: 512, 1024>}, {pipeline_mode = #tpu.pipeline_mode<synchronous>, transform_indices = @transform_10, window_bounds = array<i64: 1, 1024>}, {pipeline_mode = #tpu.pipeline_mode<synchronous>, transform_indices = @transform_11, window_bounds = array<i64: 1, 1024>}, {pipeline_mode = #tpu.pipeline_mode<synchronous>, transform_indices = @transform_12, window_bounds = array<i64: 1, 1>}, {pipeline_mode = #tpu.pipeline_mode<synchronous>, transform_indices = @transform_13, window_bounds = array<i64: 8, 128>}, {pipeline_mode = #tpu.pipeline_mode<synchronous>, transform_indices = @transform_14, window_bounds = array<i64: 8, 128>}]} {
    %c0_i32 = arith.constant 0 : i32
    %0 = arith.cmpi eq, %arg0, %c0_i32 : i32
    %1 = arith.extui %0 : i1 to i32
    %c0_i32_0 = arith.constant 0 : i32
    %2 = arith.cmpi ne, %1, %c0_i32_0 : i32
    scf.if %2 {
      %c0_15 = arith.constant 0 : index
      %c0_16 = arith.constant 0 : index
      %21 = vector.load %arg1[%c0_15, %c0_16] : memref<8x896xf32, #tpu.memory_space<vmem>>, vector<8x896xf32>
      %22 = arith.truncf %21 : vector<8x896xf32> to vector<8x896xbf16>
      %c0_17 = arith.constant 0 : index
      %c0_18 = arith.constant 0 : index
      %23 = vector.load %arg2[%c0_17, %c0_18] : memref<896x1024xbf16, #tpu.memory_space<vmem>>, vector<896x1024xbf16>
      %cst_19 = arith.constant dense<0.000000e+00> : vector<8x1024xf32>
      %24 = tpu.matmul %22, %23, %cst_19 {dimension_numbers = #tpu.dot_dimension_numbers<[1], [0], [0], [1], [0, 0, 1, 1], [], []>} : vector<8x896xbf16>, vector<896x1024xbf16>, vector<8x1024xf32> -> vector<8x1024xf32>
      %c0_20 = arith.constant 0 : index
      %c0_21 = arith.constant 0 : index
      %25 = vector.load %arg3[%c0_20, %c0_21] : memref<1x1024xf32, #tpu.memory_space<vmem>>, vector<1x1024xf32>
      %26 = vector.broadcast %25 : vector<1x1024xf32> to vector<8x1024xf32>
      %27 = arith.addf %24, %26 : vector<8x1024xf32>
      %28 = arith.truncf %27 : vector<8x1024xf32> to vector<8x1024xbf16>
      %c0_22 = arith.constant 0 : index
      %c0_23 = arith.constant 0 : index
      %29 = vector.load %arg4[%c0_22, %c0_23] : memref<1024x128xbf16, #tpu.memory_space<vmem>>, vector<1024x128xbf16>
      %cst_24 = arith.constant dense<0.000000e+00> : vector<8x128xf32>
      %30 = tpu.matmul %28, %29, %cst_24 {dimension_numbers = #tpu.dot_dimension_numbers<[1], [0], [0], [1], [0, 0, 1, 1], [], []>} : vector<8x1024xbf16>, vector<1024x128xbf16>, vector<8x128xf32> -> vector<8x128xf32>
      %c0_25 = arith.constant 0 : index
      %c0_26 = arith.constant 0 : index
      %31 = vector.load %arg5[%c0_25, %c0_26] : memref<1x128xf32, #tpu.memory_space<vmem>>, vector<1x128xf32>
      %32 = vector.broadcast %31 : vector<1x128xf32> to vector<8x128xf32>
      %33 = arith.addf %30, %32 : vector<8x128xf32>
      %cst_27 = arith.constant dense<0xFF800000> : vector<8xf32>
      %34 = vector.multi_reduction <maximumf>, %33, %cst_27 [1] : vector<8x128xf32> to vector<8xf32>
      %35 = vector.shape_cast %34 : vector<8xf32> to vector<8x1xf32>
      %36 = vector.broadcast %35 : vector<8x1xf32> to vector<8x128xf32>
      %37 = arith.subf %33, %36 : vector<8x128xf32>
      %38 = math.exp %37 : vector<8x128xf32>
      %cst_28 = arith.constant dense<0.000000e+00> : vector<8xf32>
      %39 = vector.multi_reduction <add>, %38, %cst_28 [1] : vector<8x128xf32> to vector<8xf32>
      %40 = vector.shape_cast %39 : vector<8xf32> to vector<8x1xf32>
      %41 = tpu.reciprocal %40 {approx = true} : vector<8x1xf32> -> vector<8x1xf32>
      %42 = vector.broadcast %41 : vector<8x1xf32> to vector<8x128xf32>
      %43 = arith.mulf %38, %42 : vector<8x128xf32>
      %c0_29 = arith.constant 0 : index
      %c0_30 = arith.constant 0 : index
      %44 = vector.load %arg14[%c0_29, %c0_30] : memref<8x128xf32, #tpu.memory_space<vmem>>, vector<8x128xf32>
      tpu.vector_store %arg14[%c0_29, %c0_30], %43 {strides = array<i32>} : memref<8x128xf32, #tpu.memory_space<vmem>>, vector<8x128xf32>,
      %cst_31 = arith.constant dense<0.000000e+00> : vector<8xf32>
      %45 = vector.multi_reduction <add>, %27, %cst_31 [1] : vector<8x1024xf32> to vector<8xf32>
      %46 = vector.shape_cast %45 : vector<8xf32> to vector<8x1xf32>
      %cst_32 = arith.constant 1.024000e+03 : f32
      %47 = vector.broadcast %cst_32 : f32 to vector<8x1xf32>
      %48 = arith.divf %46, %47 : vector<8x1xf32>
      %49 = vector.broadcast %48 : vector<8x1xf32> to vector<8x1024xf32>
      %50 = arith.subf %27, %49 : vector<8x1024xf32>
      %51 = arith.mulf %50, %50 : vector<8x1024xf32>
      %cst_33 = arith.constant dense<0.000000e+00> : vector<8xf32>
      %52 = vector.multi_reduction <add>, %51, %cst_33 [1] : vector<8x1024xf32> to vector<8xf32>
      %53 = vector.shape_cast %52 : vector<8xf32> to vector<8x1xf32>
      %cst_34 = arith.constant 1.024000e+03 : f32
      %54 = vector.broadcast %cst_34 : f32 to vector<8x1xf32>
      %55 = arith.divf %53, %54 : vector<8x1xf32>
      %cst_35 = arith.constant 9.99999974E-6 : f32
      %56 = vector.broadcast %cst_35 : f32 to vector<8x1xf32>
      %57 = arith.addf %55, %56 : vector<8x1xf32>
      %58 = math.rsqrt %57 : vector<8x1xf32>
      %59 = vector.broadcast %58 : vector<8x1xf32> to vector<8x1024xf32>
      %60 = arith.mulf %50, %59 : vector<8x1024xf32>
      %c0_36 = arith.constant 0 : index
      %c0_37 = arith.constant 0 : index
      %61 = vector.load %arg6[%c0_36, %c0_37] : memref<1x1024xf32, #tpu.memory_space<vmem>>, vector<1x1024xf32>
      %62 = vector.broadcast %61 : vector<1x1024xf32> to vector<8x1024xf32>
      %63 = arith.mulf %60, %62 : vector<8x1024xf32>
      %c0_38 = arith.constant 0 : index
      %c0_39 = arith.constant 0 : index
      %64 = vector.load %arg7[%c0_38, %c0_39] : memref<1x1024xf32, #tpu.memory_space<vmem>>, vector<1x1024xf32>
      %65 = vector.broadcast %64 : vector<1x1024xf32> to vector<8x1024xf32>
      %66 = arith.addf %63, %65 : vector<8x1024xf32>
      %c0_40 = arith.constant 0 : index
      %c0_41 = arith.constant 0 : index
      %67 = vector.load %arg16[%c0_40, %c0_41] : memref<8x1024xf32, #tpu.memory_space<vmem>>, vector<8x1024xf32>
      tpu.vector_store %arg16[%c0_40, %c0_41], %66 {strides = array<i32>} : memref<8x1024xf32, #tpu.memory_space<vmem>>, vector<8x1024xf32>,
      %cst_42 = arith.constant 0.000000e+00 : f32
      %68 = vector.broadcast %cst_42 : f32 to vector<8x1024xf32>
      %c0_43 = arith.constant 0 : index
      %c0_44 = arith.constant 0 : index
      %69 = vector.load %arg17[%c0_43, %c0_44] : memref<8x1024xf32, #tpu.memory_space<vmem>>, vector<8x1024xf32>
      tpu.vector_store %arg17[%c0_43, %c0_44], %68 {strides = array<i32>} : memref<8x1024xf32, #tpu.memory_space<vmem>>, vector<8x1024xf32>,
    } else {
    }
    %c0 = arith.constant 0 : index
    %c0_1 = arith.constant 0 : index
    %3 = vector.load %arg16[%c0, %c0_1] : memref<8x1024xf32, #tpu.memory_space<vmem>>, vector<8x1024xf32>
    %4 = arith.truncf %3 : vector<8x1024xf32> to vector<8x1024xbf16>
    %c0_2 = arith.constant 0 : index
    %c0_3 = arith.constant 0 : index
    %5 = vector.load %arg8[%c0_2, %c0_3] : memref<1024x512xbf16, #tpu.memory_space<vmem>>, vector<1024x512xbf16>
    %cst = arith.constant dense<0.000000e+00> : vector<8x512xf32>
    %6 = tpu.matmul %4, %5, %cst {dimension_numbers = #tpu.dot_dimension_numbers<[1], [0], [0], [1], [0, 0, 1, 1], [], []>} : vector<8x1024xbf16>, vector<1024x512xbf16>, vector<8x512xf32> -> vector<8x512xf32>
    %c0_4 = arith.constant 0 : index
    %c0_5 = arith.constant 0 : index
    %7 = vector.load %arg9[%c0_4, %c0_5] : memref<1x512xf32, #tpu.memory_space<vmem>>, vector<1x512xf32>
    %8 = vector.broadcast %7 : vector<1x512xf32> to vector<8x512xf32>
    %9 = arith.addf %6, %8 : vector<8x512xf32>
    %cst_6 = arith.constant 0.000000e+00 : f32
    %10 = vector.broadcast %cst_6 : f32 to vector<8x512xf32>
    %11 = arith.maximumf %9, %10 : vector<8x512xf32>
    %c0_7 = arith.constant 0 : index
    %c0_8 = arith.constant 0 : index
    %12 = vector.load %arg17[%c0_7, %c0_8] : memref<8x1024xf32, #tpu.memory_space<vmem>>, vector<8x1024xf32>
    %13 = arith.truncf %11 : vector<8x512xf32> to vector<8x512xbf16>
    %c0_9 = arith.constant 0 : index
    %c0_10 = arith.constant 0 : index
    %14 = vector.load %arg10[%c0_9, %c0_10] : memref<512x1024xbf16, #tpu.memory_space<vmem>>, vector<512x1024xbf16>
    %cst_11 = arith.constant dense<0.000000e+00> : vector<8x1024xf32>
    %15 = tpu.matmul %13, %14, %cst_11 {dimension_numbers = #tpu.dot_dimension_numbers<[1], [0], [0], [1], [0, 0, 1, 1], [], []>} : vector<8x512xbf16>, vector<512x1024xbf16>, vector<8x1024xf32> -> vector<8x1024xf32>
    %16 = arith.addf %12, %15 : vector<8x1024xf32>
    %c0_12 = arith.constant 0 : index
    %c0_13 = arith.constant 0 : index
    %17 = vector.load %arg17[%c0_12, %c0_13] : memref<8x1024xf32, #tpu.memory_space<vmem>>, vector<8x1024xf32>
    tpu.vector_store %arg17[%c0_12, %c0_13], %16 {strides = array<i32>} : memref<8x1024xf32, #tpu.memory_space<vmem>>, vector<8x1024xf32>,
    %c3_i32 = arith.constant 3 : i32
    %18 = arith.cmpi eq, %arg0, %c3_i32 : i32
    %19 = arith.extui %18 : i1 to i32
    %c0_i32_14 = arith.constant 0 : i32
    %20 = arith.cmpi ne, %19, %c0_i32_14 : i32
    scf.if %20 {
      %c0_15 = arith.constant 0 : index
      %c0_16 = arith.constant 0 : index
      %21 = vector.load %arg17[%c0_15, %c0_16] : memref<8x1024xf32, #tpu.memory_space<vmem>>, vector<8x1024xf32>
      %c0_17 = arith.constant 0 : index
      %c0_18 = arith.constant 0 : index
      %22 = vector.load %arg11[%c0_17, %c0_18] : memref<1x1024xf32, #tpu.memory_space<vmem>>, vector<1x1024xf32>
      %23 = vector.broadcast %22 : vector<1x1024xf32> to vector<8x1024xf32>
      %24 = arith.addf %21, %23 : vector<8x1024xf32>
      %cst_19 = arith.constant 0.000000e+00 : f32
      %25 = vector.broadcast %cst_19 : f32 to vector<8x1024xf32>
      %26 = arith.maximumf %24, %25 : vector<8x1024xf32>
      %c0_20 = arith.constant 0 : index
      %c0_21 = arith.constant 0 : index
      %27 = vector.load %arg12[%c0_20, %c0_21] : memref<1x1024xf32, #tpu.memory_space<vmem>>, vector<1x1024xf32>
      %28 = vector.broadcast %27 : vector<1x1024xf32> to vector<8x1024xf32>
      %29 = arith.mulf %26, %28 : vector<8x1024xf32>
      %cst_22 = arith.constant dense<0.000000e+00> : vector<8xf32>
      %30 = vector.multi_reduction <add>, %29, %cst_22 [1] : vector<8x1024xf32> to vector<8xf32>
      %31 = vector.shape_cast %30 : vector<8xf32> to vector<8x1xf32>
      %c0_23 = arith.constant 0 : index
      %c0_24 = arith.constant 0 : index
      %32 = vector.load %arg13[%c0_23, %c0_24] : memref<1x1xf32, #tpu.memory_space<vmem>>, vector<1x1xf32>
      %33 = vector.broadcast %32 : vector<1x1xf32> to vector<8x1xf32>
      %34 = arith.addf %31, %33 : vector<8x1xf32>
      %35 = vector.shape_cast %34 : vector<8x1xf32> to vector<8x1xf32>
      %36 = vector.broadcast %35 : vector<8x1xf32> to vector<8x128xf32>
      %c0_25 = arith.constant 0 : index
      %c0_26 = arith.constant 0 : index
      %37 = vector.load %arg15[%c0_25, %c0_26] : memref<8x128xf32, #tpu.memory_space<vmem>>, vector<8x128xf32>
      tpu.vector_store %arg15[%c0_25, %c0_26], %36 {strides = array<i32>} : memref<8x128xf32, #tpu.memory_space<vmem>>, vector<8x128xf32>,
    } else {
    }
    return
  }
  func.func @transform_0(%arg0: i32) -> (i32, i32) {
    %c0_i32 = arith.constant 0 : i32
    %c0_i32_0 = arith.constant 0 : i32
    %c0_i32_1 = arith.constant 0 : i32
    return %c0_i32, %c0_i32_0 : i32, i32
  }
  func.func @transform_1(%arg0: i32) -> (i32, i32) {
    %c0_i32 = arith.constant 0 : i32
    %c0_i32_0 = arith.constant 0 : i32
    %c0_i32_1 = arith.constant 0 : i32
    return %c0_i32, %c0_i32_0 : i32, i32
  }
  func.func @transform_2(%arg0: i32) -> (i32, i32) {
    %c0_i32 = arith.constant 0 : i32
    %c0_i32_0 = arith.constant 0 : i32
    %c0_i32_1 = arith.constant 0 : i32
    return %c0_i32, %c0_i32_0 : i32, i32
  }
  func.func @transform_3(%arg0: i32) -> (i32, i32) {
    %c0_i32 = arith.constant 0 : i32
    %c0_i32_0 = arith.constant 0 : i32
    %c0_i32_1 = arith.constant 0 : i32
    return %c0_i32, %c0_i32_0 : i32, i32
  }
  func.func @transform_4(%arg0: i32) -> (i32, i32) {
    %c0_i32 = arith.constant 0 : i32
    %c0_i32_0 = arith.constant 0 : i32
    %c0_i32_1 = arith.constant 0 : i32
    return %c0_i32, %c0_i32_0 : i32, i32
  }
  func.func @transform_5(%arg0: i32) -> (i32, i32) {
    %c0_i32 = arith.constant 0 : i32
    %c0_i32_0 = arith.constant 0 : i32
    %c0_i32_1 = arith.constant 0 : i32
    return %c0_i32, %c0_i32_0 : i32, i32
  }
  func.func @transform_6(%arg0: i32) -> (i32, i32) {
    %c0_i32 = arith.constant 0 : i32
    %c0_i32_0 = arith.constant 0 : i32
    %c0_i32_1 = arith.constant 0 : i32
    return %c0_i32, %c0_i32_0 : i32, i32
  }
  func.func @transform_7(%arg0: i32) -> (i32, i32) {
    %c0_i32 = arith.constant 0 : i32
    %c0_i32_0 = arith.constant 0 : i32
    return %c0_i32, %arg0 : i32, i32
  }
  func.func @transform_8(%arg0: i32) -> (i32, i32) {
    %c0_i32 = arith.constant 0 : i32
    %c0_i32_0 = arith.constant 0 : i32
    return %c0_i32, %arg0 : i32, i32
  }
  func.func @transform_9(%arg0: i32) -> (i32, i32) {
    %c0_i32 = arith.constant 0 : i32
    %c0_i32_0 = arith.constant 0 : i32
    return %arg0, %c0_i32 : i32, i32
  }
  func.func @transform_10(%arg0: i32) -> (i32, i32) {
    %c0_i32 = arith.constant 0 : i32
    %c0_i32_0 = arith.constant 0 : i32
    %c0_i32_1 = arith.constant 0 : i32
    return %c0_i32, %c0_i32_0 : i32, i32
  }
  func.func @transform_11(%arg0: i32) -> (i32, i32) {
    %c0_i32 = arith.constant 0 : i32
    %c0_i32_0 = arith.constant 0 : i32
    %c0_i32_1 = arith.constant 0 : i32
    return %c0_i32, %c0_i32_0 : i32, i32
  }
  func.func @transform_12(%arg0: i32) -> (i32, i32) {
    %c0_i32 = arith.constant 0 : i32
    %c0_i32_0 = arith.constant 0 : i32
    %c0_i32_1 = arith.constant 0 : i32
    return %c0_i32, %c0_i32_0 : i32, i32
  }
  func.func @transform_13(%arg0: i32) -> (i32, i32) {
    %c0_i32 = arith.constant 0 : i32
    %c0_i32_0 = arith.constant 0 : i32
    %c0_i32_1 = arith.constant 0 : i32
    return %c0_i32, %c0_i32_0 : i32, i32
  }
  func.func @transform_14(%arg0: i32) -> (i32, i32) {
    %c0_i32 = arith.constant 0 : i32
    %c0_i32_0 = arith.constant 0 : i32
    %c0_i32_1 = arith.constant 0 : i32
    return %c0_i32, %c0_i32_0 : i32, i32
  }
}

</mosaic_0001>

<llo_original>
// kernel: policy_forward.1
$region0: #{policy_forward.1}
  #allocation0 [shape = 'u32[]', space=smem, size = 0x4, offset = 0x4, fixed_abs, tag = 'smem constant byte address 0x4 - core index']
  #allocation1 [shape = 'u32[72,128]{1,0:T(1,128)}', space=vmem, size = 0x9000, scoped, tag = 'internal scratch']
  #allocation2 [shape = 'f32[8,1024]{1,0:T(8,128)}', space=vmem, size = 0x8000, scoped, tag = 'scratch operand']
  #allocation3 [shape = 'f32[8,1024]{1,0:T(8,128)}', space=vmem, size = 0x8000, scoped, tag = 'scratch operand']
  #allocation4 [shape = 'f32[1,1]{1,0:T(1,128)S(1)}', space=vmem, size = 0x200, scoped, tag = 'scoped memory for policy_forward.1']
  %s0 = inlined_call_operand.vmem [shape: f32[8,896], index: 0, kind: input, shape index: {}]
  %s1 = inlined_call_operand.hbm [shape: bf16[896,1024], index: 1, kind: input, shape index: {}]
  %s2 = inlined_call_operand.hbm [shape: f32[1,1024], index: 2, kind: input, shape index: {}]
  %s3 = inlined_call_operand.hbm [shape: bf16[1024,128], index: 3, kind: input, shape index: {}]
  %s4 = inlined_call_operand.hbm [shape: f32[1,128], index: 4, kind: input, shape index: {}]
  %s5 = inlined_call_operand.hbm [shape: f32[1,1024], index: 5, kind: input, shape index: {}]
  %s6 = inlined_call_operand.hbm [shape: f32[1,1024], index: 6, kind: input, shape index: {}]
  %s7 = inlined_call_operand.hbm [shape: bf16[1024,2048], index: 7, kind: input, shape index: {}]
  %s8 = inlined_call_operand.hbm [shape: f32[1,2048], index: 8, kind: input, shape index: {}]
  %s9 = inlined_call_operand.hbm [shape: bf16[2048,1024], index: 9, kind: input, shape index: {}]
  %s10 = inlined_call_operand.hbm [shape: f32[1,1024], index: 10, kind: input, shape index: {}]
  %s11 = inlined_call_operand.hbm [shape: f32[1,1024], index: 11, kind: input, shape index: {}]
  %s12 = inlined_call_operand.<no memory space> [shape: f32[1,1], index: 12, kind: input, shape index: {}]
  %s13 = inlined_call_operand.vmem [shape: f32[8,128], index: 13, kind: output, shape index: {0}]
  %s14 = inlined_call_operand.vmem [shape: f32[8,128], index: 14, kind: output, shape index: {1}]
  %15 = xla_tuple %s13, %s14
  %s16 = sld [smem:[#allocation0]]
  $region145: #{policy_forward.1} parent=0
    _
  %s18 = ssub.s32 1, %s16
  %s19 = scalar_select 0, %s18, %s16
  %v20 = vstv %s12
  %21 = vst [vmem:[#allocation4] sm:$0x1] %v20
  $region1: #{policy_forward.1} parent=0
    #allocation5 [shape = 'u8[1835008]{0}', space=vmem, size = 0x1c0000, scoped, tag = 'input window, operand 1, single buffered']
    #allocation6 [shape = 's32[2]{0}', space=sflag, size = 0x8, scoped, tag = 'scoped memory for policy_forward.1']
    #allocation7 [shape = 'u8[4096]{0}', space=vmem, size = 0x1000, scoped, tag = 'input window, operand 2, single buffered']
    #allocation8 [shape = 's32[1]{0}', space=sflag, size = 0x4, scoped, tag = 'scoped memory for policy_forward.1']
    #allocation9 [shape = 'u8[262144]{0}', space=vmem, size = 0x40000, scoped, tag = 'input window, operand 3, single buffered']
    #allocation10 [shape = 'u8[512]{0}', space=vmem, size = 0x400, scoped, tag = 'input window, operand 4, single buffered']
    #allocation11 [shape = 's32[1]{0}', space=sflag, size = 0x4, scoped, tag = 'scoped memory for policy_forward.1']
    #allocation12 [shape = 'u8[4096]{0}', space=vmem, size = 0x1000, scoped, tag = 'input window, operand 5, single buffered']
    #allocation13 [shape = 'u8[4096]{0}', space=vmem, size = 0x1000, scoped, tag = 'input window, operand 6, single buffered']
    #allocation14 [shape = 's32[1]{0}', space=sflag, size = 0x4, scoped, tag = 'scoped memory for policy_forward.1']
    #allocation15 [shape = 'u8[2097152]{0}', space=vmem, size = 0x200000, scoped, tag = 'input window, operand 7']
    #allocation16 [shape = 'u8[4096]{0}', space=vmem, size = 0x1000, scoped, tag = 'input window, operand 8']
    #allocation17 [shape = 'u8[2097152]{0}', space=vmem, size = 0x200000, scoped, tag = 'input window, operand 9']
    #allocation18 [shape = 'u8[4096]{0}', space=vmem, size = 0x1000, scoped, tag = 'input window, operand 10, single buffered']
    #allocation19 [shape = 'u8[4096]{0}', space=vmem, size = 0x1000, scoped, tag = 'input window, operand 11, single buffered']
    %22 = vsyncpa [#allocation6], 0
    %23 = vsyncpa [#allocation8], 0
    %24 = vsyncpa [#allocation11], 0
    %25 = vsyncpa [#allocation14], 0
    loop: start=0, step=1, limit=6
    $region2: #{policy_forward.1} parent=1 // loop_pre_header
      _
    $region3: #{policy_forward.1} parent=1 // loop_header
      %s27 = sphi 0, %s31
      %p28 = scmp.ge.s32.totalorder %s27, 6
      %s35 = sphi 0, %s35
      %s37 = sphi 0, %s35
      %s38 = sphi 0, %s37
      %s52 = sphi 0, %s38
      %s56 = sphi 0, %s56
      %s58 = sphi 0, %s56
      %s59 = sphi 0, %s58
      %s73 = sphi 0, %s59
      %s77 = sphi 0, %s77
      %s79 = sphi 0, %s77
      %s80 = sphi 0, %s79
      %s94 = sphi 0, %s80
      %s98 = sphi 0, %s98
      %s100 = sphi 0, %s98
      %s101 = sphi 0, %s100
      %s115 = sphi 0, %s101
      %s119 = sphi 0, %s119
      %s121 = sphi 0, %s119
      %s122 = sphi 0, %s121
      %s136 = sphi 0, %s122
      %s140 = sphi 0, %s140
      %s142 = sphi 0, %s140
      %s143 = sphi 0, %s142
      %s157 = sphi 0, %s143
      %s161 = sphi 0, %s161
      %s163 = sphi 0, %s161
      %s164 = sphi 0, %s163
      %s178 = sphi 0, %s164
      %s184 = sphi 0, %s186
      %s187 = sphi 0, %s184
      %s188 = sphi 0, %s187
      %s204 = sphi 0, %s188
      %s210 = sphi 0, %s212
      %s213 = sphi 0, %s210
      %s214 = sphi 0, %s213
      %s230 = sphi 0, %s214
      %s236 = sphi 0, %s238
      %s239 = sphi 0, %s236
      %s240 = sphi 0, %s239
      %s256 = sphi 0, %s240
      %s260 = sphi 0, %s260
      %s262 = sphi 0, %s260
      %s263 = sphi 0, %s262
      %s277 = sphi 0, %s263
      %s281 = sphi 0, %s281
      %s283 = sphi 0, %s281
      %s284 = sphi 0, %s283
      %s298 = sphi 0, %s284
      %s302 = sphi 0, %s302
      %s304 = sphi 0, %s302
      %s305 = sphi 0, %s304
      %s319 = sphi 0, %s305
      %s323 = sphi 0, %s323
      %s325 = sphi 0, %s323
      %s326 = sphi 0, %s325
      %s340 = sphi 0, %s326
      %s344 = sphi 0, %s344
      %s346 = sphi 0, %s344
      %s347 = sphi 0, %s346
      %s361 = sphi 0, %s347
    $region4: #{policy_forward.1} parent=1 // loop_header_branch
      %30 = sbr.rel (%p28) target = $region8
    $region5: #{policy_forward.1} parent=1 // loop_body
      %s32 = ssub.s32 %s27, 1
      %s33 = ssub.s32 %s27, 2
      %s34 = sadd.s32 %s27, 1
      %s36 = sadd.s32 %s35, 1
      %p39 = scmp.eq.s32.totalorder %s27, 3
      %p40 = scmp.ne.s32.totalorder %s35, %s37
      %p41 = scmp.eq.s32.totalorder %s27, 0
      %p42 = por %p40, %p41
      %p43 = scmp.ne.s32.totalorder %s35, %s37
      %p44 = scmp.eq.s32.totalorder %s32, 3
      %p45 = por %p43, %p44
      %p46 = scmp.ne.s32.totalorder %s37, %s38
      %p47 = scmp.eq.s32.totalorder %s32, 0
      %p48 = por %p46, %p47
      %p49 = scmp.ne.s32.totalorder %s37, %s38
      %p50 = scmp.eq.s32.totalorder %s33, 3
      %p51 = por %p49, %p50
      %p53 = scmp.ne.s32.totalorder %s38, %s52
      %p54 = scmp.eq.s32.totalorder %s33, 0
      %p55 = por %p53, %p54
      %s57 = sadd.s32 %s56, 1
      %p60 = scmp.eq.s32.totalorder %s27, 3
      %p61 = scmp.ne.s32.totalorder %s56, %s58
      %p62 = scmp.eq.s32.totalorder %s27, 0
      %p63 = por %p61, %p62
      %p64 = scmp.ne.s32.totalorder %s56, %s58
      %p65 = scmp.eq.s32.totalorder %s32, 3
      %p66 = por %p64, %p65
      %p67 = scmp.ne.s32.totalorder %s58, %s59
      %p68 = scmp.eq.s32.totalorder %s32, 0
      %p69 = por %p67, %p68
      %p70 = scmp.ne.s32.totalorder %s58, %s59
      %p71 = scmp.eq.s32.totalorder %s33, 3
      %p72 = por %p70, %p71
      %p74 = scmp.ne.s32.totalorder %s59, %s73
      %p75 = scmp.eq.s32.totalorder %s33, 0
      %p76 = por %p74, %p75
      %s78 = sadd.s32 %s77, 1
      %p81 = scmp.eq.s32.totalorder %s27, 3
      %p82 = scmp.ne.s32.totalorder %s77, %s79
      %p83 = scmp.eq.s32.totalorder %s27, 0
      %p84 = por %p82, %p83
      %p85 = scmp.ne.s32.totalorder %s77, %s79
      %p86 = scmp.eq.s32.totalorder %s32, 3
      %p87 = por %p85, %p86
      %p88 = scmp.ne.s32.totalorder %s79, %s80
      %p89 = scmp.eq.s32.totalorder %s32, 0
      %p90 = por %p88, %p89
      %p91 = scmp.ne.s32.totalorder %s79, %s80
      %p92 = scmp.eq.s32.totalorder %s33, 3
      %p93 = por %p91, %p92
      %p95 = scmp.ne.s32.totalorder %s80, %s94
      %p96 = scmp.eq.s32.totalorder %s33, 0
      %p97 = por %p95, %p96
      %s99 = sadd.s32 %s98, 1
      %p102 = scmp.eq.s32.totalorder %s27, 3
      %p103 = scmp.ne.s32.totalorder %s98, %s100
      %p104 = scmp.eq.s32.totalorder %s27, 0
      %p105 = por %p103, %p104
      %p106 = scmp.ne.s32.totalorder %s98, %s100
      %p107 = scmp.eq.s32.totalorder %s32, 3
      %p108 = por %p106, %p107
      %p109 = scmp.ne.s32.totalorder %s100, %s101
      %p110 = scmp.eq.s32.totalorder %s32, 0
      %p111 = por %p109, %p110
      %p112 = scmp.ne.s32.totalorder %s100, %s101
      %p113 = scmp.eq.s32.totalorder %s33, 3
      %p114 = por %p112, %p113
      %p116 = scmp.ne.s32.totalorder %s101, %s115
      %p117 = scmp.eq.s32.totalorder %s33, 0
      %p118 = por %p116, %p117
      %s120 = sadd.s32 %s119, 1
      %p123 = scmp.eq.s32.totalorder %s27, 3
      %p124 = scmp.ne.s32.totalorder %s119, %s121
      %p125 = scmp.eq.s32.totalorder %s27, 0
      %p126 = por %p124, %p125
      %p127 = scmp.ne.s32.totalorder %s119, %s121
      %p128 = scmp.eq.s32.totalorder %s32, 3
      %p129 = por %p127, %p128
      %p130 = scmp.ne.s32.totalorder %s121, %s122
      %p131 = scmp.eq.s32.totalorder %s32, 0
      %p132 = por %p130, %p131
      %p133 = scmp.ne.s32.totalorder %s121, %s122
      %p134 = scmp.eq.s32.totalorder %s33, 3
      %p135 = por %p133, %p134
      %p137 = scmp.ne.s32.totalorder %s122, %s136
      %p138 = scmp.eq.s32.totalorder %s33, 0
      %p139 = por %p137, %p138
      %s141 = sadd.s32 %s140, 1
      %p144 = scmp.eq.s32.totalorder %s27, 3
      %p145 = scmp.ne.s32.totalorder %s140, %s142
      %p146 = scmp.eq.s32.totalorder %s27, 0
      %p147 = por %p145, %p146
      %p148 = scmp.ne.s32.totalorder %s140, %s142
      %p149 = scmp.eq.s32.totalorder %s32, 3
      %p150 = por %p148, %p149
      %p151 = scmp.ne.s32.totalorder %s142, %s143
      %p152 = scmp.eq.s32.totalorder %s32, 0
      %p153 = por %p151, %p152
      %p154 = scmp.ne.s32.totalorder %s142, %s143
      %p155 = scmp.eq.s32.totalorder %s33, 3
      %p156 = por %p154, %p155
      %p158 = scmp.ne.s32.totalorder %s143, %s157
      %p159 = scmp.eq.s32.totalorder %s33, 0
      %p160 = por %p158, %p159
      %s162 = sadd.s32 %s161, 1
      %p165 = scmp.eq.s32.totalorder %s27, 3
      %p166 = scmp.ne.s32.totalorder %s161, %s163
      %p167 = scmp.eq.s32.totalorder %s27, 0
      %p168 = por %p166, %p167
      %p169 = scmp.ne.s32.totalorder %s161, %s163
      %p170 = scmp.eq.s32.totalorder %s32, 3
      %p171 = por %p169, %p170
      %p172 = scmp.ne.s32.totalorder %s163, %s164
      %p173 = scmp.eq.s32.totalorder %s32, 0
      %p174 = por %p172, %p173
      %p175 = scmp.ne.s32.totalorder %s163, %s164
      %p176 = scmp.eq.s32.totalorder %s33, 3
      %p177 = por %p175, %p176
      %p179 = scmp.ne.s32.totalorder %s164, %s178
      %p180 = scmp.eq.s32.totalorder %s33, 0
      %p181 = por %p179, %p180
      %s182 = ssub.s32 %s27, %s34
      %p183 = scmp.eq.s32.totalorder %s182, 0
      %s185 = sadd.s32 %s184, 1
      %s186 = scalar_select %p183, %s184, %s185
      %p189 = pneg %p183
      %p190 = scmp.eq.s32.totalorder %s27, 3
      %p191 = por %p189, %p190
      %p192 = scmp.ne.s32.totalorder %s184, %s187
      %p193 = scmp.eq.s32.totalorder %s27, 0
      %p194 = por %p192, %p193
      %p195 = scmp.ne.s32.totalorder %s184, %s187
      %p196 = scmp.eq.s32.totalorder %s32, 3
      %p197 = por %p195, %p196
      %p198 = scmp.ne.s32.totalorder %s187, %s188
      %p199 = scmp.eq.s32.totalorder %s32, 0
      %p200 = por %p198, %p199
      %p201 = scmp.ne.s32.totalorder %s187, %s188
      %p202 = scmp.eq.s32.totalorder %s33, 3
      %p203 = por %p201, %p202
      %p205 = scmp.ne.s32.totalorder %s188, %s204
      %p206 = scmp.eq.s32.totalorder %s33, 0
      %p207 = por %p205, %p206
      %s208 = ssub.s32 %s27, %s34
      %p209 = scmp.eq.s32.totalorder %s208, 0
      %s211 = sadd.s32 %s210, 1
      %s212 = scalar_select %p209, %s210, %s211
      %p215 = pneg %p209
      %p216 = scmp.eq.s32.totalorder %s27, 3
      %p217 = por %p215, %p216
      %p218 = scmp.ne.s32.totalorder %s210, %s213
      %p219 = scmp.eq.s32.totalorder %s27, 0
      %p220 = por %p218, %p219
      %p221 = scmp.ne.s32.totalorder %s210, %s213
      %p222 = scmp.eq.s32.totalorder %s32, 3
      %p223 = por %p221, %p222
      %p224 = scmp.ne.s32.totalorder %s213, %s214
      %p225 = scmp.eq.s32.totalorder %s32, 0
      %p226 = por %p224, %p225
      %p227 = scmp.ne.s32.totalorder %s213, %s214
      %p228 = scmp.eq.s32.totalorder %s33, 3
      %p229 = por %p227, %p228
      %p231 = scmp.ne.s32.totalorder %s214, %s230
      %p232 = scmp.eq.s32.totalorder %s33, 0
      %p233 = por %p231, %p232
      %s234 = ssub.s32 %s27, %s34
      %p235 = scmp.eq.s32.totalorder %s234, 0
      %s237 = sadd.s32 %s236, 1
      %s238 = scalar_select %p235, %s236, %s237
      %p241 = pneg %p235
      %p242 = scmp.eq.s32.totalorder %s27, 3
      %p243 = por %p241, %p242
      %p244 = scmp.ne.s32.totalorder %s236, %s239
      %p245 = scmp.eq.s32.totalorder %s27, 0
      %p246 = por %p244, %p245
      %p247 = scmp.ne.s32.totalorder %s236, %s239
      %p248 = scmp.eq.s32.totalorder %s32, 3
      %p249 = por %p247, %p248
      %p250 = scmp.ne.s32.totalorder %s239, %s240
      %p251 = scmp.eq.s32.totalorder %s32, 0
      %p252 = por %p250, %p251
      %p253 = scmp.ne.s32.totalorder %s239, %s240
      %p254 = scmp.eq.s32.totalorder %s33, 3
      %p255 = por %p253, %p254
      %p257 = scmp.ne.s32.totalorder %s240, %s256
      %p258 = scmp.eq.s32.totalorder %s33, 0
      %p259 = por %p257, %p258
      %s261 = sadd.s32 %s260, 1
      %p264 = scmp.eq.s32.totalorder %s27, 3
      %p265 = scmp.ne.s32.totalorder %s260, %s262
      %p266 = scmp.eq.s32.totalorder %s27, 0
      %p267 = por %p265, %p266
      %p268 = scmp.ne.s32.totalorder %s260, %s262
      %p269 = scmp.eq.s32.totalorder %s32, 3
      %p270 = por %p268, %p269
      %p271 = scmp.ne.s32.totalorder %s262, %s263
      %p272 = scmp.eq.s32.totalorder %s32, 0
      %p273 = por %p271, %p272
      %p274 = scmp.ne.s32.totalorder %s262, %s263
      %p275 = scmp.eq.s32.totalorder %s33, 3
      %p276 = por %p274, %p275
      %p278 = scmp.ne.s32.totalorder %s263, %s277
      %p279 = scmp.eq.s32.totalorder %s33, 0
      %p280 = por %p278, %p279
      %s282 = sadd.s32 %s281, 1
      %p285 = scmp.eq.s32.totalorder %s27, 3
      %p286 = scmp.ne.s32.totalorder %s281, %s283
      %p287 = scmp.eq.s32.totalorder %s27, 0
      %p288 = por %p286, %p287
      %p289 = scmp.ne.s32.totalorder %s281, %s283
      %p290 = scmp.eq.s32.totalorder %s32, 3
      %p291 = por %p289, %p290
      %p292 = scmp.ne.s32.totalorder %s283, %s284
      %p293 = scmp.eq.s32.totalorder %s32, 0
      %p294 = por %p292, %p293
      %p295 = scmp.ne.s32.totalorder %s283, %s284
      %p296 = scmp.eq.s32.totalorder %s33, 3
      %p297 = por %p295, %p296
      %p299 = scmp.ne.s32.totalorder %s284, %s298
      %p300 = scmp.eq.s32.totalorder %s33, 0
      %p301 = por %p299, %p300
      %s303 = sadd.s32 %s302, 1
      %p306 = scmp.eq.s32.totalorder %s27, 3
      %p307 = scmp.ne.s32.totalorder %s302, %s304
      %p308 = scmp.eq.s32.totalorder %s27, 0
      %p309 = por %p307, %p308
      %p310 = scmp.ne.s32.totalorder %s302, %s304
      %p311 = scmp.eq.s32.totalorder %s32, 3
      %p312 = por %p310, %p311
      %p313 = scmp.ne.s32.totalorder %s304, %s305
      %p314 = scmp.eq.s32.totalorder %s32, 0
      %p315 = por %p313, %p314
      %p316 = scmp.ne.s32.totalorder %s304, %s305
      %p317 = scmp.eq.s32.totalorder %s33, 3
      %p318 = por %p316, %p317
      %p320 = scmp.ne.s32.totalorder %s305, %s319
      %p321 = scmp.eq.s32.totalorder %s33, 0
      %p322 = por %p320, %p321
      %s324 = sadd.s32 %s323, 1
      %p327 = scmp.eq.s32.totalorder %s27, 3
      %p328 = scmp.ne.s32.totalorder %s323, %s325
      %p329 = scmp.eq.s32.totalorder %s27, 0
      %p330 = por %p328, %p329
      %p331 = scmp.ne.s32.totalorder %s323, %s325
      %p332 = scmp.eq.s32.totalorder %s32, 3
      %p333 = por %p331, %p332
      %p334 = scmp.ne.s32.totalorder %s325, %s326
      %p335 = scmp.eq.s32.totalorder %s32, 0
      %p336 = por %p334, %p335
      %p337 = scmp.ne.s32.totalorder %s325, %s326
      %p338 = scmp.eq.s32.totalorder %s33, 3
      %p339 = por %p337, %p338
      %p341 = scmp.ne.s32.totalorder %s326, %s340
      %p342 = scmp.eq.s32.totalorder %s33, 0
      %p343 = por %p341, %p342
      %s345 = sadd.s32 %s344, 1
      %p348 = scmp.eq.s32.totalorder %s27, 3
      %p349 = scmp.ne.s32.totalorder %s344, %s346
      %p350 = scmp.eq.s32.totalorder %s27, 0
      %p351 = por %p349, %p350
      %p352 = scmp.ne.s32.totalorder %s344, %s346
      %p353 = scmp.eq.s32.totalorder %s32, 3
      %p354 = por %p352, %p353
      %p355 = scmp.ne.s32.totalorder %s346, %s347
      %p356 = scmp.eq.s32.totalorder %s32, 0
      %p357 = por %p355, %p356
      %p358 = scmp.ne.s32.totalorder %s346, %s347
      %p359 = scmp.eq.s32.totalorder %s33, 3
      %p360 = por %p358, %p359
      %p362 = scmp.ne.s32.totalorder %s347, %s361
      %p363 = scmp.eq.s32.totalorder %s33, 0
      %p364 = por %p362, %p363
      %p365 = scmp.le.s32.totalorder 1, %s27
      %p366 = scmp.lt.s32.totalorder %s27, 5
      %p367 = pnand %p365, %p366
      %p368 = pneg %p367
      // Predicated region
      $region9: #{policy_forward.1} parent=5 // pred_check
        _
      $region10: #{policy_forward.1} parent=5 // pred_check_branch
        %370 = sbr.rel (%p367) target = $region12
      $region11: #{policy_forward.1} parent=5 // pred_region
        %s371 = ssub.s32 %s27, 1
        // Predicated region
        $region13: #{policy_forward.1} parent=11 // pred_check
          %p372 = pneg %p48
        $region14: #{policy_forward.1} parent=11 // pred_check_branch
          %374 = sbr.rel (%p372) target = $region16
        $region15: #{policy_forward.1} parent=11 // pred_region
          _
        $region16: #{policy_forward.1} parent=11 // pred_fallthru
          _
        // Predicated region
        $region17: #{policy_forward.1} parent=11 // pred_check
          %p375 = pneg %p69
        $region18: #{policy_forward.1} parent=11 // pred_check_branch
          %377 = sbr.rel (%p375) target = $region20
        $region19: #{policy_forward.1} parent=11 // pred_region
          %379 = vsyncadd [#allocation6], 0
          %s380 = sshll.u32 %s1, 4
          %s381 = int_to_ptr.hbm [resolvable:$true] %s380
          %s382 = sshll.u32 [#allocation5], 4
          %s383 = int_to_ptr.vmem [resolvable:$true] %s382
          %388 = dma.hbm_to_vmem [thread:$0]  %s381, 57344, %s383, [#allocation6], 512, 512, 32
        $region20: #{policy_forward.1} parent=11 // pred_fallthru
          _
        // Predicated region
        $region21: #{policy_forward.1} parent=11 // pred_check
          %p389 = pneg %p90
        $region22: #{policy_forward.1} parent=11 // pred_check_branch
          %391 = sbr.rel (%p389) target = $region24
        $region23: #{policy_forward.1} parent=11 // pred_region
          %393 = vsyncadd [#allocation8], 0
          %s395 = sshll.u32 %s2, 4
          %s396 = int_to_ptr.hbm [resolvable:$true] %s395
          %s397 = sshll.u32 [#allocation7], 4
          %s398 = int_to_ptr.vmem [resolvable:$true] %s397
          %400 = dma.hbm_to_vmem [thread:$0]  %s396, 128, %s398, [#allocation8]
        $region24: #{policy_forward.1} parent=11 // pred_fallthru
          _
        // Predicated region
        $region25: #{policy_forward.1} parent=11 // pred_check
          %p401 = pneg %p111
        $region26: #{policy_forward.1} parent=11 // pred_check_branch
          %403 = sbr.rel (%p401) target = $region28
        $region27: #{policy_forward.1} parent=11 // pred_region
          %405 = vsyncadd [#allocation8], 0
          %s406 = sshll.u32 %s3, 4
          %s407 = int_to_ptr.hbm [resolvable:$true] %s406
          %s408 = sshll.u32 [#allocation9], 4
          %s409 = int_to_ptr.vmem [resolvable:$true] %s408
          %414 = dma.hbm_to_vmem [thread:$0]  %s407, 8192, %s409, [#allocation8], 64, 64, 4
        $region28: #{policy_forward.1} parent=11 // pred_fallthru
          _
        // Predicated region
        $region29: #{policy_forward.1} parent=11 // pred_check
          %p415 = pneg %p132
        $region30: #{policy_forward.1} parent=11 // pred_check_branch
          %417 = sbr.rel (%p415) target = $region32
        $region31: #{policy_forward.1} parent=11 // pred_region
          %419 = vsyncadd [#allocation11], 0
          %s421 = sshll.u32 %s4, 4
          %s422 = int_to_ptr.hbm [resolvable:$true] %s421
          %s423 = sshll.u32 [#allocation10], 4
          %s424 = int_to_ptr.vmem [resolvable:$true] %s423
          %426 = dma.hbm_to_vmem [thread:$0]  %s422, 16, %s424, [#allocation11]
        $region32: #{policy_forward.1} parent=11 // pred_fallthru
          _
        // Predicated region
        $region33: #{policy_forward.1} parent=11 // pred_check
          %p427 = pneg %p153
        $region34: #{policy_forward.1} parent=11 // pred_check_branch
          %429 = sbr.rel (%p427) target = $region36
        $region35: #{policy_forward.1} parent=11 // pred_region
          %431 = vsyncadd [#allocation11], 0
          %s433 = sshll.u32 %s5, 4
          %s434 = int_to_ptr.hbm [resolvable:$true] %s433
          %s435 = sshll.u32 [#allocation12], 4
          %s436 = int_to_ptr.vmem [resolvable:$true] %s435
          %438 = dma.hbm_to_vmem [thread:$0]  %s434, 128, %s436, [#allocation11]
        $region36: #{policy_forward.1} parent=11 // pred_fallthru
          _
        // Predicated region
        $region37: #{policy_forward.1} parent=11 // pred_check
          %p439 = pneg %p174
        $region38: #{policy_forward.1} parent=11 // pred_check_branch
          %441 = sbr.rel (%p439) target = $region40
        $region39: #{policy_forward.1} parent=11 // pred_region
          %443 = vsyncadd [#allocation14], 0
          %s445 = sshll.u32 %s6, 4
          %s446 = int_to_ptr.hbm [resolvable:$true] %s445
          %s447 = sshll.u32 [#allocation13], 4
          %s448 = int_to_ptr.vmem [resolvable:$true] %s447
          %450 = dma.hbm_to_vmem [thread:$0]  %s446, 128, %s448, [#allocation14]
        $region40: #{policy_forward.1} parent=11 // pred_fallthru
          _
        // Predicated region
        $region41: #{policy_forward.1} parent=11 // pred_check
          %p451 = pneg %p273
        $region42: #{policy_forward.1} parent=11 // pred_check_branch
          %453 = sbr.rel (%p451) target = $region44
        $region43: #{policy_forward.1} parent=11 // pred_region
          %455 = vsyncadd [#allocation8], 0
          %s457 = sshll.u32 %s10, 4
          %s458 = int_to_ptr.hbm [resolvable:$true] %s457
          %s459 = sshll.u32 [#allocation18], 4
          %s460 = int_to_ptr.vmem [resolvable:$true] %s459
          %462 = dma.hbm_to_vmem [thread:$0]  %s458, 128, %s460, [#allocation8]
        $region44: #{policy_forward.1} parent=11 // pred_fallthru
          _
        // Predicated region
        $region45: #{policy_forward.1} parent=11 // pred_check
          %p463 = pneg %p294
        $region46: #{policy_forward.1} parent=11 // pred_check_branch
          %465 = sbr.rel (%p463) target = $region48
        $region47: #{policy_forward.1} parent=11 // pred_region
          %467 = vsyncadd [#allocation11], 0
          %s469 = sshll.u32 %s11, 4
          %s470 = int_to_ptr.hbm [resolvable:$true] %s469
          %s471 = sshll.u32 [#allocation19], 4
          %s472 = int_to_ptr.vmem [resolvable:$true] %s471
          %474 = dma.hbm_to_vmem [thread:$0]  %s470, 128, %s472, [#allocation11]
        $region48: #{policy_forward.1} parent=11 // pred_fallthru
          _
        // Predicated region
        $region49: #{policy_forward.1} parent=11 // pred_check
          %p475 = pneg %p315
        $region50: #{policy_forward.1} parent=11 // pred_check_branch
          %477 = sbr.rel (%p475) target = $region52
        $region51: #{policy_forward.1} parent=11 // pred_region
          _
        $region52: #{policy_forward.1} parent=11 // pred_fallthru
          _
      $region12: #{policy_forward.1} parent=5 // pred_fallthru
        _
      %p478 = scmp.lt.s32.totalorder %s27, 4
      // Predicated region
      $region53: #{policy_forward.1} parent=5 // pred_check
        %p479 = pneg %p478
      $region54: #{policy_forward.1} parent=5 // pred_check_branch
        %481 = sbr.rel (%p479) target = $region56
      $region55: #{policy_forward.1} parent=5 // pred_region
        // Predicated region
        $region57: #{policy_forward.1} parent=55 // pred_check
          %p482 = pneg %p194
        $region58: #{policy_forward.1} parent=55 // pred_check_branch
          %484 = sbr.rel (%p482) target = $region60
        $region59: #{policy_forward.1} parent=55 // pred_region
          %s485 = sand.u32 %s27, 1
          %s486 = scalar_lea.sflag [#allocation6], %s485
          %s487 = sand.u32 %s184, 1
          %s488 = smul.addr %s487, 2048
          %s489 = scalar_lea.vmem [#allocation15], %s488
          %s490 = smul.u32 4, %s27
          %492 = vsyncadd %s486, 0
          %s493 = smul.addr %s490, 4
          %s494 = scalar_lea.hbm %s7, %s493
          %s495 = sshll.u32 %s494, 4
          %s496 = int_to_ptr.hbm [resolvable:$true] %s495
          %s497 = sshll.u32 %s489, 4
          %s498 = int_to_ptr.vmem [resolvable:$true] %s497
          %503 = dma.hbm_to_vmem [thread:$0]  %s496, 32768, %s498, %s486, 1024, 256, 16
        $region60: #{policy_forward.1} parent=55 // pred_fallthru
          _
        // Predicated region
        $region61: #{policy_forward.1} parent=55 // pred_check
          %p504 = pneg %p220
        $region62: #{policy_forward.1} parent=55 // pred_check_branch
          %506 = sbr.rel (%p504) target = $region64
        $region63: #{policy_forward.1} parent=55 // pred_region
          %s507 = sand.u32 %s27, 1
          %s508 = scalar_lea.sflag [#allocation6], %s507
          %s509 = sand.u32 %s210, 1
          %s510 = smul.addr %s509, 4
          %s511 = scalar_lea.vmem [#allocation16], %s510
          %s512 = smul.u32 4, %s27
          %514 = vsyncadd %s508, 0
          %s515 = scalar_lea.hbm %s8, %s512
          %s517 = sshll.u32 %s515, 4
          %s518 = int_to_ptr.hbm [resolvable:$true] %s517
          %s519 = sshll.u32 %s511, 4
          %s520 = int_to_ptr.vmem [resolvable:$true] %s519
          %522 = dma.hbm_to_vmem [thread:$0]  %s518, 64, %s520, %s508
        $region64: #{policy_forward.1} parent=55 // pred_fallthru
          _
        // Predicated region
        $region65: #{policy_forward.1} parent=55 // pred_check
          %p523 = pneg %p246
        $region66: #{policy_forward.1} parent=55 // pred_check_branch
          %525 = sbr.rel (%p523) target = $region68
        $region67: #{policy_forward.1} parent=55 // pred_region
          %s526 = sand.u32 %s27, 1
          %s527 = scalar_lea.sflag [#allocation6], %s526
          %s528 = sand.u32 %s236, 1
          %s529 = smul.addr %s528, 2048
          %s530 = scalar_lea.vmem [#allocation17], %s529
          %s531 = smul.u32 64, %s27
          %533 = vsyncadd %s527, 0
          %s534 = smul.addr %s531, 8
          %s535 = smul.addr %s534, 4
          %s536 = scalar_lea.hbm %s9, %s535
          %s537 = sshll.u32 %s536, 4
          %s538 = int_to_ptr.hbm [resolvable:$true] %s537
          %s539 = sshll.u32 %s530, 4
          %s540 = int_to_ptr.vmem [resolvable:$true] %s539
          %545 = dma.hbm_to_vmem [thread:$0]  %s538, 32768, %s540, %s527, 512, 512, 32
        $region68: #{policy_forward.1} parent=55 // pred_fallthru
          _
      $region56: #{policy_forward.1} parent=5 // pred_fallthru
        _
      %p546 = scmp.le.s32.totalorder 1, %s27
      %p547 = scmp.lt.s32.totalorder %s27, 5
      %p548 = pnand %p546, %p547
      %p549 = pneg %p548
      // Predicated region
      $region69: #{policy_forward.1} parent=5 // pred_check
        _
      $region70: #{policy_forward.1} parent=5 // pred_check_branch
        %551 = sbr.rel (%p548) target = $region72
      $region71: #{policy_forward.1} parent=5 // pred_region
        %s552 = ssub.s32 %s27, 1
        // Predicated region
        $region73: #{policy_forward.1} parent=71 // pred_check
          %p553 = pneg %p69
        $region74: #{policy_forward.1} parent=71 // pred_check_branch
          %555 = sbr.rel (%p553) target = $region76
        $region75: #{policy_forward.1} parent=71 // pred_region
          %557 = dma.done [#allocation6], 57344
        $region76: #{policy_forward.1} parent=71 // pred_fallthru
          _
        // Predicated region
        $region77: #{policy_forward.1} parent=71 // pred_check
          %p558 = pneg %p90
        $region78: #{policy_forward.1} parent=71 // pred_check_branch
          %560 = sbr.rel (%p558) target = $region80
        $region79: #{policy_forward.1} parent=71 // pred_region
          %562 = dma.done [#allocation8], 128
        $region80: #{policy_forward.1} parent=71 // pred_fallthru
          _
        // Predicated region
        $region81: #{policy_forward.1} parent=71 // pred_check
          %p563 = pneg %p111
        $region82: #{policy_forward.1} parent=71 // pred_check_branch
          %565 = sbr.rel (%p563) target = $region84
        $region83: #{policy_forward.1} parent=71 // pred_region
          %567 = dma.done [#allocation8], 8192
        $region84: #{policy_forward.1} parent=71 // pred_fallthru
          _
        // Predicated region
        $region85: #{policy_forward.1} parent=71 // pred_check
          %p568 = pneg %p132
        $region86: #{policy_forward.1} parent=71 // pred_check_branch
          %570 = sbr.rel (%p568) target = $region88
        $region87: #{policy_forward.1} parent=71 // pred_region
          %572 = dma.done [#allocation11], 16
        $region88: #{policy_forward.1} parent=71 // pred_fallthru
          _
        // Predicated region
        $region89: #{policy_forward.1} parent=71 // pred_check
          %p573 = pneg %p153
        $region90: #{policy_forward.1} parent=71 // pred_check_branch
          %575 = sbr.rel (%p573) target = $region92
        $region91: #{policy_forward.1} parent=71 // pred_region
          %577 = dma.done [#allocation11], 128
        $region92: #{policy_forward.1} parent=71 // pred_fallthru
          _
        // Predicated region
        $region93: #{policy_forward.1} parent=71 // pred_check
          %p578 = pneg %p174
        $region94: #{policy_forward.1} parent=71 // pred_check_branch
          %580 = sbr.rel (%p578) target = $region96
        $region95: #{policy_forward.1} parent=71 // pred_region
          %582 = dma.done [#allocation14], 128
        $region96: #{policy_forward.1} parent=71 // pred_fallthru
          _
        %s583 = sand.u32 %s32, 1
        %s584 = scalar_lea.sflag [#allocation6], %s583
        %s585 = sand.u32 %s187, 1
        %s586 = smul.addr %s585, 2048
        %s587 = scalar_lea.vmem [#allocation15], %s586
        // Predicated region
        $region97: #{policy_forward.1} parent=71 // pred_check
          %p588 = pneg %p200
        $region98: #{policy_forward.1} parent=71 // pred_check_branch
          %590 = sbr.rel (%p588) target = $region100
        $region99: #{policy_forward.1} parent=71 // pred_region
          %592 = dma.done %s584, 32768
        $region100: #{policy_forward.1} parent=71 // pred_fallthru
          _
        %s593 = sand.u32 %s32, 1
        %s594 = scalar_lea.sflag [#allocation6], %s593
        %s595 = sand.u32 %s213, 1
        %s596 = smul.addr %s595, 4
        %s597 = scalar_lea.vmem [#allocation16], %s596
        // Predicated region
        $region101: #{policy_forward.1} parent=71 // pred_check
          %p598 = pneg %p226
        $region102: #{policy_forward.1} parent=71 // pred_check_branch
          %600 = sbr.rel (%p598) target = $region104
        $region103: #{policy_forward.1} parent=71 // pred_region
          %602 = dma.done %s594, 64
        $region104: #{policy_forward.1} parent=71 // pred_fallthru
          _
        %s603 = sand.u32 %s32, 1
        %s604 = scalar_lea.sflag [#allocation6], %s603
        %s605 = sand.u32 %s239, 1
        %s606 = smul.addr %s605, 2048
        %s607 = scalar_lea.vmem [#allocation17], %s606
        // Predicated region
        $region105: #{policy_forward.1} parent=71 // pred_check
          %p608 = pneg %p252
        $region106: #{policy_forward.1} parent=71 // pred_check_branch
          %610 = sbr.rel (%p608) target = $region108
        $region107: #{policy_forward.1} parent=71 // pred_region
          %612 = dma.done %s604, 32768
        $region108: #{policy_forward.1} parent=71 // pred_fallthru
          _
        // Predicated region
        $region109: #{policy_forward.1} parent=71 // pred_check
          %p613 = pneg %p273
        $region110: #{policy_forward.1} parent=71 // pred_check_branch
          %615 = sbr.rel (%p613) target = $region112
        $region111: #{policy_forward.1} parent=71 // pred_region
          %617 = dma.done [#allocation8], 128
        $region112: #{policy_forward.1} parent=71 // pred_fallthru
          _
        // Predicated region
        $region113: #{policy_forward.1} parent=71 // pred_check
          %p618 = pneg %p294
        $region114: #{policy_forward.1} parent=71 // pred_check_branch
          %620 = sbr.rel (%p618) target = $region116
        $region115: #{policy_forward.1} parent=71 // pred_region
          %622 = dma.done [#allocation11], 128
        $region116: #{policy_forward.1} parent=71 // pred_fallthru
          _
        %p623 = pneg %p48
        %p624 = pneg %p45
        %p625 = pneg %p69
        %p626 = pneg %p66
        %p627 = pneg %p90
        %p628 = pneg %p87
        %p629 = pneg %p111
        %p630 = pneg %p108
        %p631 = pneg %p132
        %p632 = pneg %p129
        %p633 = pneg %p153
        %p634 = pneg %p150
        %p635 = pneg %p174
        %p636 = pneg %p171
        %s637 = sand.u32 %s32, 1
        %s638 = scalar_lea.sflag [#allocation6], %s637
        %s639 = sand.u32 %s187, 1
        %s640 = smul.addr %s639, 2048
        %s641 = scalar_lea.vmem [#allocation15], %s640
        %p642 = pneg %p200
        %p643 = pneg %p197
        %s644 = sand.u32 %s32, 1
        %s645 = scalar_lea.sflag [#allocation6], %s644
        %s646 = sand.u32 %s213, 1
        %s647 = smul.addr %s646, 4
        %s648 = scalar_lea.vmem [#allocation16], %s647
        %p649 = pneg %p226
        %p650 = pneg %p223
        %s651 = sand.u32 %s32, 1
        %s652 = scalar_lea.sflag [#allocation6], %s651
        %s653 = sand.u32 %s239, 1
        %s654 = smul.addr %s653, 2048
        %s655 = scalar_lea.vmem [#allocation17], %s654
        %p656 = pneg %p252
        %p657 = pneg %p249
        %p658 = pneg %p273
        %p659 = pneg %p270
        %p660 = pneg %p294
        %p661 = pneg %p291
        %p662 = pneg %p315
        %p663 = pneg %p312
        %p664 = pneg %p336
        %p665 = pneg %p333
        %p666 = pneg %p357
        %p667 = pneg %p354
        %s668 = smul.u32 4, %s32
        %s669 = smul.u32 4, %s32
        %s670 = smul.u32 64, %s32
        %p671 = scmp.eq.s32.totalorder %s32, 0
        // Predicated region
        $region117: #{policy_forward.1} parent=71 // pred_check
          %p672 = pneg %p671
        $region118: #{policy_forward.1} parent=71 // pred_check_branch
          %674 = sbr.rel (%p672) target = $region120
        $region119: #{policy_forward.1} parent=71 // pred_region
          %v675 = vld [vmem:[%s0] sm:$0xff]
          %v676 = vld [vmem:[%s0 + $0x8] sm:$0xff]
          %v677 = vld [vmem:[%s0 + $0x10] sm:$0xff]
          %v678 = vld [vmem:[%s0 + $0x18] sm:$0xff]
          %v679 = vld [vmem:[%s0 + $0x20] sm:$0xff]
          %v680 = vld [vmem:[%s0 + $0x28] sm:$0xff]
          %v681 = vld [vmem:[%s0 + $0x30] sm:$0xff]
          %v682 = vpack.c.bf16 %v675, %v675
          %v683 = vpack.c.bf16 %v676, %v676
          %v684 = vpack.c.bf16 %v677, %v677
          %v685 = vpack.c.bf16 %v678, %v678
          %v686 = vpack.c.bf16 %v679, %v679
          %v687 = vpack.c.bf16 %v680, %v680
          %v688 = vpack.c.bf16 %v681, %v681
          %v689 = vld [vmem:[#allocation5] sm:$0xff]
          %v690 = vld [vmem:[#allocation5 + $0x8] sm:$0xff]
          %v691 = vld [vmem:[#allocation5 + $0x10] sm:$0xff]
          %v692 = vld [vmem:[#allocation5 + $0x18] sm:$0xff]
          %v693 = vld [vmem:[#allocation5 + $0x20] sm:$0xff]
          %v694 = vld [vmem:[#allocation5 + $0x28] sm:$0xff]
          %v695 = vld [vmem:[#allocation5 + $0x30] sm:$0xff]
          %v696 = vld [vmem:[#allocation5 + $0x38] sm:$0xff]
          %v697 = vld [vmem:[#allocation5 + $0x40] sm:$0xff]
          %v698 = vld [vmem:[#allocation5 + $0x48] sm:$0xff]
          %v699 = vld [vmem:[#allocation5 + $0x50] sm:$0xff]
          %v700 = vld [vmem:[#allocation5 + $0x58] sm:$0xff]
          %v701 = vld [vmem:[#allocation5 + $0x60] sm:$0xff]
          %v702 = vld [vmem:[#allocation5 + $0x68] sm:$0xff]
          %v703 = vld [vmem:[#allocation5 + $0x70] sm:$0xff]
          %v704 = vld [vmem:[#allocation5 + $0x78] sm:$0xff]
          %v705 = vld [vmem:[#allocation5 + $0x80] sm:$0xff]
          %v706 = vld [vmem:[#allocation5 + $0x88] sm:$0xff]
          %v707 = vld [vmem:[#allocation5 + $0x90] sm:$0xff]
          %v708 = vld [vmem:[#allocation5 + $0x98] sm:$0xff]
          %v709 = vld [vmem:[#allocation5 + $0xa0] sm:$0xff]
          %v710 = vld [vmem:[#allocation5 + $0xa8] sm:$0xff]
          %v711 = vld [vmem:[#allocation5 + $0xb0] sm:$0xff]
          %v712 = vld [vmem:[#allocation5 + $0xb8] sm:$0xff]
          %v713 = vld [vmem:[#allocation5 + $0xc0] sm:$0xff]
          %v714 = vld [vmem:[#allocation5 + $0xc8] sm:$0xff]
          %v715 = vld [vmem:[#allocation5 + $0xd0] sm:$0xff]
          %v716 = vld [vmem:[#allocation5 + $0xd8] sm:$0xff]
          %v717 = vld [vmem:[#allocation5 + $0xe0] sm:$0xff]
          %v718 = vld [vmem:[#allocation5 + $0xe8] sm:$0xff]
          %v719 = vld [vmem:[#allocation5 + $0xf0] sm:$0xff]
          %v720 = vld [vmem:[#allocation5 + $0xf8] sm:$0xff]
          %v721 = vld [vmem:[#allocation5 + $0x100] sm:$0xff]
          %v722 = vld [vmem:[#allocation5 + $0x108] sm:$0xff]
          %v723 = vld [vmem:[#allocation5 + $0x110] sm:$0xff]
          %v724 = vld [vmem:[#allocation5 + $0x118] sm:$0xff]
          %v725 = vld [vmem:[#allocation5 + $0x120] sm:$0xff]
          %v726 = vld [vmem:[#allocation5 + $0x128] sm:$0xff]
          %v727 = vld [vmem:[#allocation5 + $0x130] sm:$0xff]
          %v728 = vld [vmem:[#allocation5 + $0x138] sm:$0xff]
          %v729 = vld [vmem:[#allocation5 + $0x140] sm:$0xff]
          %v730 = vld [vmem:[#allocation5 + $0x148] sm:$0xff]
          %v731 = vld [vmem:[#allocation5 + $0x150] sm:$0xff]
          %v732 = vld [vmem:[#allocation5 + $0x158] sm:$0xff]
          %v733 = vld [vmem:[#allocation5 + $0x160] sm:$0xff]
          %v734 = vld [vmem:[#allocation5 + $0x168] sm:$0xff]
          %v735 = vld [vmem:[#allocation5 + $0x170] sm:$0xff]
          %v736 = vld [vmem:[#allocation5 + $0x178] sm:$0xff]
          %v737 = vld [vmem:[#allocation5 + $0x180] sm:$0xff]
          %v738 = vld [vmem:[#allocation5 + $0x188] sm:$0xff]
          %v739 = vld [vmem:[#allocation5 + $0x190] sm:$0xff]
          %v740 = vld [vmem:[#allocation5 + $0x198] sm:$0xff]
          %v741 = vld [vmem:[#allocation5 + $0x1a0] sm:$0xff]
          %v742 = vld [vmem:[#allocation5 + $0x1a8] sm:$0xff]
          %v743 = vld [vmem:[#allocation5 + $0x1b0] sm:$0xff]
          %v744 = vld [vmem:[#allocation5 + $0x1b8] sm:$0xff]
          %v745 = vld [vmem:[#allocation5 + $0x1c0] sm:$0xff]
          %v746 = vld [vmem:[#allocation5 + $0x1c8] sm:$0xff]
          %v747 = vld [vmem:[#allocation5 + $0x1d0] sm:$0xff]
          %v748 = vld [vmem:[#allocation5 + $0x1d8] sm:$0xff]
          %v749 = vld [vmem:[#allocation5 + $0x1e0] sm:$0xff]
          %v750 = vld [vmem:[#allocation5 + $0x1e8] sm:$0xff]
          %v751 = vld [vmem:[#allocation5 + $0x1f0] sm:$0xff]
          %v752 = vld [vmem:[#allocation5 + $0x1f8] sm:$0xff]
          %v753 = vld [vmem:[#allocation5 + $0x200] sm:$0xff]
          %v754 = vld [vmem:[#allocation5 + $0x208] sm:$0xff]
          %v755 = vld [vmem:[#allocation5 + $0x210] sm:$0xff]
          %v756 = vld [vmem:[#allocation5 + $0x218] sm:$0xff]
          %v757 = vld [vmem:[#allocation5 + $0x220] sm:$0xff]
          %v758 = vld [vmem:[#allocation5 + $0x228] sm:$0xff]
          %v759 = vld [vmem:[#allocation5 + $0x230] sm:$0xff]
          %v760 = vld [vmem:[#allocation5 + $0x238] sm:$0xff]
          %v761 = vld [vmem:[#allocation5 + $0x240] sm:$0xff]
          %v762 = vld [vmem:[#allocation5 + $0x248] sm:$0xff]
          %v763 = vld [vmem:[#allocation5 + $0x250] sm:$0xff]
          %v764 = vld [vmem:[#allocation5 + $0x258] sm:$0xff]
          %v765 = vld [vmem:[#allocation5 + $0x260] sm:$0xff]
          %v766 = vld [vmem:[#allocation5 + $0x268] sm:$0xff]
          %v767 = vld [vmem:[#allocation5 + $0x270] sm:$0xff]
          %v768 = vld [vmem:[#allocation5 + $0x278] sm:$0xff]
          %v769 = vld [vmem:[#allocation5 + $0x280] sm:$0xff]
          %v770 = vld [vmem:[#allocation5 + $0x288] sm:$0xff]
          %v771 = vld [vmem:[#allocation5 + $0x290] sm:$0xff]
          %v772 = vld [vmem:[#allocation5 + $0x298] sm:$0xff]
          %v773 = vld [vmem:[#allocation5 + $0x2a0] sm:$0xff]
          %v774 = vld [vmem:[#allocation5 + $0x2a8] sm:$0xff]
          %v775 = vld [vmem:[#allocation5 + $0x2b0] sm:$0xff]
          %v776 = vld [vmem:[#allocation5 + $0x2b8] sm:$0xff]
          %v777 = vld [vmem:[#allocation5 + $0x2c0] sm:$0xff]
          %v778 = vld [vmem:[#allocation5 + $0x2c8] sm:$0xff]
          %v779 = vld [vmem:[#allocation5 + $0x2d0] sm:$0xff]
          %v780 = vld [vmem:[#allocation5 + $0x2d8] sm:$0xff]
          %v781 = vld [vmem:[#allocation5 + $0x2e0] sm:$0xff]
          %v782 = vld [vmem:[#allocation5 + $0x2e8] sm:$0xff]
          %v783 = vld [vmem:[#allocation5 + $0x2f0] sm:$0xff]
          %v784 = vld [vmem:[#allocation5 + $0x2f8] sm:$0xff]
          %v785 = vld [vmem:[#allocation5 + $0x300] sm:$0xff]
          %v786 = vld [vmem:[#allocation5 + $0x308] sm:$0xff]
          %v787 = vld [vmem:[#allocation5 + $0x310] sm:$0xff]
          %v788 = vld [vmem:[#allocation5 + $0x318] sm:$0xff]
          %v789 = vld [vmem:[#allocation5 + $0x320] sm:$0xff]
          %v790 = vld [vmem:[#allocation5 + $0x328] sm:$0xff]
          %v791 = vld [vmem:[#allocation5 + $0x330] sm:$0xff]
          %v792 = vld [vmem:[#allocation5 + $0x338] sm:$0xff]
          %v793 = vld [vmem:[#allocation5 + $0x340] sm:$0xff]
          %v794 = vld [vmem:[#allocation5 + $0x348] sm:$0xff]
          %v795 = vld [vmem:[#allocation5 + $0x350] sm:$0xff]
          %v796 = vld [vmem:[#allocation5 + $0x358] sm:$0xff]
          %v797 = vld [vmem:[#allocation5 + $0x360] sm:$0xff]
          %v798 = vld [vmem:[#allocation5 + $0x368] sm:$0xff]
          %v799 = vld [vmem:[#allocation5 + $0x370] sm:$0xff]
          %v800 = vld [vmem:[#allocation5 + $0x378] sm:$0xff]
          %v801 = vld [vmem:[#allocation5 + $0x380] sm:$0xff]
          %v802 = vld [vmem:[#allocation5 + $0x388] sm:$0xff]
          %v803 = vld [vmem:[#allocation5 + $0x390] sm:$0xff]
          %v804 = vld [vmem:[#allocation5 + $0x398] sm:$0xff]
          %v805 = vld [vmem:[#allocation5 + $0x3a0] sm:$0xff]
          %v806 = vld [vmem:[#allocation5 + $0x3a8] sm:$0xff]
          %v807 = vld [vmem:[#allocation5 + $0x3b0] sm:$0xff]
          %v808 = vld [vmem:[#allocation5 + $0x3b8] sm:$0xff]
          %v809 = vld [vmem:[#allocation5 + $0x3c0] sm:$0xff]
          %v810 = vld [vmem:[#allocation5 + $0x3c8] sm:$0xff]
          %v811 = vld [vmem:[#allocation5 + $0x3d0] sm:$0xff]
          %v812 = vld [vmem:[#allocation5 + $0x3d8] sm:$0xff]
          %v813 = vld [vmem:[#allocation5 + $0x3e0] sm:$0xff]
          %v814 = vld [vmem:[#allocation5 + $0x3e8] sm:$0xff]
          %v815 = vld [vmem:[#allocation5 + $0x3f0] sm:$0xff]
          %v816 = vld [vmem:[#allocation5 + $0x3f8] sm:$0xff]
          %v817 = vld [vmem:[#allocation5 + $0x400] sm:$0xff]
          %v818 = vld [vmem:[#allocation5 + $0x408] sm:$0xff]
          %v819 = vld [vmem:[#allocation5 + $0x410] sm:$0xff]
          %v820 = vld [vmem:[#allocation5 + $0x418] sm:$0xff]
          %v821 = vld [vmem:[#allocation5 + $0x420] sm:$0xff]
          %v822 = vld [vmem:[#allocation5 + $0x428] sm:$0xff]
          %v823 = vld [vmem:[#allocation5 + $0x430] sm:$0xff]
          %v824 = vld [vmem:[#allocation5 + $0x438] sm:$0xff]
          %v825 = vld [vmem:[#allocation5 + $0x440] sm:$0xff]
          %v826 = vld [vmem:[#allocation5 + $0x448] sm:$0xff]
          %v827 = vld [vmem:[#allocation5 + $0x450] sm:$0xff]
          %v828 = vld [vmem:[#allocation5 + $0x458] sm:$0xff]
          %v829 = vld [vmem:[#allocation5 + $0x460] sm:$0xff]
          %v830 = vld [vmem:[#allocation5 + $0x468] sm:$0xff]
          %v831 = vld [vmem:[#allocation5 + $0x470] sm:$0xff]
          %v832 = vld [vmem:[#allocation5 + $0x478] sm:$0xff]
          %v833 = vld [vmem:[#allocation5 + $0x480] sm:$0xff]
          %v834 = vld [vmem:[#allocation5 + $0x488] sm:$0xff]
          %v835 = vld [vmem:[#allocation5 + $0x490] sm:$0xff]
          %v836 = vld [vmem:[#allocation5 + $0x498] sm:$0xff]
          %v837 = vld [vmem:[#allocation5 + $0x4a0] sm:$0xff]
          %v838 = vld [vmem:[#allocation5 + $0x4a8] sm:$0xff]
          %v839 = vld [vmem:[#allocation5 + $0x4b0] sm:$0xff]
          %v840 = vld [vmem:[#allocation5 + $0x4b8] sm:$0xff]
          %v841 = vld [vmem:[#allocation5 + $0x4c0] sm:$0xff]
          %v842 = vld [vmem:[#allocation5 + $0x4c8] sm:$0xff]
          %v843 = vld [vmem:[#allocation5 + $0x4d0] sm:$0xff]
          %v844 = vld [vmem:[#allocation5 + $0x4d8] sm:$0xff]
          %v845 = vld [vmem:[#allocation5 + $0x4e0] sm:$0xff]
          %v846 = vld [vmem:[#allocation5 + $0x4e8] sm:$0xff]
          %v847 = vld [vmem:[#allocation5 + $0x4f0] sm:$0xff]
          %v848 = vld [vmem:[#allocation5 + $0x4f8] sm:$0xff]
          %v849 = vld [vmem:[#allocation5 + $0x500] sm:$0xff]
          %v850 = vld [vmem:[#allocation5 + $0x508] sm:$0xff]
          %v851 = vld [vmem:[#allocation5 + $0x510] sm:$0xff]
          %v852 = vld [vmem:[#allocation5 + $0x518] sm:$0xff]
          %v853 = vld [vmem:[#allocation5 + $0x520] sm:$0xff]
          %v854 = vld [vmem:[#allocation5 + $0x528] sm:$0xff]
          %v855 = vld [vmem:[#allocation5 + $0x530] sm:$0xff]
          %v856 = vld [vmem:[#allocation5 + $0x538] sm:$0xff]
          %v857 = vld [vmem:[#allocation5 + $0x540] sm:$0xff]
          %v858 = vld [vmem:[#allocation5 + $0x548] sm:$0xff]
          %v859 = vld [vmem:[#allocation5 + $0x550] sm:$0xff]
          %v860 = vld [vmem:[#allocation5 + $0x558] sm:$0xff]
          %v861 = vld [vmem:[#allocation5 + $0x560] sm:$0xff]
          %v862 = vld [vmem:[#allocation5 + $0x568] sm:$0xff]
          %v863 = vld [vmem:[#allocation5 + $0x570] sm:$0xff]
          %v864 = vld [vmem:[#allocation5 + $0x578] sm:$0xff]
          %v865 = vld [vmem:[#allocation5 + $0x580] sm:$0xff]
          %v866 = vld [vmem:[#allocation5 + $0x588] sm:$0xff]
          %v867 = vld [vmem:[#allocation5 + $0x590] sm:$0xff]
          %v868 = vld [vmem:[#allocation5 + $0x598] sm:$0xff]
          %v869 = vld [vmem:[#allocation5 + $0x5a0] sm:$0xff]
          %v870 = vld [vmem:[#allocation5 + $0x5a8] sm:$0xff]
          %v871 = vld [vmem:[#allocation5 + $0x5b0] sm:$0xff]
          %v872 = vld [vmem:[#allocation5 + $0x5b8] sm:$0xff]
          %v873 = vld [vmem:[#allocation5 + $0x5c0] sm:$0xff]
          %v874 = vld [vmem:[#allocation5 + $0x5c8] sm:$0xff]
          %v875 = vld [vmem:[#allocation5 + $0x5d0] sm:$0xff]
          %v876 = vld [vmem:[#allocation5 + $0x5d8] sm:$0xff]
          %v877 = vld [vmem:[#allocation5 + $0x5e0] sm:$0xff]
          %v878 = vld [vmem:[#allocation5 + $0x5e8] sm:$0xff]
          %v879 = vld [vmem:[#allocation5 + $0x5f0] sm:$0xff]
          %v880 = vld [vmem:[#allocation5 + $0x5f8] sm:$0xff]
          %v881 = vld [vmem:[#allocation5 + $0x600] sm:$0xff]
          %v882 = vld [vmem:[#allocation5 + $0x608] sm:$0xff]
          %v883 = vld [vmem:[#allocation5 + $0x610] sm:$0xff]
          %v884 = vld [vmem:[#allocation5 + $0x618] sm:$0xff]
          %v885 = vld [vmem:[#allocation5 + $0x620] sm:$0xff]
          %v886 = vld [vmem:[#allocation5 + $0x628] sm:$0xff]
          %v887 = vld [vmem:[#allocation5 + $0x630] sm:$0xff]
          %v888 = vld [vmem:[#allocation5 + $0x638] sm:$0xff]
          %v889 = vld [vmem:[#allocation5 + $0x640] sm:$0xff]
          %v890 = vld [vmem:[#allocation5 + $0x648] sm:$0xff]
          %v891 = vld [vmem:[#allocation5 + $0x650] sm:$0xff]
          %v892 = vld [vmem:[#allocation5 + $0x658] sm:$0xff]
          %v893 = vld [vmem:[#allocation5 + $0x660] sm:$0xff]
          %v894 = vld [vmem:[#allocation5 + $0x668] sm:$0xff]
          %v895 = vld [vmem:[#allocation5 + $0x670] sm:$0xff]
          %v896 = vld [vmem:[#allocation5 + $0x678] sm:$0xff]
          %v897 = vld [vmem:[#allocation5 + $0x680] sm:$0xff]
          %v898 = vld [vmem:[#allocation5 + $0x688] sm:$0xff]
          %v899 = vld [vmem:[#allocation5 + $0x690] sm:$0xff]
          %v900 = vld [vmem:[#allocation5 + $0x698] sm:$0xff]
          %v901 = vld [vmem:[#allocation5 + $0x6a0] sm:$0xff]
          %v902 = vld [vmem:[#allocation5 + $0x6a8] sm:$0xff]
          %v903 = vld [vmem:[#allocation5 + $0x6b0] sm:$0xff]
          %v904 = vld [vmem:[#allocation5 + $0x6b8] sm:$0xff]
          %v905 = vld [vmem:[#allocation5 + $0x6c0] sm:$0xff]
          %v906 = vld [vmem:[#allocation5 + $0x6c8] sm:$0xff]
          %v907 = vld [vmem:[#allocation5 + $0x6d0] sm:$0xff]
          %v908 = vld [vmem:[#allocation5 + $0x6d8] sm:$0xff]
          %v909 = vld [vmem:[#allocation5 + $0x6e0] sm:$0xff]
          %v910 = vld [vmem:[#allocation5 + $0x6e8] sm:$0xff]
          %v911 = vld [vmem:[#allocation5 + $0x6f0] sm:$0xff]
          %v912 = vld [vmem:[#allocation5 + $0x6f8] sm:$0xff]
          %v913 = vld [vmem:[#allocation5 + $0x700] sm:$0xff]
          %v914 = vld [vmem:[#allocation5 + $0x708] sm:$0xff]
          %v915 = vld [vmem:[#allocation5 + $0x710] sm:$0xff]
          %v916 = vld [vmem:[#allocation5 + $0x718] sm:$0xff]
          %v917 = vld [vmem:[#allocation5 + $0x720] sm:$0xff]
          %v918 = vld [vmem:[#allocation5 + $0x728] sm:$0xff]
          %v919 = vld [vmem:[#allocation5 + $0x730] sm:$0xff]
          %v920 = vld [vmem:[#allocation5 + $0x738] sm:$0xff]
          %v921 = vld [vmem:[#allocation5 + $0x740] sm:$0xff]
          %v922 = vld [vmem:[#allocation5 + $0x748] sm:$0xff]
          %v923 = vld [vmem:[#allocation5 + $0x750] sm:$0xff]
          %v924 = vld [vmem:[#allocation5 + $0x758] sm:$0xff]
          %v925 = vld [vmem:[#allocation5 + $0x760] sm:$0xff]
          %v926 = vld [vmem:[#allocation5 + $0x768] sm:$0xff]
          %v927 = vld [vmem:[#allocation5 + $0x770] sm:$0xff]
          %v928 = vld [vmem:[#allocation5 + $0x778] sm:$0xff]
          %v929 = vld [vmem:[#allocation5 + $0x780] sm:$0xff]
          %v930 = vld [vmem:[#allocation5 + $0x788] sm:$0xff]
          %v931 = vld [vmem:[#allocation5 + $0x790] sm:$0xff]
          %v932 = vld [vmem:[#allocation5 + $0x798] sm:$0xff]
          %v933 = vld [vmem:[#allocation5 + $0x7a0] sm:$0xff]
          %v934 = vld [vmem:[#allocation5 + $0x7a8] sm:$0xff]
          %v935 = vld [vmem:[#allocation5 + $0x7b0] sm:$0xff]
          %v936 = vld [vmem:[#allocation5 + $0x7b8] sm:$0xff]
          %v937 = vld [vmem:[#allocation5 + $0x7c0] sm:$0xff]
          %v938 = vld [vmem:[#allocation5 + $0x7c8] sm:$0xff]
          %v939 = vld [vmem:[#allocation5 + $0x7d0] sm:$0xff]
          %v940 = vld [vmem:[#allocation5 + $0x7d8] sm:$0xff]
          %v941 = vld [vmem:[#allocation5 + $0x7e0] sm:$0xff]
          %v942 = vld [vmem:[#allocation5 + $0x7e8] sm:$0xff]
          %v943 = vld [vmem:[#allocation5 + $0x7f0] sm:$0xff]
          %v944 = vld [vmem:[#allocation5 + $0x7f8] sm:$0xff]
          %v945 = vld [vmem:[#allocation5 + $0x800] sm:$0xff]
          %v946 = vld [vmem:[#allocation5 + $0x808] sm:$0xff]
          %v947 = vld [vmem:[#allocation5 + $0x810] sm:$0xff]
          %v948 = vld [vmem:[#allocation5 + $0x818] sm:$0xff]
          %v949 = vld [vmem:[#allocation5 + $0x820] sm:$0xff]
          %v950 = vld [vmem:[#allocation5 + $0x828] sm:$0xff]
          %v951 = vld [vmem:[#allocation5 + $0x830] sm:$0xff]
          %v952 = vld [vmem:[#allocation5 + $0x838] sm:$0xff]
          %v953 = vld [vmem:[#allocation5 + $0x840] sm:$0xff]
          %v954 = vld [vmem:[#allocation5 + $0x848] sm:$0xff]
          %v955 = vld [vmem:[#allocation5 + $0x850] sm:$0xff]
          %v956 = vld [vmem:[#allocation5 + $0x858] sm:$0xff]
          %v957 = vld [vmem:[#allocation5 + $0x860] sm:$0xff]
          %v958 = vld [vmem:[#allocation5 + $0x868] sm:$0xff]
          %v959 = vld [vmem:[#allocation5 + $0x870] sm:$0xff]
          %v960 = vld [vmem:[#allocation5 + $0x878] sm:$0xff]
          %v961 = vld [vmem:[#allocation5 + $0x880] sm:$0xff]
          %v962 = vld [vmem:[#allocation5 + $0x888] sm:$0xff]
          %v963 = vld [vmem:[#allocation5 + $0x890] sm:$0xff]
          %v964 = vld [vmem:[#allocation5 + $0x898] sm:$0xff]
          %v965 = vld [vmem:[#allocation5 + $0x8a0] sm:$0xff]
          %v966 = vld [vmem:[#allocation5 + $0x8a8] sm:$0xff]
          %v967 = vld [vmem:[#allocation5 + $0x8b0] sm:$0xff]
          %v968 = vld [vmem:[#allocation5 + $0x8b8] sm:$0xff]
          %v969 = vld [vmem:[#allocation5 + $0x8c0] sm:$0xff]
          %v970 = vld [vmem:[#allocation5 + $0x8c8] sm:$0xff]
          %v971 = vld [vmem:[#allocation5 + $0x8d0] sm:$0xff]
          %v972 = vld [vmem:[#allocation5 + $0x8d8] sm:$0xff]
          %v973 = vld [vmem:[#allocation5 + $0x8e0] sm:$0xff]
          %v974 = vld [vmem:[#allocation5 + $0x8e8] sm:$0xff]
          %v975 = vld [vmem:[#allocation5 + $0x8f0] sm:$0xff]
          %v976 = vld [vmem:[#allocation5 + $0x8f8] sm:$0xff]
          %v977 = vld [vmem:[#allocation5 + $0x900] sm:$0xff]
          %v978 = vld [vmem:[#allocation5 + $0x908] sm:$0xff]
          %v979 = vld [vmem:[#allocation5 + $0x910] sm:$0xff]
          %v980 = vld [vmem:[#allocation5 + $0x918] sm:$0xff]
          %v981 = vld [vmem:[#allocation5 + $0x920] sm:$0xff]
          %v982 = vld [vmem:[#allocation5 + $0x928] sm:$0xff]
          %v983 = vld [vmem:[#allocation5 + $0x930] sm:$0xff]
          %v984 = vld [vmem:[#allocation5 + $0x938] sm:$0xff]
          %v985 = vld [vmem:[#allocation5 + $0x940] sm:$0xff]
          %v986 = vld [vmem:[#allocation5 + $0x948] sm:$0xff]
          %v987 = vld [vmem:[#allocation5 + $0x950] sm:$0xff]
          %v988 = vld [vmem:[#allocation5 + $0x958] sm:$0xff]
          %v989 = vld [vmem:[#allocation5 + $0x960] sm:$0xff]
          %v990 = vld [vmem:[#allocation5 + $0x968] sm:$0xff]
          %v991 = vld [vmem:[#allocation5 + $0x970] sm:$0xff]
          %v992 = vld [vmem:[#allocation5 + $0x978] sm:$0xff]
          %v993 = vld [vmem:[#allocation5 + $0x980] sm:$0xff]
          %v994 = vld [vmem:[#allocation5 + $0x988] sm:$0xff]
          %v995 = vld [vmem:[#allocation5 + $0x990] sm:$0xff]
          %v996 = vld [vmem:[#allocation5 + $0x998] sm:$0xff]
          %v997 = vld [vmem:[#allocation5 + $0x9a0] sm:$0xff]
          %v998 = vld [vmem:[#allocation5 + $0x9a8] sm:$0xff]
          %v999 = vld [vmem:[#allocation5 + $0x9b0] sm:$0xff]
          %v1000 = vld [vmem:[#allocation5 + $0x9b8] sm:$0xff]
          %v1001 = vld [vmem:[#allocation5 + $0x9c0] sm:$0xff]
          %v1002 = vld [vmem:[#allocation5 + $0x9c8] sm:$0xff]
          %v1003 = vld [vmem:[#allocation5 + $0x9d0] sm:$0xff]
          %v1004 = vld [vmem:[#allocation5 + $0x9d8] sm:$0xff]
          %v1005 = vld [vmem:[#allocation5 + $0x9e0] sm:$0xff]
          %v1006 = vld [vmem:[#allocation5 + $0x9e8] sm:$0xff]
          %v1007 = vld [vmem:[#allocation5 + $0x9f0] sm:$0xff]
          %v1008 = vld [vmem:[#allocation5 + $0x9f8] sm:$0xff]
          %v1009 = vld [vmem:[#allocation5 + $0xa00] sm:$0xff]
          %v1010 = vld [vmem:[#allocation5 + $0xa08] sm:$0xff]
          %v1011 = vld [vmem:[#allocation5 + $0xa10] sm:$0xff]
          %v1012 = vld [vmem:[#allocation5 + $0xa18] sm:$0xff]
          %v1013 = vld [vmem:[#allocation5 + $0xa20] sm:$0xff]
          %v1014 = vld [vmem:[#allocation5 + $0xa28] sm:$0xff]
          %v1015 = vld [vmem:[#allocation5 + $0xa30] sm:$0xff]
          %v1016 = vld [vmem:[#allocation5 + $0xa38] sm:$0xff]
          %v1017 = vld [vmem:[#allocation5 + $0xa40] sm:$0xff]
          %v1018 = vld [vmem:[#allocation5 + $0xa48] sm:$0xff]
          %v1019 = vld [vmem:[#allocation5 + $0xa50] sm:$0xff]
          %v1020 = vld [vmem:[#allocation5 + $0xa58] sm:$0xff]
          %v1021 = vld [vmem:[#allocation5 + $0xa60] sm:$0xff]
          %v1022 = vld [vmem:[#allocation5 + $0xa68] sm:$0xff]
          %v1023 = vld [vmem:[#allocation5 + $0xa70] sm:$0xff]
          %v1024 = vld [vmem:[#allocation5 + $0xa78] sm:$0xff]
          %v1025 = vld [vmem:[#allocation5 + $0xa80] sm:$0xff]
          %v1026 = vld [vmem:[#allocation5 + $0xa88] sm:$0xff]
          %v1027 = vld [vmem:[#allocation5 + $0xa90] sm:$0xff]
          %v1028 = vld [vmem:[#allocation5 + $0xa98] sm:$0xff]
          %v1029 = vld [vmem:[#allocation5 + $0xaa0] sm:$0xff]
          %v1030 = vld [vmem:[#allocation5 + $0xaa8] sm:$0xff]
          %v1031 = vld [vmem:[#allocation5 + $0xab0] sm:$0xff]
          %v1032 = vld [vmem:[#allocation5 + $0xab8] sm:$0xff]
          %v1033 = vld [vmem:[#allocation5 + $0xac0] sm:$0xff]
          %v1034 = vld [vmem:[#allocation5 + $0xac8] sm:$0xff]
          %v1035 = vld [vmem:[#allocation5 + $0xad0] sm:$0xff]
          %v1036 = vld [vmem:[#allocation5 + $0xad8] sm:$0xff]
          %v1037 = vld [vmem:[#allocation5 + $0xae0] sm:$0xff]
          %v1038 = vld [vmem:[#allocation5 + $0xae8] sm:$0xff]
          %v1039 = vld [vmem:[#allocation5 + $0xaf0] sm:$0xff]
          %v1040 = vld [vmem:[#allocation5 + $0xaf8] sm:$0xff]
          %v1041 = vld [vmem:[#allocation5 + $0xb00] sm:$0xff]
          %v1042 = vld [vmem:[#allocation5 + $0xb08] sm:$0xff]
          %v1043 = vld [vmem:[#allocation5 + $0xb10] sm:$0xff]
          %v1044 = vld [vmem:[#allocation5 + $0xb18] sm:$0xff]
          %v1045 = vld [vmem:[#allocation5 + $0xb20] sm:$0xff]
          %v1046 = vld [vmem:[#allocation5 + $0xb28] sm:$0xff]
          %v1047 = vld [vmem:[#allocation5 + $0xb30] sm:$0xff]
          %v1048 = vld [vmem:[#allocation5 + $0xb38] sm:$0xff]
          %v1049 = vld [vmem:[#allocation5 + $0xb40] sm:$0xff]
          %v1050 = vld [vmem:[#allocation5 + $0xb48] sm:$0xff]
          %v1051 = vld [vmem:[#allocation5 + $0xb50] sm:$0xff]
          %v1052 = vld [vmem:[#allocation5 + $0xb58] sm:$0xff]
          %v1053 = vld [vmem:[#allocation5 + $0xb60] sm:$0xff]
          %v1054 = vld [vmem:[#allocation5 + $0xb68] sm:$0xff]
          %v1055 = vld [vmem:[#allocation5 + $0xb70] sm:$0xff]
          %v1056 = vld [vmem:[#allocation5 + $0xb78] sm:$0xff]
          %v1057 = vld [vmem:[#allocation5 + $0xb80] sm:$0xff]
          %v1058 = vld [vmem:[#allocation5 + $0xb88] sm:$0xff]
          %v1059 = vld [vmem:[#allocation5 + $0xb90] sm:$0xff]
          %v1060 = vld [vmem:[#allocation5 + $0xb98] sm:$0xff]
          %v1061 = vld [vmem:[#allocation5 + $0xba0] sm:$0xff]
          %v1062 = vld [vmem:[#allocation5 + $0xba8] sm:$0xff]
          %v1063 = vld [vmem:[#allocation5 + $0xbb0] sm:$0xff]
          %v1064 = vld [vmem:[#allocation5 + $0xbb8] sm:$0xff]
          %v1065 = vld [vmem:[#allocation5 + $0xbc0] sm:$0xff]
          %v1066 = vld [vmem:[#allocation5 + $0xbc8] sm:$0xff]
          %v1067 = vld [vmem:[#allocation5 + $0xbd0] sm:$0xff]
          %v1068 = vld [vmem:[#allocation5 + $0xbd8] sm:$0xff]
          %v1069 = vld [vmem:[#allocation5 + $0xbe0] sm:$0xff]
          %v1070 = vld [vmem:[#allocation5 + $0xbe8] sm:$0xff]
          %v1071 = vld [vmem:[#allocation5 + $0xbf0] sm:$0xff]
          %v1072 = vld [vmem:[#allocation5 + $0xbf8] sm:$0xff]
          %v1073 = vld [vmem:[#allocation5 + $0xc00] sm:$0xff]
          %v1074 = vld [vmem:[#allocation5 + $0xc08] sm:$0xff]
          %v1075 = vld [vmem:[#allocation5 + $0xc10] sm:$0xff]
          %v1076 = vld [vmem:[#allocation5 + $0xc18] sm:$0xff]
          %v1077 = vld [vmem:[#allocation5 + $0xc20] sm:$0xff]
          %v1078 = vld [vmem:[#allocation5 + $0xc28] sm:$0xff]
          %v1079 = vld [vmem:[#allocation5 + $0xc30] sm:$0xff]
          %v1080 = vld [vmem:[#allocation5 + $0xc38] sm:$0xff]
          %v1081 = vld [vmem:[#allocation5 + $0xc40] sm:$0xff]
          %v1082 = vld [vmem:[#allocation5 + $0xc48] sm:$0xff]
          %v1083 = vld [vmem:[#allocation5 + $0xc50] sm:$0xff]
          %v1084 = vld [vmem:[#allocation5 + $0xc58] sm:$0xff]
          %v1085 = vld [vmem:[#allocation5 + $0xc60] sm:$0xff]
          %v1086 = vld [vmem:[#allocation5 + $0xc68] sm:$0xff]
          %v1087 = vld [vmem:[#allocation5 + $0xc70] sm:$0xff]
          %v1088 = vld [vmem:[#allocation5 + $0xc78] sm:$0xff]
          %v1089 = vld [vmem:[#allocation5 + $0xc80] sm:$0xff]
          %v1090 = vld [vmem:[#allocation5 + $0xc88] sm:$0xff]
          %v1091 = vld [vmem:[#allocation5 + $0xc90] sm:$0xff]
          %v1092 = vld [vmem:[#allocation5 + $0xc98] sm:$0xff]
          %v1093 = vld [vmem:[#allocation5 + $0xca0] sm:$0xff]
          %v1094 = vld [vmem:[#allocation5 + $0xca8] sm:$0xff]
          %v1095 = vld [vmem:[#allocation5 + $0xcb0] sm:$0xff]
          %v1096 = vld [vmem:[#allocation5 + $0xcb8] sm:$0xff]
          %v1097 = vld [vmem:[#allocation5 + $0xcc0] sm:$0xff]
          %v1098 = vld [vmem:[#allocation5 + $0xcc8] sm:$0xff]
          %v1099 = vld [vmem:[#allocation5 + $0xcd0] sm:$0xff]
          %v1100 = vld [vmem:[#allocation5 + $0xcd8] sm:$0xff]
          %v1101 = vld [vmem:[#allocation5 + $0xce0] sm:$0xff]
          %v1102 = vld [vmem:[#allocation5 + $0xce8] sm:$0xff]
          %v1103 = vld [vmem:[#allocation5 + $0xcf0] sm:$0xff]
          %v1104 = vld [vmem:[#allocation5 + $0xcf8] sm:$0xff]
          %v1105 = vld [vmem:[#allocation5 + $0xd00] sm:$0xff]
          %v1106 = vld [vmem:[#allocation5 + $0xd08] sm:$0xff]
          %v1107 = vld [vmem:[#allocation5 + $0xd10] sm:$0xff]
          %v1108 = vld [vmem:[#allocation5 + $0xd18] sm:$0xff]
          %v1109 = vld [vmem:[#allocation5 + $0xd20] sm:$0xff]
          %v1110 = vld [vmem:[#allocation5 + $0xd28] sm:$0xff]
          %v1111 = vld [vmem:[#allocation5 + $0xd30] sm:$0xff]
          %v1112 = vld [vmem:[#allocation5 + $0xd38] sm:$0xff]
          %v1113 = vld [vmem:[#allocation5 + $0xd40] sm:$0xff]
          %v1114 = vld [vmem:[#allocation5 + $0xd48] sm:$0xff]
          %v1115 = vld [vmem:[#allocation5 + $0xd50] sm:$0xff]
          %v1116 = vld [vmem:[#allocation5 + $0xd58] sm:$0xff]
          %v1117 = vld [vmem:[#allocation5 + $0xd60] sm:$0xff]
          %v1118 = vld [vmem:[#allocation5 + $0xd68] sm:$0xff]
          %v1119 = vld [vmem:[#allocation5 + $0xd70] sm:$0xff]
          %v1120 = vld [vmem:[#allocation5 + $0xd78] sm:$0xff]
          %v1121 = vld [vmem:[#allocation5 + $0xd80] sm:$0xff]
          %v1122 = vld [vmem:[#allocation5 + $0xd88] sm:$0xff]
          %v1123 = vld [vmem:[#allocation5 + $0xd90] sm:$0xff]
          %v1124 = vld [vmem:[#allocation5 + $0xd98] sm:$0xff]
          %v1125 = vld [vmem:[#allocation5 + $0xda0] sm:$0xff]
          %v1126 = vld [vmem:[#allocation5 + $0xda8] sm:$0xff]
          %v1127 = vld [vmem:[#allocation5 + $0xdb0] sm:$0xff]
          %v1128 = vld [vmem:[#allocation5 + $0xdb8] sm:$0xff]
          %v1129 = vld [vmem:[#allocation5 + $0xdc0] sm:$0xff]
          %v1130 = vld [vmem:[#allocation5 + $0xdc8] sm:$0xff]
          %v1131 = vld [vmem:[#allocation5 + $0xdd0] sm:$0xff]
          %v1132 = vld [vmem:[#allocation5 + $0xdd8] sm:$0xff]
          %v1133 = vld [vmem:[#allocation5 + $0xde0] sm:$0xff]
          %v1134 = vld [vmem:[#allocation5 + $0xde8] sm:$0xff]
          %v1135 = vld [vmem:[#allocation5 + $0xdf0] sm:$0xff]
          %v1136 = vld [vmem:[#allocation5 + $0xdf8] sm:$0xff]
          %v1137 = vld [vmem:[#allocation7] sm:$0xff]
          %v1139 = vperm.slane %v1137, 0
          %v1140 = vperm.slane %v1137, 1
          %v1141 = vperm.slane %v1137, 2
          %v1142 = vperm.slane %v1137, 3
          %v1143 = vperm.slane %v1137, 4
          %v1144 = vperm.slane %v1137, 5
          %v1145 = vperm.slane %v1137, 6
          %v1146 = vperm.slane %v1137, 7
          %v1603 = vunpack.c.l.b16 %v689
          %v1604 = vunpack.c.h.b16 %v689
          %v1605 = vunpack.c.l.b16 %v690
          %v1606 = vunpack.c.h.b16 %v690
          %v1607 = vunpack.c.l.b16 %v691
          %v1608 = vunpack.c.h.b16 %v691
          %v1609 = vunpack.c.l.b16 %v692
          %v1610 = vunpack.c.h.b16 %v692
          %v1611 = vunpack.c.l.b16 %v693
          %v1612 = vunpack.c.h.b16 %v693
          %v1613 = vunpack.c.l.b16 %v694
          %v1614 = vunpack.c.h.b16 %v694
          %v1615 = vunpack.c.l.b16 %v695
          %v1616 = vunpack.c.h.b16 %v695
          %v1617 = vunpack.c.l.b16 %v696
          %v1618 = vunpack.c.h.b16 %v696
          %v1619 = vunpack.c.l.b16 %v697
          %v1620 = vunpack.c.h.b16 %v697
          %v1621 = vunpack.c.l.b16 %v698
          %v1622 = vunpack.c.h.b16 %v698
          %v1623 = vunpack.c.l.b16 %v699
          %v1624 = vunpack.c.h.b16 %v699
          %v1625 = vunpack.c.l.b16 %v700
          %v1626 = vunpack.c.h.b16 %v700
          %v1627 = vunpack.c.l.b16 %v701
          %v1628 = vunpack.c.h.b16 %v701
          %v1629 = vunpack.c.l.b16 %v702
          %v1630 = vunpack.c.h.b16 %v702
          %v1631 = vunpack.c.l.b16 %v703
          %v1632 = vunpack.c.h.b16 %v703
          %v1633 = vunpack.c.l.b16 %v704
          %v1634 = vunpack.c.h.b16 %v704
          %v1635 = vunpack.c.l.b16 %v705
          %v1636 = vunpack.c.h.b16 %v705
          %v1637 = vunpack.c.l.b16 %v706
          %v1638 = vunpack.c.h.b16 %v706
          %v1639 = vunpack.c.l.b16 %v707
          %v1640 = vunpack.c.h.b16 %v707
          %v1641 = vunpack.c.l.b16 %v708
          %v1642 = vunpack.c.h.b16 %v708
          %v1643 = vunpack.c.l.b16 %v709
          %v1644 = vunpack.c.h.b16 %v709
          %v1645 = vunpack.c.l.b16 %v710
          %v1646 = vunpack.c.h.b16 %v710
          %v1647 = vunpack.c.l.b16 %v711
          %v1648 = vunpack.c.h.b16 %v711
          %v1649 = vunpack.c.l.b16 %v712
          %v1650 = vunpack.c.h.b16 %v712
          %v1651 = vunpack.c.l.b16 %v713
          %v1652 = vunpack.c.h.b16 %v713
          %v1653 = vunpack.c.l.b16 %v714
          %v1654 = vunpack.c.h.b16 %v714
          %v1655 = vunpack.c.l.b16 %v715
          %v1656 = vunpack.c.h.b16 %v715
          %v1657 = vunpack.c.l.b16 %v716
          %v1658 = vunpack.c.h.b16 %v716
          %v1659 = vunpack.c.l.b16 %v717
          %v1660 = vunpack.c.h.b16 %v717
          %v1661 = vunpack.c.l.b16 %v718
          %v1662 = vunpack.c.h.b16 %v718
          %v1663 = vunpack.c.l.b16 %v719
          %v1664 = vunpack.c.h.b16 %v719
          %v1665 = vunpack.c.l.b16 %v720
          %v1666 = vunpack.c.h.b16 %v720
          %v1667 = vunpack.c.l.b16 %v721
          %v1668 = vunpack.c.h.b16 %v721
          %v1669 = vunpack.c.l.b16 %v722
          %v1670 = vunpack.c.h.b16 %v722
          %v1671 = vunpack.c.l.b16 %v723
          %v1672 = vunpack.c.h.b16 %v723
          %v1673 = vunpack.c.l.b16 %v724
          %v1674 = vunpack.c.h.b16 %v724
          %v1675 = vunpack.c.l.b16 %v725
          %v1676 = vunpack.c.h.b16 %v725
          %v1677 = vunpack.c.l.b16 %v726
          %v1678 = vunpack.c.h.b16 %v726
          %v1679 = vunpack.c.l.b16 %v727
          %v1680 = vunpack.c.h.b16 %v727
          %v1681 = vunpack.c.l.b16 %v728
          %v1682 = vunpack.c.h.b16 %v728
          %v1683 = vunpack.c.l.b16 %v729
          %v1684 = vunpack.c.h.b16 %v729
          %v1685 = vunpack.c.l.b16 %v730
          %v1686 = vunpack.c.h.b16 %v730
          %v1687 = vunpack.c.l.b16 %v731
          %v1688 = vunpack.c.h.b16 %v731
          %v1689 = vunpack.c.l.b16 %v732
          %v1690 = vunpack.c.h.b16 %v732
          %v1691 = vunpack.c.l.b16 %v733
          %v1692 = vunpack.c.h.b16 %v733
          %v1693 = vunpack.c.l.b16 %v734
          %v1694 = vunpack.c.h.b16 %v734
          %v1695 = vunpack.c.l.b16 %v735
          %v1696 = vunpack.c.h.b16 %v735
          %v1697 = vunpack.c.l.b16 %v736
          %v1698 = vunpack.c.h.b16 %v736
          %v1699 = vunpack.c.l.b16 %v737
          %v1700 = vunpack.c.h.b16 %v737
          %v1701 = vunpack.c.l.b16 %v738
          %v1702 = vunpack.c.h.b16 %v738
          %v1703 = vunpack.c.l.b16 %v739
          %v1704 = vunpack.c.h.b16 %v739
          %v1705 = vunpack.c.l.b16 %v740
          %v1706 = vunpack.c.h.b16 %v740
          %v1707 = vunpack.c.l.b16 %v741
          %v1708 = vunpack.c.h.b16 %v741
          %v1709 = vunpack.c.l.b16 %v742
          %v1710 = vunpack.c.h.b16 %v742
          %v1711 = vunpack.c.l.b16 %v743
          %v1712 = vunpack.c.h.b16 %v743
          %v1713 = vunpack.c.l.b16 %v744
          %v1714 = vunpack.c.h.b16 %v744
          %v1715 = vunpack.c.l.b16 %v745
          %v1716 = vunpack.c.h.b16 %v745
          %v1717 = vunpack.c.l.b16 %v746
          %v1718 = vunpack.c.h.b16 %v746
          %v1719 = vunpack.c.l.b16 %v747
          %v1720 = vunpack.c.h.b16 %v747
          %v1721 = vunpack.c.l.b16 %v748
          %v1722 = vunpack.c.h.b16 %v748
          %v1723 = vunpack.c.l.b16 %v749
          %v1724 = vunpack.c.h.b16 %v749
          %v1725 = vunpack.c.l.b16 %v750
          %v1726 = vunpack.c.h.b16 %v750
          %v1727 = vunpack.c.l.b16 %v751
          %v1728 = vunpack.c.h.b16 %v751
          %v1729 = vunpack.c.l.b16 %v752
          %v1730 = vunpack.c.h.b16 %v752
          %v1731 = vunpack.c.l.b16 %v753
          %v1732 = vunpack.c.h.b16 %v753
          %v1733 = vunpack.c.l.b16 %v754
          %v1734 = vunpack.c.h.b16 %v754
          %v1735 = vunpack.c.l.b16 %v755
          %v1736 = vunpack.c.h.b16 %v755
          %v1737 = vunpack.c.l.b16 %v756
          %v1738 = vunpack.c.h.b16 %v756
          %v1739 = vunpack.c.l.b16 %v757
          %v1740 = vunpack.c.h.b16 %v757
          %v1741 = vunpack.c.l.b16 %v758
          %v1742 = vunpack.c.h.b16 %v758
          %v1743 = vunpack.c.l.b16 %v759
          %v1744 = vunpack.c.h.b16 %v759
          %v1745 = vunpack.c.l.b16 %v760
          %v1746 = vunpack.c.h.b16 %v760
          %v1747 = vunpack.c.l.b16 %v761
          %v1748 = vunpack.c.h.b16 %v761
          %v1749 = vunpack.c.l.b16 %v762
          %v1750 = vunpack.c.h.b16 %v762
          %v1751 = vunpack.c.l.b16 %v763
          %v1752 = vunpack.c.h.b16 %v763
          %v1753 = vunpack.c.l.b16 %v764
          %v1754 = vunpack.c.h.b16 %v764
          %v1755 = vunpack.c.l.b16 %v765
          %v1756 = vunpack.c.h.b16 %v765
          %v1757 = vunpack.c.l.b16 %v766
          %v1758 = vunpack.c.h.b16 %v766
          %v1759 = vunpack.c.l.b16 %v767
          %v1760 = vunpack.c.h.b16 %v767
          %v1761 = vunpack.c.l.b16 %v768
          %v1762 = vunpack.c.h.b16 %v768
          %v1763 = vunpack.c.l.b16 %v769
          %v1764 = vunpack.c.h.b16 %v769
          %v1765 = vunpack.c.l.b16 %v770
          %v1766 = vunpack.c.h.b16 %v770
          %v1767 = vunpack.c.l.b16 %v771
          %v1768 = vunpack.c.h.b16 %v771
          %v1769 = vunpack.c.l.b16 %v772
          %v1770 = vunpack.c.h.b16 %v772
          %v1771 = vunpack.c.l.b16 %v773
          %v1772 = vunpack.c.h.b16 %v773
          %v1773 = vunpack.c.l.b16 %v774
          %v1774 = vunpack.c.h.b16 %v774
          %v1775 = vunpack.c.l.b16 %v775
          %v1776 = vunpack.c.h.b16 %v775
          %v1777 = vunpack.c.l.b16 %v776
          %v1778 = vunpack.c.h.b16 %v776
          %v1779 = vunpack.c.l.b16 %v777
          %v1780 = vunpack.c.h.b16 %v777
          %v1781 = vunpack.c.l.b16 %v778
          %v1782 = vunpack.c.h.b16 %v778
          %v1783 = vunpack.c.l.b16 %v779
          %v1784 = vunpack.c.h.b16 %v779
          %v1785 = vunpack.c.l.b16 %v780
          %v1786 = vunpack.c.h.b16 %v780
          %v1787 = vunpack.c.l.b16 %v781
          %v1788 = vunpack.c.h.b16 %v781
          %v1789 = vunpack.c.l.b16 %v782
          %v1790 = vunpack.c.h.b16 %v782
          %v1791 = vunpack.c.l.b16 %v783
          %v1792 = vunpack.c.h.b16 %v783
          %v1793 = vunpack.c.l.b16 %v784
          %v1794 = vunpack.c.h.b16 %v784
          %v1795 = vunpack.c.l.b16 %v785
          %v1796 = vunpack.c.h.b16 %v785
          %v1797 = vunpack.c.l.b16 %v786
          %v1798 = vunpack.c.h.b16 %v786
          %v1799 = vunpack.c.l.b16 %v787
          %v1800 = vunpack.c.h.b16 %v787
          %v1801 = vunpack.c.l.b16 %v788
          %v1802 = vunpack.c.h.b16 %v788
          %v1803 = vunpack.c.l.b16 %v789
          %v1804 = vunpack.c.h.b16 %v789
          %v1805 = vunpack.c.l.b16 %v790
          %v1806 = vunpack.c.h.b16 %v790
          %v1807 = vunpack.c.l.b16 %v791
          %v1808 = vunpack.c.h.b16 %v791
          %v1809 = vunpack.c.l.b16 %v792
          %v1810 = vunpack.c.h.b16 %v792
          %v1811 = vunpack.c.l.b16 %v793
          %v1812 = vunpack.c.h.b16 %v793
          %v1813 = vunpack.c.l.b16 %v794
          %v1814 = vunpack.c.h.b16 %v794
          %v1815 = vunpack.c.l.b16 %v795
          %v1816 = vunpack.c.h.b16 %v795
          %v1817 = vunpack.c.l.b16 %v796
          %v1818 = vunpack.c.h.b16 %v796
          %v1819 = vunpack.c.l.b16 %v797
          %v1820 = vunpack.c.h.b16 %v797
          %v1821 = vunpack.c.l.b16 %v798
          %v1822 = vunpack.c.h.b16 %v798
          %v1823 = vunpack.c.l.b16 %v799
          %v1824 = vunpack.c.h.b16 %v799
          %v1825 = vunpack.c.l.b16 %v800
          %v1826 = vunpack.c.h.b16 %v800
          %v1827 = vunpack.c.l.b16 %v801
          %v1828 = vunpack.c.h.b16 %v801
          %v1829 = vunpack.c.l.b16 %v802
          %v1830 = vunpack.c.h.b16 %v802
          %v1831 = vunpack.c.l.b16 %v803
          %v1832 = vunpack.c.h.b16 %v803
          %v1833 = vunpack.c.l.b16 %v804
          %v1834 = vunpack.c.h.b16 %v804
          %v1835 = vunpack.c.l.b16 %v805
          %v1836 = vunpack.c.h.b16 %v805
          %v1837 = vunpack.c.l.b16 %v806
          %v1838 = vunpack.c.h.b16 %v806
          %v1839 = vunpack.c.l.b16 %v807
          %v1840 = vunpack.c.h.b16 %v807
          %v1841 = vunpack.c.l.b16 %v808
          %v1842 = vunpack.c.h.b16 %v808
          %v1843 = vunpack.c.l.b16 %v809
          %v1844 = vunpack.c.h.b16 %v809
          %v1845 = vunpack.c.l.b16 %v810
          %v1846 = vunpack.c.h.b16 %v810
          %v1847 = vunpack.c.l.b16 %v811
          %v1848 = vunpack.c.h.b16 %v811
          %v1849 = vunpack.c.l.b16 %v812
          %v1850 = vunpack.c.h.b16 %v812
          %v1851 = vunpack.c.l.b16 %v813
          %v1852 = vunpack.c.h.b16 %v813
          %v1853 = vunpack.c.l.b16 %v814
          %v1854 = vunpack.c.h.b16 %v814
          %v1855 = vunpack.c.l.b16 %v815
          %v1856 = vunpack.c.h.b16 %v815
          %v1857 = vunpack.c.l.b16 %v816
          %v1858 = vunpack.c.h.b16 %v816
          %v1859 = vunpack.c.l.b16 %v817
          %v1860 = vunpack.c.h.b16 %v817
          %v1861 = vunpack.c.l.b16 %v818
          %v1862 = vunpack.c.h.b16 %v818
          %v1863 = vunpack.c.l.b16 %v819
          %v1864 = vunpack.c.h.b16 %v819
          %v1865 = vunpack.c.l.b16 %v820
          %v1866 = vunpack.c.h.b16 %v820
          %v1867 = vunpack.c.l.b16 %v821
          %v1868 = vunpack.c.h.b16 %v821
          %v1869 = vunpack.c.l.b16 %v822
          %v1870 = vunpack.c.h.b16 %v822
          %v1871 = vunpack.c.l.b16 %v823
          %v1872 = vunpack.c.h.b16 %v823
          %v1873 = vunpack.c.l.b16 %v824
          %v1874 = vunpack.c.h.b16 %v824
          %v1875 = vunpack.c.l.b16 %v825
          %v1876 = vunpack.c.h.b16 %v825
          %v1877 = vunpack.c.l.b16 %v826
          %v1878 = vunpack.c.h.b16 %v826
          %v1879 = vunpack.c.l.b16 %v827
          %v1880 = vunpack.c.h.b16 %v827
          %v1881 = vunpack.c.l.b16 %v828
          %v1882 = vunpack.c.h.b16 %v828
          %v1883 = vunpack.c.l.b16 %v829
          %v1884 = vunpack.c.h.b16 %v829
          %v1885 = vunpack.c.l.b16 %v830
          %v1886 = vunpack.c.h.b16 %v830
          %v1887 = vunpack.c.l.b16 %v831
          %v1888 = vunpack.c.h.b16 %v831
          %v1889 = vunpack.c.l.b16 %v832
          %v1890 = vunpack.c.h.b16 %v832
          %v1891 = vunpack.c.l.b16 %v833
          %v1892 = vunpack.c.h.b16 %v833
          %v1893 = vunpack.c.l.b16 %v834
          %v1894 = vunpack.c.h.b16 %v834
          %v1895 = vunpack.c.l.b16 %v835
          %v1896 = vunpack.c.h.b16 %v835
          %v1897 = vunpack.c.l.b16 %v836
          %v1898 = vunpack.c.h.b16 %v836
          %v1899 = vunpack.c.l.b16 %v837
          %v1900 = vunpack.c.h.b16 %v837
          %v1901 = vunpack.c.l.b16 %v838
          %v1902 = vunpack.c.h.b16 %v838
          %v1903 = vunpack.c.l.b16 %v839
          %v1904 = vunpack.c.h.b16 %v839
          %v1905 = vunpack.c.l.b16 %v840
          %v1906 = vunpack.c.h.b16 %v840
          %v1907 = vunpack.c.l.b16 %v841
          %v1908 = vunpack.c.h.b16 %v841
          %v1909 = vunpack.c.l.b16 %v842
          %v1910 = vunpack.c.h.b16 %v842
          %v1911 = vunpack.c.l.b16 %v843
          %v1912 = vunpack.c.h.b16 %v843
          %v1913 = vunpack.c.l.b16 %v844
          %v1914 = vunpack.c.h.b16 %v844
          %v1915 = vunpack.c.l.b16 %v845
          %v1916 = vunpack.c.h.b16 %v845
          %v1917 = vunpack.c.l.b16 %v846
          %v1918 = vunpack.c.h.b16 %v846
          %v1919 = vunpack.c.l.b16 %v847
          %v1920 = vunpack.c.h.b16 %v847
          %v1921 = vunpack.c.l.b16 %v848
          %v1922 = vunpack.c.h.b16 %v848
          %v1923 = vunpack.c.l.b16 %v849
          %v1924 = vunpack.c.h.b16 %v849
          %v1925 = vunpack.c.l.b16 %v850
          %v1926 = vunpack.c.h.b16 %v850
          %v1927 = vunpack.c.l.b16 %v851
          %v1928 = vunpack.c.h.b16 %v851
          %v1929 = vunpack.c.l.b16 %v852
          %v1930 = vunpack.c.h.b16 %v852
          %v1931 = vunpack.c.l.b16 %v853
          %v1932 = vunpack.c.h.b16 %v853
          %v1933 = vunpack.c.l.b16 %v854
          %v1934 = vunpack.c.h.b16 %v854
          %v1935 = vunpack.c.l.b16 %v855
          %v1936 = vunpack.c.h.b16 %v855
          %v1937 = vunpack.c.l.b16 %v856
          %v1938 = vunpack.c.h.b16 %v856
          %v1939 = vunpack.c.l.b16 %v857
          %v1940 = vunpack.c.h.b16 %v857
          %v1941 = vunpack.c.l.b16 %v858
          %v1942 = vunpack.c.h.b16 %v858
          %v1943 = vunpack.c.l.b16 %v859
          %v1944 = vunpack.c.h.b16 %v859
          %v1945 = vunpack.c.l.b16 %v860
          %v1946 = vunpack.c.h.b16 %v860
          %v1947 = vunpack.c.l.b16 %v861
          %v1948 = vunpack.c.h.b16 %v861
          %v1949 = vunpack.c.l.b16 %v862
          %v1950 = vunpack.c.h.b16 %v862
          %v1951 = vunpack.c.l.b16 %v863
          %v1952 = vunpack.c.h.b16 %v863
          %v1953 = vunpack.c.l.b16 %v864
          %v1954 = vunpack.c.h.b16 %v864
          %v1955 = vunpack.c.l.b16 %v865
          %v1956 = vunpack.c.h.b16 %v865
          %v1957 = vunpack.c.l.b16 %v866
          %v1958 = vunpack.c.h.b16 %v866
          %v1959 = vunpack.c.l.b16 %v867
          %v1960 = vunpack.c.h.b16 %v867
          %v1961 = vunpack.c.l.b16 %v868
          %v1962 = vunpack.c.h.b16 %v868
          %v1963 = vunpack.c.l.b16 %v869
          %v1964 = vunpack.c.h.b16 %v869
          %v1965 = vunpack.c.l.b16 %v870
          %v1966 = vunpack.c.h.b16 %v870
          %v1967 = vunpack.c.l.b16 %v871
          %v1968 = vunpack.c.h.b16 %v871
          %v1969 = vunpack.c.l.b16 %v872
          %v1970 = vunpack.c.h.b16 %v872
          %v1971 = vunpack.c.l.b16 %v873
          %v1972 = vunpack.c.h.b16 %v873
          %v1973 = vunpack.c.l.b16 %v874
          %v1974 = vunpack.c.h.b16 %v874
          %v1975 = vunpack.c.l.b16 %v875
          %v1976 = vunpack.c.h.b16 %v875
          %v1977 = vunpack.c.l.b16 %v876
          %v1978 = vunpack.c.h.b16 %v876
          %v1979 = vunpack.c.l.b16 %v877
          %v1980 = vunpack.c.h.b16 %v877
          %v1981 = vunpack.c.l.b16 %v878
          %v1982 = vunpack.c.h.b16 %v878
          %v1983 = vunpack.c.l.b16 %v879
          %v1984 = vunpack.c.h.b16 %v879
          %v1985 = vunpack.c.l.b16 %v880
          %v1986 = vunpack.c.h.b16 %v880
          %v1987 = vunpack.c.l.b16 %v881
          %v1988 = vunpack.c.h.b16 %v881
          %v1989 = vunpack.c.l.b16 %v882
          %v1990 = vunpack.c.h.b16 %v882
          %v1991 = vunpack.c.l.b16 %v883
          %v1992 = vunpack.c.h.b16 %v883
          %v1993 = vunpack.c.l.b16 %v884
          %v1994 = vunpack.c.h.b16 %v884
          %v1995 = vunpack.c.l.b16 %v885
          %v1996 = vunpack.c.h.b16 %v885
          %v1997 = vunpack.c.l.b16 %v886
          %v1998 = vunpack.c.h.b16 %v886
          %v1999 = vunpack.c.l.b16 %v887
          %v2000 = vunpack.c.h.b16 %v887
          %v2001 = vunpack.c.l.b16 %v888
          %v2002 = vunpack.c.h.b16 %v888
          %v2003 = vunpack.c.l.b16 %v889
          %v2004 = vunpack.c.h.b16 %v889
          %v2005 = vunpack.c.l.b16 %v890
          %v2006 = vunpack.c.h.b16 %v890
          %v2007 = vunpack.c.l.b16 %v891
          %v2008 = vunpack.c.h.b16 %v891
          %v2009 = vunpack.c.l.b16 %v892
          %v2010 = vunpack.c.h.b16 %v892
          %v2011 = vunpack.c.l.b16 %v893
          %v2012 = vunpack.c.h.b16 %v893
          %v2013 = vunpack.c.l.b16 %v894
          %v2014 = vunpack.c.h.b16 %v894
          %v2015 = vunpack.c.l.b16 %v895
          %v2016 = vunpack.c.h.b16 %v895
          %v2017 = vunpack.c.l.b16 %v896
          %v2018 = vunpack.c.h.b16 %v896
          %v2019 = vunpack.c.l.b16 %v897
          %v2020 = vunpack.c.h.b16 %v897
          %v2021 = vunpack.c.l.b16 %v898
          %v2022 = vunpack.c.h.b16 %v898
          %v2023 = vunpack.c.l.b16 %v899
          %v2024 = vunpack.c.h.b16 %v899
          %v2025 = vunpack.c.l.b16 %v900
          %v2026 = vunpack.c.h.b16 %v900
          %v2027 = vunpack.c.l.b16 %v901
          %v2028 = vunpack.c.h.b16 %v901
          %v2029 = vunpack.c.l.b16 %v902
          %v2030 = vunpack.c.h.b16 %v902
          %v2031 = vunpack.c.l.b16 %v903
          %v2032 = vunpack.c.h.b16 %v903
          %v2033 = vunpack.c.l.b16 %v904
          %v2034 = vunpack.c.h.b16 %v904
          %v2035 = vunpack.c.l.b16 %v905
          %v2036 = vunpack.c.h.b16 %v905
          %v2037 = vunpack.c.l.b16 %v906
          %v2038 = vunpack.c.h.b16 %v906
          %v2039 = vunpack.c.l.b16 %v907
          %v2040 = vunpack.c.h.b16 %v907
          %v2041 = vunpack.c.l.b16 %v908
          %v2042 = vunpack.c.h.b16 %v908
          %v2043 = vunpack.c.l.b16 %v909
          %v2044 = vunpack.c.h.b16 %v909
          %v2045 = vunpack.c.l.b16 %v910
          %v2046 = vunpack.c.h.b16 %v910
          %v2047 = vunpack.c.l.b16 %v911
          %v2048 = vunpack.c.h.b16 %v911
          %v2049 = vunpack.c.l.b16 %v912
          %v2050 = vunpack.c.h.b16 %v912
          %v2051 = vunpack.c.l.b16 %v913
          %v2052 = vunpack.c.h.b16 %v913
          %v2053 = vunpack.c.l.b16 %v914
          %v2054 = vunpack.c.h.b16 %v914
          %v2055 = vunpack.c.l.b16 %v915
          %v2056 = vunpack.c.h.b16 %v915
          %v2057 = vunpack.c.l.b16 %v916
          %v2058 = vunpack.c.h.b16 %v916
          %v2059 = vunpack.c.l.b16 %v917
          %v2060 = vunpack.c.h.b16 %v917
          %v2061 = vunpack.c.l.b16 %v918
          %v2062 = vunpack.c.h.b16 %v918
          %v2063 = vunpack.c.l.b16 %v919
          %v2064 = vunpack.c.h.b16 %v919
          %v2065 = vunpack.c.l.b16 %v920
          %v2066 = vunpack.c.h.b16 %v920
          %v2067 = vunpack.c.l.b16 %v921
          %v2068 = vunpack.c.h.b16 %v921
          %v2069 = vunpack.c.l.b16 %v922
          %v2070 = vunpack.c.h.b16 %v922
          %v2071 = vunpack.c.l.b16 %v923
          %v2072 = vunpack.c.h.b16 %v923
          %v2073 = vunpack.c.l.b16 %v924
          %v2074 = vunpack.c.h.b16 %v924
          %v2075 = vunpack.c.l.b16 %v925
          %v2076 = vunpack.c.h.b16 %v925
          %v2077 = vunpack.c.l.b16 %v926
          %v2078 = vunpack.c.h.b16 %v926
          %v2079 = vunpack.c.l.b16 %v927
          %v2080 = vunpack.c.h.b16 %v927
          %v2081 = vunpack.c.l.b16 %v928
          %v2082 = vunpack.c.h.b16 %v928
          %v2083 = vunpack.c.l.b16 %v929
          %v2084 = vunpack.c.h.b16 %v929
          %v2085 = vunpack.c.l.b16 %v930
          %v2086 = vunpack.c.h.b16 %v930
          %v2087 = vunpack.c.l.b16 %v931
          %v2088 = vunpack.c.h.b16 %v931
          %v2089 = vunpack.c.l.b16 %v932
          %v2090 = vunpack.c.h.b16 %v932
          %v2091 = vunpack.c.l.b16 %v933
          %v2092 = vunpack.c.h.b16 %v933
          %v2093 = vunpack.c.l.b16 %v934
          %v2094 = vunpack.c.h.b16 %v934
          %v2095 = vunpack.c.l.b16 %v935
          %v2096 = vunpack.c.h.b16 %v935
          %v2097 = vunpack.c.l.b16 %v936
          %v2098 = vunpack.c.h.b16 %v936
          %v2099 = vunpack.c.l.b16 %v937
          %v2100 = vunpack.c.h.b16 %v937
          %v2101 = vunpack.c.l.b16 %v938
          %v2102 = vunpack.c.h.b16 %v938
          %v2103 = vunpack.c.l.b16 %v939
          %v2104 = vunpack.c.h.b16 %v939
          %v2105 = vunpack.c.l.b16 %v940
          %v2106 = vunpack.c.h.b16 %v940
          %v2107 = vunpack.c.l.b16 %v941
          %v2108 = vunpack.c.h.b16 %v941
          %v2109 = vunpack.c.l.b16 %v942
          %v2110 = vunpack.c.h.b16 %v942
          %v2111 = vunpack.c.l.b16 %v943
          %v2112 = vunpack.c.h.b16 %v943
          %v2113 = vunpack.c.l.b16 %v944
          %v2114 = vunpack.c.h.b16 %v944
          %v2115 = vunpack.c.l.b16 %v945
          %v2116 = vunpack.c.h.b16 %v945
          %v2117 = vunpack.c.l.b16 %v946
          %v2118 = vunpack.c.h.b16 %v946
          %v2119 = vunpack.c.l.b16 %v947
          %v2120 = vunpack.c.h.b16 %v947
          %v2121 = vunpack.c.l.b16 %v948
          %v2122 = vunpack.c.h.b16 %v948
          %v2123 = vunpack.c.l.b16 %v949
          %v2124 = vunpack.c.h.b16 %v949
          %v2125 = vunpack.c.l.b16 %v950
          %v2126 = vunpack.c.h.b16 %v950
          %v2127 = vunpack.c.l.b16 %v951
          %v2128 = vunpack.c.h.b16 %v951
          %v2129 = vunpack.c.l.b16 %v952
          %v2130 = vunpack.c.h.b16 %v952
          %v2131 = vunpack.c.l.b16 %v953
          %v2132 = vunpack.c.h.b16 %v953
          %v2133 = vunpack.c.l.b16 %v954
          %v2134 = vunpack.c.h.b16 %v954
          %v2135 = vunpack.c.l.b16 %v955
          %v2136 = vunpack.c.h.b16 %v955
          %v2137 = vunpack.c.l.b16 %v956
          %v2138 = vunpack.c.h.b16 %v956
          %v2139 = vunpack.c.l.b16 %v957
          %v2140 = vunpack.c.h.b16 %v957
          %v2141 = vunpack.c.l.b16 %v958
          %v2142 = vunpack.c.h.b16 %v958
          %v2143 = vunpack.c.l.b16 %v959
          %v2144 = vunpack.c.h.b16 %v959
          %v2145 = vunpack.c.l.b16 %v960
          %v2146 = vunpack.c.h.b16 %v960
          %v2147 = vunpack.c.l.b16 %v961
          %v2148 = vunpack.c.h.b16 %v961
          %v2149 = vunpack.c.l.b16 %v962
          %v2150 = vunpack.c.h.b16 %v962
          %v2151 = vunpack.c.l.b16 %v963
          %v2152 = vunpack.c.h.b16 %v963
          %v2153 = vunpack.c.l.b16 %v964
          %v2154 = vunpack.c.h.b16 %v964
          %v2155 = vunpack.c.l.b16 %v965
          %v2156 = vunpack.c.h.b16 %v965
          %v2157 = vunpack.c.l.b16 %v966
          %v2158 = vunpack.c.h.b16 %v966
          %v2159 = vunpack.c.l.b16 %v967
          %v2160 = vunpack.c.h.b16 %v967
          %v2161 = vunpack.c.l.b16 %v968
          %v2162 = vunpack.c.h.b16 %v968
          %v2163 = vunpack.c.l.b16 %v969
          %v2164 = vunpack.c.h.b16 %v969
          %v2165 = vunpack.c.l.b16 %v970
          %v2166 = vunpack.c.h.b16 %v970
          %v2167 = vunpack.c.l.b16 %v971
          %v2168 = vunpack.c.h.b16 %v971
          %v2169 = vunpack.c.l.b16 %v972
          %v2170 = vunpack.c.h.b16 %v972
          %v2171 = vunpack.c.l.b16 %v973
          %v2172 = vunpack.c.h.b16 %v973
          %v2173 = vunpack.c.l.b16 %v974
          %v2174 = vunpack.c.h.b16 %v974
          %v2175 = vunpack.c.l.b16 %v975
          %v2176 = vunpack.c.h.b16 %v975
          %v2177 = vunpack.c.l.b16 %v976
          %v2178 = vunpack.c.h.b16 %v976
          %v2179 = vunpack.c.l.b16 %v977
          %v2180 = vunpack.c.h.b16 %v977
          %v2181 = vunpack.c.l.b16 %v978
          %v2182 = vunpack.c.h.b16 %v978
          %v2183 = vunpack.c.l.b16 %v979
          %v2184 = vunpack.c.h.b16 %v979
          %v2185 = vunpack.c.l.b16 %v980
          %v2186 = vunpack.c.h.b16 %v980
          %v2187 = vunpack.c.l.b16 %v981
          %v2188 = vunpack.c.h.b16 %v981
          %v2189 = vunpack.c.l.b16 %v982
          %v2190 = vunpack.c.h.b16 %v982
          %v2191 = vunpack.c.l.b16 %v983
          %v2192 = vunpack.c.h.b16 %v983
          %v2193 = vunpack.c.l.b16 %v984
          %v2194 = vunpack.c.h.b16 %v984
          %v2195 = vunpack.c.l.b16 %v985
          %v2196 = vunpack.c.h.b16 %v985
          %v2197 = vunpack.c.l.b16 %v986
          %v2198 = vunpack.c.h.b16 %v986
          %v2199 = vunpack.c.l.b16 %v987
          %v2200 = vunpack.c.h.b16 %v987
          %v2201 = vunpack.c.l.b16 %v988
          %v2202 = vunpack.c.h.b16 %v988
          %v2203 = vunpack.c.l.b16 %v989
          %v2204 = vunpack.c.h.b16 %v989
          %v2205 = vunpack.c.l.b16 %v990
          %v2206 = vunpack.c.h.b16 %v990
          %v2207 = vunpack.c.l.b16 %v991
          %v2208 = vunpack.c.h.b16 %v991
          %v2209 = vunpack.c.l.b16 %v992
          %v2210 = vunpack.c.h.b16 %v992
          %v2211 = vunpack.c.l.b16 %v993
          %v2212 = vunpack.c.h.b16 %v993
          %v2213 = vunpack.c.l.b16 %v994
          %v2214 = vunpack.c.h.b16 %v994
          %v2215 = vunpack.c.l.b16 %v995
          %v2216 = vunpack.c.h.b16 %v995
          %v2217 = vunpack.c.l.b16 %v996
          %v2218 = vunpack.c.h.b16 %v996
          %v2219 = vunpack.c.l.b16 %v997
          %v2220 = vunpack.c.h.b16 %v997
          %v2221 = vunpack.c.l.b16 %v998
          %v2222 = vunpack.c.h.b16 %v998
          %v2223 = vunpack.c.l.b16 %v999
          %v2224 = vunpack.c.h.b16 %v999
          %v2225 = vunpack.c.l.b16 %v1000
          %v2226 = vunpack.c.h.b16 %v1000
          %v2227 = vunpack.c.l.b16 %v1001
          %v2228 = vunpack.c.h.b16 %v1001
          %v2229 = vunpack.c.l.b16 %v1002
          %v2230 = vunpack.c.h.b16 %v1002
          %v2231 = vunpack.c.l.b16 %v1003
          %v2232 = vunpack.c.h.b16 %v1003
          %v2233 = vunpack.c.l.b16 %v1004
          %v2234 = vunpack.c.h.b16 %v1004
          %v2235 = vunpack.c.l.b16 %v1005
          %v2236 = vunpack.c.h.b16 %v1005
          %v2237 = vunpack.c.l.b16 %v1006
          %v2238 = vunpack.c.h.b16 %v1006
          %v2239 = vunpack.c.l.b16 %v1007
          %v2240 = vunpack.c.h.b16 %v1007
          %v2241 = vunpack.c.l.b16 %v1008
          %v2242 = vunpack.c.h.b16 %v1008
          %v2243 = vunpack.c.l.b16 %v1009
          %v2244 = vunpack.c.h.b16 %v1009
          %v2245 = vunpack.c.l.b16 %v1010
          %v2246 = vunpack.c.h.b16 %v1010
          %v2247 = vunpack.c.l.b16 %v1011
          %v2248 = vunpack.c.h.b16 %v1011
          %v2249 = vunpack.c.l.b16 %v1012
          %v2250 = vunpack.c.h.b16 %v1012
          %v2251 = vunpack.c.l.b16 %v1013
          %v2252 = vunpack.c.h.b16 %v1013
          %v2253 = vunpack.c.l.b16 %v1014
          %v2254 = vunpack.c.h.b16 %v1014
          %v2255 = vunpack.c.l.b16 %v1015
          %v2256 = vunpack.c.h.b16 %v1015
          %v2257 = vunpack.c.l.b16 %v1016
          %v2258 = vunpack.c.h.b16 %v1016
          %v2259 = vunpack.c.l.b16 %v1017
          %v2260 = vunpack.c.h.b16 %v1017
          %v2261 = vunpack.c.l.b16 %v1018
          %v2262 = vunpack.c.h.b16 %v1018
          %v2263 = vunpack.c.l.b16 %v1019
          %v2264 = vunpack.c.h.b16 %v1019
          %v2265 = vunpack.c.l.b16 %v1020
          %v2266 = vunpack.c.h.b16 %v1020
          %v2267 = vunpack.c.l.b16 %v1021
          %v2268 = vunpack.c.h.b16 %v1021
          %v2269 = vunpack.c.l.b16 %v1022
          %v2270 = vunpack.c.h.b16 %v1022
          %v2271 = vunpack.c.l.b16 %v1023
          %v2272 = vunpack.c.h.b16 %v1023
          %v2273 = vunpack.c.l.b16 %v1024
          %v2274 = vunpack.c.h.b16 %v1024
          %v2275 = vunpack.c.l.b16 %v1025
          %v2276 = vunpack.c.h.b16 %v1025
          %v2277 = vunpack.c.l.b16 %v1026
          %v2278 = vunpack.c.h.b16 %v1026
          %v2279 = vunpack.c.l.b16 %v1027
          %v2280 = vunpack.c.h.b16 %v1027
          %v2281 = vunpack.c.l.b16 %v1028
          %v2282 = vunpack.c.h.b16 %v1028
          %v2283 = vunpack.c.l.b16 %v1029
          %v2284 = vunpack.c.h.b16 %v1029
          %v2285 = vunpack.c.l.b16 %v1030
          %v2286 = vunpack.c.h.b16 %v1030
          %v2287 = vunpack.c.l.b16 %v1031
          %v2288 = vunpack.c.h.b16 %v1031
          %v2289 = vunpack.c.l.b16 %v1032
          %v2290 = vunpack.c.h.b16 %v1032
          %v2291 = vunpack.c.l.b16 %v1033
          %v2292 = vunpack.c.h.b16 %v1033
          %v2293 = vunpack.c.l.b16 %v1034
          %v2294 = vunpack.c.h.b16 %v1034
          %v2295 = vunpack.c.l.b16 %v1035
          %v2296 = vunpack.c.h.b16 %v1035
          %v2297 = vunpack.c.l.b16 %v1036
          %v2298 = vunpack.c.h.b16 %v1036
          %v2299 = vunpack.c.l.b16 %v1037
          %v2300 = vunpack.c.h.b16 %v1037
          %v2301 = vunpack.c.l.b16 %v1038
          %v2302 = vunpack.c.h.b16 %v1038
          %v2303 = vunpack.c.l.b16 %v1039
          %v2304 = vunpack.c.h.b16 %v1039
          %v2305 = vunpack.c.l.b16 %v1040
          %v2306 = vunpack.c.h.b16 %v1040
          %v2307 = vunpack.c.l.b16 %v1041
          %v2308 = vunpack.c.h.b16 %v1041
          %v2309 = vunpack.c.l.b16 %v1042
          %v2310 = vunpack.c.h.b16 %v1042
          %v2311 = vunpack.c.l.b16 %v1043
          %v2312 = vunpack.c.h.b16 %v1043
          %v2313 = vunpack.c.l.b16 %v1044
          %v2314 = vunpack.c.h.b16 %v1044
          %v2315 = vunpack.c.l.b16 %v1045
          %v2316 = vunpack.c.h.b16 %v1045
          %v2317 = vunpack.c.l.b16 %v1046
          %v2318 = vunpack.c.h.b16 %v1046
          %v2319 = vunpack.c.l.b16 %v1047
          %v2320 = vunpack.c.h.b16 %v1047
          %v2321 = vunpack.c.l.b16 %v1048
          %v2322 = vunpack.c.h.b16 %v1048
          %v2323 = vunpack.c.l.b16 %v1049
          %v2324 = vunpack.c.h.b16 %v1049
          %v2325 = vunpack.c.l.b16 %v1050
          %v2326 = vunpack.c.h.b16 %v1050
          %v2327 = vunpack.c.l.b16 %v1051
          %v2328 = vunpack.c.h.b16 %v1051
          %v2329 = vunpack.c.l.b16 %v1052
          %v2330 = vunpack.c.h.b16 %v1052
          %v2331 = vunpack.c.l.b16 %v1053
          %v2332 = vunpack.c.h.b16 %v1053
          %v2333 = vunpack.c.l.b16 %v1054
          %v2334 = vunpack.c.h.b16 %v1054
          %v2335 = vunpack.c.l.b16 %v1055
          %v2336 = vunpack.c.h.b16 %v1055
          %v2337 = vunpack.c.l.b16 %v1056
          %v2338 = vunpack.c.h.b16 %v1056
          %v2339 = vunpack.c.l.b16 %v1057
          %v2340 = vunpack.c.h.b16 %v1057
          %v2341 = vunpack.c.l.b16 %v1058
          %v2342 = vunpack.c.h.b16 %v1058
          %v2343 = vunpack.c.l.b16 %v1059
          %v2344 = vunpack.c.h.b16 %v1059
          %v2345 = vunpack.c.l.b16 %v1060
          %v2346 = vunpack.c.h.b16 %v1060
          %v2347 = vunpack.c.l.b16 %v1061
          %v2348 = vunpack.c.h.b16 %v1061
          %v2349 = vunpack.c.l.b16 %v1062
          %v2350 = vunpack.c.h.b16 %v1062
          %v2351 = vunpack.c.l.b16 %v1063
          %v2352 = vunpack.c.h.b16 %v1063
          %v2353 = vunpack.c.l.b16 %v1064
          %v2354 = vunpack.c.h.b16 %v1064
          %v2355 = vunpack.c.l.b16 %v1065
          %v2356 = vunpack.c.h.b16 %v1065
          %v2357 = vunpack.c.l.b16 %v1066
          %v2358 = vunpack.c.h.b16 %v1066
          %v2359 = vunpack.c.l.b16 %v1067
          %v2360 = vunpack.c.h.b16 %v1067
          %v2361 = vunpack.c.l.b16 %v1068
          %v2362 = vunpack.c.h.b16 %v1068
          %v2363 = vunpack.c.l.b16 %v1069
          %v2364 = vunpack.c.h.b16 %v1069
          %v2365 = vunpack.c.l.b16 %v1070
          %v2366 = vunpack.c.h.b16 %v1070
          %v2367 = vunpack.c.l.b16 %v1071
          %v2368 = vunpack.c.h.b16 %v1071
          %v2369 = vunpack.c.l.b16 %v1072
          %v2370 = vunpack.c.h.b16 %v1072
          %v2371 = vunpack.c.l.b16 %v1073
          %v2372 = vunpack.c.h.b16 %v1073
          %v2373 = vunpack.c.l.b16 %v1074
          %v2374 = vunpack.c.h.b16 %v1074
          %v2375 = vunpack.c.l.b16 %v1075
          %v2376 = vunpack.c.h.b16 %v1075
          %v2377 = vunpack.c.l.b16 %v1076
          %v2378 = vunpack.c.h.b16 %v1076
          %v2379 = vunpack.c.l.b16 %v1077
          %v2380 = vunpack.c.h.b16 %v1077
          %v2381 = vunpack.c.l.b16 %v1078
          %v2382 = vunpack.c.h.b16 %v1078
          %v2383 = vunpack.c.l.b16 %v1079
          %v2384 = vunpack.c.h.b16 %v1079
          %v2385 = vunpack.c.l.b16 %v1080
          %v2386 = vunpack.c.h.b16 %v1080
          %v2387 = vunpack.c.l.b16 %v1081
          %v2388 = vunpack.c.h.b16 %v1081
          %v2389 = vunpack.c.l.b16 %v1082
          %v2390 = vunpack.c.h.b16 %v1082
          %v2391 = vunpack.c.l.b16 %v1083
          %v2392 = vunpack.c.h.b16 %v1083
          %v2393 = vunpack.c.l.b16 %v1084
          %v2394 = vunpack.c.h.b16 %v1084
          %v2395 = vunpack.c.l.b16 %v1085
          %v2396 = vunpack.c.h.b16 %v1085
          %v2397 = vunpack.c.l.b16 %v1086
          %v2398 = vunpack.c.h.b16 %v1086
          %v2399 = vunpack.c.l.b16 %v1087
          %v2400 = vunpack.c.h.b16 %v1087
          %v2401 = vunpack.c.l.b16 %v1088
          %v2402 = vunpack.c.h.b16 %v1088
          %v2403 = vunpack.c.l.b16 %v1089
          %v2404 = vunpack.c.h.b16 %v1089
          %v2405 = vunpack.c.l.b16 %v1090
          %v2406 = vunpack.c.h.b16 %v1090
          %v2407 = vunpack.c.l.b16 %v1091
          %v2408 = vunpack.c.h.b16 %v1091
          %v2409 = vunpack.c.l.b16 %v1092
          %v2410 = vunpack.c.h.b16 %v1092
          %v2411 = vunpack.c.l.b16 %v1093
          %v2412 = vunpack.c.h.b16 %v1093
          %v2413 = vunpack.c.l.b16 %v1094
          %v2414 = vunpack.c.h.b16 %v1094
          %v2415 = vunpack.c.l.b16 %v1095
          %v2416 = vunpack.c.h.b16 %v1095
          %v2417 = vunpack.c.l.b16 %v1096
          %v2418 = vunpack.c.h.b16 %v1096
          %v2419 = vunpack.c.l.b16 %v1097
          %v2420 = vunpack.c.h.b16 %v1097
          %v2421 = vunpack.c.l.b16 %v1098
          %v2422 = vunpack.c.h.b16 %v1098
          %v2423 = vunpack.c.l.b16 %v1099
          %v2424 = vunpack.c.h.b16 %v1099
          %v2425 = vunpack.c.l.b16 %v1100
          %v2426 = vunpack.c.h.b16 %v1100
          %v2427 = vunpack.c.l.b16 %v1101
          %v2428 = vunpack.c.h.b16 %v1101
          %v2429 = vunpack.c.l.b16 %v1102
          %v2430 = vunpack.c.h.b16 %v1102
          %v2431 = vunpack.c.l.b16 %v1103
          %v2432 = vunpack.c.h.b16 %v1103
          %v2433 = vunpack.c.l.b16 %v1104
          %v2434 = vunpack.c.h.b16 %v1104
          %v2435 = vunpack.c.l.b16 %v1105
          %v2436 = vunpack.c.h.b16 %v1105
          %v2437 = vunpack.c.l.b16 %v1106
          %v2438 = vunpack.c.h.b16 %v1106
          %v2439 = vunpack.c.l.b16 %v1107
          %v2440 = vunpack.c.h.b16 %v1107
          %v2441 = vunpack.c.l.b16 %v1108
          %v2442 = vunpack.c.h.b16 %v1108
          %v2443 = vunpack.c.l.b16 %v1109
          %v2444 = vunpack.c.h.b16 %v1109
          %v2445 = vunpack.c.l.b16 %v1110
          %v2446 = vunpack.c.h.b16 %v1110
          %v2447 = vunpack.c.l.b16 %v1111
          %v2448 = vunpack.c.h.b16 %v1111
          %v2449 = vunpack.c.l.b16 %v1112
          %v2450 = vunpack.c.h.b16 %v1112
          %v2451 = vunpack.c.l.b16 %v1113
          %v2452 = vunpack.c.h.b16 %v1113
          %v2453 = vunpack.c.l.b16 %v1114
          %v2454 = vunpack.c.h.b16 %v1114
          %v2455 = vunpack.c.l.b16 %v1115
          %v2456 = vunpack.c.h.b16 %v1115
          %v2457 = vunpack.c.l.b16 %v1116
          %v2458 = vunpack.c.h.b16 %v1116
          %v2459 = vunpack.c.l.b16 %v1117
          %v2460 = vunpack.c.h.b16 %v1117
          %v2461 = vunpack.c.l.b16 %v1118
          %v2462 = vunpack.c.h.b16 %v1118
          %v2463 = vunpack.c.l.b16 %v1119
          %v2464 = vunpack.c.h.b16 %v1119
          %v2465 = vunpack.c.l.b16 %v1120
          %v2466 = vunpack.c.h.b16 %v1120
          %v2467 = vunpack.c.l.b16 %v1121
          %v2468 = vunpack.c.h.b16 %v1121
          %v2469 = vunpack.c.l.b16 %v1122
          %v2470 = vunpack.c.h.b16 %v1122
          %v2471 = vunpack.c.l.b16 %v1123
          %v2472 = vunpack.c.h.b16 %v1123
          %v2473 = vunpack.c.l.b16 %v1124
          %v2474 = vunpack.c.h.b16 %v1124
          %v2475 = vunpack.c.l.b16 %v1125
          %v2476 = vunpack.c.h.b16 %v1125
          %v2477 = vunpack.c.l.b16 %v1126
          %v2478 = vunpack.c.h.b16 %v1126
          %v2479 = vunpack.c.l.b16 %v1127
          %v2480 = vunpack.c.h.b16 %v1127
          %v2481 = vunpack.c.l.b16 %v1128
          %v2482 = vunpack.c.h.b16 %v1128
          %v2483 = vunpack.c.l.b16 %v1129
          %v2484 = vunpack.c.h.b16 %v1129
          %v2485 = vunpack.c.l.b16 %v1130
          %v2486 = vunpack.c.h.b16 %v1130
          %v2487 = vunpack.c.l.b16 %v1131
          %v2488 = vunpack.c.h.b16 %v1131
          %v2489 = vunpack.c.l.b16 %v1132
          %v2490 = vunpack.c.h.b16 %v1132
          %v2491 = vunpack.c.l.b16 %v1133
          %v2492 = vunpack.c.h.b16 %v1133
          %v2493 = vunpack.c.l.b16 %v1134
          %v2494 = vunpack.c.h.b16 %v1134
          %v2495 = vunpack.c.l.b16 %v1135
          %v2496 = vunpack.c.h.b16 %v1135
          %v2497 = vunpack.c.l.b16 %v1136
          %v2498 = vunpack.c.h.b16 %v1136
          %v2499 = vpack.c.b16 %v1611, %v1603
          %v2500 = vpack.c.b16 %v1612, %v1604
          %v2501 = vpack.c.b16 %v1613, %v1605
          %v2502 = vpack.c.b16 %v1614, %v1606
          %v2503 = vpack.c.b16 %v1615, %v1607
          %v2504 = vpack.c.b16 %v1616, %v1608
          %v2505 = vpack.c.b16 %v1617, %v1609
          %v2506 = vpack.c.b16 %v1618, %v1610
          %v2507 = vpack.c.b16 %v1627, %v1619
          %v2508 = vpack.c.b16 %v1628, %v1620
          %v2509 = vpack.c.b16 %v1629, %v1621
          %v2510 = vpack.c.b16 %v1630, %v1622
          %v2511 = vpack.c.b16 %v1631, %v1623
          %v2512 = vpack.c.b16 %v1632, %v1624
          %v2513 = vpack.c.b16 %v1633, %v1625
          %v2514 = vpack.c.b16 %v1634, %v1626
          %v2515 = vpack.c.b16 %v1643, %v1635
          %v2516 = vpack.c.b16 %v1644, %v1636
          %v2517 = vpack.c.b16 %v1645, %v1637
          %v2518 = vpack.c.b16 %v1646, %v1638
          %v2519 = vpack.c.b16 %v1647, %v1639
          %v2520 = vpack.c.b16 %v1648, %v1640
          %v2521 = vpack.c.b16 %v1649, %v1641
          %v2522 = vpack.c.b16 %v1650, %v1642
          %v2523 = vpack.c.b16 %v1659, %v1651
          %v2524 = vpack.c.b16 %v1660, %v1652
          %v2525 = vpack.c.b16 %v1661, %v1653
          %v2526 = vpack.c.b16 %v1662, %v1654
          %v2527 = vpack.c.b16 %v1663, %v1655
          %v2528 = vpack.c.b16 %v1664, %v1656
          %v2529 = vpack.c.b16 %v1665, %v1657
          %v2530 = vpack.c.b16 %v1666, %v1658
          %v2531 = vpack.c.b16 %v1675, %v1667
          %v2532 = vpack.c.b16 %v1676, %v1668
          %v2533 = vpack.c.b16 %v1677, %v1669
          %v2534 = vpack.c.b16 %v1678, %v1670
          %v2535 = vpack.c.b16 %v1679, %v1671
          %v2536 = vpack.c.b16 %v1680, %v1672
          %v2537 = vpack.c.b16 %v1681, %v1673
          %v2538 = vpack.c.b16 %v1682, %v1674
          %v2539 = vpack.c.b16 %v1691, %v1683
          %v2540 = vpack.c.b16 %v1692, %v1684
          %v2541 = vpack.c.b16 %v1693, %v1685
          %v2542 = vpack.c.b16 %v1694, %v1686
          %v2543 = vpack.c.b16 %v1695, %v1687
          %v2544 = vpack.c.b16 %v1696, %v1688
          %v2545 = vpack.c.b16 %v1697, %v1689
          %v2546 = vpack.c.b16 %v1698, %v1690
          %v2547 = vpack.c.b16 %v1707, %v1699
          %v2548 = vpack.c.b16 %v1708, %v1700
          %v2549 = vpack.c.b16 %v1709, %v1701
          %v2550 = vpack.c.b16 %v1710, %v1702
          %v2551 = vpack.c.b16 %v1711, %v1703
          %v2552 = vpack.c.b16 %v1712, %v1704
          %v2553 = vpack.c.b16 %v1713, %v1705
          %v2554 = vpack.c.b16 %v1714, %v1706
          %v2555 = vpack.c.b16 %v1723, %v1715
          %v2556 = vpack.c.b16 %v1724, %v1716
          %v2557 = vpack.c.b16 %v1725, %v1717
          %v2558 = vpack.c.b16 %v1726, %v1718
          %v2559 = vpack.c.b16 %v1727, %v1719
          %v2560 = vpack.c.b16 %v1728, %v1720
          %v2561 = vpack.c.b16 %v1729, %v1721
          %v2562 = vpack.c.b16 %v1730, %v1722
          %v2563 = vpack.c.b16 %v1739, %v1731
          %v2564 = vpack.c.b16 %v1740, %v1732
          %v2565 = vpack.c.b16 %v1741, %v1733
          %v2566 = vpack.c.b16 %v1742, %v1734
          %v2567 = vpack.c.b16 %v1743, %v1735
          %v2568 = vpack.c.b16 %v1744, %v1736
          %v2569 = vpack.c.b16 %v1745, %v1737
          %v2570 = vpack.c.b16 %v1746, %v1738
          %v2571 = vpack.c.b16 %v1755, %v1747
          %v2572 = vpack.c.b16 %v1756, %v1748
          %v2573 = vpack.c.b16 %v1757, %v1749
          %v2574 = vpack.c.b16 %v1758, %v1750
          %v2575 = vpack.c.b16 %v1759, %v1751
          %v2576 = vpack.c.b16 %v1760, %v1752
          %v2577 = vpack.c.b16 %v1761, %v1753
          %v2578 = vpack.c.b16 %v1762, %v1754
          %v2579 = vpack.c.b16 %v1771, %v1763
          %v2580 = vpack.c.b16 %v1772, %v1764
          %v2581 = vpack.c.b16 %v1773, %v1765
          %v2582 = vpack.c.b16 %v1774, %v1766
          %v2583 = vpack.c.b16 %v1775, %v1767
          %v2584 = vpack.c.b16 %v1776, %v1768
          %v2585 = vpack.c.b16 %v1777, %v1769
          %v2586 = vpack.c.b16 %v1778, %v1770
          %v2587 = vpack.c.b16 %v1787, %v1779
          %v2588 = vpack.c.b16 %v1788, %v1780
          %v2589 = vpack.c.b16 %v1789, %v1781
          %v2590 = vpack.c.b16 %v1790, %v1782
          %v2591 = vpack.c.b16 %v1791, %v1783
          %v2592 = vpack.c.b16 %v1792, %v1784
          %v2593 = vpack.c.b16 %v1793, %v1785
          %v2594 = vpack.c.b16 %v1794, %v1786
          %v2595 = vpack.c.b16 %v1803, %v1795
          %v2596 = vpack.c.b16 %v1804, %v1796
          %v2597 = vpack.c.b16 %v1805, %v1797
          %v2598 = vpack.c.b16 %v1806, %v1798
          %v2599 = vpack.c.b16 %v1807, %v1799
          %v2600 = vpack.c.b16 %v1808, %v1800
          %v2601 = vpack.c.b16 %v1809, %v1801
          %v2602 = vpack.c.b16 %v1810, %v1802
          %v2603 = vpack.c.b16 %v1819, %v1811
          %v2604 = vpack.c.b16 %v1820, %v1812
          %v2605 = vpack.c.b16 %v1821, %v1813
          %v2606 = vpack.c.b16 %v1822, %v1814
          %v2607 = vpack.c.b16 %v1823, %v1815
          %v2608 = vpack.c.b16 %v1824, %v1816
          %v2609 = vpack.c.b16 %v1825, %v1817
          %v2610 = vpack.c.b16 %v1826, %v1818
          %v2611 = vpack.c.b16 %v1835, %v1827
          %v2612 = vpack.c.b16 %v1836, %v1828
          %v2613 = vpack.c.b16 %v1837, %v1829
          %v2614 = vpack.c.b16 %v1838, %v1830
          %v2615 = vpack.c.b16 %v1839, %v1831
          %v2616 = vpack.c.b16 %v1840, %v1832
          %v2617 = vpack.c.b16 %v1841, %v1833
          %v2618 = vpack.c.b16 %v1842, %v1834
          %v2619 = vpack.c.b16 %v1851, %v1843
          %v2620 = vpack.c.b16 %v1852, %v1844
          %v2621 = vpack.c.b16 %v1853, %v1845
          %v2622 = vpack.c.b16 %v1854, %v1846
          %v2623 = vpack.c.b16 %v1855, %v1847
          %v2624 = vpack.c.b16 %v1856, %v1848
          %v2625 = vpack.c.b16 %v1857, %v1849
          %v2626 = vpack.c.b16 %v1858, %v1850
          %v2627 = vpack.c.b16 %v1867, %v1859
          %v2628 = vpack.c.b16 %v1868, %v1860
          %v2629 = vpack.c.b16 %v1869, %v1861
          %v2630 = vpack.c.b16 %v1870, %v1862
          %v2631 = vpack.c.b16 %v1871, %v1863
          %v2632 = vpack.c.b16 %v1872, %v1864
          %v2633 = vpack.c.b16 %v1873, %v1865
          %v2634 = vpack.c.b16 %v1874, %v1866
          %v2635 = vpack.c.b16 %v1883, %v1875
          %v2636 = vpack.c.b16 %v1884, %v1876
          %v2637 = vpack.c.b16 %v1885, %v1877
          %v2638 = vpack.c.b16 %v1886, %v1878
          %v2639 = vpack.c.b16 %v1887, %v1879
          %v2640 = vpack.c.b16 %v1888, %v1880
          %v2641 = vpack.c.b16 %v1889, %v1881
          %v2642 = vpack.c.b16 %v1890, %v1882
          %v2643 = vpack.c.b16 %v1899, %v1891
          %v2644 = vpack.c.b16 %v1900, %v1892
          %v2645 = vpack.c.b16 %v1901, %v1893
          %v2646 = vpack.c.b16 %v1902, %v1894
          %v2647 = vpack.c.b16 %v1903, %v1895
          %v2648 = vpack.c.b16 %v1904, %v1896
          %v2649 = vpack.c.b16 %v1905, %v1897
          %v2650 = vpack.c.b16 %v1906, %v1898
          %v2651 = vpack.c.b16 %v1915, %v1907
          %v2652 = vpack.c.b16 %v1916, %v1908
          %v2653 = vpack.c.b16 %v1917, %v1909
          %v2654 = vpack.c.b16 %v1918, %v1910
          %v2655 = vpack.c.b16 %v1919, %v1911
          %v2656 = vpack.c.b16 %v1920, %v1912
          %v2657 = vpack.c.b16 %v1921, %v1913
          %v2658 = vpack.c.b16 %v1922, %v1914
          %v2659 = vpack.c.b16 %v1931, %v1923
          %v2660 = vpack.c.b16 %v1932, %v1924
          %v2661 = vpack.c.b16 %v1933, %v1925
          %v2662 = vpack.c.b16 %v1934, %v1926
          %v2663 = vpack.c.b16 %v1935, %v1927
          %v2664 = vpack.c.b16 %v1936, %v1928
          %v2665 = vpack.c.b16 %v1937, %v1929
          %v2666 = vpack.c.b16 %v1938, %v1930
          %v2667 = vpack.c.b16 %v1947, %v1939
          %v2668 = vpack.c.b16 %v1948, %v1940
          %v2669 = vpack.c.b16 %v1949, %v1941
          %v2670 = vpack.c.b16 %v1950, %v1942
          %v2671 = vpack.c.b16 %v1951, %v1943
          %v2672 = vpack.c.b16 %v1952, %v1944
          %v2673 = vpack.c.b16 %v1953, %v1945
          %v2674 = vpack.c.b16 %v1954, %v1946
          %v2675 = vpack.c.b16 %v1963, %v1955
          %v2676 = vpack.c.b16 %v1964, %v1956
          %v2677 = vpack.c.b16 %v1965, %v1957
          %v2678 = vpack.c.b16 %v1966, %v1958
          %v2679 = vpack.c.b16 %v1967, %v1959
          %v2680 = vpack.c.b16 %v1968, %v1960
          %v2681 = vpack.c.b16 %v1969, %v1961
          %v2682 = vpack.c.b16 %v1970, %v1962
          %v2683 = vpack.c.b16 %v1979, %v1971
          %v2684 = vpack.c.b16 %v1980, %v1972
          %v2685 = vpack.c.b16 %v1981, %v1973
          %v2686 = vpack.c.b16 %v1982, %v1974
          %v2687 = vpack.c.b16 %v1983, %v1975
          %v2688 = vpack.c.b16 %v1984, %v1976
          %v2689 = vpack.c.b16 %v1985, %v1977
          %v2690 = vpack.c.b16 %v1986, %v1978
          %v2691 = vpack.c.b16 %v1995, %v1987
          %v2692 = vpack.c.b16 %v1996, %v1988
          %v2693 = vpack.c.b16 %v1997, %v1989
          %v2694 = vpack.c.b16 %v1998, %v1990
          %v2695 = vpack.c.b16 %v1999, %v1991
          %v2696 = vpack.c.b16 %v2000, %v1992
          %v2697 = vpack.c.b16 %v2001, %v1993
          %v2698 = vpack.c.b16 %v2002, %v1994
          %v2699 = vpack.c.b16 %v2011, %v2003
          %v2700 = vpack.c.b16 %v2012, %v2004
          %v2701 = vpack.c.b16 %v2013, %v2005
          %v2702 = vpack.c.b16 %v2014, %v2006
          %v2703 = vpack.c.b16 %v2015, %v2007
          %v2704 = vpack.c.b16 %v2016, %v2008
          %v2705 = vpack.c.b16 %v2017, %v2009
          %v2706 = vpack.c.b16 %v2018, %v2010
          %v2707 = vpack.c.b16 %v2027, %v2019
          %v2708 = vpack.c.b16 %v2028, %v2020
          %v2709 = vpack.c.b16 %v2029, %v2021
          %v2710 = vpack.c.b16 %v2030, %v2022
          %v2711 = vpack.c.b16 %v2031, %v2023
          %v2712 = vpack.c.b16 %v2032, %v2024
          %v2713 = vpack.c.b16 %v2033, %v2025
          %v2714 = vpack.c.b16 %v2034, %v2026
          %v2715 = vpack.c.b16 %v2043, %v2035
          %v2716 = vpack.c.b16 %v2044, %v2036
          %v2717 = vpack.c.b16 %v2045, %v2037
          %v2718 = vpack.c.b16 %v2046, %v2038
          %v2719 = vpack.c.b16 %v2047, %v2039
          %v2720 = vpack.c.b16 %v2048, %v2040
          %v2721 = vpack.c.b16 %v2049, %v2041
          %v2722 = vpack.c.b16 %v2050, %v2042
          %v2723 = vpack.c.b16 %v2059, %v2051
          %v2724 = vpack.c.b16 %v2060, %v2052
          %v2725 = vpack.c.b16 %v2061, %v2053
          %v2726 = vpack.c.b16 %v2062, %v2054
          %v2727 = vpack.c.b16 %v2063, %v2055
          %v2728 = vpack.c.b16 %v2064, %v2056
          %v2729 = vpack.c.b16 %v2065, %v2057
          %v2730 = vpack.c.b16 %v2066, %v2058
          %v2731 = vpack.c.b16 %v2075, %v2067
          %v2732 = vpack.c.b16 %v2076, %v2068
          %v2733 = vpack.c.b16 %v2077, %v2069
          %v2734 = vpack.c.b16 %v2078, %v2070
          %v2735 = vpack.c.b16 %v2079, %v2071
          %v2736 = vpack.c.b16 %v2080, %v2072
          %v2737 = vpack.c.b16 %v2081, %v2073
          %v2738 = vpack.c.b16 %v2082, %v2074
          %v2739 = vpack.c.b16 %v2091, %v2083
          %v2740 = vpack.c.b16 %v2092, %v2084
          %v2741 = vpack.c.b16 %v2093, %v2085
          %v2742 = vpack.c.b16 %v2094, %v2086
          %v2743 = vpack.c.b16 %v2095, %v2087
          %v2744 = vpack.c.b16 %v2096, %v2088
          %v2745 = vpack.c.b16 %v2097, %v2089
          %v2746 = vpack.c.b16 %v2098, %v2090
          %v2747 = vpack.c.b16 %v2107, %v2099
          %v2748 = vpack.c.b16 %v2108, %v2100
          %v2749 = vpack.c.b16 %v2109, %v2101
          %v2750 = vpack.c.b16 %v2110, %v2102
          %v2751 = vpack.c.b16 %v2111, %v2103
          %v2752 = vpack.c.b16 %v2112, %v2104
          %v2753 = vpack.c.b16 %v2113, %v2105
          %v2754 = vpack.c.b16 %v2114, %v2106
          %v2755 = vpack.c.b16 %v2123, %v2115
          %v2756 = vpack.c.b16 %v2124, %v2116
          %v2757 = vpack.c.b16 %v2125, %v2117
          %v2758 = vpack.c.b16 %v2126, %v2118
          %v2759 = vpack.c.b16 %v2127, %v2119
          %v2760 = vpack.c.b16 %v2128, %v2120
          %v2761 = vpack.c.b16 %v2129, %v2121
          %v2762 = vpack.c.b16 %v2130, %v2122
          %v2763 = vpack.c.b16 %v2139, %v2131
          %v2764 = vpack.c.b16 %v2140, %v2132
          %v2765 = vpack.c.b16 %v2141, %v2133
          %v2766 = vpack.c.b16 %v2142, %v2134
          %v2767 = vpack.c.b16 %v2143, %v2135
          %v2768 = vpack.c.b16 %v2144, %v2136
          %v2769 = vpack.c.b16 %v2145, %v2137
          %v2770 = vpack.c.b16 %v2146, %v2138
          %v2771 = vpack.c.b16 %v2155, %v2147
          %v2772 = vpack.c.b16 %v2156, %v2148
          %v2773 = vpack.c.b16 %v2157, %v2149
          %v2774 = vpack.c.b16 %v2158, %v2150
          %v2775 = vpack.c.b16 %v2159, %v2151
          %v2776 = vpack.c.b16 %v2160, %v2152
          %v2777 = vpack.c.b16 %v2161, %v2153
          %v2778 = vpack.c.b16 %v2162, %v2154
          %v2779 = vpack.c.b16 %v2171, %v2163
          %v2780 = vpack.c.b16 %v2172, %v2164
          %v2781 = vpack.c.b16 %v2173, %v2165
          %v2782 = vpack.c.b16 %v2174, %v2166
          %v2783 = vpack.c.b16 %v2175, %v2167
          %v2784 = vpack.c.b16 %v2176, %v2168
          %v2785 = vpack.c.b16 %v2177, %v2169
          %v2786 = vpack.c.b16 %v2178, %v2170
          %v2787 = vpack.c.b16 %v2187, %v2179
          %v2788 = vpack.c.b16 %v2188, %v2180
          %v2789 = vpack.c.b16 %v2189, %v2181
          %v2790 = vpack.c.b16 %v2190, %v2182
          %v2791 = vpack.c.b16 %v2191, %v2183
          %v2792 = vpack.c.b16 %v2192, %v2184
          %v2793 = vpack.c.b16 %v2193, %v2185
          %v2794 = vpack.c.b16 %v2194, %v2186
          %v2795 = vpack.c.b16 %v2203, %v2195
          %v2796 = vpack.c.b16 %v2204, %v2196
          %v2797 = vpack.c.b16 %v2205, %v2197
          %v2798 = vpack.c.b16 %v2206, %v2198
          %v2799 = vpack.c.b16 %v2207, %v2199
          %v2800 = vpack.c.b16 %v2208, %v2200
          %v2801 = vpack.c.b16 %v2209, %v2201
          %v2802 = vpack.c.b16 %v2210, %v2202
          %v2803 = vpack.c.b16 %v2219, %v2211
          %v2804 = vpack.c.b16 %v2220, %v2212
          %v2805 = vpack.c.b16 %v2221, %v2213
          %v2806 = vpack.c.b16 %v2222, %v2214
          %v2807 = vpack.c.b16 %v2223, %v2215
          %v2808 = vpack.c.b16 %v2224, %v2216
          %v2809 = vpack.c.b16 %v2225, %v2217
          %v2810 = vpack.c.b16 %v2226, %v2218
          %v2811 = vpack.c.b16 %v2235, %v2227
          %v2812 = vpack.c.b16 %v2236, %v2228
          %v2813 = vpack.c.b16 %v2237, %v2229
          %v2814 = vpack.c.b16 %v2238, %v2230
          %v2815 = vpack.c.b16 %v2239, %v2231
          %v2816 = vpack.c.b16 %v2240, %v2232
          %v2817 = vpack.c.b16 %v2241, %v2233
          %v2818 = vpack.c.b16 %v2242, %v2234
          %v2819 = vpack.c.b16 %v2251, %v2243
          %v2820 = vpack.c.b16 %v2252, %v2244
          %v2821 = vpack.c.b16 %v2253, %v2245
          %v2822 = vpack.c.b16 %v2254, %v2246
          %v2823 = vpack.c.b16 %v2255, %v2247
          %v2824 = vpack.c.b16 %v2256, %v2248
          %v2825 = vpack.c.b16 %v2257, %v2249
          %v2826 = vpack.c.b16 %v2258, %v2250
          %v2827 = vpack.c.b16 %v2267, %v2259
          %v2828 = vpack.c.b16 %v2268, %v2260
          %v2829 = vpack.c.b16 %v2269, %v2261
          %v2830 = vpack.c.b16 %v2270, %v2262
          %v2831 = vpack.c.b16 %v2271, %v2263
          %v2832 = vpack.c.b16 %v2272, %v2264
          %v2833 = vpack.c.b16 %v2273, %v2265
          %v2834 = vpack.c.b16 %v2274, %v2266
          %v2835 = vpack.c.b16 %v2283, %v2275
          %v2836 = vpack.c.b16 %v2284, %v2276
          %v2837 = vpack.c.b16 %v2285, %v2277
          %v2838 = vpack.c.b16 %v2286, %v2278
          %v2839 = vpack.c.b16 %v2287, %v2279
          %v2840 = vpack.c.b16 %v2288, %v2280
          %v2841 = vpack.c.b16 %v2289, %v2281
          %v2842 = vpack.c.b16 %v2290, %v2282
          %v2843 = vpack.c.b16 %v2299, %v2291
          %v2844 = vpack.c.b16 %v2300, %v2292
          %v2845 = vpack.c.b16 %v2301, %v2293
          %v2846 = vpack.c.b16 %v2302, %v2294
          %v2847 = vpack.c.b16 %v2303, %v2295
          %v2848 = vpack.c.b16 %v2304, %v2296
          %v2849 = vpack.c.b16 %v2305, %v2297
          %v2850 = vpack.c.b16 %v2306, %v2298
          %v2851 = vpack.c.b16 %v2315, %v2307
          %v2852 = vpack.c.b16 %v2316, %v2308
          %v2853 = vpack.c.b16 %v2317, %v2309
          %v2854 = vpack.c.b16 %v2318, %v2310
          %v2855 = vpack.c.b16 %v2319, %v2311
          %v2856 = vpack.c.b16 %v2320, %v2312
          %v2857 = vpack.c.b16 %v2321, %v2313
          %v2858 = vpack.c.b16 %v2322, %v2314
          %v2859 = vpack.c.b16 %v2331, %v2323
          %v2860 = vpack.c.b16 %v2332, %v2324
          %v2861 = vpack.c.b16 %v2333, %v2325
          %v2862 = vpack.c.b16 %v2334, %v2326
          %v2863 = vpack.c.b16 %v2335, %v2327
          %v2864 = vpack.c.b16 %v2336, %v2328
          %v2865 = vpack.c.b16 %v2337, %v2329
          %v2866 = vpack.c.b16 %v2338, %v2330
          %v2867 = vpack.c.b16 %v2347, %v2339
          %v2868 = vpack.c.b16 %v2348, %v2340
          %v2869 = vpack.c.b16 %v2349, %v2341
          %v2870 = vpack.c.b16 %v2350, %v2342
          %v2871 = vpack.c.b16 %v2351, %v2343
          %v2872 = vpack.c.b16 %v2352, %v2344
          %v2873 = vpack.c.b16 %v2353, %v2345
          %v2874 = vpack.c.b16 %v2354, %v2346
          %v2875 = vpack.c.b16 %v2363, %v2355
          %v2876 = vpack.c.b16 %v2364, %v2356
          %v2877 = vpack.c.b16 %v2365, %v2357
          %v2878 = vpack.c.b16 %v2366, %v2358
          %v2879 = vpack.c.b16 %v2367, %v2359
          %v2880 = vpack.c.b16 %v2368, %v2360
          %v2881 = vpack.c.b16 %v2369, %v2361
          %v2882 = vpack.c.b16 %v2370, %v2362
          %v2883 = vpack.c.b16 %v2379, %v2371
          %v2884 = vpack.c.b16 %v2380, %v2372
          %v2885 = vpack.c.b16 %v2381, %v2373
          %v2886 = vpack.c.b16 %v2382, %v2374
          %v2887 = vpack.c.b16 %v2383, %v2375
          %v2888 = vpack.c.b16 %v2384, %v2376
          %v2889 = vpack.c.b16 %v2385, %v2377
          %v2890 = vpack.c.b16 %v2386, %v2378
          %v2891 = vpack.c.b16 %v2395, %v2387
          %v2892 = vpack.c.b16 %v2396, %v2388
          %v2893 = vpack.c.b16 %v2397, %v2389
          %v2894 = vpack.c.b16 %v2398, %v2390
          %v2895 = vpack.c.b16 %v2399, %v2391
          %v2896 = vpack.c.b16 %v2400, %v2392
          %v2897 = vpack.c.b16 %v2401, %v2393
          %v2898 = vpack.c.b16 %v2402, %v2394
          %v2899 = vpack.c.b16 %v2411, %v2403
          %v2900 = vpack.c.b16 %v2412, %v2404
          %v2901 = vpack.c.b16 %v2413, %v2405
          %v2902 = vpack.c.b16 %v2414, %v2406
          %v2903 = vpack.c.b16 %v2415, %v2407
          %v2904 = vpack.c.b16 %v2416, %v2408
          %v2905 = vpack.c.b16 %v2417, %v2409
          %v2906 = vpack.c.b16 %v2418, %v2410
          %v2907 = vpack.c.b16 %v2427, %v2419
          %v2908 = vpack.c.b16 %v2428, %v2420
          %v2909 = vpack.c.b16 %v2429, %v2421
          %v2910 = vpack.c.b16 %v2430, %v2422
          %v2911 = vpack.c.b16 %v2431, %v2423
          %v2912 = vpack.c.b16 %v2432, %v2424
          %v2913 = vpack.c.b16 %v2433, %v2425
          %v2914 = vpack.c.b16 %v2434, %v2426
          %v2915 = vpack.c.b16 %v2443, %v2435
          %v2916 = vpack.c.b16 %v2444, %v2436
          %v2917 = vpack.c.b16 %v2445, %v2437
          %v2918 = vpack.c.b16 %v2446, %v2438
          %v2919 = vpack.c.b16 %v2447, %v2439
          %v2920 = vpack.c.b16 %v2448, %v2440
          %v2921 = vpack.c.b16 %v2449, %v2441
          %v2922 = vpack.c.b16 %v2450, %v2442
          %v2923 = vpack.c.b16 %v2459, %v2451
          %v2924 = vpack.c.b16 %v2460, %v2452
          %v2925 = vpack.c.b16 %v2461, %v2453
          %v2926 = vpack.c.b16 %v2462, %v2454
          %v2927 = vpack.c.b16 %v2463, %v2455
          %v2928 = vpack.c.b16 %v2464, %v2456
          %v2929 = vpack.c.b16 %v2465, %v2457
          %v2930 = vpack.c.b16 %v2466, %v2458
          %v2931 = vpack.c.b16 %v2475, %v2467
          %v2932 = vpack.c.b16 %v2476, %v2468
          %v2933 = vpack.c.b16 %v2477, %v2469
          %v2934 = vpack.c.b16 %v2478, %v2470
          %v2935 = vpack.c.b16 %v2479, %v2471
          %v2936 = vpack.c.b16 %v2480, %v2472
          %v2937 = vpack.c.b16 %v2481, %v2473
          %v2938 = vpack.c.b16 %v2482, %v2474
          %v2939 = vpack.c.b16 %v2491, %v2483
          %v2940 = vpack.c.b16 %v2492, %v2484
          %v2941 = vpack.c.b16 %v2493, %v2485
          %v2942 = vpack.c.b16 %v2494, %v2486
          %v2943 = vpack.c.b16 %v2495, %v2487
          %v2944 = vpack.c.b16 %v2496, %v2488
          %v2945 = vpack.c.b16 %v2497, %v2489
          %v2946 = vpack.c.b16 %v2498, %v2490
          %3395 = vmatpush.bf16.msra.mxu0 %v2555
          %3396 = vmatpush.bf16.msra.mxu0 %v2547
          %3397 = vmatpush.bf16.msra.mxu0 %v2539
          %3398 = vmatpush.bf16.msra.mxu0 %v2531
          %3399 = vmatpush.bf16.msra.mxu0 %v2523
          %3400 = vmatpush.bf16.msra.mxu0 %v2515
          %3401 = vmatpush.bf16.msra.mxu0 %v2507
          %3402 = vmatpush.bf16.msra.mxu0 %v2499
          %3403 = vmatmul.bf16.gmra.mxu0 %v682
          %v3404 = vpop.f32.mrf.mxu0
          %v3405 = vadd.f32 %v1139, %v3404
          %v3406 = vpop.f32.mrf.mxu0
          %3407 = vdwg.mxu0
          %3408 = vmatpush.bf16.msra.mxu0 %v2619
          %3409 = vmatpush.bf16.msra.mxu0 %v2611
          %3410 = vmatpush.bf16.msra.mxu0 %v2603
          %3411 = vmatpush.bf16.msra.mxu0 %v2595
          %3412 = vmatpush.bf16.msra.mxu0 %v2587
          %3413 = vmatpush.bf16.msra.mxu0 %v2579
          %3414 = vmatpush.bf16.msra.mxu0 %v2571
          %3415 = vmatpush.bf16.msra.mxu0 %v2563
          %3416 = vmatmul.bf16.gmra.mxu0 %v683
          %v3417 = vpop.f32.mrf.mxu0
          %v3418 = vadd.f32 %v3405, %v3417
          %v3419 = vpop.f32.mrf.mxu0
          %3420 = vdwg.mxu0
          %3421 = vmatpush.bf16.msra.mxu0 %v2683
          %3422 = vmatpush.bf16.msra.mxu0 %v2675
          %3423 = vmatpush.bf16.msra.mxu0 %v2667
          %3424 = vmatpush.bf16.msra.mxu0 %v2659
          %3425 = vmatpush.bf16.msra.mxu0 %v2651
          %3426 = vmatpush.bf16.msra.mxu0 %v2643
          %3427 = vmatpush.bf16.msra.mxu0 %v2635
          %3428 = vmatpush.bf16.msra.mxu0 %v2627
          %3429 = vmatmul.bf16.gmra.mxu0 %v684
          %v3430 = vpop.f32.mrf.mxu0
          %v3431 = vadd.f32 %v3418, %v3430
          %v3432 = vpop.f32.mrf.mxu0
          %3433 = vdwg.mxu0
          %3434 = vmatpush.bf16.msra.mxu0 %v2747
          %3435 = vmatpush.bf16.msra.mxu0 %v2739
          %3436 = vmatpush.bf16.msra.mxu0 %v2731
          %3437 = vmatpush.bf16.msra.mxu0 %v2723
          %3438 = vmatpush.bf16.msra.mxu0 %v2715
          %3439 = vmatpush.bf16.msra.mxu0 %v2707
          %3440 = vmatpush.bf16.msra.mxu0 %v2699
          %3441 = vmatpush.bf16.msra.mxu0 %v2691
          %3442 = vmatmul.bf16.gmra.mxu0 %v685
          %v3443 = vpop.f32.mrf.mxu0
          %v3444 = vadd.f32 %v3431, %v3443
          %v3445 = vpop.f32.mrf.mxu0
          %3446 = vdwg.mxu0
          %3447 = vmatpush.bf16.msra.mxu0 %v2811
          %3448 = vmatpush.bf16.msra.mxu0 %v2803
          %3449 = vmatpush.bf16.msra.mxu0 %v2795
          %3450 = vmatpush.bf16.msra.mxu0 %v2787
          %3451 = vmatpush.bf16.msra.mxu0 %v2779
          %3452 = vmatpush.bf16.msra.mxu0 %v2771
          %3453 = vmatpush.bf16.msra.mxu0 %v2763
          %3454 = vmatpush.bf16.msra.mxu0 %v2755
          %3455 = vmatmul.bf16.gmra.mxu0 %v686
          %v3456 = vpop.f32.mrf.mxu0
          %v3457 = vadd.f32 %v3444, %v3456
          %v3458 = vpop.f32.mrf.mxu0
          %3459 = vdwg.mxu0
          %3460 = vmatpush.bf16.msra.mxu0 %v2875
          %3461 = vmatpush.bf16.msra.mxu0 %v2867
          %3462 = vmatpush.bf16.msra.mxu0 %v2859
          %3463 = vmatpush.bf16.msra.mxu0 %v2851
          %3464 = vmatpush.bf16.msra.mxu0 %v2843
          %3465 = vmatpush.bf16.msra.mxu0 %v2835
          %3466 = vmatpush.bf16.msra.mxu0 %v2827
          %3467 = vmatpush.bf16.msra.mxu0 %v2819
          %3468 = vmatmul.bf16.gmra.mxu0 %v687
          %v3469 = vpop.f32.mrf.mxu0
          %v3470 = vadd.f32 %v3457, %v3469
          %v3471 = vpop.f32.mrf.mxu0
          %3472 = vdwg.mxu0
          %3473 = vmatpush.bf16.msra.mxu0 %v2939
          %3474 = vmatpush.bf16.msra.mxu0 %v2931
          %3475 = vmatpush.bf16.msra.mxu0 %v2923
          %3476 = vmatpush.bf16.msra.mxu0 %v2915
          %3477 = vmatpush.bf16.msra.mxu0 %v2907
          %3478 = vmatpush.bf16.msra.mxu0 %v2899
          %3479 = vmatpush.bf16.msra.mxu0 %v2891
          %3480 = vmatpush.bf16.msra.mxu0 %v2883
          %3481 = vmatmul.bf16.gmra.mxu0 %v688
          %v3482 = vpop.f32.mrf.mxu0
          %v3483 = vadd.f32 %v3470, %v3482
          %v3484 = vpop.f32.mrf.mxu0
          %3485 = vdwg.mxu0
          %3486 = vmatpush.bf16.msra.mxu0 %v2556
          %3487 = vmatpush.bf16.msra.mxu0 %v2548
          %3488 = vmatpush.bf16.msra.mxu0 %v2540
          %3489 = vmatpush.bf16.msra.mxu0 %v2532
          %3490 = vmatpush.bf16.msra.mxu0 %v2524
          %3491 = vmatpush.bf16.msra.mxu0 %v2516
          %3492 = vmatpush.bf16.msra.mxu0 %v2508
          %3493 = vmatpush.bf16.msra.mxu0 %v2500
          %3494 = vmatmul.bf16.gmra.mxu0 %v682
          %v3495 = vpop.f32.mrf.mxu0
          %v3496 = vadd.f32 %v1140, %v3495
          %v3497 = vpop.f32.mrf.mxu0
          %3498 = vdwg.mxu0
          %3499 = vmatpush.bf16.msra.mxu0 %v2620
          %3500 = vmatpush.bf16.msra.mxu0 %v2612
          %3501 = vmatpush.bf16.msra.mxu0 %v2604
          %3502 = vmatpush.bf16.msra.mxu0 %v2596
          %3503 = vmatpush.bf16.msra.mxu0 %v2588
          %3504 = vmatpush.bf16.msra.mxu0 %v2580
          %3505 = vmatpush.bf16.msra.mxu0 %v2572
          %3506 = vmatpush.bf16.msra.mxu0 %v2564
          %3507 = vmatmul.bf16.gmra.mxu0 %v683
          %v3508 = vpop.f32.mrf.mxu0
          %v3509 = vadd.f32 %v3496, %v3508
          %v3510 = vpop.f32.mrf.mxu0
          %3511 = vdwg.mxu0
          %3512 = vmatpush.bf16.msra.mxu0 %v2684
          %3513 = vmatpush.bf16.msra.mxu0 %v2676
          %3514 = vmatpush.bf16.msra.mxu0 %v2668
          %3515 = vmatpush.bf16.msra.mxu0 %v2660
          %3516 = vmatpush.bf16.msra.mxu0 %v2652
          %3517 = vmatpush.bf16.msra.mxu0 %v2644
          %3518 = vmatpush.bf16.msra.mxu0 %v2636
          %3519 = vmatpush.bf16.msra.mxu0 %v2628
          %3520 = vmatmul.bf16.gmra.mxu0 %v684
          %v3521 = vpop.f32.mrf.mxu0
          %v3522 = vadd.f32 %v3509, %v3521
          %v3523 = vpop.f32.mrf.mxu0
          %3524 = vdwg.mxu0
          %3525 = vmatpush.bf16.msra.mxu0 %v2748
          %3526 = vmatpush.bf16.msra.mxu0 %v2740
          %3527 = vmatpush.bf16.msra.mxu0 %v2732
          %3528 = vmatpush.bf16.msra.mxu0 %v2724
          %3529 = vmatpush.bf16.msra.mxu0 %v2716
          %3530 = vmatpush.bf16.msra.mxu0 %v2708
          %3531 = vmatpush.bf16.msra.mxu0 %v2700
          %3532 = vmatpush.bf16.msra.mxu0 %v2692
          %3533 = vmatmul.bf16.gmra.mxu0 %v685
          %v3534 = vpop.f32.mrf.mxu0
          %v3535 = vadd.f32 %v3522, %v3534
          %v3536 = vpop.f32.mrf.mxu0
          %3537 = vdwg.mxu0
          %3538 = vmatpush.bf16.msra.mxu0 %v2812
          %3539 = vmatpush.bf16.msra.mxu0 %v2804
          %3540 = vmatpush.bf16.msra.mxu0 %v2796
          %3541 = vmatpush.bf16.msra.mxu0 %v2788
          %3542 = vmatpush.bf16.msra.mxu0 %v2780
          %3543 = vmatpush.bf16.msra.mxu0 %v2772
          %3544 = vmatpush.bf16.msra.mxu0 %v2764
          %3545 = vmatpush.bf16.msra.mxu0 %v2756
          %3546 = vmatmul.bf16.gmra.mxu0 %v686
          %v3547 = vpop.f32.mrf.mxu0
          %v3548 = vadd.f32 %v3535, %v3547
          %v3549 = vpop.f32.mrf.mxu0
          %3550 = vdwg.mxu0
          %3551 = vmatpush.bf16.msra.mxu0 %v2876
          %3552 = vmatpush.bf16.msra.mxu0 %v2868
          %3553 = vmatpush.bf16.msra.mxu0 %v2860
          %3554 = vmatpush.bf16.msra.mxu0 %v2852
          %3555 = vmatpush.bf16.msra.mxu0 %v2844
          %3556 = vmatpush.bf16.msra.mxu0 %v2836
          %3557 = vmatpush.bf16.msra.mxu0 %v2828
          %3558 = vmatpush.bf16.msra.mxu0 %v2820
          %3559 = vmatmul.bf16.gmra.mxu0 %v687
          %v3560 = vpop.f32.mrf.mxu0
          %v3561 = vadd.f32 %v3548, %v3560
          %v3562 = vpop.f32.mrf.mxu0
          %3563 = vdwg.mxu0
          %3564 = vmatpush.bf16.msra.mxu0 %v2940
          %3565 = vmatpush.bf16.msra.mxu0 %v2932
          %3566 = vmatpush.bf16.msra.mxu0 %v2924
          %3567 = vmatpush.bf16.msra.mxu0 %v2916
          %3568 = vmatpush.bf16.msra.mxu0 %v2908
          %3569 = vmatpush.bf16.msra.mxu0 %v2900
          %3570 = vmatpush.bf16.msra.mxu0 %v2892
          %3571 = vmatpush.bf16.msra.mxu0 %v2884
          %3572 = vmatmul.bf16.gmra.mxu0 %v688
          %v3573 = vpop.f32.mrf.mxu0
          %v3574 = vadd.f32 %v3561, %v3573
          %v3575 = vpop.f32.mrf.mxu0
          %3576 = vdwg.mxu0
          %3577 = vmatpush.bf16.msra.mxu0 %v2557
          %3578 = vmatpush.bf16.msra.mxu0 %v2549
          %3579 = vmatpush.bf16.msra.mxu0 %v2541
          %3580 = vmatpush.bf16.msra.mxu0 %v2533
          %3581 = vmatpush.bf16.msra.mxu0 %v2525
          %3582 = vmatpush.bf16.msra.mxu0 %v2517
          %3583 = vmatpush.bf16.msra.mxu0 %v2509
          %3584 = vmatpush.bf16.msra.mxu0 %v2501
          %3585 = vmatmul.bf16.gmra.mxu0 %v682
          %v3586 = vpop.f32.mrf.mxu0
          %v3587 = vadd.f32 %v1141, %v3586
          %v3588 = vpop.f32.mrf.mxu0
          %3589 = vdwg.mxu0
          %3590 = vmatpush.bf16.msra.mxu0 %v2621
          %3591 = vmatpush.bf16.msra.mxu0 %v2613
          %3592 = vmatpush.bf16.msra.mxu0 %v2605
          %3593 = vmatpush.bf16.msra.mxu0 %v2597
          %3594 = vmatpush.bf16.msra.mxu0 %v2589
          %3595 = vmatpush.bf16.msra.mxu0 %v2581
          %3596 = vmatpush.bf16.msra.mxu0 %v2573
          %3597 = vmatpush.bf16.msra.mxu0 %v2565
          %3598 = vmatmul.bf16.gmra.mxu0 %v683
          %v3599 = vpop.f32.mrf.mxu0
          %v3600 = vadd.f32 %v3587, %v3599
          %v3601 = vpop.f32.mrf.mxu0
          %3602 = vdwg.mxu0
          %3603 = vmatpush.bf16.msra.mxu0 %v2685
          %3604 = vmatpush.bf16.msra.mxu0 %v2677
          %3605 = vmatpush.bf16.msra.mxu0 %v2669
          %3606 = vmatpush.bf16.msra.mxu0 %v2661
          %3607 = vmatpush.bf16.msra.mxu0 %v2653
          %3608 = vmatpush.bf16.msra.mxu0 %v2645
          %3609 = vmatpush.bf16.msra.mxu0 %v2637
          %3610 = vmatpush.bf16.msra.mxu0 %v2629
          %3611 = vmatmul.bf16.gmra.mxu0 %v684
          %v3612 = vpop.f32.mrf.mxu0
          %v3613 = vadd.f32 %v3600, %v3612
          %v3614 = vpop.f32.mrf.mxu0
          %3615 = vdwg.mxu0
          %3616 = vmatpush.bf16.msra.mxu0 %v2749
          %3617 = vmatpush.bf16.msra.mxu0 %v2741
          %3618 = vmatpush.bf16.msra.mxu0 %v2733
          %3619 = vmatpush.bf16.msra.mxu0 %v2725
          %3620 = vmatpush.bf16.msra.mxu0 %v2717
          %3621 = vmatpush.bf16.msra.mxu0 %v2709
          %3622 = vmatpush.bf16.msra.mxu0 %v2701
          %3623 = vmatpush.bf16.msra.mxu0 %v2693
          %3624 = vmatmul.bf16.gmra.mxu0 %v685
          %v3625 = vpop.f32.mrf.mxu0
          %v3626 = vadd.f32 %v3613, %v3625
          %v3627 = vpop.f32.mrf.mxu0
          %3628 = vdwg.mxu0
          %3629 = vmatpush.bf16.msra.mxu0 %v2813
          %3630 = vmatpush.bf16.msra.mxu0 %v2805
          %3631 = vmatpush.bf16.msra.mxu0 %v2797
          %3632 = vmatpush.bf16.msra.mxu0 %v2789
          %3633 = vmatpush.bf16.msra.mxu0 %v2781
          %3634 = vmatpush.bf16.msra.mxu0 %v2773
          %3635 = vmatpush.bf16.msra.mxu0 %v2765
          %3636 = vmatpush.bf16.msra.mxu0 %v2757
          %3637 = vmatmul.bf16.gmra.mxu0 %v686
          %v3638 = vpop.f32.mrf.mxu0
          %v3639 = vadd.f32 %v3626, %v3638
          %v3640 = vpop.f32.mrf.mxu0
          %3641 = vdwg.mxu0
          %3642 = vmatpush.bf16.msra.mxu0 %v2877
          %3643 = vmatpush.bf16.msra.mxu0 %v2869
          %3644 = vmatpush.bf16.msra.mxu0 %v2861
          %3645 = vmatpush.bf16.msra.mxu0 %v2853
          %3646 = vmatpush.bf16.msra.mxu0 %v2845
          %3647 = vmatpush.bf16.msra.mxu0 %v2837
          %3648 = vmatpush.bf16.msra.mxu0 %v2829
          %3649 = vmatpush.bf16.msra.mxu0 %v2821
          %3650 = vmatmul.bf16.gmra.mxu0 %v687
          %v3651 = vpop.f32.mrf.mxu0
          %v3652 = vadd.f32 %v3639, %v3651
          %v3653 = vpop.f32.mrf.mxu0
          %3654 = vdwg.mxu0
          %3655 = vmatpush.bf16.msra.mxu0 %v2941
          %3656 = vmatpush.bf16.msra.mxu0 %v2933
          %3657 = vmatpush.bf16.msra.mxu0 %v2925
          %3658 = vmatpush.bf16.msra.mxu0 %v2917
          %3659 = vmatpush.bf16.msra.mxu0 %v2909
          %3660 = vmatpush.bf16.msra.mxu0 %v2901
          %3661 = vmatpush.bf16.msra.mxu0 %v2893
          %3662 = vmatpush.bf16.msra.mxu0 %v2885
          %3663 = vmatmul.bf16.gmra.mxu0 %v688
          %v3664 = vpop.f32.mrf.mxu0
          %v3665 = vadd.f32 %v3652, %v3664
          %v3666 = vpop.f32.mrf.mxu0
          %3667 = vdwg.mxu0
          %3668 = vmatpush.bf16.msra.mxu0 %v2558
          %3669 = vmatpush.bf16.msra.mxu0 %v2550
          %3670 = vmatpush.bf16.msra.mxu0 %v2542
          %3671 = vmatpush.bf16.msra.mxu0 %v2534
          %3672 = vmatpush.bf16.msra.mxu0 %v2526
          %3673 = vmatpush.bf16.msra.mxu0 %v2518
          %3674 = vmatpush.bf16.msra.mxu0 %v2510
          %3675 = vmatpush.bf16.msra.mxu0 %v2502
          %3676 = vmatmul.bf16.gmra.mxu0 %v682
          %v3677 = vpop.f32.mrf.mxu0
          %v3678 = vadd.f32 %v1142, %v3677
          %v3679 = vpop.f32.mrf.mxu0
          %3680 = vdwg.mxu0
          %3681 = vmatpush.bf16.msra.mxu0 %v2622
          %3682 = vmatpush.bf16.msra.mxu0 %v2614
          %3683 = vmatpush.bf16.msra.mxu0 %v2606
          %3684 = vmatpush.bf16.msra.mxu0 %v2598
          %3685 = vmatpush.bf16.msra.mxu0 %v2590
          %3686 = vmatpush.bf16.msra.mxu0 %v2582
          %3687 = vmatpush.bf16.msra.mxu0 %v2574
          %3688 = vmatpush.bf16.msra.mxu0 %v2566
          %3689 = vmatmul.bf16.gmra.mxu0 %v683
          %v3690 = vpop.f32.mrf.mxu0
          %v3691 = vadd.f32 %v3678, %v3690
          %v3692 = vpop.f32.mrf.mxu0
          %3693 = vdwg.mxu0
          %3694 = vmatpush.bf16.msra.mxu0 %v2686
          %3695 = vmatpush.bf16.msra.mxu0 %v2678
          %3696 = vmatpush.bf16.msra.mxu0 %v2670
          %3697 = vmatpush.bf16.msra.mxu0 %v2662
          %3698 = vmatpush.bf16.msra.mxu0 %v2654
          %3699 = vmatpush.bf16.msra.mxu0 %v2646
          %3700 = vmatpush.bf16.msra.mxu0 %v2638
          %3701 = vmatpush.bf16.msra.mxu0 %v2630
          %3702 = vmatmul.bf16.gmra.mxu0 %v684
          %v3703 = vpop.f32.mrf.mxu0
          %v3704 = vadd.f32 %v3691, %v3703
          %v3705 = vpop.f32.mrf.mxu0
          %3706 = vdwg.mxu0
          %3707 = vmatpush.bf16.msra.mxu0 %v2750
          %3708 = vmatpush.bf16.msra.mxu0 %v2742
          %3709 = vmatpush.bf16.msra.mxu0 %v2734
          %3710 = vmatpush.bf16.msra.mxu0 %v2726
          %3711 = vmatpush.bf16.msra.mxu0 %v2718
          %3712 = vmatpush.bf16.msra.mxu0 %v2710
          %3713 = vmatpush.bf16.msra.mxu0 %v2702
          %3714 = vmatpush.bf16.msra.mxu0 %v2694
          %3715 = vmatmul.bf16.gmra.mxu0 %v685
          %v3716 = vpop.f32.mrf.mxu0
          %v3717 = vadd.f32 %v3704, %v3716
          %v3718 = vpop.f32.mrf.mxu0
          %3719 = vdwg.mxu0
          %3720 = vmatpush.bf16.msra.mxu0 %v2814
          %3721 = vmatpush.bf16.msra.mxu0 %v2806
          %3722 = vmatpush.bf16.msra.mxu0 %v2798
          %3723 = vmatpush.bf16.msra.mxu0 %v2790
          %3724 = vmatpush.bf16.msra.mxu0 %v2782
          %3725 = vmatpush.bf16.msra.mxu0 %v2774
          %3726 = vmatpush.bf16.msra.mxu0 %v2766
          %3727 = vmatpush.bf16.msra.mxu0 %v2758
          %3728 = vmatmul.bf16.gmra.mxu0 %v686
          %v3729 = vpop.f32.mrf.mxu0
          %v3730 = vadd.f32 %v3717, %v3729
          %v3731 = vpop.f32.mrf.mxu0
          %3732 = vdwg.mxu0
          %3733 = vmatpush.bf16.msra.mxu0 %v2878
          %3734 = vmatpush.bf16.msra.mxu0 %v2870
          %3735 = vmatpush.bf16.msra.mxu0 %v2862
          %3736 = vmatpush.bf16.msra.mxu0 %v2854
          %3737 = vmatpush.bf16.msra.mxu0 %v2846
          %3738 = vmatpush.bf16.msra.mxu0 %v2838
          %3739 = vmatpush.bf16.msra.mxu0 %v2830
          %3740 = vmatpush.bf16.msra.mxu0 %v2822
          %3741 = vmatmul.bf16.gmra.mxu0 %v687
          %v3742 = vpop.f32.mrf.mxu0
          %v3743 = vadd.f32 %v3730, %v3742
          %v3744 = vpop.f32.mrf.mxu0
          %3745 = vdwg.mxu0
          %3746 = vmatpush.bf16.msra.mxu0 %v2942
          %3747 = vmatpush.bf16.msra.mxu0 %v2934
          %3748 = vmatpush.bf16.msra.mxu0 %v2926
          %3749 = vmatpush.bf16.msra.mxu0 %v2918
          %3750 = vmatpush.bf16.msra.mxu0 %v2910
          %3751 = vmatpush.bf16.msra.mxu0 %v2902
          %3752 = vmatpush.bf16.msra.mxu0 %v2894
          %3753 = vmatpush.bf16.msra.mxu0 %v2886
          %3754 = vmatmul.bf16.gmra.mxu0 %v688
          %v3755 = vpop.f32.mrf.mxu0
          %v3756 = vadd.f32 %v3743, %v3755
          %v3757 = vpop.f32.mrf.mxu0
          %3758 = vdwg.mxu0
          %3759 = vmatpush.bf16.msra.mxu0 %v2559
          %3760 = vmatpush.bf16.msra.mxu0 %v2551
          %3761 = vmatpush.bf16.msra.mxu0 %v2543
          %3762 = vmatpush.bf16.msra.mxu0 %v2535
          %3763 = vmatpush.bf16.msra.mxu0 %v2527
          %3764 = vmatpush.bf16.msra.mxu0 %v2519
          %3765 = vmatpush.bf16.msra.mxu0 %v2511
          %3766 = vmatpush.bf16.msra.mxu0 %v2503
          %3767 = vmatmul.bf16.gmra.mxu0 %v682
          %v3768 = vpop.f32.mrf.mxu0
          %v3769 = vadd.f32 %v1143, %v3768
          %v3770 = vpop.f32.mrf.mxu0
          %3771 = vdwg.mxu0
          %3772 = vmatpush.bf16.msra.mxu0 %v2623
          %3773 = vmatpush.bf16.msra.mxu0 %v2615
          %3774 = vmatpush.bf16.msra.mxu0 %v2607
          %3775 = vmatpush.bf16.msra.mxu0 %v2599
          %3776 = vmatpush.bf16.msra.mxu0 %v2591
          %3777 = vmatpush.bf16.msra.mxu0 %v2583
          %3778 = vmatpush.bf16.msra.mxu0 %v2575
          %3779 = vmatpush.bf16.msra.mxu0 %v2567
          %3780 = vmatmul.bf16.gmra.mxu0 %v683
          %v3781 = vpop.f32.mrf.mxu0
          %v3782 = vadd.f32 %v3769, %v3781
          %v3783 = vpop.f32.mrf.mxu0
          %3784 = vdwg.mxu0
          %3785 = vmatpush.bf16.msra.mxu0 %v2687
          %3786 = vmatpush.bf16.msra.mxu0 %v2679
          %3787 = vmatpush.bf16.msra.mxu0 %v2671
          %3788 = vmatpush.bf16.msra.mxu0 %v2663
          %3789 = vmatpush.bf16.msra.mxu0 %v2655
          %3790 = vmatpush.bf16.msra.mxu0 %v2647
          %3791 = vmatpush.bf16.msra.mxu0 %v2639
          %3792 = vmatpush.bf16.msra.mxu0 %v2631
          %3793 = vmatmul.bf16.gmra.mxu0 %v684
          %v3794 = vpop.f32.mrf.mxu0
          %v3795 = vadd.f32 %v3782, %v3794
          %v3796 = vpop.f32.mrf.mxu0
          %3797 = vdwg.mxu0
          %3798 = vmatpush.bf16.msra.mxu0 %v2751
          %3799 = vmatpush.bf16.msra.mxu0 %v2743
          %3800 = vmatpush.bf16.msra.mxu0 %v2735
          %3801 = vmatpush.bf16.msra.mxu0 %v2727
          %3802 = vmatpush.bf16.msra.mxu0 %v2719
          %3803 = vmatpush.bf16.msra.mxu0 %v2711
          %3804 = vmatpush.bf16.msra.mxu0 %v2703
          %3805 = vmatpush.bf16.msra.mxu0 %v2695
          %3806 = vmatmul.bf16.gmra.mxu0 %v685
          %v3807 = vpop.f32.mrf.mxu0
          %v3808 = vadd.f32 %v3795, %v3807
          %v3809 = vpop.f32.mrf.mxu0
          %3810 = vdwg.mxu0
          %3811 = vmatpush.bf16.msra.mxu0 %v2815
          %3812 = vmatpush.bf16.msra.mxu0 %v2807
          %3813 = vmatpush.bf16.msra.mxu0 %v2799
          %3814 = vmatpush.bf16.msra.mxu0 %v2791
          %3815 = vmatpush.bf16.msra.mxu0 %v2783
          %3816 = vmatpush.bf16.msra.mxu0 %v2775
          %3817 = vmatpush.bf16.msra.mxu0 %v2767
          %3818 = vmatpush.bf16.msra.mxu0 %v2759
          %3819 = vmatmul.bf16.gmra.mxu0 %v686
          %v3820 = vpop.f32.mrf.mxu0
          %v3821 = vadd.f32 %v3808, %v3820
          %v3822 = vpop.f32.mrf.mxu0
          %3823 = vdwg.mxu0
          %3824 = vmatpush.bf16.msra.mxu0 %v2879
          %3825 = vmatpush.bf16.msra.mxu0 %v2871
          %3826 = vmatpush.bf16.msra.mxu0 %v2863
          %3827 = vmatpush.bf16.msra.mxu0 %v2855
          %3828 = vmatpush.bf16.msra.mxu0 %v2847
          %3829 = vmatpush.bf16.msra.mxu0 %v2839
          %3830 = vmatpush.bf16.msra.mxu0 %v2831
          %3831 = vmatpush.bf16.msra.mxu0 %v2823
          %3832 = vmatmul.bf16.gmra.mxu0 %v687
          %v3833 = vpop.f32.mrf.mxu0
          %v3834 = vadd.f32 %v3821, %v3833
          %v3835 = vpop.f32.mrf.mxu0
          %3836 = vdwg.mxu0
          %3837 = vmatpush.bf16.msra.mxu0 %v2943
          %3838 = vmatpush.bf16.msra.mxu0 %v2935
          %3839 = vmatpush.bf16.msra.mxu0 %v2927
          %3840 = vmatpush.bf16.msra.mxu0 %v2919
          %3841 = vmatpush.bf16.msra.mxu0 %v2911
          %3842 = vmatpush.bf16.msra.mxu0 %v2903
          %3843 = vmatpush.bf16.msra.mxu0 %v2895
          %3844 = vmatpush.bf16.msra.mxu0 %v2887
          %3845 = vmatmul.bf16.gmra.mxu0 %v688
          %v3846 = vpop.f32.mrf.mxu0
          %v3847 = vadd.f32 %v3834, %v3846
          %v3848 = vpop.f32.mrf.mxu0
          %3849 = vdwg.mxu0
          %3850 = vmatpush.bf16.msra.mxu0 %v2560
          %3851 = vmatpush.bf16.msra.mxu0 %v2552
          %3852 = vmatpush.bf16.msra.mxu0 %v2544
          %3853 = vmatpush.bf16.msra.mxu0 %v2536
          %3854 = vmatpush.bf16.msra.mxu0 %v2528
          %3855 = vmatpush.bf16.msra.mxu0 %v2520
          %3856 = vmatpush.bf16.msra.mxu0 %v2512
          %3857 = vmatpush.bf16.msra.mxu0 %v2504
          %3858 = vmatmul.bf16.gmra.mxu0 %v682
          %v3859 = vpop.f32.mrf.mxu0
          %v3860 = vadd.f32 %v1144, %v3859
          %v3861 = vpop.f32.mrf.mxu0
          %3862 = vdwg.mxu0
          %3863 = vmatpush.bf16.msra.mxu0 %v2624
          %3864 = vmatpush.bf16.msra.mxu0 %v2616
          %3865 = vmatpush.bf16.msra.mxu0 %v2608
          %3866 = vmatpush.bf16.msra.mxu0 %v2600
          %3867 = vmatpush.bf16.msra.mxu0 %v2592
          %3868 = vmatpush.bf16.msra.mxu0 %v2584
          %3869 = vmatpush.bf16.msra.mxu0 %v2576
          %3870 = vmatpush.bf16.msra.mxu0 %v2568
          %3871 = vmatmul.bf16.gmra.mxu0 %v683
          %v3872 = vpop.f32.mrf.mxu0
          %v3873 = vadd.f32 %v3860, %v3872
          %v3874 = vpop.f32.mrf.mxu0
          %3875 = vdwg.mxu0
          %3876 = vmatpush.bf16.msra.mxu0 %v2688
          %3877 = vmatpush.bf16.msra.mxu0 %v2680
          %3878 = vmatpush.bf16.msra.mxu0 %v2672
          %3879 = vmatpush.bf16.msra.mxu0 %v2664
          %3880 = vmatpush.bf16.msra.mxu0 %v2656
          %3881 = vmatpush.bf16.msra.mxu0 %v2648
          %3882 = vmatpush.bf16.msra.mxu0 %v2640
          %3883 = vmatpush.bf16.msra.mxu0 %v2632
          %3884 = vmatmul.bf16.gmra.mxu0 %v684
          %v3885 = vpop.f32.mrf.mxu0
          %v3886 = vadd.f32 %v3873, %v3885
          %v3887 = vpop.f32.mrf.mxu0
          %3888 = vdwg.mxu0
          %3889 = vmatpush.bf16.msra.mxu0 %v2752
          %3890 = vmatpush.bf16.msra.mxu0 %v2744
          %3891 = vmatpush.bf16.msra.mxu0 %v2736
          %3892 = vmatpush.bf16.msra.mxu0 %v2728
          %3893 = vmatpush.bf16.msra.mxu0 %v2720
          %3894 = vmatpush.bf16.msra.mxu0 %v2712
          %3895 = vmatpush.bf16.msra.mxu0 %v2704
          %3896 = vmatpush.bf16.msra.mxu0 %v2696
          %3897 = vmatmul.bf16.gmra.mxu0 %v685
          %v3898 = vpop.f32.mrf.mxu0
          %v3899 = vadd.f32 %v3886, %v3898
          %v3900 = vpop.f32.mrf.mxu0
          %3901 = vdwg.mxu0
          %3902 = vmatpush.bf16.msra.mxu0 %v2816
          %3903 = vmatpush.bf16.msra.mxu0 %v2808
          %3904 = vmatpush.bf16.msra.mxu0 %v2800
          %3905 = vmatpush.bf16.msra.mxu0 %v2792
          %3906 = vmatpush.bf16.msra.mxu0 %v2784
          %3907 = vmatpush.bf16.msra.mxu0 %v2776
          %3908 = vmatpush.bf16.msra.mxu0 %v2768
          %3909 = vmatpush.bf16.msra.mxu0 %v2760
          %3910 = vmatmul.bf16.gmra.mxu0 %v686
          %v3911 = vpop.f32.mrf.mxu0
          %v3912 = vadd.f32 %v3899, %v3911
          %v3913 = vpop.f32.mrf.mxu0
          %3914 = vdwg.mxu0
          %3915 = vmatpush.bf16.msra.mxu0 %v2880
          %3916 = vmatpush.bf16.msra.mxu0 %v2872
          %3917 = vmatpush.bf16.msra.mxu0 %v2864
          %3918 = vmatpush.bf16.msra.mxu0 %v2856
          %3919 = vmatpush.bf16.msra.mxu0 %v2848
          %3920 = vmatpush.bf16.msra.mxu0 %v2840
          %3921 = vmatpush.bf16.msra.mxu0 %v2832
          %3922 = vmatpush.bf16.msra.mxu0 %v2824
          %3923 = vmatmul.bf16.gmra.mxu0 %v687
          %v3924 = vpop.f32.mrf.mxu0
          %v3925 = vadd.f32 %v3912, %v3924
          %v3926 = vpop.f32.mrf.mxu0
          %3927 = vdwg.mxu0
          %3928 = vmatpush.bf16.msra.mxu0 %v2944
          %3929 = vmatpush.bf16.msra.mxu0 %v2936
          %3930 = vmatpush.bf16.msra.mxu0 %v2928
          %3931 = vmatpush.bf16.msra.mxu0 %v2920
          %3932 = vmatpush.bf16.msra.mxu0 %v2912
          %3933 = vmatpush.bf16.msra.mxu0 %v2904
          %3934 = vmatpush.bf16.msra.mxu0 %v2896
          %3935 = vmatpush.bf16.msra.mxu0 %v2888
          %3936 = vmatmul.bf16.gmra.mxu0 %v688
          %v3937 = vpop.f32.mrf.mxu0
          %v3938 = vadd.f32 %v3925, %v3937
          %v3939 = vpop.f32.mrf.mxu0
          %3940 = vdwg.mxu0
          %3941 = vmatpush.bf16.msra.mxu0 %v2561
          %3942 = vmatpush.bf16.msra.mxu0 %v2553
          %3943 = vmatpush.bf16.msra.mxu0 %v2545
          %3944 = vmatpush.bf16.msra.mxu0 %v2537
          %3945 = vmatpush.bf16.msra.mxu0 %v2529
          %3946 = vmatpush.bf16.msra.mxu0 %v2521
          %3947 = vmatpush.bf16.msra.mxu0 %v2513
          %3948 = vmatpush.bf16.msra.mxu0 %v2505
          %3949 = vmatmul.bf16.gmra.mxu0 %v682
          %v3950 = vpop.f32.mrf.mxu0
          %v3951 = vadd.f32 %v1145, %v3950
          %v3952 = vpop.f32.mrf.mxu0
          %3953 = vdwg.mxu0
          %3954 = vmatpush.bf16.msra.mxu0 %v2625
          %3955 = vmatpush.bf16.msra.mxu0 %v2617
          %3956 = vmatpush.bf16.msra.mxu0 %v2609
          %3957 = vmatpush.bf16.msra.mxu0 %v2601
          %3958 = vmatpush.bf16.msra.mxu0 %v2593
          %3959 = vmatpush.bf16.msra.mxu0 %v2585
          %3960 = vmatpush.bf16.msra.mxu0 %v2577
          %3961 = vmatpush.bf16.msra.mxu0 %v2569
          %3962 = vmatmul.bf16.gmra.mxu0 %v683
          %v3963 = vpop.f32.mrf.mxu0
          %v3964 = vadd.f32 %v3951, %v3963
          %v3965 = vpop.f32.mrf.mxu0
          %3966 = vdwg.mxu0
          %3967 = vmatpush.bf16.msra.mxu0 %v2689
          %3968 = vmatpush.bf16.msra.mxu0 %v2681
          %3969 = vmatpush.bf16.msra.mxu0 %v2673
          %3970 = vmatpush.bf16.msra.mxu0 %v2665
          %3971 = vmatpush.bf16.msra.mxu0 %v2657
          %3972 = vmatpush.bf16.msra.mxu0 %v2649
          %3973 = vmatpush.bf16.msra.mxu0 %v2641
          %3974 = vmatpush.bf16.msra.mxu0 %v2633
          %3975 = vmatmul.bf16.gmra.mxu0 %v684
          %v3976 = vpop.f32.mrf.mxu0
          %v3977 = vadd.f32 %v3964, %v3976
          %v3978 = vpop.f32.mrf.mxu0
          %3979 = vdwg.mxu0
          %3980 = vmatpush.bf16.msra.mxu0 %v2753
          %3981 = vmatpush.bf16.msra.mxu0 %v2745
          %3982 = vmatpush.bf16.msra.mxu0 %v2737
          %3983 = vmatpush.bf16.msra.mxu0 %v2729
          %3984 = vmatpush.bf16.msra.mxu0 %v2721
          %3985 = vmatpush.bf16.msra.mxu0 %v2713
          %3986 = vmatpush.bf16.msra.mxu0 %v2705
          %3987 = vmatpush.bf16.msra.mxu0 %v2697
          %3988 = vmatmul.bf16.gmra.mxu0 %v685
          %v3989 = vpop.f32.mrf.mxu0
          %v3990 = vadd.f32 %v3977, %v3989
          %v3991 = vpop.f32.mrf.mxu0
          %3992 = vdwg.mxu0
          %3993 = vmatpush.bf16.msra.mxu0 %v2817
          %3994 = vmatpush.bf16.msra.mxu0 %v2809
          %3995 = vmatpush.bf16.msra.mxu0 %v2801
          %3996 = vmatpush.bf16.msra.mxu0 %v2793
          %3997 = vmatpush.bf16.msra.mxu0 %v2785
          %3998 = vmatpush.bf16.msra.mxu0 %v2777
          %3999 = vmatpush.bf16.msra.mxu0 %v2769
          %4000 = vmatpush.bf16.msra.mxu0 %v2761
          %4001 = vmatmul.bf16.gmra.mxu0 %v686
          %v4002 = vpop.f32.mrf.mxu0
          %v4003 = vadd.f32 %v3990, %v4002
          %v4004 = vpop.f32.mrf.mxu0
          %4005 = vdwg.mxu0
          %4006 = vmatpush.bf16.msra.mxu0 %v2881
          %4007 = vmatpush.bf16.msra.mxu0 %v2873
          %4008 = vmatpush.bf16.msra.mxu0 %v2865
          %4009 = vmatpush.bf16.msra.mxu0 %v2857
          %4010 = vmatpush.bf16.msra.mxu0 %v2849
          %4011 = vmatpush.bf16.msra.mxu0 %v2841
          %4012 = vmatpush.bf16.msra.mxu0 %v2833
          %4013 = vmatpush.bf16.msra.mxu0 %v2825
          %4014 = vmatmul.bf16.gmra.mxu0 %v687
          %v4015 = vpop.f32.mrf.mxu0
          %v4016 = vadd.f32 %v4003, %v4015
          %v4017 = vpop.f32.mrf.mxu0
          %4018 = vdwg.mxu0
          %4019 = vmatpush.bf16.msra.mxu0 %v2945
          %4020 = vmatpush.bf16.msra.mxu0 %v2937
          %4021 = vmatpush.bf16.msra.mxu0 %v2929
          %4022 = vmatpush.bf16.msra.mxu0 %v2921
          %4023 = vmatpush.bf16.msra.mxu0 %v2913
          %4024 = vmatpush.bf16.msra.mxu0 %v2905
          %4025 = vmatpush.bf16.msra.mxu0 %v2897
          %4026 = vmatpush.bf16.msra.mxu0 %v2889
          %4027 = vmatmul.bf16.gmra.mxu0 %v688
          %v4028 = vpop.f32.mrf.mxu0
          %v4029 = vadd.f32 %v4016, %v4028
          %v4030 = vpop.f32.mrf.mxu0
          %4031 = vdwg.mxu0
          %4032 = vmatpush.bf16.msra.mxu0 %v2562
          %4033 = vmatpush.bf16.msra.mxu0 %v2554
          %4034 = vmatpush.bf16.msra.mxu0 %v2546
          %4035 = vmatpush.bf16.msra.mxu0 %v2538
          %4036 = vmatpush.bf16.msra.mxu0 %v2530
          %4037 = vmatpush.bf16.msra.mxu0 %v2522
          %4038 = vmatpush.bf16.msra.mxu0 %v2514
          %4039 = vmatpush.bf16.msra.mxu0 %v2506
          %4040 = vmatmul.bf16.gmra.mxu0 %v682
          %v4041 = vpop.f32.mrf.mxu0
          %v4042 = vadd.f32 %v1146, %v4041
          %v4043 = vpop.f32.mrf.mxu0
          %4044 = vdwg.mxu0
          %4045 = vmatpush.bf16.msra.mxu0 %v2626
          %4046 = vmatpush.bf16.msra.mxu0 %v2618
          %4047 = vmatpush.bf16.msra.mxu0 %v2610
          %4048 = vmatpush.bf16.msra.mxu0 %v2602
          %4049 = vmatpush.bf16.msra.mxu0 %v2594
          %4050 = vmatpush.bf16.msra.mxu0 %v2586
          %4051 = vmatpush.bf16.msra.mxu0 %v2578
          %4052 = vmatpush.bf16.msra.mxu0 %v2570
          %4053 = vmatmul.bf16.gmra.mxu0 %v683
          %v4054 = vpop.f32.mrf.mxu0
          %v4055 = vadd.f32 %v4042, %v4054
          %v4056 = vpop.f32.mrf.mxu0
          %4057 = vdwg.mxu0
          %4058 = vmatpush.bf16.msra.mxu0 %v2690
          %4059 = vmatpush.bf16.msra.mxu0 %v2682
          %4060 = vmatpush.bf16.msra.mxu0 %v2674
          %4061 = vmatpush.bf16.msra.mxu0 %v2666
          %4062 = vmatpush.bf16.msra.mxu0 %v2658
          %4063 = vmatpush.bf16.msra.mxu0 %v2650
          %4064 = vmatpush.bf16.msra.mxu0 %v2642
          %4065 = vmatpush.bf16.msra.mxu0 %v2634
          %4066 = vmatmul.bf16.gmra.mxu0 %v684
          %v4067 = vpop.f32.mrf.mxu0
          %v4068 = vadd.f32 %v4055, %v4067
          %v4069 = vpop.f32.mrf.mxu0
          %4070 = vdwg.mxu0
          %4071 = vmatpush.bf16.msra.mxu0 %v2754
          %4072 = vmatpush.bf16.msra.mxu0 %v2746
          %4073 = vmatpush.bf16.msra.mxu0 %v2738
          %4074 = vmatpush.bf16.msra.mxu0 %v2730
          %4075 = vmatpush.bf16.msra.mxu0 %v2722
          %4076 = vmatpush.bf16.msra.mxu0 %v2714
          %4077 = vmatpush.bf16.msra.mxu0 %v2706
          %4078 = vmatpush.bf16.msra.mxu0 %v2698
          %4079 = vmatmul.bf16.gmra.mxu0 %v685
          %v4080 = vpop.f32.mrf.mxu0
          %v4081 = vadd.f32 %v4068, %v4080
          %v4082 = vpop.f32.mrf.mxu0
          %4083 = vdwg.mxu0
          %4084 = vmatpush.bf16.msra.mxu0 %v2818
          %4085 = vmatpush.bf16.msra.mxu0 %v2810
          %4086 = vmatpush.bf16.msra.mxu0 %v2802
          %4087 = vmatpush.bf16.msra.mxu0 %v2794
          %4088 = vmatpush.bf16.msra.mxu0 %v2786
          %4089 = vmatpush.bf16.msra.mxu0 %v2778
          %4090 = vmatpush.bf16.msra.mxu0 %v2770
          %4091 = vmatpush.bf16.msra.mxu0 %v2762
          %4092 = vmatmul.bf16.gmra.mxu0 %v686
          %v4093 = vpop.f32.mrf.mxu0
          %v4094 = vadd.f32 %v4081, %v4093
          %v4095 = vpop.f32.mrf.mxu0
          %4096 = vdwg.mxu0
          %4097 = vmatpush.bf16.msra.mxu0 %v2882
          %4098 = vmatpush.bf16.msra.mxu0 %v2874
          %4099 = vmatpush.bf16.msra.mxu0 %v2866
          %4100 = vmatpush.bf16.msra.mxu0 %v2858
          %4101 = vmatpush.bf16.msra.mxu0 %v2850
          %4102 = vmatpush.bf16.msra.mxu0 %v2842
          %4103 = vmatpush.bf16.msra.mxu0 %v2834
          %4104 = vmatpush.bf16.msra.mxu0 %v2826
          %4105 = vmatmul.bf16.gmra.mxu0 %v687
          %v4106 = vpop.f32.mrf.mxu0
          %v4107 = vadd.f32 %v4094, %v4106
          %v4108 = vpop.f32.mrf.mxu0
          %4109 = vdwg.mxu0
          %4110 = vmatpush.bf16.msra.mxu0 %v2946
          %4111 = vmatpush.bf16.msra.mxu0 %v2938
          %4112 = vmatpush.bf16.msra.mxu0 %v2930
          %4113 = vmatpush.bf16.msra.mxu0 %v2922
          %4114 = vmatpush.bf16.msra.mxu0 %v2914
          %4115 = vmatpush.bf16.msra.mxu0 %v2906
          %4116 = vmatpush.bf16.msra.mxu0 %v2898
          %4117 = vmatpush.bf16.msra.mxu0 %v2890
          %4118 = vmatmul.bf16.gmra.mxu0 %v688
          %v4119 = vpop.f32.mrf.mxu0
          %v4120 = vadd.f32 %v4107, %v4119
          %v4121 = vpop.f32.mrf.mxu0
          %4122 = vdwg.mxu0
          %v4123 = vpack.c.bf16 %v3483, %v3483
          %v4124 = vpack.c.bf16 %v3574, %v3574
          %v4125 = vpack.c.bf16 %v3665, %v3665
          %v4126 = vpack.c.bf16 %v3756, %v3756
          %v4127 = vpack.c.bf16 %v3847, %v3847
          %v4128 = vpack.c.bf16 %v3938, %v3938
          %v4129 = vpack.c.bf16 %v4029, %v4029
          %v4130 = vpack.c.bf16 %v4120, %v4120
          %v4131 = vld [vmem:[#allocation9] sm:$0xf]
          %v4132 = vld [vmem:[#allocation9 + $0x4] sm:$0xf]
          %v4133 = vld [vmem:[#allocation9 + $0x8] sm:$0xf]
          %v4134 = vld [vmem:[#allocation9 + $0xc] sm:$0xf]
          %v4135 = vld [vmem:[#allocation9 + $0x10] sm:$0xf]
          %v4136 = vld [vmem:[#allocation9 + $0x14] sm:$0xf]
          %v4137 = vld [vmem:[#allocation9 + $0x18] sm:$0xf]
          %v4138 = vld [vmem:[#allocation9 + $0x1c] sm:$0xf]
          %v4139 = vld [vmem:[#allocation9 + $0x20] sm:$0xf]
          %v4140 = vld [vmem:[#allocation9 + $0x24] sm:$0xf]
          %v4141 = vld [vmem:[#allocation9 + $0x28] sm:$0xf]
          %v4142 = vld [vmem:[#allocation9 + $0x2c] sm:$0xf]
          %v4143 = vld [vmem:[#allocation9 + $0x30] sm:$0xf]
          %v4144 = vld [vmem:[#allocation9 + $0x34] sm:$0xf]
          %v4145 = vld [vmem:[#allocation9 + $0x38] sm:$0xf]
          %v4146 = vld [vmem:[#allocation9 + $0x3c] sm:$0xf]
          %v4147 = vld [vmem:[#allocation9 + $0x40] sm:$0xf]
          %v4148 = vld [vmem:[#allocation9 + $0x44] sm:$0xf]
          %v4149 = vld [vmem:[#allocation9 + $0x48] sm:$0xf]
          %v4150 = vld [vmem:[#allocation9 + $0x4c] sm:$0xf]
          %v4151 = vld [vmem:[#allocation9 + $0x50] sm:$0xf]
          %v4152 = vld [vmem:[#allocation9 + $0x54] sm:$0xf]
          %v4153 = vld [vmem:[#allocation9 + $0x58] sm:$0xf]
          %v4154 = vld [vmem:[#allocation9 + $0x5c] sm:$0xf]
          %v4155 = vld [vmem:[#allocation9 + $0x60] sm:$0xf]
          %v4156 = vld [vmem:[#allocation9 + $0x64] sm:$0xf]
          %v4157 = vld [vmem:[#allocation9 + $0x68] sm:$0xf]
          %v4158 = vld [vmem:[#allocation9 + $0x6c] sm:$0xf]
          %v4159 = vld [vmem:[#allocation9 + $0x70] sm:$0xf]
          %v4160 = vld [vmem:[#allocation9 + $0x74] sm:$0xf]
          %v4161 = vld [vmem:[#allocation9 + $0x78] sm:$0xf]
          %v4162 = vld [vmem:[#allocation9 + $0x7c] sm:$0xf]
          %v4163 = vld [vmem:[#allocation9 + $0x80] sm:$0xf]
          %v4164 = vld [vmem:[#allocation9 + $0x84] sm:$0xf]
          %v4165 = vld [vmem:[#allocation9 + $0x88] sm:$0xf]
          %v4166 = vld [vmem:[#allocation9 + $0x8c] sm:$0xf]
          %v4167 = vld [vmem:[#allocation9 + $0x90] sm:$0xf]
          %v4168 = vld [vmem:[#allocation9 + $0x94] sm:$0xf]
          %v4169 = vld [vmem:[#allocation9 + $0x98] sm:$0xf]
          %v4170 = vld [vmem:[#allocation9 + $0x9c] sm:$0xf]
          %v4171 = vld [vmem:[#allocation9 + $0xa0] sm:$0xf]
          %v4172 = vld [vmem:[#allocation9 + $0xa4] sm:$0xf]
          %v4173 = vld [vmem:[#allocation9 + $0xa8] sm:$0xf]
          %v4174 = vld [vmem:[#allocation9 + $0xac] sm:$0xf]
          %v4175 = vld [vmem:[#allocation9 + $0xb0] sm:$0xf]
          %v4176 = vld [vmem:[#allocation9 + $0xb4] sm:$0xf]
          %v4177 = vld [vmem:[#allocation9 + $0xb8] sm:$0xf]
          %v4178 = vld [vmem:[#allocation9 + $0xbc] sm:$0xf]
          %v4179 = vld [vmem:[#allocation9 + $0xc0] sm:$0xf]
          %v4180 = vld [vmem:[#allocation9 + $0xc4] sm:$0xf]
          %v4181 = vld [vmem:[#allocation9 + $0xc8] sm:$0xf]
          %v4182 = vld [vmem:[#allocation9 + $0xcc] sm:$0xf]
          %v4183 = vld [vmem:[#allocation9 + $0xd0] sm:$0xf]
          %v4184 = vld [vmem:[#allocation9 + $0xd4] sm:$0xf]
          %v4185 = vld [vmem:[#allocation9 + $0xd8] sm:$0xf]
          %v4186 = vld [vmem:[#allocation9 + $0xdc] sm:$0xf]
          %v4187 = vld [vmem:[#allocation9 + $0xe0] sm:$0xf]
          %v4188 = vld [vmem:[#allocation9 + $0xe4] sm:$0xf]
          %v4189 = vld [vmem:[#allocation9 + $0xe8] sm:$0xf]
          %v4190 = vld [vmem:[#allocation9 + $0xec] sm:$0xf]
          %v4191 = vld [vmem:[#allocation9 + $0xf0] sm:$0xf]
          %v4192 = vld [vmem:[#allocation9 + $0xf4] sm:$0xf]
          %v4193 = vld [vmem:[#allocation9 + $0xf8] sm:$0xf]
          %v4194 = vld [vmem:[#allocation9 + $0xfc] sm:$0xf]
          %v4195 = vld [vmem:[#allocation9 + $0x100] sm:$0xf]
          %v4196 = vld [vmem:[#allocation9 + $0x104] sm:$0xf]
          %v4197 = vld [vmem:[#allocation9 + $0x108] sm:$0xf]
          %v4198 = vld [vmem:[#allocation9 + $0x10c] sm:$0xf]
          %v4199 = vld [vmem:[#allocation9 + $0x110] sm:$0xf]
          %v4200 = vld [vmem:[#allocation9 + $0x114] sm:$0xf]
          %v4201 = vld [vmem:[#allocation9 + $0x118] sm:$0xf]
          %v4202 = vld [vmem:[#allocation9 + $0x11c] sm:$0xf]
          %v4203 = vld [vmem:[#allocation9 + $0x120] sm:$0xf]
          %v4204 = vld [vmem:[#allocation9 + $0x124] sm:$0xf]
          %v4205 = vld [vmem:[#allocation9 + $0x128] sm:$0xf]
          %v4206 = vld [vmem:[#allocation9 + $0x12c] sm:$0xf]
          %v4207 = vld [vmem:[#allocation9 + $0x130] sm:$0xf]
          %v4208 = vld [vmem:[#allocation9 + $0x134] sm:$0xf]
          %v4209 = vld [vmem:[#allocation9 + $0x138] sm:$0xf]
          %v4210 = vld [vmem:[#allocation9 + $0x13c] sm:$0xf]
          %v4211 = vld [vmem:[#allocation9 + $0x140] sm:$0xf]
          %v4212 = vld [vmem:[#allocation9 + $0x144] sm:$0xf]
          %v4213 = vld [vmem:[#allocation9 + $0x148] sm:$0xf]
          %v4214 = vld [vmem:[#allocation9 + $0x14c] sm:$0xf]
          %v4215 = vld [vmem:[#allocation9 + $0x150] sm:$0xf]
          %v4216 = vld [vmem:[#allocation9 + $0x154] sm:$0xf]
          %v4217 = vld [vmem:[#allocation9 + $0x158] sm:$0xf]
          %v4218 = vld [vmem:[#allocation9 + $0x15c] sm:$0xf]
          %v4219 = vld [vmem:[#allocation9 + $0x160] sm:$0xf]
          %v4220 = vld [vmem:[#allocation9 + $0x164] sm:$0xf]
          %v4221 = vld [vmem:[#allocation9 + $0x168] sm:$0xf]
          %v4222 = vld [vmem:[#allocation9 + $0x16c] sm:$0xf]
          %v4223 = vld [vmem:[#allocation9 + $0x170] sm:$0xf]
          %v4224 = vld [vmem:[#allocation9 + $0x174] sm:$0xf]
          %v4225 = vld [vmem:[#allocation9 + $0x178] sm:$0xf]
          %v4226 = vld [vmem:[#allocation9 + $0x17c] sm:$0xf]
          %v4227 = vld [vmem:[#allocation9 + $0x180] sm:$0xf]
          %v4228 = vld [vmem:[#allocation9 + $0x184] sm:$0xf]
          %v4229 = vld [vmem:[#allocation9 + $0x188] sm:$0xf]
          %v4230 = vld [vmem:[#allocation9 + $0x18c] sm:$0xf]
          %v4231 = vld [vmem:[#allocation9 + $0x190] sm:$0xf]
          %v4232 = vld [vmem:[#allocation9 + $0x194] sm:$0xf]
          %v4233 = vld [vmem:[#allocation9 + $0x198] sm:$0xf]
          %v4234 = vld [vmem:[#allocation9 + $0x19c] sm:$0xf]
          %v4235 = vld [vmem:[#allocation9 + $0x1a0] sm:$0xf]
          %v4236 = vld [vmem:[#allocation9 + $0x1a4] sm:$0xf]
          %v4237 = vld [vmem:[#allocation9 + $0x1a8] sm:$0xf]
          %v4238 = vld [vmem:[#allocation9 + $0x1ac] sm:$0xf]
          %v4239 = vld [vmem:[#allocation9 + $0x1b0] sm:$0xf]
          %v4240 = vld [vmem:[#allocation9 + $0x1b4] sm:$0xf]
          %v4241 = vld [vmem:[#allocation9 + $0x1b8] sm:$0xf]
          %v4242 = vld [vmem:[#allocation9 + $0x1bc] sm:$0xf]
          %v4243 = vld [vmem:[#allocation9 + $0x1c0] sm:$0xf]
          %v4244 = vld [vmem:[#allocation9 + $0x1c4] sm:$0xf]
          %v4245 = vld [vmem:[#allocation9 + $0x1c8] sm:$0xf]
          %v4246 = vld [vmem:[#allocation9 + $0x1cc] sm:$0xf]
          %v4247 = vld [vmem:[#allocation9 + $0x1d0] sm:$0xf]
          %v4248 = vld [vmem:[#allocation9 + $0x1d4] sm:$0xf]
          %v4249 = vld [vmem:[#allocation9 + $0x1d8] sm:$0xf]
          %v4250 = vld [vmem:[#allocation9 + $0x1dc] sm:$0xf]
          %v4251 = vld [vmem:[#allocation9 + $0x1e0] sm:$0xf]
          %v4252 = vld [vmem:[#allocation9 + $0x1e4] sm:$0xf]
          %v4253 = vld [vmem:[#allocation9 + $0x1e8] sm:$0xf]
          %v4254 = vld [vmem:[#allocation9 + $0x1ec] sm:$0xf]
          %v4255 = vld [vmem:[#allocation9 + $0x1f0] sm:$0xf]
          %v4256 = vld [vmem:[#allocation9 + $0x1f4] sm:$0xf]
          %v4257 = vld [vmem:[#allocation9 + $0x1f8] sm:$0xf]
          %v4258 = vld [vmem:[#allocation9 + $0x1fc] sm:$0xf]
          %v4259 = vld [vmem:[#allocation10] sm:$0x1]
          %v4261 = vperm.slane %v4259, 0
          %v4391 = vunpack.c.l.b16 %v4131
          %v4392 = vunpack.c.l.b16 %v4132
          %v4393 = vunpack.c.l.b16 %v4133
          %v4394 = vunpack.c.l.b16 %v4134
          %v4395 = vunpack.c.l.b16 %v4135
          %v4396 = vunpack.c.l.b16 %v4136
          %v4397 = vunpack.c.l.b16 %v4137
          %v4398 = vunpack.c.l.b16 %v4138
          %v4399 = vunpack.c.l.b16 %v4139
          %v4400 = vunpack.c.l.b16 %v4140
          %v4401 = vunpack.c.l.b16 %v4141
          %v4402 = vunpack.c.l.b16 %v4142
          %v4403 = vunpack.c.l.b16 %v4143
          %v4404 = vunpack.c.l.b16 %v4144
          %v4405 = vunpack.c.l.b16 %v4145
          %v4406 = vunpack.c.l.b16 %v4146
          %v4407 = vunpack.c.l.b16 %v4147
          %v4408 = vunpack.c.l.b16 %v4148
          %v4409 = vunpack.c.l.b16 %v4149
          %v4410 = vunpack.c.l.b16 %v4150
          %v4411 = vunpack.c.l.b16 %v4151
          %v4412 = vunpack.c.l.b16 %v4152
          %v4413 = vunpack.c.l.b16 %v4153
          %v4414 = vunpack.c.l.b16 %v4154
          %v4415 = vunpack.c.l.b16 %v4155
          %v4416 = vunpack.c.l.b16 %v4156
          %v4417 = vunpack.c.l.b16 %v4157
          %v4418 = vunpack.c.l.b16 %v4158
          %v4419 = vunpack.c.l.b16 %v4159
          %v4420 = vunpack.c.l.b16 %v4160
          %v4421 = vunpack.c.l.b16 %v4161
          %v4422 = vunpack.c.l.b16 %v4162
          %v4423 = vunpack.c.l.b16 %v4163
          %v4424 = vunpack.c.l.b16 %v4164
          %v4425 = vunpack.c.l.b16 %v4165
          %v4426 = vunpack.c.l.b16 %v4166
          %v4427 = vunpack.c.l.b16 %v4167
          %v4428 = vunpack.c.l.b16 %v4168
          %v4429 = vunpack.c.l.b16 %v4169
          %v4430 = vunpack.c.l.b16 %v4170
          %v4431 = vunpack.c.l.b16 %v4171
          %v4432 = vunpack.c.l.b16 %v4172
          %v4433 = vunpack.c.l.b16 %v4173
          %v4434 = vunpack.c.l.b16 %v4174
          %v4435 = vunpack.c.l.b16 %v4175
          %v4436 = vunpack.c.l.b16 %v4176
          %v4437 = vunpack.c.l.b16 %v4177
          %v4438 = vunpack.c.l.b16 %v4178
          %v4439 = vunpack.c.l.b16 %v4179
          %v4440 = vunpack.c.l.b16 %v4180
          %v4441 = vunpack.c.l.b16 %v4181
          %v4442 = vunpack.c.l.b16 %v4182
          %v4443 = vunpack.c.l.b16 %v4183
          %v4444 = vunpack.c.l.b16 %v4184
          %v4445 = vunpack.c.l.b16 %v4185
          %v4446 = vunpack.c.l.b16 %v4186
          %v4447 = vunpack.c.l.b16 %v4187
          %v4448 = vunpack.c.l.b16 %v4188
          %v4449 = vunpack.c.l.b16 %v4189
          %v4450 = vunpack.c.l.b16 %v4190
          %v4451 = vunpack.c.l.b16 %v4191
          %v4452 = vunpack.c.l.b16 %v4192
          %v4453 = vunpack.c.l.b16 %v4193
          %v4454 = vunpack.c.l.b16 %v4194
          %v4455 = vunpack.c.l.b16 %v4195
          %v4456 = vunpack.c.l.b16 %v4196
          %v4457 = vunpack.c.l.b16 %v4197
          %v4458 = vunpack.c.l.b16 %v4198
          %v4459 = vunpack.c.l.b16 %v4199
          %v4460 = vunpack.c.l.b16 %v4200
          %v4461 = vunpack.c.l.b16 %v4201
          %v4462 = vunpack.c.l.b16 %v4202
          %v4463 = vunpack.c.l.b16 %v4203
          %v4464 = vunpack.c.l.b16 %v4204
          %v4465 = vunpack.c.l.b16 %v4205
          %v4466 = vunpack.c.l.b16 %v4206
          %v4467 = vunpack.c.l.b16 %v4207
          %v4468 = vunpack.c.l.b16 %v4208
          %v4469 = vunpack.c.l.b16 %v4209
          %v4470 = vunpack.c.l.b16 %v4210
          %v4471 = vunpack.c.l.b16 %v4211
          %v4472 = vunpack.c.l.b16 %v4212
          %v4473 = vunpack.c.l.b16 %v4213
          %v4474 = vunpack.c.l.b16 %v4214
          %v4475 = vunpack.c.l.b16 %v4215
          %v4476 = vunpack.c.l.b16 %v4216
          %v4477 = vunpack.c.l.b16 %v4217
          %v4478 = vunpack.c.l.b16 %v4218
          %v4479 = vunpack.c.l.b16 %v4219
          %v4480 = vunpack.c.l.b16 %v4220
          %v4481 = vunpack.c.l.b16 %v4221
          %v4482 = vunpack.c.l.b16 %v4222
          %v4483 = vunpack.c.l.b16 %v4223
          %v4484 = vunpack.c.l.b16 %v4224
          %v4485 = vunpack.c.l.b16 %v4225
          %v4486 = vunpack.c.l.b16 %v4226
          %v4487 = vunpack.c.l.b16 %v4227
          %v4488 = vunpack.c.l.b16 %v4228
          %v4489 = vunpack.c.l.b16 %v4229
          %v4490 = vunpack.c.l.b16 %v4230
          %v4491 = vunpack.c.l.b16 %v4231
          %v4492 = vunpack.c.l.b16 %v4232
          %v4493 = vunpack.c.l.b16 %v4233
          %v4494 = vunpack.c.l.b16 %v4234
          %v4495 = vunpack.c.l.b16 %v4235
          %v4496 = vunpack.c.l.b16 %v4236
          %v4497 = vunpack.c.l.b16 %v4237
          %v4498 = vunpack.c.l.b16 %v4238
          %v4499 = vunpack.c.l.b16 %v4239
          %v4500 = vunpack.c.l.b16 %v4240
          %v4501 = vunpack.c.l.b16 %v4241
          %v4502 = vunpack.c.l.b16 %v4242
          %v4503 = vunpack.c.l.b16 %v4243
          %v4504 = vunpack.c.l.b16 %v4244
          %v4505 = vunpack.c.l.b16 %v4245
          %v4506 = vunpack.c.l.b16 %v4246
          %v4507 = vunpack.c.l.b16 %v4247
          %v4508 = vunpack.c.l.b16 %v4248
          %v4509 = vunpack.c.l.b16 %v4249
          %v4510 = vunpack.c.l.b16 %v4250
          %v4511 = vunpack.c.l.b16 %v4251
          %v4512 = vunpack.c.l.b16 %v4252
          %v4513 = vunpack.c.l.b16 %v4253
          %v4514 = vunpack.c.l.b16 %v4254
          %v4515 = vunpack.c.l.b16 %v4255
          %v4516 = vunpack.c.l.b16 %v4256
          %v4517 = vunpack.c.l.b16 %v4257
          %v4518 = vunpack.c.l.b16 %v4258
          %v4519 = vpack.c.b16 %v4392, %v4391
          %v4520 = vpack.c.b16 %v4394, %v4393
          %v4521 = vpack.c.b16 %v4396, %v4395
          %v4522 = vpack.c.b16 %v4398, %v4397
          %v4523 = vpack.c.b16 %v4400, %v4399
          %v4524 = vpack.c.b16 %v4402, %v4401
          %v4525 = vpack.c.b16 %v4404, %v4403
          %v4526 = vpack.c.b16 %v4406, %v4405
          %v4527 = vpack.c.b16 %v4408, %v4407
          %v4528 = vpack.c.b16 %v4410, %v4409
          %v4529 = vpack.c.b16 %v4412, %v4411
          %v4530 = vpack.c.b16 %v4414, %v4413
          %v4531 = vpack.c.b16 %v4416, %v4415
          %v4532 = vpack.c.b16 %v4418, %v4417
          %v4533 = vpack.c.b16 %v4420, %v4419
          %v4534 = vpack.c.b16 %v4422, %v4421
          %v4535 = vpack.c.b16 %v4424, %v4423
          %v4536 = vpack.c.b16 %v4426, %v4425
          %v4537 = vpack.c.b16 %v4428, %v4427
          %v4538 = vpack.c.b16 %v4430, %v4429
          %v4539 = vpack.c.b16 %v4432, %v4431
          %v4540 = vpack.c.b16 %v4434, %v4433
          %v4541 = vpack.c.b16 %v4436, %v4435
          %v4542 = vpack.c.b16 %v4438, %v4437
          %v4543 = vpack.c.b16 %v4440, %v4439
          %v4544 = vpack.c.b16 %v4442, %v4441
          %v4545 = vpack.c.b16 %v4444, %v4443
          %v4546 = vpack.c.b16 %v4446, %v4445
          %v4547 = vpack.c.b16 %v4448, %v4447
          %v4548 = vpack.c.b16 %v4450, %v4449
          %v4549 = vpack.c.b16 %v4452, %v4451
          %v4550 = vpack.c.b16 %v4454, %v4453
          %v4551 = vpack.c.b16 %v4456, %v4455
          %v4552 = vpack.c.b16 %v4458, %v4457
          %v4553 = vpack.c.b16 %v4460, %v4459
          %v4554 = vpack.c.b16 %v4462, %v4461
          %v4555 = vpack.c.b16 %v4464, %v4463
          %v4556 = vpack.c.b16 %v4466, %v4465
          %v4557 = vpack.c.b16 %v4468, %v4467
          %v4558 = vpack.c.b16 %v4470, %v4469
          %v4559 = vpack.c.b16 %v4472, %v4471
          %v4560 = vpack.c.b16 %v4474, %v4473
          %v4561 = vpack.c.b16 %v4476, %v4475
          %v4562 = vpack.c.b16 %v4478, %v4477
          %v4563 = vpack.c.b16 %v4480, %v4479
          %v4564 = vpack.c.b16 %v4482, %v4481
          %v4565 = vpack.c.b16 %v4484, %v4483
          %v4566 = vpack.c.b16 %v4486, %v4485
          %v4567 = vpack.c.b16 %v4488, %v4487
          %v4568 = vpack.c.b16 %v4490, %v4489
          %v4569 = vpack.c.b16 %v4492, %v4491
          %v4570 = vpack.c.b16 %v4494, %v4493
          %v4571 = vpack.c.b16 %v4496, %v4495
          %v4572 = vpack.c.b16 %v4498, %v4497
          %v4573 = vpack.c.b16 %v4500, %v4499
          %v4574 = vpack.c.b16 %v4502, %v4501
          %v4575 = vpack.c.b16 %v4504, %v4503
          %v4576 = vpack.c.b16 %v4506, %v4505
          %v4577 = vpack.c.b16 %v4508, %v4507
          %v4578 = vpack.c.b16 %v4510, %v4509
          %v4579 = vpack.c.b16 %v4512, %v4511
          %v4580 = vpack.c.b16 %v4514, %v4513
          %v4581 = vpack.c.b16 %v4516, %v4515
          %v4582 = vpack.c.b16 %v4518, %v4517
          %4647 = vmatpush.bf16.msra.mxu0 %v4526
          %4648 = vmatpush.bf16.msra.mxu0 %v4525
          %4649 = vmatpush.bf16.msra.mxu0 %v4524
          %4650 = vmatpush.bf16.msra.mxu0 %v4523
          %4651 = vmatpush.bf16.msra.mxu0 %v4522
          %4652 = vmatpush.bf16.msra.mxu0 %v4521
          %4653 = vmatpush.bf16.msra.mxu0 %v4520
          %4654 = vmatpush.bf16.msra.mxu0 %v4519
          %4655 = vmatmul.bf16.gmra.mxu0 %v4123
          %v4656 = vpop.f32.mrf.mxu0
          %v4657 = vadd.f32 %v4261, %v4656
          %v4658 = vpop.f32.mrf.mxu0
          %4659 = vdwg.mxu0
          %4660 = vmatpush.bf16.msra.mxu0 %v4534
          %4661 = vmatpush.bf16.msra.mxu0 %v4533
          %4662 = vmatpush.bf16.msra.mxu0 %v4532
          %4663 = vmatpush.bf16.msra.mxu0 %v4531
          %4664 = vmatpush.bf16.msra.mxu0 %v4530
          %4665 = vmatpush.bf16.msra.mxu0 %v4529
          %4666 = vmatpush.bf16.msra.mxu0 %v4528
          %4667 = vmatpush.bf16.msra.mxu0 %v4527
          %4668 = vmatmul.bf16.gmra.mxu0 %v4124
          %v4669 = vpop.f32.mrf.mxu0
          %v4670 = vadd.f32 %v4657, %v4669
          %v4671 = vpop.f32.mrf.mxu0
          %4672 = vdwg.mxu0
          %4673 = vmatpush.bf16.msra.mxu0 %v4542
          %4674 = vmatpush.bf16.msra.mxu0 %v4541
          %4675 = vmatpush.bf16.msra.mxu0 %v4540
          %4676 = vmatpush.bf16.msra.mxu0 %v4539
          %4677 = vmatpush.bf16.msra.mxu0 %v4538
          %4678 = vmatpush.bf16.msra.mxu0 %v4537
          %4679 = vmatpush.bf16.msra.mxu0 %v4536
          %4680 = vmatpush.bf16.msra.mxu0 %v4535
          %4681 = vmatmul.bf16.gmra.mxu0 %v4125
          %v4682 = vpop.f32.mrf.mxu0
          %v4683 = vadd.f32 %v4670, %v4682
          %v4684 = vpop.f32.mrf.mxu0
          %4685 = vdwg.mxu0
          %4686 = vmatpush.bf16.msra.mxu0 %v4550
          %4687 = vmatpush.bf16.msra.mxu0 %v4549
          %4688 = vmatpush.bf16.msra.mxu0 %v4548
          %4689 = vmatpush.bf16.msra.mxu0 %v4547
          %4690 = vmatpush.bf16.msra.mxu0 %v4546
          %4691 = vmatpush.bf16.msra.mxu0 %v4545
          %4692 = vmatpush.bf16.msra.mxu0 %v4544
          %4693 = vmatpush.bf16.msra.mxu0 %v4543
          %4694 = vmatmul.bf16.gmra.mxu0 %v4126
          %v4695 = vpop.f32.mrf.mxu0
          %v4696 = vadd.f32 %v4683, %v4695
          %v4697 = vpop.f32.mrf.mxu0
          %4698 = vdwg.mxu0
          %4699 = vmatpush.bf16.msra.mxu0 %v4558
          %4700 = vmatpush.bf16.msra.mxu0 %v4557
          %4701 = vmatpush.bf16.msra.mxu0 %v4556
          %4702 = vmatpush.bf16.msra.mxu0 %v4555
          %4703 = vmatpush.bf16.msra.mxu0 %v4554
          %4704 = vmatpush.bf16.msra.mxu0 %v4553
          %4705 = vmatpush.bf16.msra.mxu0 %v4552
          %4706 = vmatpush.bf16.msra.mxu0 %v4551
          %4707 = vmatmul.bf16.gmra.mxu0 %v4127
          %v4708 = vpop.f32.mrf.mxu0
          %v4709 = vadd.f32 %v4696, %v4708
          %v4710 = vpop.f32.mrf.mxu0
          %4711 = vdwg.mxu0
          %4712 = vmatpush.bf16.msra.mxu0 %v4566
          %4713 = vmatpush.bf16.msra.mxu0 %v4565
          %4714 = vmatpush.bf16.msra.mxu0 %v4564
          %4715 = vmatpush.bf16.msra.mxu0 %v4563
          %4716 = vmatpush.bf16.msra.mxu0 %v4562
          %4717 = vmatpush.bf16.msra.mxu0 %v4561
          %4718 = vmatpush.bf16.msra.mxu0 %v4560
          %4719 = vmatpush.bf16.msra.mxu0 %v4559
          %4720 = vmatmul.bf16.gmra.mxu0 %v4128
          %v4721 = vpop.f32.mrf.mxu0
          %v4722 = vadd.f32 %v4709, %v4721
          %v4723 = vpop.f32.mrf.mxu0
          %4724 = vdwg.mxu0
          %4725 = vmatpush.bf16.msra.mxu0 %v4574
          %4726 = vmatpush.bf16.msra.mxu0 %v4573
          %4727 = vmatpush.bf16.msra.mxu0 %v4572
          %4728 = vmatpush.bf16.msra.mxu0 %v4571
          %4729 = vmatpush.bf16.msra.mxu0 %v4570
          %4730 = vmatpush.bf16.msra.mxu0 %v4569
          %4731 = vmatpush.bf16.msra.mxu0 %v4568
          %4732 = vmatpush.bf16.msra.mxu0 %v4567
          %4733 = vmatmul.bf16.gmra.mxu0 %v4129
          %v4734 = vpop.f32.mrf.mxu0
          %v4735 = vadd.f32 %v4722, %v4734
          %v4736 = vpop.f32.mrf.mxu0
          %4737 = vdwg.mxu0
          %4738 = vmatpush.bf16.msra.mxu0 %v4582
          %4739 = vmatpush.bf16.msra.mxu0 %v4581
          %4740 = vmatpush.bf16.msra.mxu0 %v4580
          %4741 = vmatpush.bf16.msra.mxu0 %v4579
          %4742 = vmatpush.bf16.msra.mxu0 %v4578
          %4743 = vmatpush.bf16.msra.mxu0 %v4577
          %4744 = vmatpush.bf16.msra.mxu0 %v4576
          %4745 = vmatpush.bf16.msra.mxu0 %v4575
          %4746 = vmatmul.bf16.gmra.mxu0 %v4130
          %v4747 = vpop.f32.mrf.mxu0
          %v4748 = vadd.f32 %v4735, %v4747
          %v4749 = vpop.f32.mrf.mxu0
          %4750 = vdwg.mxu0
          %4751 = vmax.xlane.f32.xlu0 %v4748
          %v4752 = vpop.xlane.xlu0 %4751
          %v4753 = vsub.f32 %v4748, %v4752
          %v4754 = vmul.f32 %v4753, 1.442695
          %v4755 = vpow.pop %v4754
          %4756 = vadd.xlane.f32.xlu0 %v4755
          %v4757 = vpop.xlane.xlu0 %4756
          %v4758 = vrcp.pop %v4757
          %v4759 = vmul.f32 %v4755, %v4758
          %4760 = vst [vmem:[%s13] sm:$0xff] %v4759
          %v4761 = vadd.f32 %v3483, %v3574
          %v4762 = vadd.f32 %v4761, %v3665
          %v4763 = vadd.f32 %v4762, %v3756
          %v4764 = vadd.f32 %v4763, %v3847
          %v4765 = vadd.f32 %v4764, %v3938
          %v4766 = vadd.f32 %v4765, %v4029
          %v4767 = vadd.f32 %v4766, %v4120
          %4768 = vadd.xlane.f32.xlu0 %v4767
          %v4769 = vpop.xlane.xlu0 %4768
          %v4770 = vrcp.pop 1024.0
          %v4771 = vmul.f32 1024.0, %v4770
          %v4772 = vsub.f32 1.0, %v4771
          %v4773 = vmul.f32 %v4770, %v4772
          %v4774 = vadd.f32 %v4770, %v4773
          %vm4775 = vweird.f32 %v4770
          %v4776 = vsel %vm4775, %v4770, %v4774
          %v4777 = vmul.f32 %v4769, %v4776
          %v4778 = vsub.f32 %v3483, %v4777
          %v4779 = vsub.f32 %v3574, %v4777
          %v4780 = vsub.f32 %v3665, %v4777
          %v4781 = vsub.f32 %v3756, %v4777
          %v4782 = vsub.f32 %v3847, %v4777
          %v4783 = vsub.f32 %v3938, %v4777
          %v4784 = vsub.f32 %v4029, %v4777
          %v4785 = vsub.f32 %v4120, %v4777
          %v4786 = vmul.f32 %v4778, %v4778
          %v4787 = vmul.f32 %v4779, %v4779
          %v4788 = vmul.f32 %v4780, %v4780
          %v4789 = vmul.f32 %v4781, %v4781
          %v4790 = vmul.f32 %v4782, %v4782
          %v4791 = vmul.f32 %v4783, %v4783
          %v4792 = vmul.f32 %v4784, %v4784
          %v4793 = vmul.f32 %v4785, %v4785
          %v4794 = vadd.f32 %v4786, %v4787
          %v4795 = vadd.f32 %v4794, %v4788
          %v4796 = vadd.f32 %v4795, %v4789
          %v4797 = vadd.f32 %v4796, %v4790
          %v4798 = vadd.f32 %v4797, %v4791
          %v4799 = vadd.f32 %v4798, %v4792
          %v4800 = vadd.f32 %v4799, %v4793
          %4801 = vadd.xlane.f32.xlu0 %v4800
          %v4802 = vpop.xlane.xlu0 %4801
          %v4803 = vmul.f32 %v4802, %v4776
          %v4804 = vadd.f32 %v4803, 1e-05
          %v4805 = vrsqrt.pop %v4804
          %v4806 = vmul.f32 %v4805, %v4804
          %v4807 = vmul.f32 %v4806, %v4805
          %v4808 = vmul.f32 0.5, %v4807
          %v4809 = vsub.f32 1.5, %v4808
          %v4810 = vmul.f32 %v4805, %v4809
          %vm4811 = vweird.f32 %v4804
          %vm4812 = vweird.f32 %v4805
          %vm4813 = vmor %vm4811, %vm4812
          %v4814 = vsel %vm4813, %v4805, %v4810
          %v4815 = vmul.f32 %v4778, %v4814
          %v4816 = vmul.f32 %v4779, %v4814
          %v4817 = vmul.f32 %v4780, %v4814
          %v4818 = vmul.f32 %v4781, %v4814
          %v4819 = vmul.f32 %v4782, %v4814
          %v4820 = vmul.f32 %v4783, %v4814
          %v4821 = vmul.f32 %v4784, %v4814
          %v4822 = vmul.f32 %v4785, %v4814
          %v4823 = vld [vmem:[#allocation12] sm:$0xff]
          %v4825 = vperm.slane %v4823, 0
          %v4826 = vperm.slane %v4823, 1
          %v4827 = vperm.slane %v4823, 2
          %v4828 = vperm.slane %v4823, 3
          %v4829 = vperm.slane %v4823, 4
          %v4830 = vperm.slane %v4823, 5
          %v4831 = vperm.slane %v4823, 6
          %v4832 = vperm.slane %v4823, 7
          %v4841 = vmul.f32 %v4815, %v4825
          %v4842 = vmul.f32 %v4816, %v4826
          %v4843 = vmul.f32 %v4817, %v4827
          %v4844 = vmul.f32 %v4818, %v4828
          %v4845 = vmul.f32 %v4819, %v4829
          %v4846 = vmul.f32 %v4820, %v4830
          %v4847 = vmul.f32 %v4821, %v4831
          %v4848 = vmul.f32 %v4822, %v4832
          %v4849 = vld [vmem:[#allocation13] sm:$0xff]
          %v4851 = vperm.slane %v4849, 0
          %v4852 = vperm.slane %v4849, 1
          %v4853 = vperm.slane %v4849, 2
          %v4854 = vperm.slane %v4849, 3
          %v4855 = vperm.slane %v4849, 4
          %v4856 = vperm.slane %v4849, 5
          %v4857 = vperm.slane %v4849, 6
          %v4858 = vperm.slane %v4849, 7
          %v4867 = vadd.f32 %v4841, %v4851
          %v4868 = vadd.f32 %v4842, %v4852
          %v4869 = vadd.f32 %v4843, %v4853
          %v4870 = vadd.f32 %v4844, %v4854
          %v4871 = vadd.f32 %v4845, %v4855
          %v4872 = vadd.f32 %v4846, %v4856
          %v4873 = vadd.f32 %v4847, %v4857
          %v4874 = vadd.f32 %v4848, %v4858
          %4875 = vst [vmem:[#allocation2] sm:$0xff] %v4867
          %4876 = vst [vmem:[#allocation2 + $0x8] sm:$0xff] %v4868
          %4877 = vst [vmem:[#allocation2 + $0x10] sm:$0xff] %v4869
          %4878 = vst [vmem:[#allocation2 + $0x18] sm:$0xff] %v4870
          %4879 = vst [vmem:[#allocation2 + $0x20] sm:$0xff] %v4871
          %4880 = vst [vmem:[#allocation2 + $0x28] sm:$0xff] %v4872
          %4881 = vst [vmem:[#allocation2 + $0x30] sm:$0xff] %v4873
          %4882 = vst [vmem:[#allocation2 + $0x38] sm:$0xff] %v4874
          %4883 = vst [vmem:[#allocation3] sm:$0xff] 0.0
          %4884 = vst [vmem:[#allocation3 + $0x8] sm:$0xff] 0.0
          %4885 = vst [vmem:[#allocation3 + $0x10] sm:$0xff] 0.0
          %4886 = vst [vmem:[#allocation3 + $0x18] sm:$0xff] 0.0
          %4887 = vst [vmem:[#allocation3 + $0x20] sm:$0xff] 0.0
          %4888 = vst [vmem:[#allocation3 + $0x28] sm:$0xff] 0.0
          %4889 = vst [vmem:[#allocation3 + $0x30] sm:$0xff] 0.0
          %4890 = vst [vmem:[#allocation3 + $0x38] sm:$0xff] 0.0
        $region120: #{policy_forward.1} parent=71 // pred_fallthru
          _
        %v4891 = vld [vmem:[#allocation2] sm:$0xff]
        %v4892 = vld [vmem:[#allocation2 + $0x8] sm:$0xff]
        %v4893 = vld [vmem:[#allocation2 + $0x10] sm:$0xff]
        %v4894 = vld [vmem:[#allocation2 + $0x18] sm:$0xff]
        %v4895 = vld [vmem:[#allocation2 + $0x20] sm:$0xff]
        %v4896 = vld [vmem:[#allocation2 + $0x28] sm:$0xff]
        %v4897 = vld [vmem:[#allocation2 + $0x30] sm:$0xff]
        %v4898 = vld [vmem:[#allocation2 + $0x38] sm:$0xff]
        %v4899 = vpack.c.bf16 %v4891, %v4891
        %v4900 = vpack.c.bf16 %v4892, %v4892
        %v4901 = vpack.c.bf16 %v4893, %v4893
        %v4902 = vpack.c.bf16 %v4894, %v4894
        %v4903 = vpack.c.bf16 %v4895, %v4895
        %v4904 = vpack.c.bf16 %v4896, %v4896
        %v4905 = vpack.c.bf16 %v4897, %v4897
        %v4906 = vpack.c.bf16 %v4898, %v4898
        %v4907 = vld [vmem:[%s587] sm:$0xff]
        %v4908 = vld [vmem:[%s587 + $0x8] sm:$0xff]
        %v4909 = vld [vmem:[%s587 + $0x10] sm:$0xff]
        %v4910 = vld [vmem:[%s587 + $0x18] sm:$0xff]
        %v4911 = vld [vmem:[%s587 + $0x20] sm:$0xff]
        %v4912 = vld [vmem:[%s587 + $0x28] sm:$0xff]
        %v4913 = vld [vmem:[%s587 + $0x30] sm:$0xff]
        %v4914 = vld [vmem:[%s587 + $0x38] sm:$0xff]
        %v4915 = vld [vmem:[%s587 + $0x40] sm:$0xff]
        %v4916 = vld [vmem:[%s587 + $0x48] sm:$0xff]
        %v4917 = vld [vmem:[%s587 + $0x50] sm:$0xff]
        %v4918 = vld [vmem:[%s587 + $0x58] sm:$0xff]
        %v4919 = vld [vmem:[%s587 + $0x60] sm:$0xff]
        %v4920 = vld [vmem:[%s587 + $0x68] sm:$0xff]
        %v4921 = vld [vmem:[%s587 + $0x70] sm:$0xff]
        %v4922 = vld [vmem:[%s587 + $0x78] sm:$0xff]
        %v4923 = vld [vmem:[%s587 + $0x80] sm:$0xff]
        %v4924 = vld [vmem:[%s587 + $0x88] sm:$0xff]
        %v4925 = vld [vmem:[%s587 + $0x90] sm:$0xff]
        %v4926 = vld [vmem:[%s587 + $0x98] sm:$0xff]
        %v4927 = vld [vmem:[%s587 + $0xa0] sm:$0xff]
        %v4928 = vld [vmem:[%s587 + $0xa8] sm:$0xff]
        %v4929 = vld [vmem:[%s587 + $0xb0] sm:$0xff]
        %v4930 = vld [vmem:[%s587 + $0xb8] sm:$0xff]
        %v4931 = vld [vmem:[%s587 + $0xc0] sm:$0xff]
        %v4932 = vld [vmem:[%s587 + $0xc8] sm:$0xff]
        %v4933 = vld [vmem:[%s587 + $0xd0] sm:$0xff]
        %v4934 = vld [vmem:[%s587 + $0xd8] sm:$0xff]
        %v4935 = vld [vmem:[%s587 + $0xe0] sm:$0xff]
        %v4936 = vld [vmem:[%s587 + $0xe8] sm:$0xff]
        %v4937 = vld [vmem:[%s587 + $0xf0] sm:$0xff]
        %v4938 = vld [vmem:[%s587 + $0xf8] sm:$0xff]
        %v4939 = vld [vmem:[%s587 + $0x100] sm:$0xff]
        %v4940 = vld [vmem:[%s587 + $0x108] sm:$0xff]
        %v4941 = vld [vmem:[%s587 + $0x110] sm:$0xff]
        %v4942 = vld [vmem:[%s587 + $0x118] sm:$0xff]
        %v4943 = vld [vmem:[%s587 + $0x120] sm:$0xff]
        %v4944 = vld [vmem:[%s587 + $0x128] sm:$0xff]
        %v4945 = vld [vmem:[%s587 + $0x130] sm:$0xff]
        %v4946 = vld [vmem:[%s587 + $0x138] sm:$0xff]
        %v4947 = vld [vmem:[%s587 + $0x140] sm:$0xff]
        %v4948 = vld [vmem:[%s587 + $0x148] sm:$0xff]
        %v4949 = vld [vmem:[%s587 + $0x150] sm:$0xff]
        %v4950 = vld [vmem:[%s587 + $0x158] sm:$0xff]
        %v4951 = vld [vmem:[%s587 + $0x160] sm:$0xff]
        %v4952 = vld [vmem:[%s587 + $0x168] sm:$0xff]
        %v4953 = vld [vmem:[%s587 + $0x170] sm:$0xff]
        %v4954 = vld [vmem:[%s587 + $0x178] sm:$0xff]
        %v4955 = vld [vmem:[%s587 + $0x180] sm:$0xff]
        %v4956 = vld [vmem:[%s587 + $0x188] sm:$0xff]
        %v4957 = vld [vmem:[%s587 + $0x190] sm:$0xff]
        %v4958 = vld [vmem:[%s587 + $0x198] sm:$0xff]
        %v4959 = vld [vmem:[%s587 + $0x1a0] sm:$0xff]
        %v4960 = vld [vmem:[%s587 + $0x1a8] sm:$0xff]
        %v4961 = vld [vmem:[%s587 + $0x1b0] sm:$0xff]
        %v4962 = vld [vmem:[%s587 + $0x1b8] sm:$0xff]
        %v4963 = vld [vmem:[%s587 + $0x1c0] sm:$0xff]
        %v4964 = vld [vmem:[%s587 + $0x1c8] sm:$0xff]
        %v4965 = vld [vmem:[%s587 + $0x1d0] sm:$0xff]
        %v4966 = vld [vmem:[%s587 + $0x1d8] sm:$0xff]
        %v4967 = vld [vmem:[%s587 + $0x1e0] sm:$0xff]
        %v4968 = vld [vmem:[%s587 + $0x1e8] sm:$0xff]
        %v4969 = vld [vmem:[%s587 + $0x1f0] sm:$0xff]
        %v4970 = vld [vmem:[%s587 + $0x1f8] sm:$0xff]
        %v4971 = vld [vmem:[%s587 + $0x200] sm:$0xff]
        %v4972 = vld [vmem:[%s587 + $0x208] sm:$0xff]
        %v4973 = vld [vmem:[%s587 + $0x210] sm:$0xff]
        %v4974 = vld [vmem:[%s587 + $0x218] sm:$0xff]
        %v4975 = vld [vmem:[%s587 + $0x220] sm:$0xff]
        %v4976 = vld [vmem:[%s587 + $0x228] sm:$0xff]
        %v4977 = vld [vmem:[%s587 + $0x230] sm:$0xff]
        %v4978 = vld [vmem:[%s587 + $0x238] sm:$0xff]
        %v4979 = vld [vmem:[%s587 + $0x240] sm:$0xff]
        %v4980 = vld [vmem:[%s587 + $0x248] sm:$0xff]
        %v4981 = vld [vmem:[%s587 + $0x250] sm:$0xff]
        %v4982 = vld [vmem:[%s587 + $0x258] sm:$0xff]
        %v4983 = vld [vmem:[%s587 + $0x260] sm:$0xff]
        %v4984 = vld [vmem:[%s587 + $0x268] sm:$0xff]
        %v4985 = vld [vmem:[%s587 + $0x270] sm:$0xff]
        %v4986 = vld [vmem:[%s587 + $0x278] sm:$0xff]
        %v4987 = vld [vmem:[%s587 + $0x280] sm:$0xff]
        %v4988 = vld [vmem:[%s587 + $0x288] sm:$0xff]
        %v4989 = vld [vmem:[%s587 + $0x290] sm:$0xff]
        %v4990 = vld [vmem:[%s587 + $0x298] sm:$0xff]
        %v4991 = vld [vmem:[%s587 + $0x2a0] sm:$0xff]
        %v4992 = vld [vmem:[%s587 + $0x2a8] sm:$0xff]
        %v4993 = vld [vmem:[%s587 + $0x2b0] sm:$0xff]
        %v4994 = vld [vmem:[%s587 + $0x2b8] sm:$0xff]
        %v4995 = vld [vmem:[%s587 + $0x2c0] sm:$0xff]
        %v4996 = vld [vmem:[%s587 + $0x2c8] sm:$0xff]
        %v4997 = vld [vmem:[%s587 + $0x2d0] sm:$0xff]
        %v4998 = vld [vmem:[%s587 + $0x2d8] sm:$0xff]
        %v4999 = vld [vmem:[%s587 + $0x2e0] sm:$0xff]
        %v5000 = vld [vmem:[%s587 + $0x2e8] sm:$0xff]
        %v5001 = vld [vmem:[%s587 + $0x2f0] sm:$0xff]
        %v5002 = vld [vmem:[%s587 + $0x2f8] sm:$0xff]
        %v5003 = vld [vmem:[%s587 + $0x300] sm:$0xff]
        %v5004 = vld [vmem:[%s587 + $0x308] sm:$0xff]
        %v5005 = vld [vmem:[%s587 + $0x310] sm:$0xff]
        %v5006 = vld [vmem:[%s587 + $0x318] sm:$0xff]
        %v5007 = vld [vmem:[%s587 + $0x320] sm:$0xff]
        %v5008 = vld [vmem:[%s587 + $0x328] sm:$0xff]
        %v5009 = vld [vmem:[%s587 + $0x330] sm:$0xff]
        %v5010 = vld [vmem:[%s587 + $0x338] sm:$0xff]
        %v5011 = vld [vmem:[%s587 + $0x340] sm:$0xff]
        %v5012 = vld [vmem:[%s587 + $0x348] sm:$0xff]
        %v5013 = vld [vmem:[%s587 + $0x350] sm:$0xff]
        %v5014 = vld [vmem:[%s587 + $0x358] sm:$0xff]
        %v5015 = vld [vmem:[%s587 + $0x360] sm:$0xff]
        %v5016 = vld [vmem:[%s587 + $0x368] sm:$0xff]
        %v5017 = vld [vmem:[%s587 + $0x370] sm:$0xff]
        %v5018 = vld [vmem:[%s587 + $0x378] sm:$0xff]
        %v5019 = vld [vmem:[%s587 + $0x380] sm:$0xff]
        %v5020 = vld [vmem:[%s587 + $0x388] sm:$0xff]
        %v5021 = vld [vmem:[%s587 + $0x390] sm:$0xff]
        %v5022 = vld [vmem:[%s587 + $0x398] sm:$0xff]
        %v5023 = vld [vmem:[%s587 + $0x3a0] sm:$0xff]
        %v5024 = vld [vmem:[%s587 + $0x3a8] sm:$0xff]
        %v5025 = vld [vmem:[%s587 + $0x3b0] sm:$0xff]
        %v5026 = vld [vmem:[%s587 + $0x3b8] sm:$0xff]
        %v5027 = vld [vmem:[%s587 + $0x3c0] sm:$0xff]
        %v5028 = vld [vmem:[%s587 + $0x3c8] sm:$0xff]
        %v5029 = vld [vmem:[%s587 + $0x3d0] sm:$0xff]
        %v5030 = vld [vmem:[%s587 + $0x3d8] sm:$0xff]
        %v5031 = vld [vmem:[%s587 + $0x3e0] sm:$0xff]
        %v5032 = vld [vmem:[%s587 + $0x3e8] sm:$0xff]
        %v5033 = vld [vmem:[%s587 + $0x3f0] sm:$0xff]
        %v5034 = vld [vmem:[%s587 + $0x3f8] sm:$0xff]
        %v5035 = vld [vmem:[%s587 + $0x400] sm:$0xff]
        %v5036 = vld [vmem:[%s587 + $0x408] sm:$0xff]
        %v5037 = vld [vmem:[%s587 + $0x410] sm:$0xff]
        %v5038 = vld [vmem:[%s587 + $0x418] sm:$0xff]
        %v5039 = vld [vmem:[%s587 + $0x420] sm:$0xff]
        %v5040 = vld [vmem:[%s587 + $0x428] sm:$0xff]
        %v5041 = vld [vmem:[%s587 + $0x430] sm:$0xff]
        %v5042 = vld [vmem:[%s587 + $0x438] sm:$0xff]
        %v5043 = vld [vmem:[%s587 + $0x440] sm:$0xff]
        %v5044 = vld [vmem:[%s587 + $0x448] sm:$0xff]
        %v5045 = vld [vmem:[%s587 + $0x450] sm:$0xff]
        %v5046 = vld [vmem:[%s587 + $0x458] sm:$0xff]
        %v5047 = vld [vmem:[%s587 + $0x460] sm:$0xff]
        %v5048 = vld [vmem:[%s587 + $0x468] sm:$0xff]
        %v5049 = vld [vmem:[%s587 + $0x470] sm:$0xff]
        %v5050 = vld [vmem:[%s587 + $0x478] sm:$0xff]
        %v5051 = vld [vmem:[%s587 + $0x480] sm:$0xff]
        %v5052 = vld [vmem:[%s587 + $0x488] sm:$0xff]
        %v5053 = vld [vmem:[%s587 + $0x490] sm:$0xff]
        %v5054 = vld [vmem:[%s587 + $0x498] sm:$0xff]
        %v5055 = vld [vmem:[%s587 + $0x4a0] sm:$0xff]
        %v5056 = vld [vmem:[%s587 + $0x4a8] sm:$0xff]
        %v5057 = vld [vmem:[%s587 + $0x4b0] sm:$0xff]
        %v5058 = vld [vmem:[%s587 + $0x4b8] sm:$0xff]
        %v5059 = vld [vmem:[%s587 + $0x4c0] sm:$0xff]
        %v5060 = vld [vmem:[%s587 + $0x4c8] sm:$0xff]
        %v5061 = vld [vmem:[%s587 + $0x4d0] sm:$0xff]
        %v5062 = vld [vmem:[%s587 + $0x4d8] sm:$0xff]
        %v5063 = vld [vmem:[%s587 + $0x4e0] sm:$0xff]
        %v5064 = vld [vmem:[%s587 + $0x4e8] sm:$0xff]
        %v5065 = vld [vmem:[%s587 + $0x4f0] sm:$0xff]
        %v5066 = vld [vmem:[%s587 + $0x4f8] sm:$0xff]
        %v5067 = vld [vmem:[%s587 + $0x500] sm:$0xff]
        %v5068 = vld [vmem:[%s587 + $0x508] sm:$0xff]
        %v5069 = vld [vmem:[%s587 + $0x510] sm:$0xff]
        %v5070 = vld [vmem:[%s587 + $0x518] sm:$0xff]
        %v5071 = vld [vmem:[%s587 + $0x520] sm:$0xff]
        %v5072 = vld [vmem:[%s587 + $0x528] sm:$0xff]
        %v5073 = vld [vmem:[%s587 + $0x530] sm:$0xff]
        %v5074 = vld [vmem:[%s587 + $0x538] sm:$0xff]
        %v5075 = vld [vmem:[%s587 + $0x540] sm:$0xff]
        %v5076 = vld [vmem:[%s587 + $0x548] sm:$0xff]
        %v5077 = vld [vmem:[%s587 + $0x550] sm:$0xff]
        %v5078 = vld [vmem:[%s587 + $0x558] sm:$0xff]
        %v5079 = vld [vmem:[%s587 + $0x560] sm:$0xff]
        %v5080 = vld [vmem:[%s587 + $0x568] sm:$0xff]
        %v5081 = vld [vmem:[%s587 + $0x570] sm:$0xff]
        %v5082 = vld [vmem:[%s587 + $0x578] sm:$0xff]
        %v5083 = vld [vmem:[%s587 + $0x580] sm:$0xff]
        %v5084 = vld [vmem:[%s587 + $0x588] sm:$0xff]
        %v5085 = vld [vmem:[%s587 + $0x590] sm:$0xff]
        %v5086 = vld [vmem:[%s587 + $0x598] sm:$0xff]
        %v5087 = vld [vmem:[%s587 + $0x5a0] sm:$0xff]
        %v5088 = vld [vmem:[%s587 + $0x5a8] sm:$0xff]
        %v5089 = vld [vmem:[%s587 + $0x5b0] sm:$0xff]
        %v5090 = vld [vmem:[%s587 + $0x5b8] sm:$0xff]
        %v5091 = vld [vmem:[%s587 + $0x5c0] sm:$0xff]
        %v5092 = vld [vmem:[%s587 + $0x5c8] sm:$0xff]
        %v5093 = vld [vmem:[%s587 + $0x5d0] sm:$0xff]
        %v5094 = vld [vmem:[%s587 + $0x5d8] sm:$0xff]
        %v5095 = vld [vmem:[%s587 + $0x5e0] sm:$0xff]
        %v5096 = vld [vmem:[%s587 + $0x5e8] sm:$0xff]
        %v5097 = vld [vmem:[%s587 + $0x5f0] sm:$0xff]
        %v5098 = vld [vmem:[%s587 + $0x5f8] sm:$0xff]
        %v5099 = vld [vmem:[%s587 + $0x600] sm:$0xff]
        %v5100 = vld [vmem:[%s587 + $0x608] sm:$0xff]
        %v5101 = vld [vmem:[%s587 + $0x610] sm:$0xff]
        %v5102 = vld [vmem:[%s587 + $0x618] sm:$0xff]
        %v5103 = vld [vmem:[%s587 + $0x620] sm:$0xff]
        %v5104 = vld [vmem:[%s587 + $0x628] sm:$0xff]
        %v5105 = vld [vmem:[%s587 + $0x630] sm:$0xff]
        %v5106 = vld [vmem:[%s587 + $0x638] sm:$0xff]
        %v5107 = vld [vmem:[%s587 + $0x640] sm:$0xff]
        %v5108 = vld [vmem:[%s587 + $0x648] sm:$0xff]
        %v5109 = vld [vmem:[%s587 + $0x650] sm:$0xff]
        %v5110 = vld [vmem:[%s587 + $0x658] sm:$0xff]
        %v5111 = vld [vmem:[%s587 + $0x660] sm:$0xff]
        %v5112 = vld [vmem:[%s587 + $0x668] sm:$0xff]
        %v5113 = vld [vmem:[%s587 + $0x670] sm:$0xff]
        %v5114 = vld [vmem:[%s587 + $0x678] sm:$0xff]
        %v5115 = vld [vmem:[%s587 + $0x680] sm:$0xff]
        %v5116 = vld [vmem:[%s587 + $0x688] sm:$0xff]
        %v5117 = vld [vmem:[%s587 + $0x690] sm:$0xff]
        %v5118 = vld [vmem:[%s587 + $0x698] sm:$0xff]
        %v5119 = vld [vmem:[%s587 + $0x6a0] sm:$0xff]
        %v5120 = vld [vmem:[%s587 + $0x6a8] sm:$0xff]
        %v5121 = vld [vmem:[%s587 + $0x6b0] sm:$0xff]
        %v5122 = vld [vmem:[%s587 + $0x6b8] sm:$0xff]
        %v5123 = vld [vmem:[%s587 + $0x6c0] sm:$0xff]
        %v5124 = vld [vmem:[%s587 + $0x6c8] sm:$0xff]
        %v5125 = vld [vmem:[%s587 + $0x6d0] sm:$0xff]
        %v5126 = vld [vmem:[%s587 + $0x6d8] sm:$0xff]
        %v5127 = vld [vmem:[%s587 + $0x6e0] sm:$0xff]
        %v5128 = vld [vmem:[%s587 + $0x6e8] sm:$0xff]
        %v5129 = vld [vmem:[%s587 + $0x6f0] sm:$0xff]
        %v5130 = vld [vmem:[%s587 + $0x6f8] sm:$0xff]
        %v5131 = vld [vmem:[%s587 + $0x700] sm:$0xff]
        %v5132 = vld [vmem:[%s587 + $0x708] sm:$0xff]
        %v5133 = vld [vmem:[%s587 + $0x710] sm:$0xff]
        %v5134 = vld [vmem:[%s587 + $0x718] sm:$0xff]
        %v5135 = vld [vmem:[%s587 + $0x720] sm:$0xff]
        %v5136 = vld [vmem:[%s587 + $0x728] sm:$0xff]
        %v5137 = vld [vmem:[%s587 + $0x730] sm:$0xff]
        %v5138 = vld [vmem:[%s587 + $0x738] sm:$0xff]
        %v5139 = vld [vmem:[%s587 + $0x740] sm:$0xff]
        %v5140 = vld [vmem:[%s587 + $0x748] sm:$0xff]
        %v5141 = vld [vmem:[%s587 + $0x750] sm:$0xff]
        %v5142 = vld [vmem:[%s587 + $0x758] sm:$0xff]
        %v5143 = vld [vmem:[%s587 + $0x760] sm:$0xff]
        %v5144 = vld [vmem:[%s587 + $0x768] sm:$0xff]
        %v5145 = vld [vmem:[%s587 + $0x770] sm:$0xff]
        %v5146 = vld [vmem:[%s587 + $0x778] sm:$0xff]
        %v5147 = vld [vmem:[%s587 + $0x780] sm:$0xff]
        %v5148 = vld [vmem:[%s587 + $0x788] sm:$0xff]
        %v5149 = vld [vmem:[%s587 + $0x790] sm:$0xff]
        %v5150 = vld [vmem:[%s587 + $0x798] sm:$0xff]
        %v5151 = vld [vmem:[%s587 + $0x7a0] sm:$0xff]
        %v5152 = vld [vmem:[%s587 + $0x7a8] sm:$0xff]
        %v5153 = vld [vmem:[%s587 + $0x7b0] sm:$0xff]
        %v5154 = vld [vmem:[%s587 + $0x7b8] sm:$0xff]
        %v5155 = vld [vmem:[%s587 + $0x7c0] sm:$0xff]
        %v5156 = vld [vmem:[%s587 + $0x7c8] sm:$0xff]
        %v5157 = vld [vmem:[%s587 + $0x7d0] sm:$0xff]
        %v5158 = vld [vmem:[%s587 + $0x7d8] sm:$0xff]
        %v5159 = vld [vmem:[%s587 + $0x7e0] sm:$0xff]
        %v5160 = vld [vmem:[%s587 + $0x7e8] sm:$0xff]
        %v5161 = vld [vmem:[%s587 + $0x7f0] sm:$0xff]
        %v5162 = vld [vmem:[%s587 + $0x7f8] sm:$0xff]
        %v5163 = vld [vmem:[%s597] sm:$0xf]
        %v5165 = vperm.slane %v5163, 0
        %v5166 = vperm.slane %v5163, 1
        %v5167 = vperm.slane %v5163, 2
        %v5168 = vperm.slane %v5163, 3
        %v5429 = vunpack.c.l.b16 %v4907
        %v5430 = vunpack.c.h.b16 %v4907
        %v5431 = vunpack.c.l.b16 %v4908
        %v5432 = vunpack.c.h.b16 %v4908
        %v5433 = vunpack.c.l.b16 %v4909
        %v5434 = vunpack.c.h.b16 %v4909
        %v5435 = vunpack.c.l.b16 %v4910
        %v5436 = vunpack.c.h.b16 %v4910
        %v5437 = vunpack.c.l.b16 %v4911
        %v5438 = vunpack.c.h.b16 %v4911
        %v5439 = vunpack.c.l.b16 %v4912
        %v5440 = vunpack.c.h.b16 %v4912
        %v5441 = vunpack.c.l.b16 %v4913
        %v5442 = vunpack.c.h.b16 %v4913
        %v5443 = vunpack.c.l.b16 %v4914
        %v5444 = vunpack.c.h.b16 %v4914
        %v5445 = vunpack.c.l.b16 %v4915
        %v5446 = vunpack.c.h.b16 %v4915
        %v5447 = vunpack.c.l.b16 %v4916
        %v5448 = vunpack.c.h.b16 %v4916
        %v5449 = vunpack.c.l.b16 %v4917
        %v5450 = vunpack.c.h.b16 %v4917
        %v5451 = vunpack.c.l.b16 %v4918
        %v5452 = vunpack.c.h.b16 %v4918
        %v5453 = vunpack.c.l.b16 %v4919
        %v5454 = vunpack.c.h.b16 %v4919
        %v5455 = vunpack.c.l.b16 %v4920
        %v5456 = vunpack.c.h.b16 %v4920
        %v5457 = vunpack.c.l.b16 %v4921
        %v5458 = vunpack.c.h.b16 %v4921
        %v5459 = vunpack.c.l.b16 %v4922
        %v5460 = vunpack.c.h.b16 %v4922
        %v5461 = vunpack.c.l.b16 %v4923
        %v5462 = vunpack.c.h.b16 %v4923
        %v5463 = vunpack.c.l.b16 %v4924
        %v5464 = vunpack.c.h.b16 %v4924
        %v5465 = vunpack.c.l.b16 %v4925
        %v5466 = vunpack.c.h.b16 %v4925
        %v5467 = vunpack.c.l.b16 %v4926
        %v5468 = vunpack.c.h.b16 %v4926
        %v5469 = vunpack.c.l.b16 %v4927
        %v5470 = vunpack.c.h.b16 %v4927
        %v5471 = vunpack.c.l.b16 %v4928
        %v5472 = vunpack.c.h.b16 %v4928
        %v5473 = vunpack.c.l.b16 %v4929
        %v5474 = vunpack.c.h.b16 %v4929
        %v5475 = vunpack.c.l.b16 %v4930
        %v5476 = vunpack.c.h.b16 %v4930
        %v5477 = vunpack.c.l.b16 %v4931
        %v5478 = vunpack.c.h.b16 %v4931
        %v5479 = vunpack.c.l.b16 %v4932
        %v5480 = vunpack.c.h.b16 %v4932
        %v5481 = vunpack.c.l.b16 %v4933
        %v5482 = vunpack.c.h.b16 %v4933
        %v5483 = vunpack.c.l.b16 %v4934
        %v5484 = vunpack.c.h.b16 %v4934
        %v5485 = vunpack.c.l.b16 %v4935
        %v5486 = vunpack.c.h.b16 %v4935
        %v5487 = vunpack.c.l.b16 %v4936
        %v5488 = vunpack.c.h.b16 %v4936
        %v5489 = vunpack.c.l.b16 %v4937
        %v5490 = vunpack.c.h.b16 %v4937
        %v5491 = vunpack.c.l.b16 %v4938
        %v5492 = vunpack.c.h.b16 %v4938
        %v5493 = vunpack.c.l.b16 %v4939
        %v5494 = vunpack.c.h.b16 %v4939
        %v5495 = vunpack.c.l.b16 %v4940
        %v5496 = vunpack.c.h.b16 %v4940
        %v5497 = vunpack.c.l.b16 %v4941
        %v5498 = vunpack.c.h.b16 %v4941
        %v5499 = vunpack.c.l.b16 %v4942
        %v5500 = vunpack.c.h.b16 %v4942
        %v5501 = vunpack.c.l.b16 %v4943
        %v5502 = vunpack.c.h.b16 %v4943
        %v5503 = vunpack.c.l.b16 %v4944
        %v5504 = vunpack.c.h.b16 %v4944
        %v5505 = vunpack.c.l.b16 %v4945
        %v5506 = vunpack.c.h.b16 %v4945
        %v5507 = vunpack.c.l.b16 %v4946
        %v5508 = vunpack.c.h.b16 %v4946
        %v5509 = vunpack.c.l.b16 %v4947
        %v5510 = vunpack.c.h.b16 %v4947
        %v5511 = vunpack.c.l.b16 %v4948
        %v5512 = vunpack.c.h.b16 %v4948
        %v5513 = vunpack.c.l.b16 %v4949
        %v5514 = vunpack.c.h.b16 %v4949
        %v5515 = vunpack.c.l.b16 %v4950
        %v5516 = vunpack.c.h.b16 %v4950
        %v5517 = vunpack.c.l.b16 %v4951
        %v5518 = vunpack.c.h.b16 %v4951
        %v5519 = vunpack.c.l.b16 %v4952
        %v5520 = vunpack.c.h.b16 %v4952
        %v5521 = vunpack.c.l.b16 %v4953
        %v5522 = vunpack.c.h.b16 %v4953
        %v5523 = vunpack.c.l.b16 %v4954
        %v5524 = vunpack.c.h.b16 %v4954
        %v5525 = vunpack.c.l.b16 %v4955
        %v5526 = vunpack.c.h.b16 %v4955
        %v5527 = vunpack.c.l.b16 %v4956
        %v5528 = vunpack.c.h.b16 %v4956
        %v5529 = vunpack.c.l.b16 %v4957
        %v5530 = vunpack.c.h.b16 %v4957
        %v5531 = vunpack.c.l.b16 %v4958
        %v5532 = vunpack.c.h.b16 %v4958
        %v5533 = vunpack.c.l.b16 %v4959
        %v5534 = vunpack.c.h.b16 %v4959
        %v5535 = vunpack.c.l.b16 %v4960
        %v5536 = vunpack.c.h.b16 %v4960
        %v5537 = vunpack.c.l.b16 %v4961
        %v5538 = vunpack.c.h.b16 %v4961
        %v5539 = vunpack.c.l.b16 %v4962
        %v5540 = vunpack.c.h.b16 %v4962
        %v5541 = vunpack.c.l.b16 %v4963
        %v5542 = vunpack.c.h.b16 %v4963
        %v5543 = vunpack.c.l.b16 %v4964
        %v5544 = vunpack.c.h.b16 %v4964
        %v5545 = vunpack.c.l.b16 %v4965
        %v5546 = vunpack.c.h.b16 %v4965
        %v5547 = vunpack.c.l.b16 %v4966
        %v5548 = vunpack.c.h.b16 %v4966
        %v5549 = vunpack.c.l.b16 %v4967
        %v5550 = vunpack.c.h.b16 %v4967
        %v5551 = vunpack.c.l.b16 %v4968
        %v5552 = vunpack.c.h.b16 %v4968
        %v5553 = vunpack.c.l.b16 %v4969
        %v5554 = vunpack.c.h.b16 %v4969
        %v5555 = vunpack.c.l.b16 %v4970
        %v5556 = vunpack.c.h.b16 %v4970
        %v5557 = vunpack.c.l.b16 %v4971
        %v5558 = vunpack.c.h.b16 %v4971
        %v5559 = vunpack.c.l.b16 %v4972
        %v5560 = vunpack.c.h.b16 %v4972
        %v5561 = vunpack.c.l.b16 %v4973
        %v5562 = vunpack.c.h.b16 %v4973
        %v5563 = vunpack.c.l.b16 %v4974
        %v5564 = vunpack.c.h.b16 %v4974
        %v5565 = vunpack.c.l.b16 %v4975
        %v5566 = vunpack.c.h.b16 %v4975
        %v5567 = vunpack.c.l.b16 %v4976
        %v5568 = vunpack.c.h.b16 %v4976
        %v5569 = vunpack.c.l.b16 %v4977
        %v5570 = vunpack.c.h.b16 %v4977
        %v5571 = vunpack.c.l.b16 %v4978
        %v5572 = vunpack.c.h.b16 %v4978
        %v5573 = vunpack.c.l.b16 %v4979
        %v5574 = vunpack.c.h.b16 %v4979
        %v5575 = vunpack.c.l.b16 %v4980
        %v5576 = vunpack.c.h.b16 %v4980
        %v5577 = vunpack.c.l.b16 %v4981
        %v5578 = vunpack.c.h.b16 %v4981
        %v5579 = vunpack.c.l.b16 %v4982
        %v5580 = vunpack.c.h.b16 %v4982
        %v5581 = vunpack.c.l.b16 %v4983
        %v5582 = vunpack.c.h.b16 %v4983
        %v5583 = vunpack.c.l.b16 %v4984
        %v5584 = vunpack.c.h.b16 %v4984
        %v5585 = vunpack.c.l.b16 %v4985
        %v5586 = vunpack.c.h.b16 %v4985
        %v5587 = vunpack.c.l.b16 %v4986
        %v5588 = vunpack.c.h.b16 %v4986
        %v5589 = vunpack.c.l.b16 %v4987
        %v5590 = vunpack.c.h.b16 %v4987
        %v5591 = vunpack.c.l.b16 %v4988
        %v5592 = vunpack.c.h.b16 %v4988
        %v5593 = vunpack.c.l.b16 %v4989
        %v5594 = vunpack.c.h.b16 %v4989
        %v5595 = vunpack.c.l.b16 %v4990
        %v5596 = vunpack.c.h.b16 %v4990
        %v5597 = vunpack.c.l.b16 %v4991
        %v5598 = vunpack.c.h.b16 %v4991
        %v5599 = vunpack.c.l.b16 %v4992
        %v5600 = vunpack.c.h.b16 %v4992
        %v5601 = vunpack.c.l.b16 %v4993
        %v5602 = vunpack.c.h.b16 %v4993
        %v5603 = vunpack.c.l.b16 %v4994
        %v5604 = vunpack.c.h.b16 %v4994
        %v5605 = vunpack.c.l.b16 %v4995
        %v5606 = vunpack.c.h.b16 %v4995
        %v5607 = vunpack.c.l.b16 %v4996
        %v5608 = vunpack.c.h.b16 %v4996
        %v5609 = vunpack.c.l.b16 %v4997
        %v5610 = vunpack.c.h.b16 %v4997
        %v5611 = vunpack.c.l.b16 %v4998
        %v5612 = vunpack.c.h.b16 %v4998
        %v5613 = vunpack.c.l.b16 %v4999
        %v5614 = vunpack.c.h.b16 %v4999
        %v5615 = vunpack.c.l.b16 %v5000
        %v5616 = vunpack.c.h.b16 %v5000
        %v5617 = vunpack.c.l.b16 %v5001
        %v5618 = vunpack.c.h.b16 %v5001
        %v5619 = vunpack.c.l.b16 %v5002
        %v5620 = vunpack.c.h.b16 %v5002
        %v5621 = vunpack.c.l.b16 %v5003
        %v5622 = vunpack.c.h.b16 %v5003
        %v5623 = vunpack.c.l.b16 %v5004
        %v5624 = vunpack.c.h.b16 %v5004
        %v5625 = vunpack.c.l.b16 %v5005
        %v5626 = vunpack.c.h.b16 %v5005
        %v5627 = vunpack.c.l.b16 %v5006
        %v5628 = vunpack.c.h.b16 %v5006
        %v5629 = vunpack.c.l.b16 %v5007
        %v5630 = vunpack.c.h.b16 %v5007
        %v5631 = vunpack.c.l.b16 %v5008
        %v5632 = vunpack.c.h.b16 %v5008
        %v5633 = vunpack.c.l.b16 %v5009
        %v5634 = vunpack.c.h.b16 %v5009
        %v5635 = vunpack.c.l.b16 %v5010
        %v5636 = vunpack.c.h.b16 %v5010
        %v5637 = vunpack.c.l.b16 %v5011
        %v5638 = vunpack.c.h.b16 %v5011
        %v5639 = vunpack.c.l.b16 %v5012
        %v5640 = vunpack.c.h.b16 %v5012
        %v5641 = vunpack.c.l.b16 %v5013
        %v5642 = vunpack.c.h.b16 %v5013
        %v5643 = vunpack.c.l.b16 %v5014
        %v5644 = vunpack.c.h.b16 %v5014
        %v5645 = vunpack.c.l.b16 %v5015
        %v5646 = vunpack.c.h.b16 %v5015
        %v5647 = vunpack.c.l.b16 %v5016
        %v5648 = vunpack.c.h.b16 %v5016
        %v5649 = vunpack.c.l.b16 %v5017
        %v5650 = vunpack.c.h.b16 %v5017
        %v5651 = vunpack.c.l.b16 %v5018
        %v5652 = vunpack.c.h.b16 %v5018
        %v5653 = vunpack.c.l.b16 %v5019
        %v5654 = vunpack.c.h.b16 %v5019
        %v5655 = vunpack.c.l.b16 %v5020
        %v5656 = vunpack.c.h.b16 %v5020
        %v5657 = vunpack.c.l.b16 %v5021
        %v5658 = vunpack.c.h.b16 %v5021
        %v5659 = vunpack.c.l.b16 %v5022
        %v5660 = vunpack.c.h.b16 %v5022
        %v5661 = vunpack.c.l.b16 %v5023
        %v5662 = vunpack.c.h.b16 %v5023
        %v5663 = vunpack.c.l.b16 %v5024
        %v5664 = vunpack.c.h.b16 %v5024
        %v5665 = vunpack.c.l.b16 %v5025
        %v5666 = vunpack.c.h.b16 %v5025
        %v5667 = vunpack.c.l.b16 %v5026
        %v5668 = vunpack.c.h.b16 %v5026
        %v5669 = vunpack.c.l.b16 %v5027
        %v5670 = vunpack.c.h.b16 %v5027
        %v5671 = vunpack.c.l.b16 %v5028
        %v5672 = vunpack.c.h.b16 %v5028
        %v5673 = vunpack.c.l.b16 %v5029
        %v5674 = vunpack.c.h.b16 %v5029
        %v5675 = vunpack.c.l.b16 %v5030
        %v5676 = vunpack.c.h.b16 %v5030
        %v5677 = vunpack.c.l.b16 %v5031
        %v5678 = vunpack.c.h.b16 %v5031
        %v5679 = vunpack.c.l.b16 %v5032
        %v5680 = vunpack.c.h.b16 %v5032
        %v5681 = vunpack.c.l.b16 %v5033
        %v5682 = vunpack.c.h.b16 %v5033
        %v5683 = vunpack.c.l.b16 %v5034
        %v5684 = vunpack.c.h.b16 %v5034
        %v5685 = vunpack.c.l.b16 %v5035
        %v5686 = vunpack.c.h.b16 %v5035
        %v5687 = vunpack.c.l.b16 %v5036
        %v5688 = vunpack.c.h.b16 %v5036
        %v5689 = vunpack.c.l.b16 %v5037
        %v5690 = vunpack.c.h.b16 %v5037
        %v5691 = vunpack.c.l.b16 %v5038
        %v5692 = vunpack.c.h.b16 %v5038
        %v5693 = vunpack.c.l.b16 %v5039
        %v5694 = vunpack.c.h.b16 %v5039
        %v5695 = vunpack.c.l.b16 %v5040
        %v5696 = vunpack.c.h.b16 %v5040
        %v5697 = vunpack.c.l.b16 %v5041
        %v5698 = vunpack.c.h.b16 %v5041
        %v5699 = vunpack.c.l.b16 %v5042
        %v5700 = vunpack.c.h.b16 %v5042
        %v5701 = vunpack.c.l.b16 %v5043
        %v5702 = vunpack.c.h.b16 %v5043
        %v5703 = vunpack.c.l.b16 %v5044
        %v5704 = vunpack.c.h.b16 %v5044
        %v5705 = vunpack.c.l.b16 %v5045
        %v5706 = vunpack.c.h.b16 %v5045
        %v5707 = vunpack.c.l.b16 %v5046
        %v5708 = vunpack.c.h.b16 %v5046
        %v5709 = vunpack.c.l.b16 %v5047
        %v5710 = vunpack.c.h.b16 %v5047
        %v5711 = vunpack.c.l.b16 %v5048
        %v5712 = vunpack.c.h.b16 %v5048
        %v5713 = vunpack.c.l.b16 %v5049
        %v5714 = vunpack.c.h.b16 %v5049
        %v5715 = vunpack.c.l.b16 %v5050
        %v5716 = vunpack.c.h.b16 %v5050
        %v5717 = vunpack.c.l.b16 %v5051
        %v5718 = vunpack.c.h.b16 %v5051
        %v5719 = vunpack.c.l.b16 %v5052
        %v5720 = vunpack.c.h.b16 %v5052
        %v5721 = vunpack.c.l.b16 %v5053
        %v5722 = vunpack.c.h.b16 %v5053
        %v5723 = vunpack.c.l.b16 %v5054
        %v5724 = vunpack.c.h.b16 %v5054
        %v5725 = vunpack.c.l.b16 %v5055
        %v5726 = vunpack.c.h.b16 %v5055
        %v5727 = vunpack.c.l.b16 %v5056
        %v5728 = vunpack.c.h.b16 %v5056
        %v5729 = vunpack.c.l.b16 %v5057
        %v5730 = vunpack.c.h.b16 %v5057
        %v5731 = vunpack.c.l.b16 %v5058
        %v5732 = vunpack.c.h.b16 %v5058
        %v5733 = vunpack.c.l.b16 %v5059
        %v5734 = vunpack.c.h.b16 %v5059
        %v5735 = vunpack.c.l.b16 %v5060
        %v5736 = vunpack.c.h.b16 %v5060
        %v5737 = vunpack.c.l.b16 %v5061
        %v5738 = vunpack.c.h.b16 %v5061
        %v5739 = vunpack.c.l.b16 %v5062
        %v5740 = vunpack.c.h.b16 %v5062
        %v5741 = vunpack.c.l.b16 %v5063
        %v5742 = vunpack.c.h.b16 %v5063
        %v5743 = vunpack.c.l.b16 %v5064
        %v5744 = vunpack.c.h.b16 %v5064
        %v5745 = vunpack.c.l.b16 %v5065
        %v5746 = vunpack.c.h.b16 %v5065
        %v5747 = vunpack.c.l.b16 %v5066
        %v5748 = vunpack.c.h.b16 %v5066
        %v5749 = vunpack.c.l.b16 %v5067
        %v5750 = vunpack.c.h.b16 %v5067
        %v5751 = vunpack.c.l.b16 %v5068
        %v5752 = vunpack.c.h.b16 %v5068
        %v5753 = vunpack.c.l.b16 %v5069
        %v5754 = vunpack.c.h.b16 %v5069
        %v5755 = vunpack.c.l.b16 %v5070
        %v5756 = vunpack.c.h.b16 %v5070
        %v5757 = vunpack.c.l.b16 %v5071
        %v5758 = vunpack.c.h.b16 %v5071
        %v5759 = vunpack.c.l.b16 %v5072
        %v5760 = vunpack.c.h.b16 %v5072
        %v5761 = vunpack.c.l.b16 %v5073
        %v5762 = vunpack.c.h.b16 %v5073
        %v5763 = vunpack.c.l.b16 %v5074
        %v5764 = vunpack.c.h.b16 %v5074
        %v5765 = vunpack.c.l.b16 %v5075
        %v5766 = vunpack.c.h.b16 %v5075
        %v5767 = vunpack.c.l.b16 %v5076
        %v5768 = vunpack.c.h.b16 %v5076
        %v5769 = vunpack.c.l.b16 %v5077
        %v5770 = vunpack.c.h.b16 %v5077
        %v5771 = vunpack.c.l.b16 %v5078
        %v5772 = vunpack.c.h.b16 %v5078
        %v5773 = vunpack.c.l.b16 %v5079
        %v5774 = vunpack.c.h.b16 %v5079
        %v5775 = vunpack.c.l.b16 %v5080
        %v5776 = vunpack.c.h.b16 %v5080
        %v5777 = vunpack.c.l.b16 %v5081
        %v5778 = vunpack.c.h.b16 %v5081
        %v5779 = vunpack.c.l.b16 %v5082
        %v5780 = vunpack.c.h.b16 %v5082
        %v5781 = vunpack.c.l.b16 %v5083
        %v5782 = vunpack.c.h.b16 %v5083
        %v5783 = vunpack.c.l.b16 %v5084
        %v5784 = vunpack.c.h.b16 %v5084
        %v5785 = vunpack.c.l.b16 %v5085
        %v5786 = vunpack.c.h.b16 %v5085
        %v5787 = vunpack.c.l.b16 %v5086
        %v5788 = vunpack.c.h.b16 %v5086
        %v5789 = vunpack.c.l.b16 %v5087
        %v5790 = vunpack.c.h.b16 %v5087
        %v5791 = vunpack.c.l.b16 %v5088
        %v5792 = vunpack.c.h.b16 %v5088
        %v5793 = vunpack.c.l.b16 %v5089
        %v5794 = vunpack.c.h.b16 %v5089
        %v5795 = vunpack.c.l.b16 %v5090
        %v5796 = vunpack.c.h.b16 %v5090
        %v5797 = vunpack.c.l.b16 %v5091
        %v5798 = vunpack.c.h.b16 %v5091
        %v5799 = vunpack.c.l.b16 %v5092
        %v5800 = vunpack.c.h.b16 %v5092
        %v5801 = vunpack.c.l.b16 %v5093
        %v5802 = vunpack.c.h.b16 %v5093
        %v5803 = vunpack.c.l.b16 %v5094
        %v5804 = vunpack.c.h.b16 %v5094
        %v5805 = vunpack.c.l.b16 %v5095
        %v5806 = vunpack.c.h.b16 %v5095
        %v5807 = vunpack.c.l.b16 %v5096
        %v5808 = vunpack.c.h.b16 %v5096
        %v5809 = vunpack.c.l.b16 %v5097
        %v5810 = vunpack.c.h.b16 %v5097
        %v5811 = vunpack.c.l.b16 %v5098
        %v5812 = vunpack.c.h.b16 %v5098
        %v5813 = vunpack.c.l.b16 %v5099
        %v5814 = vunpack.c.h.b16 %v5099
        %v5815 = vunpack.c.l.b16 %v5100
        %v5816 = vunpack.c.h.b16 %v5100
        %v5817 = vunpack.c.l.b16 %v5101
        %v5818 = vunpack.c.h.b16 %v5101
        %v5819 = vunpack.c.l.b16 %v5102
        %v5820 = vunpack.c.h.b16 %v5102
        %v5821 = vunpack.c.l.b16 %v5103
        %v5822 = vunpack.c.h.b16 %v5103
        %v5823 = vunpack.c.l.b16 %v5104
        %v5824 = vunpack.c.h.b16 %v5104
        %v5825 = vunpack.c.l.b16 %v5105
        %v5826 = vunpack.c.h.b16 %v5105
        %v5827 = vunpack.c.l.b16 %v5106
        %v5828 = vunpack.c.h.b16 %v5106
        %v5829 = vunpack.c.l.b16 %v5107
        %v5830 = vunpack.c.h.b16 %v5107
        %v5831 = vunpack.c.l.b16 %v5108
        %v5832 = vunpack.c.h.b16 %v5108
        %v5833 = vunpack.c.l.b16 %v5109
        %v5834 = vunpack.c.h.b16 %v5109
        %v5835 = vunpack.c.l.b16 %v5110
        %v5836 = vunpack.c.h.b16 %v5110
        %v5837 = vunpack.c.l.b16 %v5111
        %v5838 = vunpack.c.h.b16 %v5111
        %v5839 = vunpack.c.l.b16 %v5112
        %v5840 = vunpack.c.h.b16 %v5112
        %v5841 = vunpack.c.l.b16 %v5113
        %v5842 = vunpack.c.h.b16 %v5113
        %v5843 = vunpack.c.l.b16 %v5114
        %v5844 = vunpack.c.h.b16 %v5114
        %v5845 = vunpack.c.l.b16 %v5115
        %v5846 = vunpack.c.h.b16 %v5115
        %v5847 = vunpack.c.l.b16 %v5116
        %v5848 = vunpack.c.h.b16 %v5116
        %v5849 = vunpack.c.l.b16 %v5117
        %v5850 = vunpack.c.h.b16 %v5117
        %v5851 = vunpack.c.l.b16 %v5118
        %v5852 = vunpack.c.h.b16 %v5118
        %v5853 = vunpack.c.l.b16 %v5119
        %v5854 = vunpack.c.h.b16 %v5119
        %v5855 = vunpack.c.l.b16 %v5120
        %v5856 = vunpack.c.h.b16 %v5120
        %v5857 = vunpack.c.l.b16 %v5121
        %v5858 = vunpack.c.h.b16 %v5121
        %v5859 = vunpack.c.l.b16 %v5122
        %v5860 = vunpack.c.h.b16 %v5122
        %v5861 = vunpack.c.l.b16 %v5123
        %v5862 = vunpack.c.h.b16 %v5123
        %v5863 = vunpack.c.l.b16 %v5124
        %v5864 = vunpack.c.h.b16 %v5124
        %v5865 = vunpack.c.l.b16 %v5125
        %v5866 = vunpack.c.h.b16 %v5125
        %v5867 = vunpack.c.l.b16 %v5126
        %v5868 = vunpack.c.h.b16 %v5126
        %v5869 = vunpack.c.l.b16 %v5127
        %v5870 = vunpack.c.h.b16 %v5127
        %v5871 = vunpack.c.l.b16 %v5128
        %v5872 = vunpack.c.h.b16 %v5128
        %v5873 = vunpack.c.l.b16 %v5129
        %v5874 = vunpack.c.h.b16 %v5129
        %v5875 = vunpack.c.l.b16 %v5130
        %v5876 = vunpack.c.h.b16 %v5130
        %v5877 = vunpack.c.l.b16 %v5131
        %v5878 = vunpack.c.h.b16 %v5131
        %v5879 = vunpack.c.l.b16 %v5132
        %v5880 = vunpack.c.h.b16 %v5132
        %v5881 = vunpack.c.l.b16 %v5133
        %v5882 = vunpack.c.h.b16 %v5133
        %v5883 = vunpack.c.l.b16 %v5134
        %v5884 = vunpack.c.h.b16 %v5134
        %v5885 = vunpack.c.l.b16 %v5135
        %v5886 = vunpack.c.h.b16 %v5135
        %v5887 = vunpack.c.l.b16 %v5136
        %v5888 = vunpack.c.h.b16 %v5136
        %v5889 = vunpack.c.l.b16 %v5137
        %v5890 = vunpack.c.h.b16 %v5137
        %v5891 = vunpack.c.l.b16 %v5138
        %v5892 = vunpack.c.h.b16 %v5138
        %v5893 = vunpack.c.l.b16 %v5139
        %v5894 = vunpack.c.h.b16 %v5139
        %v5895 = vunpack.c.l.b16 %v5140
        %v5896 = vunpack.c.h.b16 %v5140
        %v5897 = vunpack.c.l.b16 %v5141
        %v5898 = vunpack.c.h.b16 %v5141
        %v5899 = vunpack.c.l.b16 %v5142
        %v5900 = vunpack.c.h.b16 %v5142
        %v5901 = vunpack.c.l.b16 %v5143
        %v5902 = vunpack.c.h.b16 %v5143
        %v5903 = vunpack.c.l.b16 %v5144
        %v5904 = vunpack.c.h.b16 %v5144
        %v5905 = vunpack.c.l.b16 %v5145
        %v5906 = vunpack.c.h.b16 %v5145
        %v5907 = vunpack.c.l.b16 %v5146
        %v5908 = vunpack.c.h.b16 %v5146
        %v5909 = vunpack.c.l.b16 %v5147
        %v5910 = vunpack.c.h.b16 %v5147
        %v5911 = vunpack.c.l.b16 %v5148
        %v5912 = vunpack.c.h.b16 %v5148
        %v5913 = vunpack.c.l.b16 %v5149
        %v5914 = vunpack.c.h.b16 %v5149
        %v5915 = vunpack.c.l.b16 %v5150
        %v5916 = vunpack.c.h.b16 %v5150
        %v5917 = vunpack.c.l.b16 %v5151
        %v5918 = vunpack.c.h.b16 %v5151
        %v5919 = vunpack.c.l.b16 %v5152
        %v5920 = vunpack.c.h.b16 %v5152
        %v5921 = vunpack.c.l.b16 %v5153
        %v5922 = vunpack.c.h.b16 %v5153
        %v5923 = vunpack.c.l.b16 %v5154
        %v5924 = vunpack.c.h.b16 %v5154
        %v5925 = vunpack.c.l.b16 %v5155
        %v5926 = vunpack.c.h.b16 %v5155
        %v5927 = vunpack.c.l.b16 %v5156
        %v5928 = vunpack.c.h.b16 %v5156
        %v5929 = vunpack.c.l.b16 %v5157
        %v5930 = vunpack.c.h.b16 %v5157
        %v5931 = vunpack.c.l.b16 %v5158
        %v5932 = vunpack.c.h.b16 %v5158
        %v5933 = vunpack.c.l.b16 %v5159
        %v5934 = vunpack.c.h.b16 %v5159
        %v5935 = vunpack.c.l.b16 %v5160
        %v5936 = vunpack.c.h.b16 %v5160
        %v5937 = vunpack.c.l.b16 %v5161
        %v5938 = vunpack.c.h.b16 %v5161
        %v5939 = vunpack.c.l.b16 %v5162
        %v5940 = vunpack.c.h.b16 %v5162
        %v5941 = vpack.c.b16 %v5433, %v5429
        %v5942 = vpack.c.b16 %v5434, %v5430
        %v5943 = vpack.c.b16 %v5435, %v5431
        %v5944 = vpack.c.b16 %v5436, %v5432
        %v5945 = vpack.c.b16 %v5441, %v5437
        %v5946 = vpack.c.b16 %v5442, %v5438
        %v5947 = vpack.c.b16 %v5443, %v5439
        %v5948 = vpack.c.b16 %v5444, %v5440
        %v5949 = vpack.c.b16 %v5449, %v5445
        %v5950 = vpack.c.b16 %v5450, %v5446
        %v5951 = vpack.c.b16 %v5451, %v5447
        %v5952 = vpack.c.b16 %v5452, %v5448
        %v5953 = vpack.c.b16 %v5457, %v5453
        %v5954 = vpack.c.b16 %v5458, %v5454
        %v5955 = vpack.c.b16 %v5459, %v5455
        %v5956 = vpack.c.b16 %v5460, %v5456
        %v5957 = vpack.c.b16 %v5465, %v5461
        %v5958 = vpack.c.b16 %v5466, %v5462
        %v5959 = vpack.c.b16 %v5467, %v5463
        %v5960 = vpack.c.b16 %v5468, %v5464
        %v5961 = vpack.c.b16 %v5473, %v5469
        %v5962 = vpack.c.b16 %v5474, %v5470
        %v5963 = vpack.c.b16 %v5475, %v5471
        %v5964 = vpack.c.b16 %v5476, %v5472
        %v5965 = vpack.c.b16 %v5481, %v5477
        %v5966 = vpack.c.b16 %v5482, %v5478
        %v5967 = vpack.c.b16 %v5483, %v5479
        %v5968 = vpack.c.b16 %v5484, %v5480
        %v5969 = vpack.c.b16 %v5489, %v5485
        %v5970 = vpack.c.b16 %v5490, %v5486
        %v5971 = vpack.c.b16 %v5491, %v5487
        %v5972 = vpack.c.b16 %v5492, %v5488
        %v5973 = vpack.c.b16 %v5497, %v5493
        %v5974 = vpack.c.b16 %v5498, %v5494
        %v5975 = vpack.c.b16 %v5499, %v5495
        %v5976 = vpack.c.b16 %v5500, %v5496
        %v5977 = vpack.c.b16 %v5505, %v5501
        %v5978 = vpack.c.b16 %v5506, %v5502
        %v5979 = vpack.c.b16 %v5507, %v5503
        %v5980 = vpack.c.b16 %v5508, %v5504
        %v5981 = vpack.c.b16 %v5513, %v5509
        %v5982 = vpack.c.b16 %v5514, %v5510
        %v5983 = vpack.c.b16 %v5515, %v5511
        %v5984 = vpack.c.b16 %v5516, %v5512
        %v5985 = vpack.c.b16 %v5521, %v5517
        %v5986 = vpack.c.b16 %v5522, %v5518
        %v5987 = vpack.c.b16 %v5523, %v5519
        %v5988 = vpack.c.b16 %v5524, %v5520
        %v5989 = vpack.c.b16 %v5529, %v5525
        %v5990 = vpack.c.b16 %v5530, %v5526
        %v5991 = vpack.c.b16 %v5531, %v5527
        %v5992 = vpack.c.b16 %v5532, %v5528
        %v5993 = vpack.c.b16 %v5537, %v5533
        %v5994 = vpack.c.b16 %v5538, %v5534
        %v5995 = vpack.c.b16 %v5539, %v5535
        %v5996 = vpack.c.b16 %v5540, %v5536
        %v5997 = vpack.c.b16 %v5545, %v5541
        %v5998 = vpack.c.b16 %v5546, %v5542
        %v5999 = vpack.c.b16 %v5547, %v5543
        %v6000 = vpack.c.b16 %v5548, %v5544
        %v6001 = vpack.c.b16 %v5553, %v5549
        %v6002 = vpack.c.b16 %v5554, %v5550
        %v6003 = vpack.c.b16 %v5555, %v5551
        %v6004 = vpack.c.b16 %v5556, %v5552
        %v6005 = vpack.c.b16 %v5561, %v5557
        %v6006 = vpack.c.b16 %v5562, %v5558
        %v6007 = vpack.c.b16 %v5563, %v5559
        %v6008 = vpack.c.b16 %v5564, %v5560
        %v6009 = vpack.c.b16 %v5569, %v5565
        %v6010 = vpack.c.b16 %v5570, %v5566
        %v6011 = vpack.c.b16 %v5571, %v5567
        %v6012 = vpack.c.b16 %v5572, %v5568
        %v6013 = vpack.c.b16 %v5577, %v5573
        %v6014 = vpack.c.b16 %v5578, %v5574
        %v6015 = vpack.c.b16 %v5579, %v5575
        %v6016 = vpack.c.b16 %v5580, %v5576
        %v6017 = vpack.c.b16 %v5585, %v5581
        %v6018 = vpack.c.b16 %v5586, %v5582
        %v6019 = vpack.c.b16 %v5587, %v5583
        %v6020 = vpack.c.b16 %v5588, %v5584
        %v6021 = vpack.c.b16 %v5593, %v5589
        %v6022 = vpack.c.b16 %v5594, %v5590
        %v6023 = vpack.c.b16 %v5595, %v5591
        %v6024 = vpack.c.b16 %v5596, %v5592
        %v6025 = vpack.c.b16 %v5601, %v5597
        %v6026 = vpack.c.b16 %v5602, %v5598
        %v6027 = vpack.c.b16 %v5603, %v5599
        %v6028 = vpack.c.b16 %v5604, %v5600
        %v6029 = vpack.c.b16 %v5609, %v5605
        %v6030 = vpack.c.b16 %v5610, %v5606
        %v6031 = vpack.c.b16 %v5611, %v5607
        %v6032 = vpack.c.b16 %v5612, %v5608
        %v6033 = vpack.c.b16 %v5617, %v5613
        %v6034 = vpack.c.b16 %v5618, %v5614
        %v6035 = vpack.c.b16 %v5619, %v5615
        %v6036 = vpack.c.b16 %v5620, %v5616
        %v6037 = vpack.c.b16 %v5625, %v5621
        %v6038 = vpack.c.b16 %v5626, %v5622
        %v6039 = vpack.c.b16 %v5627, %v5623
        %v6040 = vpack.c.b16 %v5628, %v5624
        %v6041 = vpack.c.b16 %v5633, %v5629
        %v6042 = vpack.c.b16 %v5634, %v5630
        %v6043 = vpack.c.b16 %v5635, %v5631
        %v6044 = vpack.c.b16 %v5636, %v5632
        %v6045 = vpack.c.b16 %v5641, %v5637
        %v6046 = vpack.c.b16 %v5642, %v5638
        %v6047 = vpack.c.b16 %v5643, %v5639
        %v6048 = vpack.c.b16 %v5644, %v5640
        %v6049 = vpack.c.b16 %v5649, %v5645
        %v6050 = vpack.c.b16 %v5650, %v5646
        %v6051 = vpack.c.b16 %v5651, %v5647
        %v6052 = vpack.c.b16 %v5652, %v5648
        %v6053 = vpack.c.b16 %v5657, %v5653
        %v6054 = vpack.c.b16 %v5658, %v5654
        %v6055 = vpack.c.b16 %v5659, %v5655
        %v6056 = vpack.c.b16 %v5660, %v5656
        %v6057 = vpack.c.b16 %v5665, %v5661
        %v6058 = vpack.c.b16 %v5666, %v5662
        %v6059 = vpack.c.b16 %v5667, %v5663
        %v6060 = vpack.c.b16 %v5668, %v5664
        %v6061 = vpack.c.b16 %v5673, %v5669
        %v6062 = vpack.c.b16 %v5674, %v5670
        %v6063 = vpack.c.b16 %v5675, %v5671
        %v6064 = vpack.c.b16 %v5676, %v5672
        %v6065 = vpack.c.b16 %v5681, %v5677
        %v6066 = vpack.c.b16 %v5682, %v5678
        %v6067 = vpack.c.b16 %v5683, %v5679
        %v6068 = vpack.c.b16 %v5684, %v5680
        %v6069 = vpack.c.b16 %v5689, %v5685
        %v6070 = vpack.c.b16 %v5690, %v5686
        %v6071 = vpack.c.b16 %v5691, %v5687
        %v6072 = vpack.c.b16 %v5692, %v5688
        %v6073 = vpack.c.b16 %v5697, %v5693
        %v6074 = vpack.c.b16 %v5698, %v5694
        %v6075 = vpack.c.b16 %v5699, %v5695
        %v6076 = vpack.c.b16 %v5700, %v5696
        %v6077 = vpack.c.b16 %v5705, %v5701
        %v6078 = vpack.c.b16 %v5706, %v5702
        %v6079 = vpack.c.b16 %v5707, %v5703
        %v6080 = vpack.c.b16 %v5708, %v5704
        %v6081 = vpack.c.b16 %v5713, %v5709
        %v6082 = vpack.c.b16 %v5714, %v5710
        %v6083 = vpack.c.b16 %v5715, %v5711
        %v6084 = vpack.c.b16 %v5716, %v5712
        %v6085 = vpack.c.b16 %v5721, %v5717
        %v6086 = vpack.c.b16 %v5722, %v5718
        %v6087 = vpack.c.b16 %v5723, %v5719
        %v6088 = vpack.c.b16 %v5724, %v5720
        %v6089 = vpack.c.b16 %v5729, %v5725
        %v6090 = vpack.c.b16 %v5730, %v5726
        %v6091 = vpack.c.b16 %v5731, %v5727
        %v6092 = vpack.c.b16 %v5732, %v5728
        %v6093 = vpack.c.b16 %v5737, %v5733
        %v6094 = vpack.c.b16 %v5738, %v5734
        %v6095 = vpack.c.b16 %v5739, %v5735
        %v6096 = vpack.c.b16 %v5740, %v5736
        %v6097 = vpack.c.b16 %v5745, %v5741
        %v6098 = vpack.c.b16 %v5746, %v5742
        %v6099 = vpack.c.b16 %v5747, %v5743
        %v6100 = vpack.c.b16 %v5748, %v5744
        %v6101 = vpack.c.b16 %v5753, %v5749
        %v6102 = vpack.c.b16 %v5754, %v5750
        %v6103 = vpack.c.b16 %v5755, %v5751
        %v6104 = vpack.c.b16 %v5756, %v5752
        %v6105 = vpack.c.b16 %v5761, %v5757
        %v6106 = vpack.c.b16 %v5762, %v5758
        %v6107 = vpack.c.b16 %v5763, %v5759
        %v6108 = vpack.c.b16 %v5764, %v5760
        %v6109 = vpack.c.b16 %v5769, %v5765
        %v6110 = vpack.c.b16 %v5770, %v5766
        %v6111 = vpack.c.b16 %v5771, %v5767
        %v6112 = vpack.c.b16 %v5772, %v5768
        %v6113 = vpack.c.b16 %v5777, %v5773
        %v6114 = vpack.c.b16 %v5778, %v5774
        %v6115 = vpack.c.b16 %v5779, %v5775
        %v6116 = vpack.c.b16 %v5780, %v5776
        %v6117 = vpack.c.b16 %v5785, %v5781
        %v6118 = vpack.c.b16 %v5786, %v5782
        %v6119 = vpack.c.b16 %v5787, %v5783
        %v6120 = vpack.c.b16 %v5788, %v5784
        %v6121 = vpack.c.b16 %v5793, %v5789
        %v6122 = vpack.c.b16 %v5794, %v5790
        %v6123 = vpack.c.b16 %v5795, %v5791
        %v6124 = vpack.c.b16 %v5796, %v5792
        %v6125 = vpack.c.b16 %v5801, %v5797
        %v6126 = vpack.c.b16 %v5802, %v5798
        %v6127 = vpack.c.b16 %v5803, %v5799
        %v6128 = vpack.c.b16 %v5804, %v5800
        %v6129 = vpack.c.b16 %v5809, %v5805
        %v6130 = vpack.c.b16 %v5810, %v5806
        %v6131 = vpack.c.b16 %v5811, %v5807
        %v6132 = vpack.c.b16 %v5812, %v5808
        %v6133 = vpack.c.b16 %v5817, %v5813
        %v6134 = vpack.c.b16 %v5818, %v5814
        %v6135 = vpack.c.b16 %v5819, %v5815
        %v6136 = vpack.c.b16 %v5820, %v5816
        %v6137 = vpack.c.b16 %v5825, %v5821
        %v6138 = vpack.c.b16 %v5826, %v5822
        %v6139 = vpack.c.b16 %v5827, %v5823
        %v6140 = vpack.c.b16 %v5828, %v5824
        %v6141 = vpack.c.b16 %v5833, %v5829
        %v6142 = vpack.c.b16 %v5834, %v5830
        %v6143 = vpack.c.b16 %v5835, %v5831
        %v6144 = vpack.c.b16 %v5836, %v5832
        %v6145 = vpack.c.b16 %v5841, %v5837
        %v6146 = vpack.c.b16 %v5842, %v5838
        %v6147 = vpack.c.b16 %v5843, %v5839
        %v6148 = vpack.c.b16 %v5844, %v5840
        %v6149 = vpack.c.b16 %v5849, %v5845
        %v6150 = vpack.c.b16 %v5850, %v5846
        %v6151 = vpack.c.b16 %v5851, %v5847
        %v6152 = vpack.c.b16 %v5852, %v5848
        %v6153 = vpack.c.b16 %v5857, %v5853
        %v6154 = vpack.c.b16 %v5858, %v5854
        %v6155 = vpack.c.b16 %v5859, %v5855
        %v6156 = vpack.c.b16 %v5860, %v5856
        %v6157 = vpack.c.b16 %v5865, %v5861
        %v6158 = vpack.c.b16 %v5866, %v5862
        %v6159 = vpack.c.b16 %v5867, %v5863
        %v6160 = vpack.c.b16 %v5868, %v5864
        %v6161 = vpack.c.b16 %v5873, %v5869
        %v6162 = vpack.c.b16 %v5874, %v5870
        %v6163 = vpack.c.b16 %v5875, %v5871
        %v6164 = vpack.c.b16 %v5876, %v5872
        %v6165 = vpack.c.b16 %v5881, %v5877
        %v6166 = vpack.c.b16 %v5882, %v5878
        %v6167 = vpack.c.b16 %v5883, %v5879
        %v6168 = vpack.c.b16 %v5884, %v5880
        %v6169 = vpack.c.b16 %v5889, %v5885
        %v6170 = vpack.c.b16 %v5890, %v5886
        %v6171 = vpack.c.b16 %v5891, %v5887
        %v6172 = vpack.c.b16 %v5892, %v5888
        %v6173 = vpack.c.b16 %v5897, %v5893
        %v6174 = vpack.c.b16 %v5898, %v5894
        %v6175 = vpack.c.b16 %v5899, %v5895
        %v6176 = vpack.c.b16 %v5900, %v5896
        %v6177 = vpack.c.b16 %v5905, %v5901
        %v6178 = vpack.c.b16 %v5906, %v5902
        %v6179 = vpack.c.b16 %v5907, %v5903
        %v6180 = vpack.c.b16 %v5908, %v5904
        %v6181 = vpack.c.b16 %v5913, %v5909
        %v6182 = vpack.c.b16 %v5914, %v5910
        %v6183 = vpack.c.b16 %v5915, %v5911
        %v6184 = vpack.c.b16 %v5916, %v5912
        %v6185 = vpack.c.b16 %v5921, %v5917
        %v6186 = vpack.c.b16 %v5922, %v5918
        %v6187 = vpack.c.b16 %v5923, %v5919
        %v6188 = vpack.c.b16 %v5924, %v5920
        %v6189 = vpack.c.b16 %v5929, %v5925
        %v6190 = vpack.c.b16 %v5930, %v5926
        %v6191 = vpack.c.b16 %v5931, %v5927
        %v6192 = vpack.c.b16 %v5932, %v5928
        %v6193 = vpack.c.b16 %v5937, %v5933
        %v6194 = vpack.c.b16 %v5938, %v5934
        %v6195 = vpack.c.b16 %v5939, %v5935
        %v6196 = vpack.c.b16 %v5940, %v5936
        %6453 = vmatpush.bf16.msra.mxu0 %v5969
        %6454 = vmatpush.bf16.msra.mxu0 %v5965
        %6455 = vmatpush.bf16.msra.mxu0 %v5961
        %6456 = vmatpush.bf16.msra.mxu0 %v5957
        %6457 = vmatpush.bf16.msra.mxu0 %v5953
        %6458 = vmatpush.bf16.msra.mxu0 %v5949
        %6459 = vmatpush.bf16.msra.mxu0 %v5945
        %6460 = vmatpush.bf16.msra.mxu0 %v5941
        %6461 = vmatmul.bf16.gmra.mxu0 %v4899
        %v6462 = vpop.f32.mrf.mxu0
        %v6463 = vadd.f32 %v5165, %v6462
        %v6464 = vpop.f32.mrf.mxu0
        %6465 = vdwg.mxu0
        %6466 = vmatpush.bf16.msra.mxu0 %v6001
        %6467 = vmatpush.bf16.msra.mxu0 %v5997
        %6468 = vmatpush.bf16.msra.mxu0 %v5993
        %6469 = vmatpush.bf16.msra.mxu0 %v5989
        %6470 = vmatpush.bf16.msra.mxu0 %v5985
        %6471 = vmatpush.bf16.msra.mxu0 %v5981
        %6472 = vmatpush.bf16.msra.mxu0 %v5977
        %6473 = vmatpush.bf16.msra.mxu0 %v5973
        %6474 = vmatmul.bf16.gmra.mxu0 %v4900
        %v6475 = vpop.f32.mrf.mxu0
        %v6476 = vadd.f32 %v6463, %v6475
        %v6477 = vpop.f32.mrf.mxu0
        %6478 = vdwg.mxu0
        %6479 = vmatpush.bf16.msra.mxu0 %v6033
        %6480 = vmatpush.bf16.msra.mxu0 %v6029
        %6481 = vmatpush.bf16.msra.mxu0 %v6025
        %6482 = vmatpush.bf16.msra.mxu0 %v6021
        %6483 = vmatpush.bf16.msra.mxu0 %v6017
        %6484 = vmatpush.bf16.msra.mxu0 %v6013
        %6485 = vmatpush.bf16.msra.mxu0 %v6009
        %6486 = vmatpush.bf16.msra.mxu0 %v6005
        %6487 = vmatmul.bf16.gmra.mxu0 %v4901
        %v6488 = vpop.f32.mrf.mxu0
        %v6489 = vadd.f32 %v6476, %v6488
        %v6490 = vpop.f32.mrf.mxu0
        %6491 = vdwg.mxu0
        %6492 = vmatpush.bf16.msra.mxu0 %v6065
        %6493 = vmatpush.bf16.msra.mxu0 %v6061
        %6494 = vmatpush.bf16.msra.mxu0 %v6057
        %6495 = vmatpush.bf16.msra.mxu0 %v6053
        %6496 = vmatpush.bf16.msra.mxu0 %v6049
        %6497 = vmatpush.bf16.msra.mxu0 %v6045
        %6498 = vmatpush.bf16.msra.mxu0 %v6041
        %6499 = vmatpush.bf16.msra.mxu0 %v6037
        %6500 = vmatmul.bf16.gmra.mxu0 %v4902
        %v6501 = vpop.f32.mrf.mxu0
        %v6502 = vadd.f32 %v6489, %v6501
        %v6503 = vpop.f32.mrf.mxu0
        %6504 = vdwg.mxu0
        %6505 = vmatpush.bf16.msra.mxu0 %v6097
        %6506 = vmatpush.bf16.msra.mxu0 %v6093
        %6507 = vmatpush.bf16.msra.mxu0 %v6089
        %6508 = vmatpush.bf16.msra.mxu0 %v6085
        %6509 = vmatpush.bf16.msra.mxu0 %v6081
        %6510 = vmatpush.bf16.msra.mxu0 %v6077
        %6511 = vmatpush.bf16.msra.mxu0 %v6073
        %6512 = vmatpush.bf16.msra.mxu0 %v6069
        %6513 = vmatmul.bf16.gmra.mxu0 %v4903
        %v6514 = vpop.f32.mrf.mxu0
        %v6515 = vadd.f32 %v6502, %v6514
        %v6516 = vpop.f32.mrf.mxu0
        %6517 = vdwg.mxu0
        %6518 = vmatpush.bf16.msra.mxu0 %v6129
        %6519 = vmatpush.bf16.msra.mxu0 %v6125
        %6520 = vmatpush.bf16.msra.mxu0 %v6121
        %6521 = vmatpush.bf16.msra.mxu0 %v6117
        %6522 = vmatpush.bf16.msra.mxu0 %v6113
        %6523 = vmatpush.bf16.msra.mxu0 %v6109
        %6524 = vmatpush.bf16.msra.mxu0 %v6105
        %6525 = vmatpush.bf16.msra.mxu0 %v6101
        %6526 = vmatmul.bf16.gmra.mxu0 %v4904
        %v6527 = vpop.f32.mrf.mxu0
        %v6528 = vadd.f32 %v6515, %v6527
        %v6529 = vpop.f32.mrf.mxu0
        %6530 = vdwg.mxu0
        %6531 = vmatpush.bf16.msra.mxu0 %v6161
        %6532 = vmatpush.bf16.msra.mxu0 %v6157
        %6533 = vmatpush.bf16.msra.mxu0 %v6153
        %6534 = vmatpush.bf16.msra.mxu0 %v6149
        %6535 = vmatpush.bf16.msra.mxu0 %v6145
        %6536 = vmatpush.bf16.msra.mxu0 %v6141
        %6537 = vmatpush.bf16.msra.mxu0 %v6137
        %6538 = vmatpush.bf16.msra.mxu0 %v6133
        %6539 = vmatmul.bf16.gmra.mxu0 %v4905
        %v6540 = vpop.f32.mrf.mxu0
        %v6541 = vadd.f32 %v6528, %v6540
        %v6542 = vpop.f32.mrf.mxu0
        %6543 = vdwg.mxu0
        %6544 = vmatpush.bf16.msra.mxu0 %v6193
        %6545 = vmatpush.bf16.msra.mxu0 %v6189
        %6546 = vmatpush.bf16.msra.mxu0 %v6185
        %6547 = vmatpush.bf16.msra.mxu0 %v6181
        %6548 = vmatpush.bf16.msra.mxu0 %v6177
        %6549 = vmatpush.bf16.msra.mxu0 %v6173
        %6550 = vmatpush.bf16.msra.mxu0 %v6169
        %6551 = vmatpush.bf16.msra.mxu0 %v6165
        %6552 = vmatmul.bf16.gmra.mxu0 %v4906
        %v6553 = vpop.f32.mrf.mxu0
        %v6554 = vadd.f32 %v6541, %v6553
        %v6555 = vpop.f32.mrf.mxu0
        %6556 = vdwg.mxu0
        %6557 = vmatpush.bf16.msra.mxu0 %v5970
        %6558 = vmatpush.bf16.msra.mxu0 %v5966
        %6559 = vmatpush.bf16.msra.mxu0 %v5962
        %6560 = vmatpush.bf16.msra.mxu0 %v5958
        %6561 = vmatpush.bf16.msra.mxu0 %v5954
        %6562 = vmatpush.bf16.msra.mxu0 %v5950
        %6563 = vmatpush.bf16.msra.mxu0 %v5946
        %6564 = vmatpush.bf16.msra.mxu0 %v5942
        %6565 = vmatmul.bf16.gmra.mxu0 %v4899
        %v6566 = vpop.f32.mrf.mxu0
        %v6567 = vadd.f32 %v5166, %v6566
        %v6568 = vpop.f32.mrf.mxu0
        %6569 = vdwg.mxu0
        %6570 = vmatpush.bf16.msra.mxu0 %v6002
        %6571 = vmatpush.bf16.msra.mxu0 %v5998
        %6572 = vmatpush.bf16.msra.mxu0 %v5994
        %6573 = vmatpush.bf16.msra.mxu0 %v5990
        %6574 = vmatpush.bf16.msra.mxu0 %v5986
        %6575 = vmatpush.bf16.msra.mxu0 %v5982
        %6576 = vmatpush.bf16.msra.mxu0 %v5978
        %6577 = vmatpush.bf16.msra.mxu0 %v5974
        %6578 = vmatmul.bf16.gmra.mxu0 %v4900
        %v6579 = vpop.f32.mrf.mxu0
        %v6580 = vadd.f32 %v6567, %v6579
        %v6581 = vpop.f32.mrf.mxu0
        %6582 = vdwg.mxu0
        %6583 = vmatpush.bf16.msra.mxu0 %v6034
        %6584 = vmatpush.bf16.msra.mxu0 %v6030
        %6585 = vmatpush.bf16.msra.mxu0 %v6026
        %6586 = vmatpush.bf16.msra.mxu0 %v6022
        %6587 = vmatpush.bf16.msra.mxu0 %v6018
        %6588 = vmatpush.bf16.msra.mxu0 %v6014
        %6589 = vmatpush.bf16.msra.mxu0 %v6010
        %6590 = vmatpush.bf16.msra.mxu0 %v6006
        %6591 = vmatmul.bf16.gmra.mxu0 %v4901
        %v6592 = vpop.f32.mrf.mxu0
        %v6593 = vadd.f32 %v6580, %v6592
        %v6594 = vpop.f32.mrf.mxu0
        %6595 = vdwg.mxu0
        %6596 = vmatpush.bf16.msra.mxu0 %v6066
        %6597 = vmatpush.bf16.msra.mxu0 %v6062
        %6598 = vmatpush.bf16.msra.mxu0 %v6058
        %6599 = vmatpush.bf16.msra.mxu0 %v6054
        %6600 = vmatpush.bf16.msra.mxu0 %v6050
        %6601 = vmatpush.bf16.msra.mxu0 %v6046
        %6602 = vmatpush.bf16.msra.mxu0 %v6042
        %6603 = vmatpush.bf16.msra.mxu0 %v6038
        %6604 = vmatmul.bf16.gmra.mxu0 %v4902
        %v6605 = vpop.f32.mrf.mxu0
        %v6606 = vadd.f32 %v6593, %v6605
        %v6607 = vpop.f32.mrf.mxu0
        %6608 = vdwg.mxu0
        %6609 = vmatpush.bf16.msra.mxu0 %v6098
        %6610 = vmatpush.bf16.msra.mxu0 %v6094
        %6611 = vmatpush.bf16.msra.mxu0 %v6090
        %6612 = vmatpush.bf16.msra.mxu0 %v6086
        %6613 = vmatpush.bf16.msra.mxu0 %v6082
        %6614 = vmatpush.bf16.msra.mxu0 %v6078
        %6615 = vmatpush.bf16.msra.mxu0 %v6074
        %6616 = vmatpush.bf16.msra.mxu0 %v6070
        %6617 = vmatmul.bf16.gmra.mxu0 %v4903
        %v6618 = vpop.f32.mrf.mxu0
        %v6619 = vadd.f32 %v6606, %v6618
        %v6620 = vpop.f32.mrf.mxu0
        %6621 = vdwg.mxu0
        %6622 = vmatpush.bf16.msra.mxu0 %v6130
        %6623 = vmatpush.bf16.msra.mxu0 %v6126
        %6624 = vmatpush.bf16.msra.mxu0 %v6122
        %6625 = vmatpush.bf16.msra.mxu0 %v6118
        %6626 = vmatpush.bf16.msra.mxu0 %v6114
        %6627 = vmatpush.bf16.msra.mxu0 %v6110
        %6628 = vmatpush.bf16.msra.mxu0 %v6106
        %6629 = vmatpush.bf16.msra.mxu0 %v6102
        %6630 = vmatmul.bf16.gmra.mxu0 %v4904
        %v6631 = vpop.f32.mrf.mxu0
        %v6632 = vadd.f32 %v6619, %v6631
        %v6633 = vpop.f32.mrf.mxu0
        %6634 = vdwg.mxu0
        %6635 = vmatpush.bf16.msra.mxu0 %v6162
        %6636 = vmatpush.bf16.msra.mxu0 %v6158
        %6637 = vmatpush.bf16.msra.mxu0 %v6154
        %6638 = vmatpush.bf16.msra.mxu0 %v6150
        %6639 = vmatpush.bf16.msra.mxu0 %v6146
        %6640 = vmatpush.bf16.msra.mxu0 %v6142
        %6641 = vmatpush.bf16.msra.mxu0 %v6138
        %6642 = vmatpush.bf16.msra.mxu0 %v6134
        %6643 = vmatmul.bf16.gmra.mxu0 %v4905
        %v6644 = vpop.f32.mrf.mxu0
        %v6645 = vadd.f32 %v6632, %v6644
        %v6646 = vpop.f32.mrf.mxu0
        %6647 = vdwg.mxu0
        %6648 = vmatpush.bf16.msra.mxu0 %v6194
        %6649 = vmatpush.bf16.msra.mxu0 %v6190
        %6650 = vmatpush.bf16.msra.mxu0 %v6186
        %6651 = vmatpush.bf16.msra.mxu0 %v6182
        %6652 = vmatpush.bf16.msra.mxu0 %v6178
        %6653 = vmatpush.bf16.msra.mxu0 %v6174
        %6654 = vmatpush.bf16.msra.mxu0 %v6170
        %6655 = vmatpush.bf16.msra.mxu0 %v6166
        %6656 = vmatmul.bf16.gmra.mxu0 %v4906
        %v6657 = vpop.f32.mrf.mxu0
        %v6658 = vadd.f32 %v6645, %v6657
        %v6659 = vpop.f32.mrf.mxu0
        %6660 = vdwg.mxu0
        %6661 = vmatpush.bf16.msra.mxu0 %v5971
        %6662 = vmatpush.bf16.msra.mxu0 %v5967
        %6663 = vmatpush.bf16.msra.mxu0 %v5963
        %6664 = vmatpush.bf16.msra.mxu0 %v5959
        %6665 = vmatpush.bf16.msra.mxu0 %v5955
        %6666 = vmatpush.bf16.msra.mxu0 %v5951
        %6667 = vmatpush.bf16.msra.mxu0 %v5947
        %6668 = vmatpush.bf16.msra.mxu0 %v5943
        %6669 = vmatmul.bf16.gmra.mxu0 %v4899
        %v6670 = vpop.f32.mrf.mxu0
        %v6671 = vadd.f32 %v5167, %v6670
        %v6672 = vpop.f32.mrf.mxu0
        %6673 = vdwg.mxu0
        %6674 = vmatpush.bf16.msra.mxu0 %v6003
        %6675 = vmatpush.bf16.msra.mxu0 %v5999
        %6676 = vmatpush.bf16.msra.mxu0 %v5995
        %6677 = vmatpush.bf16.msra.mxu0 %v5991
        %6678 = vmatpush.bf16.msra.mxu0 %v5987
        %6679 = vmatpush.bf16.msra.mxu0 %v5983
        %6680 = vmatpush.bf16.msra.mxu0 %v5979
        %6681 = vmatpush.bf16.msra.mxu0 %v5975
        %6682 = vmatmul.bf16.gmra.mxu0 %v4900
        %v6683 = vpop.f32.mrf.mxu0
        %v6684 = vadd.f32 %v6671, %v6683
        %v6685 = vpop.f32.mrf.mxu0
        %6686 = vdwg.mxu0
        %6687 = vmatpush.bf16.msra.mxu0 %v6035
        %6688 = vmatpush.bf16.msra.mxu0 %v6031
        %6689 = vmatpush.bf16.msra.mxu0 %v6027
        %6690 = vmatpush.bf16.msra.mxu0 %v6023
        %6691 = vmatpush.bf16.msra.mxu0 %v6019
        %6692 = vmatpush.bf16.msra.mxu0 %v6015
        %6693 = vmatpush.bf16.msra.mxu0 %v6011
        %6694 = vmatpush.bf16.msra.mxu0 %v6007
        %6695 = vmatmul.bf16.gmra.mxu0 %v4901
        %v6696 = vpop.f32.mrf.mxu0
        %v6697 = vadd.f32 %v6684, %v6696
        %v6698 = vpop.f32.mrf.mxu0
        %6699 = vdwg.mxu0
        %6700 = vmatpush.bf16.msra.mxu0 %v6067
        %6701 = vmatpush.bf16.msra.mxu0 %v6063
        %6702 = vmatpush.bf16.msra.mxu0 %v6059
        %6703 = vmatpush.bf16.msra.mxu0 %v6055
        %6704 = vmatpush.bf16.msra.mxu0 %v6051
        %6705 = vmatpush.bf16.msra.mxu0 %v6047
        %6706 = vmatpush.bf16.msra.mxu0 %v6043
        %6707 = vmatpush.bf16.msra.mxu0 %v6039
        %6708 = vmatmul.bf16.gmra.mxu0 %v4902
        %v6709 = vpop.f32.mrf.mxu0
        %v6710 = vadd.f32 %v6697, %v6709
        %v6711 = vpop.f32.mrf.mxu0
        %6712 = vdwg.mxu0
        %6713 = vmatpush.bf16.msra.mxu0 %v6099
        %6714 = vmatpush.bf16.msra.mxu0 %v6095
        %6715 = vmatpush.bf16.msra.mxu0 %v6091
        %6716 = vmatpush.bf16.msra.mxu0 %v6087
        %6717 = vmatpush.bf16.msra.mxu0 %v6083
        %6718 = vmatpush.bf16.msra.mxu0 %v6079
        %6719 = vmatpush.bf16.msra.mxu0 %v6075
        %6720 = vmatpush.bf16.msra.mxu0 %v6071
        %6721 = vmatmul.bf16.gmra.mxu0 %v4903
        %v6722 = vpop.f32.mrf.mxu0
        %v6723 = vadd.f32 %v6710, %v6722
        %v6724 = vpop.f32.mrf.mxu0
        %6725 = vdwg.mxu0
        %6726 = vmatpush.bf16.msra.mxu0 %v6131
        %6727 = vmatpush.bf16.msra.mxu0 %v6127
        %6728 = vmatpush.bf16.msra.mxu0 %v6123
        %6729 = vmatpush.bf16.msra.mxu0 %v6119
        %6730 = vmatpush.bf16.msra.mxu0 %v6115
        %6731 = vmatpush.bf16.msra.mxu0 %v6111
        %6732 = vmatpush.bf16.msra.mxu0 %v6107
        %6733 = vmatpush.bf16.msra.mxu0 %v6103
        %6734 = vmatmul.bf16.gmra.mxu0 %v4904
        %v6735 = vpop.f32.mrf.mxu0
        %v6736 = vadd.f32 %v6723, %v6735
        %v6737 = vpop.f32.mrf.mxu0
        %6738 = vdwg.mxu0
        %6739 = vmatpush.bf16.msra.mxu0 %v6163
        %6740 = vmatpush.bf16.msra.mxu0 %v6159
        %6741 = vmatpush.bf16.msra.mxu0 %v6155
        %6742 = vmatpush.bf16.msra.mxu0 %v6151
        %6743 = vmatpush.bf16.msra.mxu0 %v6147
        %6744 = vmatpush.bf16.msra.mxu0 %v6143
        %6745 = vmatpush.bf16.msra.mxu0 %v6139
        %6746 = vmatpush.bf16.msra.mxu0 %v6135
        %6747 = vmatmul.bf16.gmra.mxu0 %v4905
        %v6748 = vpop.f32.mrf.mxu0
        %v6749 = vadd.f32 %v6736, %v6748
        %v6750 = vpop.f32.mrf.mxu0
        %6751 = vdwg.mxu0
        %6752 = vmatpush.bf16.msra.mxu0 %v6195
        %6753 = vmatpush.bf16.msra.mxu0 %v6191
        %6754 = vmatpush.bf16.msra.mxu0 %v6187
        %6755 = vmatpush.bf16.msra.mxu0 %v6183
        %6756 = vmatpush.bf16.msra.mxu0 %v6179
        %6757 = vmatpush.bf16.msra.mxu0 %v6175
        %6758 = vmatpush.bf16.msra.mxu0 %v6171
        %6759 = vmatpush.bf16.msra.mxu0 %v6167
        %6760 = vmatmul.bf16.gmra.mxu0 %v4906
        %v6761 = vpop.f32.mrf.mxu0
        %v6762 = vadd.f32 %v6749, %v6761
        %v6763 = vpop.f32.mrf.mxu0
        %6764 = vdwg.mxu0
        %6765 = vmatpush.bf16.msra.mxu0 %v5972
        %6766 = vmatpush.bf16.msra.mxu0 %v5968
        %6767 = vmatpush.bf16.msra.mxu0 %v5964
        %6768 = vmatpush.bf16.msra.mxu0 %v5960
        %6769 = vmatpush.bf16.msra.mxu0 %v5956
        %6770 = vmatpush.bf16.msra.mxu0 %v5952
        %6771 = vmatpush.bf16.msra.mxu0 %v5948
        %6772 = vmatpush.bf16.msra.mxu0 %v5944
        %6773 = vmatmul.bf16.gmra.mxu0 %v4899
        %v6774 = vpop.f32.mrf.mxu0
        %v6775 = vadd.f32 %v5168, %v6774
        %v6776 = vpop.f32.mrf.mxu0
        %6777 = vdwg.mxu0
        %6778 = vmatpush.bf16.msra.mxu0 %v6004
        %6779 = vmatpush.bf16.msra.mxu0 %v6000
        %6780 = vmatpush.bf16.msra.mxu0 %v5996
        %6781 = vmatpush.bf16.msra.mxu0 %v5992
        %6782 = vmatpush.bf16.msra.mxu0 %v5988
        %6783 = vmatpush.bf16.msra.mxu0 %v5984
        %6784 = vmatpush.bf16.msra.mxu0 %v5980
        %6785 = vmatpush.bf16.msra.mxu0 %v5976
        %6786 = vmatmul.bf16.gmra.mxu0 %v4900
        %v6787 = vpop.f32.mrf.mxu0
        %v6788 = vadd.f32 %v6775, %v6787
        %v6789 = vpop.f32.mrf.mxu0
        %6790 = vdwg.mxu0
        %6791 = vmatpush.bf16.msra.mxu0 %v6036
        %6792 = vmatpush.bf16.msra.mxu0 %v6032
        %6793 = vmatpush.bf16.msra.mxu0 %v6028
        %6794 = vmatpush.bf16.msra.mxu0 %v6024
        %6795 = vmatpush.bf16.msra.mxu0 %v6020
        %6796 = vmatpush.bf16.msra.mxu0 %v6016
        %6797 = vmatpush.bf16.msra.mxu0 %v6012
        %6798 = vmatpush.bf16.msra.mxu0 %v6008
        %6799 = vmatmul.bf16.gmra.mxu0 %v4901
        %v6800 = vpop.f32.mrf.mxu0
        %v6801 = vadd.f32 %v6788, %v6800
        %v6802 = vpop.f32.mrf.mxu0
        %6803 = vdwg.mxu0
        %6804 = vmatpush.bf16.msra.mxu0 %v6068
        %6805 = vmatpush.bf16.msra.mxu0 %v6064
        %6806 = vmatpush.bf16.msra.mxu0 %v6060
        %6807 = vmatpush.bf16.msra.mxu0 %v6056
        %6808 = vmatpush.bf16.msra.mxu0 %v6052
        %6809 = vmatpush.bf16.msra.mxu0 %v6048
        %6810 = vmatpush.bf16.msra.mxu0 %v6044
        %6811 = vmatpush.bf16.msra.mxu0 %v6040
        %6812 = vmatmul.bf16.gmra.mxu0 %v4902
        %v6813 = vpop.f32.mrf.mxu0
        %v6814 = vadd.f32 %v6801, %v6813
        %v6815 = vpop.f32.mrf.mxu0
        %6816 = vdwg.mxu0
        %6817 = vmatpush.bf16.msra.mxu0 %v6100
        %6818 = vmatpush.bf16.msra.mxu0 %v6096
        %6819 = vmatpush.bf16.msra.mxu0 %v6092
        %6820 = vmatpush.bf16.msra.mxu0 %v6088
        %6821 = vmatpush.bf16.msra.mxu0 %v6084
        %6822 = vmatpush.bf16.msra.mxu0 %v6080
        %6823 = vmatpush.bf16.msra.mxu0 %v6076
        %6824 = vmatpush.bf16.msra.mxu0 %v6072
        %6825 = vmatmul.bf16.gmra.mxu0 %v4903
        %v6826 = vpop.f32.mrf.mxu0
        %v6827 = vadd.f32 %v6814, %v6826
        %v6828 = vpop.f32.mrf.mxu0
        %6829 = vdwg.mxu0
        %6830 = vmatpush.bf16.msra.mxu0 %v6132
        %6831 = vmatpush.bf16.msra.mxu0 %v6128
        %6832 = vmatpush.bf16.msra.mxu0 %v6124
        %6833 = vmatpush.bf16.msra.mxu0 %v6120
        %6834 = vmatpush.bf16.msra.mxu0 %v6116
        %6835 = vmatpush.bf16.msra.mxu0 %v6112
        %6836 = vmatpush.bf16.msra.mxu0 %v6108
        %6837 = vmatpush.bf16.msra.mxu0 %v6104
        %6838 = vmatmul.bf16.gmra.mxu0 %v4904
        %v6839 = vpop.f32.mrf.mxu0
        %v6840 = vadd.f32 %v6827, %v6839
        %v6841 = vpop.f32.mrf.mxu0
        %6842 = vdwg.mxu0
        %6843 = vmatpush.bf16.msra.mxu0 %v6164
        %6844 = vmatpush.bf16.msra.mxu0 %v6160
        %6845 = vmatpush.bf16.msra.mxu0 %v6156
        %6846 = vmatpush.bf16.msra.mxu0 %v6152
        %6847 = vmatpush.bf16.msra.mxu0 %v6148
        %6848 = vmatpush.bf16.msra.mxu0 %v6144
        %6849 = vmatpush.bf16.msra.mxu0 %v6140
        %6850 = vmatpush.bf16.msra.mxu0 %v6136
        %6851 = vmatmul.bf16.gmra.mxu0 %v4905
        %v6852 = vpop.f32.mrf.mxu0
        %v6853 = vadd.f32 %v6840, %v6852
        %v6854 = vpop.f32.mrf.mxu0
        %6855 = vdwg.mxu0
        %6856 = vmatpush.bf16.msra.mxu0 %v6196
        %6857 = vmatpush.bf16.msra.mxu0 %v6192
        %6858 = vmatpush.bf16.msra.mxu0 %v6188
        %6859 = vmatpush.bf16.msra.mxu0 %v6184
        %6860 = vmatpush.bf16.msra.mxu0 %v6180
        %6861 = vmatpush.bf16.msra.mxu0 %v6176
        %6862 = vmatpush.bf16.msra.mxu0 %v6172
        %6863 = vmatpush.bf16.msra.mxu0 %v6168
        %6864 = vmatmul.bf16.gmra.mxu0 %v4906
        %v6865 = vpop.f32.mrf.mxu0
        %v6866 = vadd.f32 %v6853, %v6865
        %v6867 = vpop.f32.mrf.mxu0
        %6868 = vdwg.mxu0
        %v6869 = vmax.f32 %v6554, 0.0
        %v6870 = vmax.f32 %v6658, 0.0
        %v6871 = vmax.f32 %v6762, 0.0
        %v6872 = vmax.f32 %v6866, 0.0
        %v6873 = vld [vmem:[#allocation3] sm:$0xff]
        %v6874 = vld [vmem:[#allocation3 + $0x8] sm:$0xff]
        %v6875 = vld [vmem:[#allocation3 + $0x10] sm:$0xff]
        %v6876 = vld [vmem:[#allocation3 + $0x18] sm:$0xff]
        %v6877 = vld [vmem:[#allocation3 + $0x20] sm:$0xff]
        %v6878 = vld [vmem:[#allocation3 + $0x28] sm:$0xff]
        %v6879 = vld [vmem:[#allocation3 + $0x30] sm:$0xff]
        %v6880 = vld [vmem:[#allocation3 + $0x38] sm:$0xff]
        %v6881 = vpack.c.bf16 %v6869, %v6869
        %v6882 = vpack.c.bf16 %v6870, %v6870
        %v6883 = vpack.c.bf16 %v6871, %v6871
        %v6884 = vpack.c.bf16 %v6872, %v6872
        %v6885 = vld [vmem:[%s607] sm:$0xff]
        %v6886 = vld [vmem:[%s607 + $0x8] sm:$0xff]
        %v6887 = vld [vmem:[%s607 + $0x10] sm:$0xff]
        %v6888 = vld [vmem:[%s607 + $0x18] sm:$0xff]
        %v6889 = vld [vmem:[%s607 + $0x20] sm:$0xff]
        %v6890 = vld [vmem:[%s607 + $0x28] sm:$0xff]
        %v6891 = vld [vmem:[%s607 + $0x30] sm:$0xff]
        %v6892 = vld [vmem:[%s607 + $0x38] sm:$0xff]
        %v6893 = vld [vmem:[%s607 + $0x40] sm:$0xff]
        %v6894 = vld [vmem:[%s607 + $0x48] sm:$0xff]
        %v6895 = vld [vmem:[%s607 + $0x50] sm:$0xff]
        %v6896 = vld [vmem:[%s607 + $0x58] sm:$0xff]
        %v6897 = vld [vmem:[%s607 + $0x60] sm:$0xff]
        %v6898 = vld [vmem:[%s607 + $0x68] sm:$0xff]
        %v6899 = vld [vmem:[%s607 + $0x70] sm:$0xff]
        %v6900 = vld [vmem:[%s607 + $0x78] sm:$0xff]
        %v6901 = vld [vmem:[%s607 + $0x80] sm:$0xff]
        %v6902 = vld [vmem:[%s607 + $0x88] sm:$0xff]
        %v6903 = vld [vmem:[%s607 + $0x90] sm:$0xff]
        %v6904 = vld [vmem:[%s607 + $0x98] sm:$0xff]
        %v6905 = vld [vmem:[%s607 + $0xa0] sm:$0xff]
        %v6906 = vld [vmem:[%s607 + $0xa8] sm:$0xff]
        %v6907 = vld [vmem:[%s607 + $0xb0] sm:$0xff]
        %v6908 = vld [vmem:[%s607 + $0xb8] sm:$0xff]
        %v6909 = vld [vmem:[%s607 + $0xc0] sm:$0xff]
        %v6910 = vld [vmem:[%s607 + $0xc8] sm:$0xff]
        %v6911 = vld [vmem:[%s607 + $0xd0] sm:$0xff]
        %v6912 = vld [vmem:[%s607 + $0xd8] sm:$0xff]
        %v6913 = vld [vmem:[%s607 + $0xe0] sm:$0xff]
        %v6914 = vld [vmem:[%s607 + $0xe8] sm:$0xff]
        %v6915 = vld [vmem:[%s607 + $0xf0] sm:$0xff]
        %v6916 = vld [vmem:[%s607 + $0xf8] sm:$0xff]
        %v6917 = vld [vmem:[%s607 + $0x100] sm:$0xff]
        %v6918 = vld [vmem:[%s607 + $0x108] sm:$0xff]
        %v6919 = vld [vmem:[%s607 + $0x110] sm:$0xff]
        %v6920 = vld [vmem:[%s607 + $0x118] sm:$0xff]
        %v6921 = vld [vmem:[%s607 + $0x120] sm:$0xff]
        %v6922 = vld [vmem:[%s607 + $0x128] sm:$0xff]
        %v6923 = vld [vmem:[%s607 + $0x130] sm:$0xff]
        %v6924 = vld [vmem:[%s607 + $0x138] sm:$0xff]
        %v6925 = vld [vmem:[%s607 + $0x140] sm:$0xff]
        %v6926 = vld [vmem:[%s607 + $0x148] sm:$0xff]
        %v6927 = vld [vmem:[%s607 + $0x150] sm:$0xff]
        %v6928 = vld [vmem:[%s607 + $0x158] sm:$0xff]
        %v6929 = vld [vmem:[%s607 + $0x160] sm:$0xff]
        %v6930 = vld [vmem:[%s607 + $0x168] sm:$0xff]
        %v6931 = vld [vmem:[%s607 + $0x170] sm:$0xff]
        %v6932 = vld [vmem:[%s607 + $0x178] sm:$0xff]
        %v6933 = vld [vmem:[%s607 + $0x180] sm:$0xff]
        %v6934 = vld [vmem:[%s607 + $0x188] sm:$0xff]
        %v6935 = vld [vmem:[%s607 + $0x190] sm:$0xff]
        %v6936 = vld [vmem:[%s607 + $0x198] sm:$0xff]
        %v6937 = vld [vmem:[%s607 + $0x1a0] sm:$0xff]
        %v6938 = vld [vmem:[%s607 + $0x1a8] sm:$0xff]
        %v6939 = vld [vmem:[%s607 + $0x1b0] sm:$0xff]
        %v6940 = vld [vmem:[%s607 + $0x1b8] sm:$0xff]
        %v6941 = vld [vmem:[%s607 + $0x1c0] sm:$0xff]
        %v6942 = vld [vmem:[%s607 + $0x1c8] sm:$0xff]
        %v6943 = vld [vmem:[%s607 + $0x1d0] sm:$0xff]
        %v6944 = vld [vmem:[%s607 + $0x1d8] sm:$0xff]
        %v6945 = vld [vmem:[%s607 + $0x1e0] sm:$0xff]
        %v6946 = vld [vmem:[%s607 + $0x1e8] sm:$0xff]
        %v6947 = vld [vmem:[%s607 + $0x1f0] sm:$0xff]
        %v6948 = vld [vmem:[%s607 + $0x1f8] sm:$0xff]
        %v6949 = vld [vmem:[%s607 + $0x200] sm:$0xff]
        %v6950 = vld [vmem:[%s607 + $0x208] sm:$0xff]
        %v6951 = vld [vmem:[%s607 + $0x210] sm:$0xff]
        %v6952 = vld [vmem:[%s607 + $0x218] sm:$0xff]
        %v6953 = vld [vmem:[%s607 + $0x220] sm:$0xff]
        %v6954 = vld [vmem:[%s607 + $0x228] sm:$0xff]
        %v6955 = vld [vmem:[%s607 + $0x230] sm:$0xff]
        %v6956 = vld [vmem:[%s607 + $0x238] sm:$0xff]
        %v6957 = vld [vmem:[%s607 + $0x240] sm:$0xff]
        %v6958 = vld [vmem:[%s607 + $0x248] sm:$0xff]
        %v6959 = vld [vmem:[%s607 + $0x250] sm:$0xff]
        %v6960 = vld [vmem:[%s607 + $0x258] sm:$0xff]
        %v6961 = vld [vmem:[%s607 + $0x260] sm:$0xff]
        %v6962 = vld [vmem:[%s607 + $0x268] sm:$0xff]
        %v6963 = vld [vmem:[%s607 + $0x270] sm:$0xff]
        %v6964 = vld [vmem:[%s607 + $0x278] sm:$0xff]
        %v6965 = vld [vmem:[%s607 + $0x280] sm:$0xff]
        %v6966 = vld [vmem:[%s607 + $0x288] sm:$0xff]
        %v6967 = vld [vmem:[%s607 + $0x290] sm:$0xff]
        %v6968 = vld [vmem:[%s607 + $0x298] sm:$0xff]
        %v6969 = vld [vmem:[%s607 + $0x2a0] sm:$0xff]
        %v6970 = vld [vmem:[%s607 + $0x2a8] sm:$0xff]
        %v6971 = vld [vmem:[%s607 + $0x2b0] sm:$0xff]
        %v6972 = vld [vmem:[%s607 + $0x2b8] sm:$0xff]
        %v6973 = vld [vmem:[%s607 + $0x2c0] sm:$0xff]
        %v6974 = vld [vmem:[%s607 + $0x2c8] sm:$0xff]
        %v6975 = vld [vmem:[%s607 + $0x2d0] sm:$0xff]
        %v6976 = vld [vmem:[%s607 + $0x2d8] sm:$0xff]
        %v6977 = vld [vmem:[%s607 + $0x2e0] sm:$0xff]
        %v6978 = vld [vmem:[%s607 + $0x2e8] sm:$0xff]
        %v6979 = vld [vmem:[%s607 + $0x2f0] sm:$0xff]
        %v6980 = vld [vmem:[%s607 + $0x2f8] sm:$0xff]
        %v6981 = vld [vmem:[%s607 + $0x300] sm:$0xff]
        %v6982 = vld [vmem:[%s607 + $0x308] sm:$0xff]
        %v6983 = vld [vmem:[%s607 + $0x310] sm:$0xff]
        %v6984 = vld [vmem:[%s607 + $0x318] sm:$0xff]
        %v6985 = vld [vmem:[%s607 + $0x320] sm:$0xff]
        %v6986 = vld [vmem:[%s607 + $0x328] sm:$0xff]
        %v6987 = vld [vmem:[%s607 + $0x330] sm:$0xff]
        %v6988 = vld [vmem:[%s607 + $0x338] sm:$0xff]
        %v6989 = vld [vmem:[%s607 + $0x340] sm:$0xff]
        %v6990 = vld [vmem:[%s607 + $0x348] sm:$0xff]
        %v6991 = vld [vmem:[%s607 + $0x350] sm:$0xff]
        %v6992 = vld [vmem:[%s607 + $0x358] sm:$0xff]
        %v6993 = vld [vmem:[%s607 + $0x360] sm:$0xff]
        %v6994 = vld [vmem:[%s607 + $0x368] sm:$0xff]
        %v6995 = vld [vmem:[%s607 + $0x370] sm:$0xff]
        %v6996 = vld [vmem:[%s607 + $0x378] sm:$0xff]
        %v6997 = vld [vmem:[%s607 + $0x380] sm:$0xff]
        %v6998 = vld [vmem:[%s607 + $0x388] sm:$0xff]
        %v6999 = vld [vmem:[%s607 + $0x390] sm:$0xff]
        %v7000 = vld [vmem:[%s607 + $0x398] sm:$0xff]
        %v7001 = vld [vmem:[%s607 + $0x3a0] sm:$0xff]
        %v7002 = vld [vmem:[%s607 + $0x3a8] sm:$0xff]
        %v7003 = vld [vmem:[%s607 + $0x3b0] sm:$0xff]
        %v7004 = vld [vmem:[%s607 + $0x3b8] sm:$0xff]
        %v7005 = vld [vmem:[%s607 + $0x3c0] sm:$0xff]
        %v7006 = vld [vmem:[%s607 + $0x3c8] sm:$0xff]
        %v7007 = vld [vmem:[%s607 + $0x3d0] sm:$0xff]
        %v7008 = vld [vmem:[%s607 + $0x3d8] sm:$0xff]
        %v7009 = vld [vmem:[%s607 + $0x3e0] sm:$0xff]
        %v7010 = vld [vmem:[%s607 + $0x3e8] sm:$0xff]
        %v7011 = vld [vmem:[%s607 + $0x3f0] sm:$0xff]
        %v7012 = vld [vmem:[%s607 + $0x3f8] sm:$0xff]
        %v7013 = vld [vmem:[%s607 + $0x400] sm:$0xff]
        %v7014 = vld [vmem:[%s607 + $0x408] sm:$0xff]
        %v7015 = vld [vmem:[%s607 + $0x410] sm:$0xff]
        %v7016 = vld [vmem:[%s607 + $0x418] sm:$0xff]
        %v7017 = vld [vmem:[%s607 + $0x420] sm:$0xff]
        %v7018 = vld [vmem:[%s607 + $0x428] sm:$0xff]
        %v7019 = vld [vmem:[%s607 + $0x430] sm:$0xff]
        %v7020 = vld [vmem:[%s607 + $0x438] sm:$0xff]
        %v7021 = vld [vmem:[%s607 + $0x440] sm:$0xff]
        %v7022 = vld [vmem:[%s607 + $0x448] sm:$0xff]
        %v7023 = vld [vmem:[%s607 + $0x450] sm:$0xff]
        %v7024 = vld [vmem:[%s607 + $0x458] sm:$0xff]
        %v7025 = vld [vmem:[%s607 + $0x460] sm:$0xff]
        %v7026 = vld [vmem:[%s607 + $0x468] sm:$0xff]
        %v7027 = vld [vmem:[%s607 + $0x470] sm:$0xff]
        %v7028 = vld [vmem:[%s607 + $0x478] sm:$0xff]
        %v7029 = vld [vmem:[%s607 + $0x480] sm:$0xff]
        %v7030 = vld [vmem:[%s607 + $0x488] sm:$0xff]
        %v7031 = vld [vmem:[%s607 + $0x490] sm:$0xff]
        %v7032 = vld [vmem:[%s607 + $0x498] sm:$0xff]
        %v7033 = vld [vmem:[%s607 + $0x4a0] sm:$0xff]
        %v7034 = vld [vmem:[%s607 + $0x4a8] sm:$0xff]
        %v7035 = vld [vmem:[%s607 + $0x4b0] sm:$0xff]
        %v7036 = vld [vmem:[%s607 + $0x4b8] sm:$0xff]
        %v7037 = vld [vmem:[%s607 + $0x4c0] sm:$0xff]
        %v7038 = vld [vmem:[%s607 + $0x4c8] sm:$0xff]
        %v7039 = vld [vmem:[%s607 + $0x4d0] sm:$0xff]
        %v7040 = vld [vmem:[%s607 + $0x4d8] sm:$0xff]
        %v7041 = vld [vmem:[%s607 + $0x4e0] sm:$0xff]
        %v7042 = vld [vmem:[%s607 + $0x4e8] sm:$0xff]
        %v7043 = vld [vmem:[%s607 + $0x4f0] sm:$0xff]
        %v7044 = vld [vmem:[%s607 + $0x4f8] sm:$0xff]
        %v7045 = vld [vmem:[%s607 + $0x500] sm:$0xff]
        %v7046 = vld [vmem:[%s607 + $0x508] sm:$0xff]
        %v7047 = vld [vmem:[%s607 + $0x510] sm:$0xff]
        %v7048 = vld [vmem:[%s607 + $0x518] sm:$0xff]
        %v7049 = vld [vmem:[%s607 + $0x520] sm:$0xff]
        %v7050 = vld [vmem:[%s607 + $0x528] sm:$0xff]
        %v7051 = vld [vmem:[%s607 + $0x530] sm:$0xff]
        %v7052 = vld [vmem:[%s607 + $0x538] sm:$0xff]
        %v7053 = vld [vmem:[%s607 + $0x540] sm:$0xff]
        %v7054 = vld [vmem:[%s607 + $0x548] sm:$0xff]
        %v7055 = vld [vmem:[%s607 + $0x550] sm:$0xff]
        %v7056 = vld [vmem:[%s607 + $0x558] sm:$0xff]
        %v7057 = vld [vmem:[%s607 + $0x560] sm:$0xff]
        %v7058 = vld [vmem:[%s607 + $0x568] sm:$0xff]
        %v7059 = vld [vmem:[%s607 + $0x570] sm:$0xff]
        %v7060 = vld [vmem:[%s607 + $0x578] sm:$0xff]
        %v7061 = vld [vmem:[%s607 + $0x580] sm:$0xff]
        %v7062 = vld [vmem:[%s607 + $0x588] sm:$0xff]
        %v7063 = vld [vmem:[%s607 + $0x590] sm:$0xff]
        %v7064 = vld [vmem:[%s607 + $0x598] sm:$0xff]
        %v7065 = vld [vmem:[%s607 + $0x5a0] sm:$0xff]
        %v7066 = vld [vmem:[%s607 + $0x5a8] sm:$0xff]
        %v7067 = vld [vmem:[%s607 + $0x5b0] sm:$0xff]
        %v7068 = vld [vmem:[%s607 + $0x5b8] sm:$0xff]
        %v7069 = vld [vmem:[%s607 + $0x5c0] sm:$0xff]
        %v7070 = vld [vmem:[%s607 + $0x5c8] sm:$0xff]
        %v7071 = vld [vmem:[%s607 + $0x5d0] sm:$0xff]
        %v7072 = vld [vmem:[%s607 + $0x5d8] sm:$0xff]
        %v7073 = vld [vmem:[%s607 + $0x5e0] sm:$0xff]
        %v7074 = vld [vmem:[%s607 + $0x5e8] sm:$0xff]
        %v7075 = vld [vmem:[%s607 + $0x5f0] sm:$0xff]
        %v7076 = vld [vmem:[%s607 + $0x5f8] sm:$0xff]
        %v7077 = vld [vmem:[%s607 + $0x600] sm:$0xff]
        %v7078 = vld [vmem:[%s607 + $0x608] sm:$0xff]
        %v7079 = vld [vmem:[%s607 + $0x610] sm:$0xff]
        %v7080 = vld [vmem:[%s607 + $0x618] sm:$0xff]
        %v7081 = vld [vmem:[%s607 + $0x620] sm:$0xff]
        %v7082 = vld [vmem:[%s607 + $0x628] sm:$0xff]
        %v7083 = vld [vmem:[%s607 + $0x630] sm:$0xff]
        %v7084 = vld [vmem:[%s607 + $0x638] sm:$0xff]
        %v7085 = vld [vmem:[%s607 + $0x640] sm:$0xff]
        %v7086 = vld [vmem:[%s607 + $0x648] sm:$0xff]
        %v7087 = vld [vmem:[%s607 + $0x650] sm:$0xff]
        %v7088 = vld [vmem:[%s607 + $0x658] sm:$0xff]
        %v7089 = vld [vmem:[%s607 + $0x660] sm:$0xff]
        %v7090 = vld [vmem:[%s607 + $0x668] sm:$0xff]
        %v7091 = vld [vmem:[%s607 + $0x670] sm:$0xff]
        %v7092 = vld [vmem:[%s607 + $0x678] sm:$0xff]
        %v7093 = vld [vmem:[%s607 + $0x680] sm:$0xff]
        %v7094 = vld [vmem:[%s607 + $0x688] sm:$0xff]
        %v7095 = vld [vmem:[%s607 + $0x690] sm:$0xff]
        %v7096 = vld [vmem:[%s607 + $0x698] sm:$0xff]
        %v7097 = vld [vmem:[%s607 + $0x6a0] sm:$0xff]
        %v7098 = vld [vmem:[%s607 + $0x6a8] sm:$0xff]
        %v7099 = vld [vmem:[%s607 + $0x6b0] sm:$0xff]
        %v7100 = vld [vmem:[%s607 + $0x6b8] sm:$0xff]
        %v7101 = vld [vmem:[%s607 + $0x6c0] sm:$0xff]
        %v7102 = vld [vmem:[%s607 + $0x6c8] sm:$0xff]
        %v7103 = vld [vmem:[%s607 + $0x6d0] sm:$0xff]
        %v7104 = vld [vmem:[%s607 + $0x6d8] sm:$0xff]
        %v7105 = vld [vmem:[%s607 + $0x6e0] sm:$0xff]
        %v7106 = vld [vmem:[%s607 + $0x6e8] sm:$0xff]
        %v7107 = vld [vmem:[%s607 + $0x6f0] sm:$0xff]
        %v7108 = vld [vmem:[%s607 + $0x6f8] sm:$0xff]
        %v7109 = vld [vmem:[%s607 + $0x700] sm:$0xff]
        %v7110 = vld [vmem:[%s607 + $0x708] sm:$0xff]
        %v7111 = vld [vmem:[%s607 + $0x710] sm:$0xff]
        %v7112 = vld [vmem:[%s607 + $0x718] sm:$0xff]
        %v7113 = vld [vmem:[%s607 + $0x720] sm:$0xff]
        %v7114 = vld [vmem:[%s607 + $0x728] sm:$0xff]
        %v7115 = vld [vmem:[%s607 + $0x730] sm:$0xff]
        %v7116 = vld [vmem:[%s607 + $0x738] sm:$0xff]
        %v7117 = vld [vmem:[%s607 + $0x740] sm:$0xff]
        %v7118 = vld [vmem:[%s607 + $0x748] sm:$0xff]
        %v7119 = vld [vmem:[%s607 + $0x750] sm:$0xff]
        %v7120 = vld [vmem:[%s607 + $0x758] sm:$0xff]
        %v7121 = vld [vmem:[%s607 + $0x760] sm:$0xff]
        %v7122 = vld [vmem:[%s607 + $0x768] sm:$0xff]
        %v7123 = vld [vmem:[%s607 + $0x770] sm:$0xff]
        %v7124 = vld [vmem:[%s607 + $0x778] sm:$0xff]
        %v7125 = vld [vmem:[%s607 + $0x780] sm:$0xff]
        %v7126 = vld [vmem:[%s607 + $0x788] sm:$0xff]
        %v7127 = vld [vmem:[%s607 + $0x790] sm:$0xff]
        %v7128 = vld [vmem:[%s607 + $0x798] sm:$0xff]
        %v7129 = vld [vmem:[%s607 + $0x7a0] sm:$0xff]
        %v7130 = vld [vmem:[%s607 + $0x7a8] sm:$0xff]
        %v7131 = vld [vmem:[%s607 + $0x7b0] sm:$0xff]
        %v7132 = vld [vmem:[%s607 + $0x7b8] sm:$0xff]
        %v7133 = vld [vmem:[%s607 + $0x7c0] sm:$0xff]
        %v7134 = vld [vmem:[%s607 + $0x7c8] sm:$0xff]
        %v7135 = vld [vmem:[%s607 + $0x7d0] sm:$0xff]
        %v7136 = vld [vmem:[%s607 + $0x7d8] sm:$0xff]
        %v7137 = vld [vmem:[%s607 + $0x7e0] sm:$0xff]
        %v7138 = vld [vmem:[%s607 + $0x7e8] sm:$0xff]
        %v7139 = vld [vmem:[%s607 + $0x7f0] sm:$0xff]
        %v7140 = vld [vmem:[%s607 + $0x7f8] sm:$0xff]
        %v7397 = vunpack.c.l.b16 %v6885
        %v7398 = vunpack.c.h.b16 %v6885
        %v7399 = vunpack.c.l.b16 %v6886
        %v7400 = vunpack.c.h.b16 %v6886
        %v7401 = vunpack.c.l.b16 %v6887
        %v7402 = vunpack.c.h.b16 %v6887
        %v7403 = vunpack.c.l.b16 %v6888
        %v7404 = vunpack.c.h.b16 %v6888
        %v7405 = vunpack.c.l.b16 %v6889
        %v7406 = vunpack.c.h.b16 %v6889
        %v7407 = vunpack.c.l.b16 %v6890
        %v7408 = vunpack.c.h.b16 %v6890
        %v7409 = vunpack.c.l.b16 %v6891
        %v7410 = vunpack.c.h.b16 %v6891
        %v7411 = vunpack.c.l.b16 %v6892
        %v7412 = vunpack.c.h.b16 %v6892
        %v7413 = vunpack.c.l.b16 %v6893
        %v7414 = vunpack.c.h.b16 %v6893
        %v7415 = vunpack.c.l.b16 %v6894
        %v7416 = vunpack.c.h.b16 %v6894
        %v7417 = vunpack.c.l.b16 %v6895
        %v7418 = vunpack.c.h.b16 %v6895
        %v7419 = vunpack.c.l.b16 %v6896
        %v7420 = vunpack.c.h.b16 %v6896
        %v7421 = vunpack.c.l.b16 %v6897
        %v7422 = vunpack.c.h.b16 %v6897
        %v7423 = vunpack.c.l.b16 %v6898
        %v7424 = vunpack.c.h.b16 %v6898
        %v7425 = vunpack.c.l.b16 %v6899
        %v7426 = vunpack.c.h.b16 %v6899
        %v7427 = vunpack.c.l.b16 %v6900
        %v7428 = vunpack.c.h.b16 %v6900
        %v7429 = vunpack.c.l.b16 %v6901
        %v7430 = vunpack.c.h.b16 %v6901
        %v7431 = vunpack.c.l.b16 %v6902
        %v7432 = vunpack.c.h.b16 %v6902
        %v7433 = vunpack.c.l.b16 %v6903
        %v7434 = vunpack.c.h.b16 %v6903
        %v7435 = vunpack.c.l.b16 %v6904
        %v7436 = vunpack.c.h.b16 %v6904
        %v7437 = vunpack.c.l.b16 %v6905
        %v7438 = vunpack.c.h.b16 %v6905
        %v7439 = vunpack.c.l.b16 %v6906
        %v7440 = vunpack.c.h.b16 %v6906
        %v7441 = vunpack.c.l.b16 %v6907
        %v7442 = vunpack.c.h.b16 %v6907
        %v7443 = vunpack.c.l.b16 %v6908
        %v7444 = vunpack.c.h.b16 %v6908
        %v7445 = vunpack.c.l.b16 %v6909
        %v7446 = vunpack.c.h.b16 %v6909
        %v7447 = vunpack.c.l.b16 %v6910
        %v7448 = vunpack.c.h.b16 %v6910
        %v7449 = vunpack.c.l.b16 %v6911
        %v7450 = vunpack.c.h.b16 %v6911
        %v7451 = vunpack.c.l.b16 %v6912
        %v7452 = vunpack.c.h.b16 %v6912
        %v7453 = vunpack.c.l.b16 %v6913
        %v7454 = vunpack.c.h.b16 %v6913
        %v7455 = vunpack.c.l.b16 %v6914
        %v7456 = vunpack.c.h.b16 %v6914
        %v7457 = vunpack.c.l.b16 %v6915
        %v7458 = vunpack.c.h.b16 %v6915
        %v7459 = vunpack.c.l.b16 %v6916
        %v7460 = vunpack.c.h.b16 %v6916
        %v7461 = vunpack.c.l.b16 %v6917
        %v7462 = vunpack.c.h.b16 %v6917
        %v7463 = vunpack.c.l.b16 %v6918
        %v7464 = vunpack.c.h.b16 %v6918
        %v7465 = vunpack.c.l.b16 %v6919
        %v7466 = vunpack.c.h.b16 %v6919
        %v7467 = vunpack.c.l.b16 %v6920
        %v7468 = vunpack.c.h.b16 %v6920
        %v7469 = vunpack.c.l.b16 %v6921
        %v7470 = vunpack.c.h.b16 %v6921
        %v7471 = vunpack.c.l.b16 %v6922
        %v7472 = vunpack.c.h.b16 %v6922
        %v7473 = vunpack.c.l.b16 %v6923
        %v7474 = vunpack.c.h.b16 %v6923
        %v7475 = vunpack.c.l.b16 %v6924
        %v7476 = vunpack.c.h.b16 %v6924
        %v7477 = vunpack.c.l.b16 %v6925
        %v7478 = vunpack.c.h.b16 %v6925
        %v7479 = vunpack.c.l.b16 %v6926
        %v7480 = vunpack.c.h.b16 %v6926
        %v7481 = vunpack.c.l.b16 %v6927
        %v7482 = vunpack.c.h.b16 %v6927
        %v7483 = vunpack.c.l.b16 %v6928
        %v7484 = vunpack.c.h.b16 %v6928
        %v7485 = vunpack.c.l.b16 %v6929
        %v7486 = vunpack.c.h.b16 %v6929
        %v7487 = vunpack.c.l.b16 %v6930
        %v7488 = vunpack.c.h.b16 %v6930
        %v7489 = vunpack.c.l.b16 %v6931
        %v7490 = vunpack.c.h.b16 %v6931
        %v7491 = vunpack.c.l.b16 %v6932
        %v7492 = vunpack.c.h.b16 %v6932
        %v7493 = vunpack.c.l.b16 %v6933
        %v7494 = vunpack.c.h.b16 %v6933
        %v7495 = vunpack.c.l.b16 %v6934
        %v7496 = vunpack.c.h.b16 %v6934
        %v7497 = vunpack.c.l.b16 %v6935
        %v7498 = vunpack.c.h.b16 %v6935
        %v7499 = vunpack.c.l.b16 %v6936
        %v7500 = vunpack.c.h.b16 %v6936
        %v7501 = vunpack.c.l.b16 %v6937
        %v7502 = vunpack.c.h.b16 %v6937
        %v7503 = vunpack.c.l.b16 %v6938
        %v7504 = vunpack.c.h.b16 %v6938
        %v7505 = vunpack.c.l.b16 %v6939
        %v7506 = vunpack.c.h.b16 %v6939
        %v7507 = vunpack.c.l.b16 %v6940
        %v7508 = vunpack.c.h.b16 %v6940
        %v7509 = vunpack.c.l.b16 %v6941
        %v7510 = vunpack.c.h.b16 %v6941
        %v7511 = vunpack.c.l.b16 %v6942
        %v7512 = vunpack.c.h.b16 %v6942
        %v7513 = vunpack.c.l.b16 %v6943
        %v7514 = vunpack.c.h.b16 %v6943
        %v7515 = vunpack.c.l.b16 %v6944
        %v7516 = vunpack.c.h.b16 %v6944
        %v7517 = vunpack.c.l.b16 %v6945
        %v7518 = vunpack.c.h.b16 %v6945
        %v7519 = vunpack.c.l.b16 %v6946
        %v7520 = vunpack.c.h.b16 %v6946
        %v7521 = vunpack.c.l.b16 %v6947
        %v7522 = vunpack.c.h.b16 %v6947
        %v7523 = vunpack.c.l.b16 %v6948
        %v7524 = vunpack.c.h.b16 %v6948
        %v7525 = vunpack.c.l.b16 %v6949
        %v7526 = vunpack.c.h.b16 %v6949
        %v7527 = vunpack.c.l.b16 %v6950
        %v7528 = vunpack.c.h.b16 %v6950
        %v7529 = vunpack.c.l.b16 %v6951
        %v7530 = vunpack.c.h.b16 %v6951
        %v7531 = vunpack.c.l.b16 %v6952
        %v7532 = vunpack.c.h.b16 %v6952
        %v7533 = vunpack.c.l.b16 %v6953
        %v7534 = vunpack.c.h.b16 %v6953
        %v7535 = vunpack.c.l.b16 %v6954
        %v7536 = vunpack.c.h.b16 %v6954
        %v7537 = vunpack.c.l.b16 %v6955
        %v7538 = vunpack.c.h.b16 %v6955
        %v7539 = vunpack.c.l.b16 %v6956
        %v7540 = vunpack.c.h.b16 %v6956
        %v7541 = vunpack.c.l.b16 %v6957
        %v7542 = vunpack.c.h.b16 %v6957
        %v7543 = vunpack.c.l.b16 %v6958
        %v7544 = vunpack.c.h.b16 %v6958
        %v7545 = vunpack.c.l.b16 %v6959
        %v7546 = vunpack.c.h.b16 %v6959
        %v7547 = vunpack.c.l.b16 %v6960
        %v7548 = vunpack.c.h.b16 %v6960
        %v7549 = vunpack.c.l.b16 %v6961
        %v7550 = vunpack.c.h.b16 %v6961
        %v7551 = vunpack.c.l.b16 %v6962
        %v7552 = vunpack.c.h.b16 %v6962
        %v7553 = vunpack.c.l.b16 %v6963
        %v7554 = vunpack.c.h.b16 %v6963
        %v7555 = vunpack.c.l.b16 %v6964
        %v7556 = vunpack.c.h.b16 %v6964
        %v7557 = vunpack.c.l.b16 %v6965
        %v7558 = vunpack.c.h.b16 %v6965
        %v7559 = vunpack.c.l.b16 %v6966
        %v7560 = vunpack.c.h.b16 %v6966
        %v7561 = vunpack.c.l.b16 %v6967
        %v7562 = vunpack.c.h.b16 %v6967
        %v7563 = vunpack.c.l.b16 %v6968
        %v7564 = vunpack.c.h.b16 %v6968
        %v7565 = vunpack.c.l.b16 %v6969
        %v7566 = vunpack.c.h.b16 %v6969
        %v7567 = vunpack.c.l.b16 %v6970
        %v7568 = vunpack.c.h.b16 %v6970
        %v7569 = vunpack.c.l.b16 %v6971
        %v7570 = vunpack.c.h.b16 %v6971
        %v7571 = vunpack.c.l.b16 %v6972
        %v7572 = vunpack.c.h.b16 %v6972
        %v7573 = vunpack.c.l.b16 %v6973
        %v7574 = vunpack.c.h.b16 %v6973
        %v7575 = vunpack.c.l.b16 %v6974
        %v7576 = vunpack.c.h.b16 %v6974
        %v7577 = vunpack.c.l.b16 %v6975
        %v7578 = vunpack.c.h.b16 %v6975
        %v7579 = vunpack.c.l.b16 %v6976
        %v7580 = vunpack.c.h.b16 %v6976
        %v7581 = vunpack.c.l.b16 %v6977
        %v7582 = vunpack.c.h.b16 %v6977
        %v7583 = vunpack.c.l.b16 %v6978
        %v7584 = vunpack.c.h.b16 %v6978
        %v7585 = vunpack.c.l.b16 %v6979
        %v7586 = vunpack.c.h.b16 %v6979
        %v7587 = vunpack.c.l.b16 %v6980
        %v7588 = vunpack.c.h.b16 %v6980
        %v7589 = vunpack.c.l.b16 %v6981
        %v7590 = vunpack.c.h.b16 %v6981
        %v7591 = vunpack.c.l.b16 %v6982
        %v7592 = vunpack.c.h.b16 %v6982
        %v7593 = vunpack.c.l.b16 %v6983
        %v7594 = vunpack.c.h.b16 %v6983
        %v7595 = vunpack.c.l.b16 %v6984
        %v7596 = vunpack.c.h.b16 %v6984
        %v7597 = vunpack.c.l.b16 %v6985
        %v7598 = vunpack.c.h.b16 %v6985
        %v7599 = vunpack.c.l.b16 %v6986
        %v7600 = vunpack.c.h.b16 %v6986
        %v7601 = vunpack.c.l.b16 %v6987
        %v7602 = vunpack.c.h.b16 %v6987
        %v7603 = vunpack.c.l.b16 %v6988
        %v7604 = vunpack.c.h.b16 %v6988
        %v7605 = vunpack.c.l.b16 %v6989
        %v7606 = vunpack.c.h.b16 %v6989
        %v7607 = vunpack.c.l.b16 %v6990
        %v7608 = vunpack.c.h.b16 %v6990
        %v7609 = vunpack.c.l.b16 %v6991
        %v7610 = vunpack.c.h.b16 %v6991
        %v7611 = vunpack.c.l.b16 %v6992
        %v7612 = vunpack.c.h.b16 %v6992
        %v7613 = vunpack.c.l.b16 %v6993
        %v7614 = vunpack.c.h.b16 %v6993
        %v7615 = vunpack.c.l.b16 %v6994
        %v7616 = vunpack.c.h.b16 %v6994
        %v7617 = vunpack.c.l.b16 %v6995
        %v7618 = vunpack.c.h.b16 %v6995
        %v7619 = vunpack.c.l.b16 %v6996
        %v7620 = vunpack.c.h.b16 %v6996
        %v7621 = vunpack.c.l.b16 %v6997
        %v7622 = vunpack.c.h.b16 %v6997
        %v7623 = vunpack.c.l.b16 %v6998
        %v7624 = vunpack.c.h.b16 %v6998
        %v7625 = vunpack.c.l.b16 %v6999
        %v7626 = vunpack.c.h.b16 %v6999
        %v7627 = vunpack.c.l.b16 %v7000
        %v7628 = vunpack.c.h.b16 %v7000
        %v7629 = vunpack.c.l.b16 %v7001
        %v7630 = vunpack.c.h.b16 %v7001
        %v7631 = vunpack.c.l.b16 %v7002
        %v7632 = vunpack.c.h.b16 %v7002
        %v7633 = vunpack.c.l.b16 %v7003
        %v7634 = vunpack.c.h.b16 %v7003
        %v7635 = vunpack.c.l.b16 %v7004
        %v7636 = vunpack.c.h.b16 %v7004
        %v7637 = vunpack.c.l.b16 %v7005
        %v7638 = vunpack.c.h.b16 %v7005
        %v7639 = vunpack.c.l.b16 %v7006
        %v7640 = vunpack.c.h.b16 %v7006
        %v7641 = vunpack.c.l.b16 %v7007
        %v7642 = vunpack.c.h.b16 %v7007
        %v7643 = vunpack.c.l.b16 %v7008
        %v7644 = vunpack.c.h.b16 %v7008
        %v7645 = vunpack.c.l.b16 %v7009
        %v7646 = vunpack.c.h.b16 %v7009
        %v7647 = vunpack.c.l.b16 %v7010
        %v7648 = vunpack.c.h.b16 %v7010
        %v7649 = vunpack.c.l.b16 %v7011
        %v7650 = vunpack.c.h.b16 %v7011
        %v7651 = vunpack.c.l.b16 %v7012
        %v7652 = vunpack.c.h.b16 %v7012
        %v7653 = vunpack.c.l.b16 %v7013
        %v7654 = vunpack.c.h.b16 %v7013
        %v7655 = vunpack.c.l.b16 %v7014
        %v7656 = vunpack.c.h.b16 %v7014
        %v7657 = vunpack.c.l.b16 %v7015
        %v7658 = vunpack.c.h.b16 %v7015
        %v7659 = vunpack.c.l.b16 %v7016
        %v7660 = vunpack.c.h.b16 %v7016
        %v7661 = vunpack.c.l.b16 %v7017
        %v7662 = vunpack.c.h.b16 %v7017
        %v7663 = vunpack.c.l.b16 %v7018
        %v7664 = vunpack.c.h.b16 %v7018
        %v7665 = vunpack.c.l.b16 %v7019
        %v7666 = vunpack.c.h.b16 %v7019
        %v7667 = vunpack.c.l.b16 %v7020
        %v7668 = vunpack.c.h.b16 %v7020
        %v7669 = vunpack.c.l.b16 %v7021
        %v7670 = vunpack.c.h.b16 %v7021
        %v7671 = vunpack.c.l.b16 %v7022
        %v7672 = vunpack.c.h.b16 %v7022
        %v7673 = vunpack.c.l.b16 %v7023
        %v7674 = vunpack.c.h.b16 %v7023
        %v7675 = vunpack.c.l.b16 %v7024
        %v7676 = vunpack.c.h.b16 %v7024
        %v7677 = vunpack.c.l.b16 %v7025
        %v7678 = vunpack.c.h.b16 %v7025
        %v7679 = vunpack.c.l.b16 %v7026
        %v7680 = vunpack.c.h.b16 %v7026
        %v7681 = vunpack.c.l.b16 %v7027
        %v7682 = vunpack.c.h.b16 %v7027
        %v7683 = vunpack.c.l.b16 %v7028
        %v7684 = vunpack.c.h.b16 %v7028
        %v7685 = vunpack.c.l.b16 %v7029
        %v7686 = vunpack.c.h.b16 %v7029
        %v7687 = vunpack.c.l.b16 %v7030
        %v7688 = vunpack.c.h.b16 %v7030
        %v7689 = vunpack.c.l.b16 %v7031
        %v7690 = vunpack.c.h.b16 %v7031
        %v7691 = vunpack.c.l.b16 %v7032
        %v7692 = vunpack.c.h.b16 %v7032
        %v7693 = vunpack.c.l.b16 %v7033
        %v7694 = vunpack.c.h.b16 %v7033
        %v7695 = vunpack.c.l.b16 %v7034
        %v7696 = vunpack.c.h.b16 %v7034
        %v7697 = vunpack.c.l.b16 %v7035
        %v7698 = vunpack.c.h.b16 %v7035
        %v7699 = vunpack.c.l.b16 %v7036
        %v7700 = vunpack.c.h.b16 %v7036
        %v7701 = vunpack.c.l.b16 %v7037
        %v7702 = vunpack.c.h.b16 %v7037
        %v7703 = vunpack.c.l.b16 %v7038
        %v7704 = vunpack.c.h.b16 %v7038
        %v7705 = vunpack.c.l.b16 %v7039
        %v7706 = vunpack.c.h.b16 %v7039
        %v7707 = vunpack.c.l.b16 %v7040
        %v7708 = vunpack.c.h.b16 %v7040
        %v7709 = vunpack.c.l.b16 %v7041
        %v7710 = vunpack.c.h.b16 %v7041
        %v7711 = vunpack.c.l.b16 %v7042
        %v7712 = vunpack.c.h.b16 %v7042
        %v7713 = vunpack.c.l.b16 %v7043
        %v7714 = vunpack.c.h.b16 %v7043
        %v7715 = vunpack.c.l.b16 %v7044
        %v7716 = vunpack.c.h.b16 %v7044
        %v7717 = vunpack.c.l.b16 %v7045
        %v7718 = vunpack.c.h.b16 %v7045
        %v7719 = vunpack.c.l.b16 %v7046
        %v7720 = vunpack.c.h.b16 %v7046
        %v7721 = vunpack.c.l.b16 %v7047
        %v7722 = vunpack.c.h.b16 %v7047
        %v7723 = vunpack.c.l.b16 %v7048
        %v7724 = vunpack.c.h.b16 %v7048
        %v7725 = vunpack.c.l.b16 %v7049
        %v7726 = vunpack.c.h.b16 %v7049
        %v7727 = vunpack.c.l.b16 %v7050
        %v7728 = vunpack.c.h.b16 %v7050
        %v7729 = vunpack.c.l.b16 %v7051
        %v7730 = vunpack.c.h.b16 %v7051
        %v7731 = vunpack.c.l.b16 %v7052
        %v7732 = vunpack.c.h.b16 %v7052
        %v7733 = vunpack.c.l.b16 %v7053
        %v7734 = vunpack.c.h.b16 %v7053
        %v7735 = vunpack.c.l.b16 %v7054
        %v7736 = vunpack.c.h.b16 %v7054
        %v7737 = vunpack.c.l.b16 %v7055
        %v7738 = vunpack.c.h.b16 %v7055
        %v7739 = vunpack.c.l.b16 %v7056
        %v7740 = vunpack.c.h.b16 %v7056
        %v7741 = vunpack.c.l.b16 %v7057
        %v7742 = vunpack.c.h.b16 %v7057
        %v7743 = vunpack.c.l.b16 %v7058
        %v7744 = vunpack.c.h.b16 %v7058
        %v7745 = vunpack.c.l.b16 %v7059
        %v7746 = vunpack.c.h.b16 %v7059
        %v7747 = vunpack.c.l.b16 %v7060
        %v7748 = vunpack.c.h.b16 %v7060
        %v7749 = vunpack.c.l.b16 %v7061
        %v7750 = vunpack.c.h.b16 %v7061
        %v7751 = vunpack.c.l.b16 %v7062
        %v7752 = vunpack.c.h.b16 %v7062
        %v7753 = vunpack.c.l.b16 %v7063
        %v7754 = vunpack.c.h.b16 %v7063
        %v7755 = vunpack.c.l.b16 %v7064
        %v7756 = vunpack.c.h.b16 %v7064
        %v7757 = vunpack.c.l.b16 %v7065
        %v7758 = vunpack.c.h.b16 %v7065
        %v7759 = vunpack.c.l.b16 %v7066
        %v7760 = vunpack.c.h.b16 %v7066
        %v7761 = vunpack.c.l.b16 %v7067
        %v7762 = vunpack.c.h.b16 %v7067
        %v7763 = vunpack.c.l.b16 %v7068
        %v7764 = vunpack.c.h.b16 %v7068
        %v7765 = vunpack.c.l.b16 %v7069
        %v7766 = vunpack.c.h.b16 %v7069
        %v7767 = vunpack.c.l.b16 %v7070
        %v7768 = vunpack.c.h.b16 %v7070
        %v7769 = vunpack.c.l.b16 %v7071
        %v7770 = vunpack.c.h.b16 %v7071
        %v7771 = vunpack.c.l.b16 %v7072
        %v7772 = vunpack.c.h.b16 %v7072
        %v7773 = vunpack.c.l.b16 %v7073
        %v7774 = vunpack.c.h.b16 %v7073
        %v7775 = vunpack.c.l.b16 %v7074
        %v7776 = vunpack.c.h.b16 %v7074
        %v7777 = vunpack.c.l.b16 %v7075
        %v7778 = vunpack.c.h.b16 %v7075
        %v7779 = vunpack.c.l.b16 %v7076
        %v7780 = vunpack.c.h.b16 %v7076
        %v7781 = vunpack.c.l.b16 %v7077
        %v7782 = vunpack.c.h.b16 %v7077
        %v7783 = vunpack.c.l.b16 %v7078
        %v7784 = vunpack.c.h.b16 %v7078
        %v7785 = vunpack.c.l.b16 %v7079
        %v7786 = vunpack.c.h.b16 %v7079
        %v7787 = vunpack.c.l.b16 %v7080
        %v7788 = vunpack.c.h.b16 %v7080
        %v7789 = vunpack.c.l.b16 %v7081
        %v7790 = vunpack.c.h.b16 %v7081
        %v7791 = vunpack.c.l.b16 %v7082
        %v7792 = vunpack.c.h.b16 %v7082
        %v7793 = vunpack.c.l.b16 %v7083
        %v7794 = vunpack.c.h.b16 %v7083
        %v7795 = vunpack.c.l.b16 %v7084
        %v7796 = vunpack.c.h.b16 %v7084
        %v7797 = vunpack.c.l.b16 %v7085
        %v7798 = vunpack.c.h.b16 %v7085
        %v7799 = vunpack.c.l.b16 %v7086
        %v7800 = vunpack.c.h.b16 %v7086
        %v7801 = vunpack.c.l.b16 %v7087
        %v7802 = vunpack.c.h.b16 %v7087
        %v7803 = vunpack.c.l.b16 %v7088
        %v7804 = vunpack.c.h.b16 %v7088
        %v7805 = vunpack.c.l.b16 %v7089
        %v7806 = vunpack.c.h.b16 %v7089
        %v7807 = vunpack.c.l.b16 %v7090
        %v7808 = vunpack.c.h.b16 %v7090
        %v7809 = vunpack.c.l.b16 %v7091
        %v7810 = vunpack.c.h.b16 %v7091
        %v7811 = vunpack.c.l.b16 %v7092
        %v7812 = vunpack.c.h.b16 %v7092
        %v7813 = vunpack.c.l.b16 %v7093
        %v7814 = vunpack.c.h.b16 %v7093
        %v7815 = vunpack.c.l.b16 %v7094
        %v7816 = vunpack.c.h.b16 %v7094
        %v7817 = vunpack.c.l.b16 %v7095
        %v7818 = vunpack.c.h.b16 %v7095
        %v7819 = vunpack.c.l.b16 %v7096
        %v7820 = vunpack.c.h.b16 %v7096
        %v7821 = vunpack.c.l.b16 %v7097
        %v7822 = vunpack.c.h.b16 %v7097
        %v7823 = vunpack.c.l.b16 %v7098
        %v7824 = vunpack.c.h.b16 %v7098
        %v7825 = vunpack.c.l.b16 %v7099
        %v7826 = vunpack.c.h.b16 %v7099
        %v7827 = vunpack.c.l.b16 %v7100
        %v7828 = vunpack.c.h.b16 %v7100
        %v7829 = vunpack.c.l.b16 %v7101
        %v7830 = vunpack.c.h.b16 %v7101
        %v7831 = vunpack.c.l.b16 %v7102
        %v7832 = vunpack.c.h.b16 %v7102
        %v7833 = vunpack.c.l.b16 %v7103
        %v7834 = vunpack.c.h.b16 %v7103
        %v7835 = vunpack.c.l.b16 %v7104
        %v7836 = vunpack.c.h.b16 %v7104
        %v7837 = vunpack.c.l.b16 %v7105
        %v7838 = vunpack.c.h.b16 %v7105
        %v7839 = vunpack.c.l.b16 %v7106
        %v7840 = vunpack.c.h.b16 %v7106
        %v7841 = vunpack.c.l.b16 %v7107
        %v7842 = vunpack.c.h.b16 %v7107
        %v7843 = vunpack.c.l.b16 %v7108
        %v7844 = vunpack.c.h.b16 %v7108
        %v7845 = vunpack.c.l.b16 %v7109
        %v7846 = vunpack.c.h.b16 %v7109
        %v7847 = vunpack.c.l.b16 %v7110
        %v7848 = vunpack.c.h.b16 %v7110
        %v7849 = vunpack.c.l.b16 %v7111
        %v7850 = vunpack.c.h.b16 %v7111
        %v7851 = vunpack.c.l.b16 %v7112
        %v7852 = vunpack.c.h.b16 %v7112
        %v7853 = vunpack.c.l.b16 %v7113
        %v7854 = vunpack.c.h.b16 %v7113
        %v7855 = vunpack.c.l.b16 %v7114
        %v7856 = vunpack.c.h.b16 %v7114
        %v7857 = vunpack.c.l.b16 %v7115
        %v7858 = vunpack.c.h.b16 %v7115
        %v7859 = vunpack.c.l.b16 %v7116
        %v7860 = vunpack.c.h.b16 %v7116
        %v7861 = vunpack.c.l.b16 %v7117
        %v7862 = vunpack.c.h.b16 %v7117
        %v7863 = vunpack.c.l.b16 %v7118
        %v7864 = vunpack.c.h.b16 %v7118
        %v7865 = vunpack.c.l.b16 %v7119
        %v7866 = vunpack.c.h.b16 %v7119
        %v7867 = vunpack.c.l.b16 %v7120
        %v7868 = vunpack.c.h.b16 %v7120
        %v7869 = vunpack.c.l.b16 %v7121
        %v7870 = vunpack.c.h.b16 %v7121
        %v7871 = vunpack.c.l.b16 %v7122
        %v7872 = vunpack.c.h.b16 %v7122
        %v7873 = vunpack.c.l.b16 %v7123
        %v7874 = vunpack.c.h.b16 %v7123
        %v7875 = vunpack.c.l.b16 %v7124
        %v7876 = vunpack.c.h.b16 %v7124
        %v7877 = vunpack.c.l.b16 %v7125
        %v7878 = vunpack.c.h.b16 %v7125
        %v7879 = vunpack.c.l.b16 %v7126
        %v7880 = vunpack.c.h.b16 %v7126
        %v7881 = vunpack.c.l.b16 %v7127
        %v7882 = vunpack.c.h.b16 %v7127
        %v7883 = vunpack.c.l.b16 %v7128
        %v7884 = vunpack.c.h.b16 %v7128
        %v7885 = vunpack.c.l.b16 %v7129
        %v7886 = vunpack.c.h.b16 %v7129
        %v7887 = vunpack.c.l.b16 %v7130
        %v7888 = vunpack.c.h.b16 %v7130
        %v7889 = vunpack.c.l.b16 %v7131
        %v7890 = vunpack.c.h.b16 %v7131
        %v7891 = vunpack.c.l.b16 %v7132
        %v7892 = vunpack.c.h.b16 %v7132
        %v7893 = vunpack.c.l.b16 %v7133
        %v7894 = vunpack.c.h.b16 %v7133
        %v7895 = vunpack.c.l.b16 %v7134
        %v7896 = vunpack.c.h.b16 %v7134
        %v7897 = vunpack.c.l.b16 %v7135
        %v7898 = vunpack.c.h.b16 %v7135
        %v7899 = vunpack.c.l.b16 %v7136
        %v7900 = vunpack.c.h.b16 %v7136
        %v7901 = vunpack.c.l.b16 %v7137
        %v7902 = vunpack.c.h.b16 %v7137
        %v7903 = vunpack.c.l.b16 %v7138
        %v7904 = vunpack.c.h.b16 %v7138
        %v7905 = vunpack.c.l.b16 %v7139
        %v7906 = vunpack.c.h.b16 %v7139
        %v7907 = vunpack.c.l.b16 %v7140
        %v7908 = vunpack.c.h.b16 %v7140
        %v7909 = vpack.c.b16 %v7405, %v7397
        %v7910 = vpack.c.b16 %v7406, %v7398
        %v7911 = vpack.c.b16 %v7407, %v7399
        %v7912 = vpack.c.b16 %v7408, %v7400
        %v7913 = vpack.c.b16 %v7409, %v7401
        %v7914 = vpack.c.b16 %v7410, %v7402
        %v7915 = vpack.c.b16 %v7411, %v7403
        %v7916 = vpack.c.b16 %v7412, %v7404
        %v7917 = vpack.c.b16 %v7421, %v7413
        %v7918 = vpack.c.b16 %v7422, %v7414
        %v7919 = vpack.c.b16 %v7423, %v7415
        %v7920 = vpack.c.b16 %v7424, %v7416
        %v7921 = vpack.c.b16 %v7425, %v7417
        %v7922 = vpack.c.b16 %v7426, %v7418
        %v7923 = vpack.c.b16 %v7427, %v7419
        %v7924 = vpack.c.b16 %v7428, %v7420
        %v7925 = vpack.c.b16 %v7437, %v7429
        %v7926 = vpack.c.b16 %v7438, %v7430
        %v7927 = vpack.c.b16 %v7439, %v7431
        %v7928 = vpack.c.b16 %v7440, %v7432
        %v7929 = vpack.c.b16 %v7441, %v7433
        %v7930 = vpack.c.b16 %v7442, %v7434
        %v7931 = vpack.c.b16 %v7443, %v7435
        %v7932 = vpack.c.b16 %v7444, %v7436
        %v7933 = vpack.c.b16 %v7453, %v7445
        %v7934 = vpack.c.b16 %v7454, %v7446
        %v7935 = vpack.c.b16 %v7455, %v7447
        %v7936 = vpack.c.b16 %v7456, %v7448
        %v7937 = vpack.c.b16 %v7457, %v7449
        %v7938 = vpack.c.b16 %v7458, %v7450
        %v7939 = vpack.c.b16 %v7459, %v7451
        %v7940 = vpack.c.b16 %v7460, %v7452
        %v7941 = vpack.c.b16 %v7469, %v7461
        %v7942 = vpack.c.b16 %v7470, %v7462
        %v7943 = vpack.c.b16 %v7471, %v7463
        %v7944 = vpack.c.b16 %v7472, %v7464
        %v7945 = vpack.c.b16 %v7473, %v7465
        %v7946 = vpack.c.b16 %v7474, %v7466
        %v7947 = vpack.c.b16 %v7475, %v7467
        %v7948 = vpack.c.b16 %v7476, %v7468
        %v7949 = vpack.c.b16 %v7485, %v7477
        %v7950 = vpack.c.b16 %v7486, %v7478
        %v7951 = vpack.c.b16 %v7487, %v7479
        %v7952 = vpack.c.b16 %v7488, %v7480
        %v7953 = vpack.c.b16 %v7489, %v7481
        %v7954 = vpack.c.b16 %v7490, %v7482
        %v7955 = vpack.c.b16 %v7491, %v7483
        %v7956 = vpack.c.b16 %v7492, %v7484
        %v7957 = vpack.c.b16 %v7501, %v7493
        %v7958 = vpack.c.b16 %v7502, %v7494
        %v7959 = vpack.c.b16 %v7503, %v7495
        %v7960 = vpack.c.b16 %v7504, %v7496
        %v7961 = vpack.c.b16 %v7505, %v7497
        %v7962 = vpack.c.b16 %v7506, %v7498
        %v7963 = vpack.c.b16 %v7507, %v7499
        %v7964 = vpack.c.b16 %v7508, %v7500
        %v7965 = vpack.c.b16 %v7517, %v7509
        %v7966 = vpack.c.b16 %v7518, %v7510
        %v7967 = vpack.c.b16 %v7519, %v7511
        %v7968 = vpack.c.b16 %v7520, %v7512
        %v7969 = vpack.c.b16 %v7521, %v7513
        %v7970 = vpack.c.b16 %v7522, %v7514
        %v7971 = vpack.c.b16 %v7523, %v7515
        %v7972 = vpack.c.b16 %v7524, %v7516
        %v7973 = vpack.c.b16 %v7533, %v7525
        %v7974 = vpack.c.b16 %v7534, %v7526
        %v7975 = vpack.c.b16 %v7535, %v7527
        %v7976 = vpack.c.b16 %v7536, %v7528
        %v7977 = vpack.c.b16 %v7537, %v7529
        %v7978 = vpack.c.b16 %v7538, %v7530
        %v7979 = vpack.c.b16 %v7539, %v7531
        %v7980 = vpack.c.b16 %v7540, %v7532
        %v7981 = vpack.c.b16 %v7549, %v7541
        %v7982 = vpack.c.b16 %v7550, %v7542
        %v7983 = vpack.c.b16 %v7551, %v7543
        %v7984 = vpack.c.b16 %v7552, %v7544
        %v7985 = vpack.c.b16 %v7553, %v7545
        %v7986 = vpack.c.b16 %v7554, %v7546
        %v7987 = vpack.c.b16 %v7555, %v7547
        %v7988 = vpack.c.b16 %v7556, %v7548
        %v7989 = vpack.c.b16 %v7565, %v7557
        %v7990 = vpack.c.b16 %v7566, %v7558
        %v7991 = vpack.c.b16 %v7567, %v7559
        %v7992 = vpack.c.b16 %v7568, %v7560
        %v7993 = vpack.c.b16 %v7569, %v7561
        %v7994 = vpack.c.b16 %v7570, %v7562
        %v7995 = vpack.c.b16 %v7571, %v7563
        %v7996 = vpack.c.b16 %v7572, %v7564
        %v7997 = vpack.c.b16 %v7581, %v7573
        %v7998 = vpack.c.b16 %v7582, %v7574
        %v7999 = vpack.c.b16 %v7583, %v7575
        %v8000 = vpack.c.b16 %v7584, %v7576
        %v8001 = vpack.c.b16 %v7585, %v7577
        %v8002 = vpack.c.b16 %v7586, %v7578
        %v8003 = vpack.c.b16 %v7587, %v7579
        %v8004 = vpack.c.b16 %v7588, %v7580
        %v8005 = vpack.c.b16 %v7597, %v7589
        %v8006 = vpack.c.b16 %v7598, %v7590
        %v8007 = vpack.c.b16 %v7599, %v7591
        %v8008 = vpack.c.b16 %v7600, %v7592
        %v8009 = vpack.c.b16 %v7601, %v7593
        %v8010 = vpack.c.b16 %v7602, %v7594
        %v8011 = vpack.c.b16 %v7603, %v7595
        %v8012 = vpack.c.b16 %v7604, %v7596
        %v8013 = vpack.c.b16 %v7613, %v7605
        %v8014 = vpack.c.b16 %v7614, %v7606
        %v8015 = vpack.c.b16 %v7615, %v7607
        %v8016 = vpack.c.b16 %v7616, %v7608
        %v8017 = vpack.c.b16 %v7617, %v7609
        %v8018 = vpack.c.b16 %v7618, %v7610
        %v8019 = vpack.c.b16 %v7619, %v7611
        %v8020 = vpack.c.b16 %v7620, %v7612
        %v8021 = vpack.c.b16 %v7629, %v7621
        %v8022 = vpack.c.b16 %v7630, %v7622
        %v8023 = vpack.c.b16 %v7631, %v7623
        %v8024 = vpack.c.b16 %v7632, %v7624
        %v8025 = vpack.c.b16 %v7633, %v7625
        %v8026 = vpack.c.b16 %v7634, %v7626
        %v8027 = vpack.c.b16 %v7635, %v7627
        %v8028 = vpack.c.b16 %v7636, %v7628
        %v8029 = vpack.c.b16 %v7645, %v7637
        %v8030 = vpack.c.b16 %v7646, %v7638
        %v8031 = vpack.c.b16 %v7647, %v7639
        %v8032 = vpack.c.b16 %v7648, %v7640
        %v8033 = vpack.c.b16 %v7649, %v7641
        %v8034 = vpack.c.b16 %v7650, %v7642
        %v8035 = vpack.c.b16 %v7651, %v7643
        %v8036 = vpack.c.b16 %v7652, %v7644
        %v8037 = vpack.c.b16 %v7661, %v7653
        %v8038 = vpack.c.b16 %v7662, %v7654
        %v8039 = vpack.c.b16 %v7663, %v7655
        %v8040 = vpack.c.b16 %v7664, %v7656
        %v8041 = vpack.c.b16 %v7665, %v7657
        %v8042 = vpack.c.b16 %v7666, %v7658
        %v8043 = vpack.c.b16 %v7667, %v7659
        %v8044 = vpack.c.b16 %v7668, %v7660
        %v8045 = vpack.c.b16 %v7677, %v7669
        %v8046 = vpack.c.b16 %v7678, %v7670
        %v8047 = vpack.c.b16 %v7679, %v7671
        %v8048 = vpack.c.b16 %v7680, %v7672
        %v8049 = vpack.c.b16 %v7681, %v7673
        %v8050 = vpack.c.b16 %v7682, %v7674
        %v8051 = vpack.c.b16 %v7683, %v7675
        %v8052 = vpack.c.b16 %v7684, %v7676
        %v8053 = vpack.c.b16 %v7693, %v7685
        %v8054 = vpack.c.b16 %v7694, %v7686
        %v8055 = vpack.c.b16 %v7695, %v7687
        %v8056 = vpack.c.b16 %v7696, %v7688
        %v8057 = vpack.c.b16 %v7697, %v7689
        %v8058 = vpack.c.b16 %v7698, %v7690
        %v8059 = vpack.c.b16 %v7699, %v7691
        %v8060 = vpack.c.b16 %v7700, %v7692
        %v8061 = vpack.c.b16 %v7709, %v7701
        %v8062 = vpack.c.b16 %v7710, %v7702
        %v8063 = vpack.c.b16 %v7711, %v7703
        %v8064 = vpack.c.b16 %v7712, %v7704
        %v8065 = vpack.c.b16 %v7713, %v7705
        %v8066 = vpack.c.b16 %v7714, %v7706
        %v8067 = vpack.c.b16 %v7715, %v7707
        %v8068 = vpack.c.b16 %v7716, %v7708
        %v8069 = vpack.c.b16 %v7725, %v7717
        %v8070 = vpack.c.b16 %v7726, %v7718
        %v8071 = vpack.c.b16 %v7727, %v7719
        %v8072 = vpack.c.b16 %v7728, %v7720
        %v8073 = vpack.c.b16 %v7729, %v7721
        %v8074 = vpack.c.b16 %v7730, %v7722
        %v8075 = vpack.c.b16 %v7731, %v7723
        %v8076 = vpack.c.b16 %v7732, %v7724
        %v8077 = vpack.c.b16 %v7741, %v7733
        %v8078 = vpack.c.b16 %v7742, %v7734
        %v8079 = vpack.c.b16 %v7743, %v7735
        %v8080 = vpack.c.b16 %v7744, %v7736
        %v8081 = vpack.c.b16 %v7745, %v7737
        %v8082 = vpack.c.b16 %v7746, %v7738
        %v8083 = vpack.c.b16 %v7747, %v7739
        %v8084 = vpack.c.b16 %v7748, %v7740
        %v8085 = vpack.c.b16 %v7757, %v7749
        %v8086 = vpack.c.b16 %v7758, %v7750
        %v8087 = vpack.c.b16 %v7759, %v7751
        %v8088 = vpack.c.b16 %v7760, %v7752
        %v8089 = vpack.c.b16 %v7761, %v7753
        %v8090 = vpack.c.b16 %v7762, %v7754
        %v8091 = vpack.c.b16 %v7763, %v7755
        %v8092 = vpack.c.b16 %v7764, %v7756
        %v8093 = vpack.c.b16 %v7773, %v7765
        %v8094 = vpack.c.b16 %v7774, %v7766
        %v8095 = vpack.c.b16 %v7775, %v7767
        %v8096 = vpack.c.b16 %v7776, %v7768
        %v8097 = vpack.c.b16 %v7777, %v7769
        %v8098 = vpack.c.b16 %v7778, %v7770
        %v8099 = vpack.c.b16 %v7779, %v7771
        %v8100 = vpack.c.b16 %v7780, %v7772
        %v8101 = vpack.c.b16 %v7789, %v7781
        %v8102 = vpack.c.b16 %v7790, %v7782
        %v8103 = vpack.c.b16 %v7791, %v7783
        %v8104 = vpack.c.b16 %v7792, %v7784
        %v8105 = vpack.c.b16 %v7793, %v7785
        %v8106 = vpack.c.b16 %v7794, %v7786
        %v8107 = vpack.c.b16 %v7795, %v7787
        %v8108 = vpack.c.b16 %v7796, %v7788
        %v8109 = vpack.c.b16 %v7805, %v7797
        %v8110 = vpack.c.b16 %v7806, %v7798
        %v8111 = vpack.c.b16 %v7807, %v7799
        %v8112 = vpack.c.b16 %v7808, %v7800
        %v8113 = vpack.c.b16 %v7809, %v7801
        %v8114 = vpack.c.b16 %v7810, %v7802
        %v8115 = vpack.c.b16 %v7811, %v7803
        %v8116 = vpack.c.b16 %v7812, %v7804
        %v8117 = vpack.c.b16 %v7821, %v7813
        %v8118 = vpack.c.b16 %v7822, %v7814
        %v8119 = vpack.c.b16 %v7823, %v7815
        %v8120 = vpack.c.b16 %v7824, %v7816
        %v8121 = vpack.c.b16 %v7825, %v7817
        %v8122 = vpack.c.b16 %v7826, %v7818
        %v8123 = vpack.c.b16 %v7827, %v7819
        %v8124 = vpack.c.b16 %v7828, %v7820
        %v8125 = vpack.c.b16 %v7837, %v7829
        %v8126 = vpack.c.b16 %v7838, %v7830
        %v8127 = vpack.c.b16 %v7839, %v7831
        %v8128 = vpack.c.b16 %v7840, %v7832
        %v8129 = vpack.c.b16 %v7841, %v7833
        %v8130 = vpack.c.b16 %v7842, %v7834
        %v8131 = vpack.c.b16 %v7843, %v7835
        %v8132 = vpack.c.b16 %v7844, %v7836
        %v8133 = vpack.c.b16 %v7853, %v7845
        %v8134 = vpack.c.b16 %v7854, %v7846
        %v8135 = vpack.c.b16 %v7855, %v7847
        %v8136 = vpack.c.b16 %v7856, %v7848
        %v8137 = vpack.c.b16 %v7857, %v7849
        %v8138 = vpack.c.b16 %v7858, %v7850
        %v8139 = vpack.c.b16 %v7859, %v7851
        %v8140 = vpack.c.b16 %v7860, %v7852
        %v8141 = vpack.c.b16 %v7869, %v7861
        %v8142 = vpack.c.b16 %v7870, %v7862
        %v8143 = vpack.c.b16 %v7871, %v7863
        %v8144 = vpack.c.b16 %v7872, %v7864
        %v8145 = vpack.c.b16 %v7873, %v7865
        %v8146 = vpack.c.b16 %v7874, %v7866
        %v8147 = vpack.c.b16 %v7875, %v7867
        %v8148 = vpack.c.b16 %v7876, %v7868
        %v8149 = vpack.c.b16 %v7885, %v7877
        %v8150 = vpack.c.b16 %v7886, %v7878
        %v8151 = vpack.c.b16 %v7887, %v7879
        %v8152 = vpack.c.b16 %v7888, %v7880
        %v8153 = vpack.c.b16 %v7889, %v7881
        %v8154 = vpack.c.b16 %v7890, %v7882
        %v8155 = vpack.c.b16 %v7891, %v7883
        %v8156 = vpack.c.b16 %v7892, %v7884
        %v8157 = vpack.c.b16 %v7901, %v7893
        %v8158 = vpack.c.b16 %v7902, %v7894
        %v8159 = vpack.c.b16 %v7903, %v7895
        %v8160 = vpack.c.b16 %v7904, %v7896
        %v8161 = vpack.c.b16 %v7905, %v7897
        %v8162 = vpack.c.b16 %v7906, %v7898
        %v8163 = vpack.c.b16 %v7907, %v7899
        %v8164 = vpack.c.b16 %v7908, %v7900
        %8421 = vmatpush.bf16.msra.mxu0 %v7965
        %8422 = vmatpush.bf16.msra.mxu0 %v7957
        %8423 = vmatpush.bf16.msra.mxu0 %v7949
        %8424 = vmatpush.bf16.msra.mxu0 %v7941
        %8425 = vmatpush.bf16.msra.mxu0 %v7933
        %8426 = vmatpush.bf16.msra.mxu0 %v7925
        %8427 = vmatpush.bf16.msra.mxu0 %v7917
        %8428 = vmatpush.bf16.msra.mxu0 %v7909
        %8429 = vmatmul.bf16.gmra.mxu0 %v6881
        %v8430 = vpop.f32.mrf.mxu0
        %v8431 = vadd.f32 0.0, %v8430
        %v8432 = vpop.f32.mrf.mxu0
        %8433 = vdwg.mxu0
        %8434 = vmatpush.bf16.msra.mxu0 %v8029
        %8435 = vmatpush.bf16.msra.mxu0 %v8021
        %8436 = vmatpush.bf16.msra.mxu0 %v8013
        %8437 = vmatpush.bf16.msra.mxu0 %v8005
        %8438 = vmatpush.bf16.msra.mxu0 %v7997
        %8439 = vmatpush.bf16.msra.mxu0 %v7989
        %8440 = vmatpush.bf16.msra.mxu0 %v7981
        %8441 = vmatpush.bf16.msra.mxu0 %v7973
        %8442 = vmatmul.bf16.gmra.mxu0 %v6882
        %v8443 = vpop.f32.mrf.mxu0
        %v8444 = vadd.f32 %v8431, %v8443
        %v8445 = vpop.f32.mrf.mxu0
        %8446 = vdwg.mxu0
        %8447 = vmatpush.bf16.msra.mxu0 %v8093
        %8448 = vmatpush.bf16.msra.mxu0 %v8085
        %8449 = vmatpush.bf16.msra.mxu0 %v8077
        %8450 = vmatpush.bf16.msra.mxu0 %v8069
        %8451 = vmatpush.bf16.msra.mxu0 %v8061
        %8452 = vmatpush.bf16.msra.mxu0 %v8053
        %8453 = vmatpush.bf16.msra.mxu0 %v8045
        %8454 = vmatpush.bf16.msra.mxu0 %v8037
        %8455 = vmatmul.bf16.gmra.mxu0 %v6883
        %v8456 = vpop.f32.mrf.mxu0
        %v8457 = vadd.f32 %v8444, %v8456
        %v8458 = vpop.f32.mrf.mxu0
        %8459 = vdwg.mxu0
        %8460 = vmatpush.bf16.msra.mxu0 %v8157
        %8461 = vmatpush.bf16.msra.mxu0 %v8149
        %8462 = vmatpush.bf16.msra.mxu0 %v8141
        %8463 = vmatpush.bf16.msra.mxu0 %v8133
        %8464 = vmatpush.bf16.msra.mxu0 %v8125
        %8465 = vmatpush.bf16.msra.mxu0 %v8117
        %8466 = vmatpush.bf16.msra.mxu0 %v8109
        %8467 = vmatpush.bf16.msra.mxu0 %v8101
        %8468 = vmatmul.bf16.gmra.mxu0 %v6884
        %v8469 = vpop.f32.mrf.mxu0
        %v8470 = vadd.f32 %v8457, %v8469
        %v8471 = vpop.f32.mrf.mxu0
        %8472 = vdwg.mxu0
        %8473 = vmatpush.bf16.msra.mxu0 %v7966
        %8474 = vmatpush.bf16.msra.mxu0 %v7958
        %8475 = vmatpush.bf16.msra.mxu0 %v7950
        %8476 = vmatpush.bf16.msra.mxu0 %v7942
        %8477 = vmatpush.bf16.msra.mxu0 %v7934
        %8478 = vmatpush.bf16.msra.mxu0 %v7926
        %8479 = vmatpush.bf16.msra.mxu0 %v7918
        %8480 = vmatpush.bf16.msra.mxu0 %v7910
        %8481 = vmatmul.bf16.gmra.mxu0 %v6881
        %v8482 = vpop.f32.mrf.mxu0
        %v8483 = vadd.f32 0.0, %v8482
        %v8484 = vpop.f32.mrf.mxu0
        %8485 = vdwg.mxu0
        %8486 = vmatpush.bf16.msra.mxu0 %v8030
        %8487 = vmatpush.bf16.msra.mxu0 %v8022
        %8488 = vmatpush.bf16.msra.mxu0 %v8014
        %8489 = vmatpush.bf16.msra.mxu0 %v8006
        %8490 = vmatpush.bf16.msra.mxu0 %v7998
        %8491 = vmatpush.bf16.msra.mxu0 %v7990
        %8492 = vmatpush.bf16.msra.mxu0 %v7982
        %8493 = vmatpush.bf16.msra.mxu0 %v7974
        %8494 = vmatmul.bf16.gmra.mxu0 %v6882
        %v8495 = vpop.f32.mrf.mxu0
        %v8496 = vadd.f32 %v8483, %v8495
        %v8497 = vpop.f32.mrf.mxu0
        %8498 = vdwg.mxu0
        %8499 = vmatpush.bf16.msra.mxu0 %v8094
        %8500 = vmatpush.bf16.msra.mxu0 %v8086
        %8501 = vmatpush.bf16.msra.mxu0 %v8078
        %8502 = vmatpush.bf16.msra.mxu0 %v8070
        %8503 = vmatpush.bf16.msra.mxu0 %v8062
        %8504 = vmatpush.bf16.msra.mxu0 %v8054
        %8505 = vmatpush.bf16.msra.mxu0 %v8046
        %8506 = vmatpush.bf16.msra.mxu0 %v8038
        %8507 = vmatmul.bf16.gmra.mxu0 %v6883
        %v8508 = vpop.f32.mrf.mxu0
        %v8509 = vadd.f32 %v8496, %v8508
        %v8510 = vpop.f32.mrf.mxu0
        %8511 = vdwg.mxu0
        %8512 = vmatpush.bf16.msra.mxu0 %v8158
        %8513 = vmatpush.bf16.msra.mxu0 %v8150
        %8514 = vmatpush.bf16.msra.mxu0 %v8142
        %8515 = vmatpush.bf16.msra.mxu0 %v8134
        %8516 = vmatpush.bf16.msra.mxu0 %v8126
        %8517 = vmatpush.bf16.msra.mxu0 %v8118
        %8518 = vmatpush.bf16.msra.mxu0 %v8110
        %8519 = vmatpush.bf16.msra.mxu0 %v8102
        %8520 = vmatmul.bf16.gmra.mxu0 %v6884
        %v8521 = vpop.f32.mrf.mxu0
        %v8522 = vadd.f32 %v8509, %v8521
        %v8523 = vpop.f32.mrf.mxu0
        %8524 = vdwg.mxu0
        %8525 = vmatpush.bf16.msra.mxu0 %v7967
        %8526 = vmatpush.bf16.msra.mxu0 %v7959
        %8527 = vmatpush.bf16.msra.mxu0 %v7951
        %8528 = vmatpush.bf16.msra.mxu0 %v7943
        %8529 = vmatpush.bf16.msra.mxu0 %v7935
        %8530 = vmatpush.bf16.msra.mxu0 %v7927
        %8531 = vmatpush.bf16.msra.mxu0 %v7919
        %8532 = vmatpush.bf16.msra.mxu0 %v7911
        %8533 = vmatmul.bf16.gmra.mxu0 %v6881
        %v8534 = vpop.f32.mrf.mxu0
        %v8535 = vadd.f32 0.0, %v8534
        %v8536 = vpop.f32.mrf.mxu0
        %8537 = vdwg.mxu0
        %8538 = vmatpush.bf16.msra.mxu0 %v8031
        %8539 = vmatpush.bf16.msra.mxu0 %v8023
        %8540 = vmatpush.bf16.msra.mxu0 %v8015
        %8541 = vmatpush.bf16.msra.mxu0 %v8007
        %8542 = vmatpush.bf16.msra.mxu0 %v7999
        %8543 = vmatpush.bf16.msra.mxu0 %v7991
        %8544 = vmatpush.bf16.msra.mxu0 %v7983
        %8545 = vmatpush.bf16.msra.mxu0 %v7975
        %8546 = vmatmul.bf16.gmra.mxu0 %v6882
        %v8547 = vpop.f32.mrf.mxu0
        %v8548 = vadd.f32 %v8535, %v8547
        %v8549 = vpop.f32.mrf.mxu0
        %8550 = vdwg.mxu0
        %8551 = vmatpush.bf16.msra.mxu0 %v8095
        %8552 = vmatpush.bf16.msra.mxu0 %v8087
        %8553 = vmatpush.bf16.msra.mxu0 %v8079
        %8554 = vmatpush.bf16.msra.mxu0 %v8071
        %8555 = vmatpush.bf16.msra.mxu0 %v8063
        %8556 = vmatpush.bf16.msra.mxu0 %v8055
        %8557 = vmatpush.bf16.msra.mxu0 %v8047
        %8558 = vmatpush.bf16.msra.mxu0 %v8039
        %8559 = vmatmul.bf16.gmra.mxu0 %v6883
        %v8560 = vpop.f32.mrf.mxu0
        %v8561 = vadd.f32 %v8548, %v8560
        %v8562 = vpop.f32.mrf.mxu0
        %8563 = vdwg.mxu0
        %8564 = vmatpush.bf16.msra.mxu0 %v8159
        %8565 = vmatpush.bf16.msra.mxu0 %v8151
        %8566 = vmatpush.bf16.msra.mxu0 %v8143
        %8567 = vmatpush.bf16.msra.mxu0 %v8135
        %8568 = vmatpush.bf16.msra.mxu0 %v8127
        %8569 = vmatpush.bf16.msra.mxu0 %v8119
        %8570 = vmatpush.bf16.msra.mxu0 %v8111
        %8571 = vmatpush.bf16.msra.mxu0 %v8103
        %8572 = vmatmul.bf16.gmra.mxu0 %v6884
        %v8573 = vpop.f32.mrf.mxu0
        %v8574 = vadd.f32 %v8561, %v8573
        %v8575 = vpop.f32.mrf.mxu0
        %8576 = vdwg.mxu0
        %8577 = vmatpush.bf16.msra.mxu0 %v7968
        %8578 = vmatpush.bf16.msra.mxu0 %v7960
        %8579 = vmatpush.bf16.msra.mxu0 %v7952
        %8580 = vmatpush.bf16.msra.mxu0 %v7944
        %8581 = vmatpush.bf16.msra.mxu0 %v7936
        %8582 = vmatpush.bf16.msra.mxu0 %v7928
        %8583 = vmatpush.bf16.msra.mxu0 %v7920
        %8584 = vmatpush.bf16.msra.mxu0 %v7912
        %8585 = vmatmul.bf16.gmra.mxu0 %v6881
        %v8586 = vpop.f32.mrf.mxu0
        %v8587 = vadd.f32 0.0, %v8586
        %v8588 = vpop.f32.mrf.mxu0
        %8589 = vdwg.mxu0
        %8590 = vmatpush.bf16.msra.mxu0 %v8032
        %8591 = vmatpush.bf16.msra.mxu0 %v8024
        %8592 = vmatpush.bf16.msra.mxu0 %v8016
        %8593 = vmatpush.bf16.msra.mxu0 %v8008
        %8594 = vmatpush.bf16.msra.mxu0 %v8000
        %8595 = vmatpush.bf16.msra.mxu0 %v7992
        %8596 = vmatpush.bf16.msra.mxu0 %v7984
        %8597 = vmatpush.bf16.msra.mxu0 %v7976
        %8598 = vmatmul.bf16.gmra.mxu0 %v6882
        %v8599 = vpop.f32.mrf.mxu0
        %v8600 = vadd.f32 %v8587, %v8599
        %v8601 = vpop.f32.mrf.mxu0
        %8602 = vdwg.mxu0
        %8603 = vmatpush.bf16.msra.mxu0 %v8096
        %8604 = vmatpush.bf16.msra.mxu0 %v8088
        %8605 = vmatpush.bf16.msra.mxu0 %v8080
        %8606 = vmatpush.bf16.msra.mxu0 %v8072
        %8607 = vmatpush.bf16.msra.mxu0 %v8064
        %8608 = vmatpush.bf16.msra.mxu0 %v8056
        %8609 = vmatpush.bf16.msra.mxu0 %v8048
        %8610 = vmatpush.bf16.msra.mxu0 %v8040
        %8611 = vmatmul.bf16.gmra.mxu0 %v6883
        %v8612 = vpop.f32.mrf.mxu0
        %v8613 = vadd.f32 %v8600, %v8612
        %v8614 = vpop.f32.mrf.mxu0
        %8615 = vdwg.mxu0
        %8616 = vmatpush.bf16.msra.mxu0 %v8160
        %8617 = vmatpush.bf16.msra.mxu0 %v8152
        %8618 = vmatpush.bf16.msra.mxu0 %v8144
        %8619 = vmatpush.bf16.msra.mxu0 %v8136
        %8620 = vmatpush.bf16.msra.mxu0 %v8128
        %8621 = vmatpush.bf16.msra.mxu0 %v8120
        %8622 = vmatpush.bf16.msra.mxu0 %v8112
        %8623 = vmatpush.bf16.msra.mxu0 %v8104
        %8624 = vmatmul.bf16.gmra.mxu0 %v6884
        %v8625 = vpop.f32.mrf.mxu0
        %v8626 = vadd.f32 %v8613, %v8625
        %v8627 = vpop.f32.mrf.mxu0
        %8628 = vdwg.mxu0
        %8629 = vmatpush.bf16.msra.mxu0 %v7969
        %8630 = vmatpush.bf16.msra.mxu0 %v7961
        %8631 = vmatpush.bf16.msra.mxu0 %v7953
        %8632 = vmatpush.bf16.msra.mxu0 %v7945
        %8633 = vmatpush.bf16.msra.mxu0 %v7937
        %8634 = vmatpush.bf16.msra.mxu0 %v7929
        %8635 = vmatpush.bf16.msra.mxu0 %v7921
        %8636 = vmatpush.bf16.msra.mxu0 %v7913
        %8637 = vmatmul.bf16.gmra.mxu0 %v6881
        %v8638 = vpop.f32.mrf.mxu0
        %v8639 = vadd.f32 0.0, %v8638
        %v8640 = vpop.f32.mrf.mxu0
        %8641 = vdwg.mxu0
        %8642 = vmatpush.bf16.msra.mxu0 %v8033
        %8643 = vmatpush.bf16.msra.mxu0 %v8025
        %8644 = vmatpush.bf16.msra.mxu0 %v8017
        %8645 = vmatpush.bf16.msra.mxu0 %v8009
        %8646 = vmatpush.bf16.msra.mxu0 %v8001
        %8647 = vmatpush.bf16.msra.mxu0 %v7993
        %8648 = vmatpush.bf16.msra.mxu0 %v7985
        %8649 = vmatpush.bf16.msra.mxu0 %v7977
        %8650 = vmatmul.bf16.gmra.mxu0 %v6882
        %v8651 = vpop.f32.mrf.mxu0
        %v8652 = vadd.f32 %v8639, %v8651
        %v8653 = vpop.f32.mrf.mxu0
        %8654 = vdwg.mxu0
        %8655 = vmatpush.bf16.msra.mxu0 %v8097
        %8656 = vmatpush.bf16.msra.mxu0 %v8089
        %8657 = vmatpush.bf16.msra.mxu0 %v8081
        %8658 = vmatpush.bf16.msra.mxu0 %v8073
        %8659 = vmatpush.bf16.msra.mxu0 %v8065
        %8660 = vmatpush.bf16.msra.mxu0 %v8057
        %8661 = vmatpush.bf16.msra.mxu0 %v8049
        %8662 = vmatpush.bf16.msra.mxu0 %v8041
        %8663 = vmatmul.bf16.gmra.mxu0 %v6883
        %v8664 = vpop.f32.mrf.mxu0
        %v8665 = vadd.f32 %v8652, %v8664
        %v8666 = vpop.f32.mrf.mxu0
        %8667 = vdwg.mxu0
        %8668 = vmatpush.bf16.msra.mxu0 %v8161
        %8669 = vmatpush.bf16.msra.mxu0 %v8153
        %8670 = vmatpush.bf16.msra.mxu0 %v8145
        %8671 = vmatpush.bf16.msra.mxu0 %v8137
        %8672 = vmatpush.bf16.msra.mxu0 %v8129
        %8673 = vmatpush.bf16.msra.mxu0 %v8121
        %8674 = vmatpush.bf16.msra.mxu0 %v8113
        %8675 = vmatpush.bf16.msra.mxu0 %v8105
        %8676 = vmatmul.bf16.gmra.mxu0 %v6884
        %v8677 = vpop.f32.mrf.mxu0
        %v8678 = vadd.f32 %v8665, %v8677
        %v8679 = vpop.f32.mrf.mxu0
        %8680 = vdwg.mxu0
        %8681 = vmatpush.bf16.msra.mxu0 %v7970
        %8682 = vmatpush.bf16.msra.mxu0 %v7962
        %8683 = vmatpush.bf16.msra.mxu0 %v7954
        %8684 = vmatpush.bf16.msra.mxu0 %v7946
        %8685 = vmatpush.bf16.msra.mxu0 %v7938
        %8686 = vmatpush.bf16.msra.mxu0 %v7930
        %8687 = vmatpush.bf16.msra.mxu0 %v7922
        %8688 = vmatpush.bf16.msra.mxu0 %v7914
        %8689 = vmatmul.bf16.gmra.mxu0 %v6881
        %v8690 = vpop.f32.mrf.mxu0
        %v8691 = vadd.f32 0.0, %v8690
        %v8692 = vpop.f32.mrf.mxu0
        %8693 = vdwg.mxu0
        %8694 = vmatpush.bf16.msra.mxu0 %v8034
        %8695 = vmatpush.bf16.msra.mxu0 %v8026
        %8696 = vmatpush.bf16.msra.mxu0 %v8018
        %8697 = vmatpush.bf16.msra.mxu0 %v8010
        %8698 = vmatpush.bf16.msra.mxu0 %v8002
        %8699 = vmatpush.bf16.msra.mxu0 %v7994
        %8700 = vmatpush.bf16.msra.mxu0 %v7986
        %8701 = vmatpush.bf16.msra.mxu0 %v7978
        %8702 = vmatmul.bf16.gmra.mxu0 %v6882
        %v8703 = vpop.f32.mrf.mxu0
        %v8704 = vadd.f32 %v8691, %v8703
        %v8705 = vpop.f32.mrf.mxu0
        %8706 = vdwg.mxu0
        %8707 = vmatpush.bf16.msra.mxu0 %v8098
        %8708 = vmatpush.bf16.msra.mxu0 %v8090
        %8709 = vmatpush.bf16.msra.mxu0 %v8082
        %8710 = vmatpush.bf16.msra.mxu0 %v8074
        %8711 = vmatpush.bf16.msra.mxu0 %v8066
        %8712 = vmatpush.bf16.msra.mxu0 %v8058
        %8713 = vmatpush.bf16.msra.mxu0 %v8050
        %8714 = vmatpush.bf16.msra.mxu0 %v8042
        %8715 = vmatmul.bf16.gmra.mxu0 %v6883
        %v8716 = vpop.f32.mrf.mxu0
        %v8717 = vadd.f32 %v8704, %v8716
        %v8718 = vpop.f32.mrf.mxu0
        %8719 = vdwg.mxu0
        %8720 = vmatpush.bf16.msra.mxu0 %v8162
        %8721 = vmatpush.bf16.msra.mxu0 %v8154
        %8722 = vmatpush.bf16.msra.mxu0 %v8146
        %8723 = vmatpush.bf16.msra.mxu0 %v8138
        %8724 = vmatpush.bf16.msra.mxu0 %v8130
        %8725 = vmatpush.bf16.msra.mxu0 %v8122
        %8726 = vmatpush.bf16.msra.mxu0 %v8114
        %8727 = vmatpush.bf16.msra.mxu0 %v8106
        %8728 = vmatmul.bf16.gmra.mxu0 %v6884
        %v8729 = vpop.f32.mrf.mxu0
        %v8730 = vadd.f32 %v8717, %v8729
        %v8731 = vpop.f32.mrf.mxu0
        %8732 = vdwg.mxu0
        %8733 = vmatpush.bf16.msra.mxu0 %v7971
        %8734 = vmatpush.bf16.msra.mxu0 %v7963
        %8735 = vmatpush.bf16.msra.mxu0 %v7955
        %8736 = vmatpush.bf16.msra.mxu0 %v7947
        %8737 = vmatpush.bf16.msra.mxu0 %v7939
        %8738 = vmatpush.bf16.msra.mxu0 %v7931
        %8739 = vmatpush.bf16.msra.mxu0 %v7923
        %8740 = vmatpush.bf16.msra.mxu0 %v7915
        %8741 = vmatmul.bf16.gmra.mxu0 %v6881
        %v8742 = vpop.f32.mrf.mxu0
        %v8743 = vadd.f32 0.0, %v8742
        %v8744 = vpop.f32.mrf.mxu0
        %8745 = vdwg.mxu0
        %8746 = vmatpush.bf16.msra.mxu0 %v8035
        %8747 = vmatpush.bf16.msra.mxu0 %v8027
        %8748 = vmatpush.bf16.msra.mxu0 %v8019
        %8749 = vmatpush.bf16.msra.mxu0 %v8011
        %8750 = vmatpush.bf16.msra.mxu0 %v8003
        %8751 = vmatpush.bf16.msra.mxu0 %v7995
        %8752 = vmatpush.bf16.msra.mxu0 %v7987
        %8753 = vmatpush.bf16.msra.mxu0 %v7979
        %8754 = vmatmul.bf16.gmra.mxu0 %v6882
        %v8755 = vpop.f32.mrf.mxu0
        %v8756 = vadd.f32 %v8743, %v8755
        %v8757 = vpop.f32.mrf.mxu0
        %8758 = vdwg.mxu0
        %8759 = vmatpush.bf16.msra.mxu0 %v8099
        %8760 = vmatpush.bf16.msra.mxu0 %v8091
        %8761 = vmatpush.bf16.msra.mxu0 %v8083
        %8762 = vmatpush.bf16.msra.mxu0 %v8075
        %8763 = vmatpush.bf16.msra.mxu0 %v8067
        %8764 = vmatpush.bf16.msra.mxu0 %v8059
        %8765 = vmatpush.bf16.msra.mxu0 %v8051
        %8766 = vmatpush.bf16.msra.mxu0 %v8043
        %8767 = vmatmul.bf16.gmra.mxu0 %v6883
        %v8768 = vpop.f32.mrf.mxu0
        %v8769 = vadd.f32 %v8756, %v8768
        %v8770 = vpop.f32.mrf.mxu0
        %8771 = vdwg.mxu0
        %8772 = vmatpush.bf16.msra.mxu0 %v8163
        %8773 = vmatpush.bf16.msra.mxu0 %v8155
        %8774 = vmatpush.bf16.msra.mxu0 %v8147
        %8775 = vmatpush.bf16.msra.mxu0 %v8139
        %8776 = vmatpush.bf16.msra.mxu0 %v8131
        %8777 = vmatpush.bf16.msra.mxu0 %v8123
        %8778 = vmatpush.bf16.msra.mxu0 %v8115
        %8779 = vmatpush.bf16.msra.mxu0 %v8107
        %8780 = vmatmul.bf16.gmra.mxu0 %v6884
        %v8781 = vpop.f32.mrf.mxu0
        %v8782 = vadd.f32 %v8769, %v8781
        %v8783 = vpop.f32.mrf.mxu0
        %8784 = vdwg.mxu0
        %8785 = vmatpush.bf16.msra.mxu0 %v7972
        %8786 = vmatpush.bf16.msra.mxu0 %v7964
        %8787 = vmatpush.bf16.msra.mxu0 %v7956
        %8788 = vmatpush.bf16.msra.mxu0 %v7948
        %8789 = vmatpush.bf16.msra.mxu0 %v7940
        %8790 = vmatpush.bf16.msra.mxu0 %v7932
        %8791 = vmatpush.bf16.msra.mxu0 %v7924
        %8792 = vmatpush.bf16.msra.mxu0 %v7916
        %8793 = vmatmul.bf16.gmra.mxu0 %v6881
        %v8794 = vpop.f32.mrf.mxu0
        %v8795 = vadd.f32 0.0, %v8794
        %v8796 = vpop.f32.mrf.mxu0
        %8797 = vdwg.mxu0
        %8798 = vmatpush.bf16.msra.mxu0 %v8036
        %8799 = vmatpush.bf16.msra.mxu0 %v8028
        %8800 = vmatpush.bf16.msra.mxu0 %v8020
        %8801 = vmatpush.bf16.msra.mxu0 %v8012
        %8802 = vmatpush.bf16.msra.mxu0 %v8004
        %8803 = vmatpush.bf16.msra.mxu0 %v7996
        %8804 = vmatpush.bf16.msra.mxu0 %v7988
        %8805 = vmatpush.bf16.msra.mxu0 %v7980
        %8806 = vmatmul.bf16.gmra.mxu0 %v6882
        %v8807 = vpop.f32.mrf.mxu0
        %v8808 = vadd.f32 %v8795, %v8807
        %v8809 = vpop.f32.mrf.mxu0
        %8810 = vdwg.mxu0
        %8811 = vmatpush.bf16.msra.mxu0 %v8100
        %8812 = vmatpush.bf16.msra.mxu0 %v8092
        %8813 = vmatpush.bf16.msra.mxu0 %v8084
        %8814 = vmatpush.bf16.msra.mxu0 %v8076
        %8815 = vmatpush.bf16.msra.mxu0 %v8068
        %8816 = vmatpush.bf16.msra.mxu0 %v8060
        %8817 = vmatpush.bf16.msra.mxu0 %v8052
        %8818 = vmatpush.bf16.msra.mxu0 %v8044
        %8819 = vmatmul.bf16.gmra.mxu0 %v6883
        %v8820 = vpop.f32.mrf.mxu0
        %v8821 = vadd.f32 %v8808, %v8820
        %v8822 = vpop.f32.mrf.mxu0
        %8823 = vdwg.mxu0
        %8824 = vmatpush.bf16.msra.mxu0 %v8164
        %8825 = vmatpush.bf16.msra.mxu0 %v8156
        %8826 = vmatpush.bf16.msra.mxu0 %v8148
        %8827 = vmatpush.bf16.msra.mxu0 %v8140
        %8828 = vmatpush.bf16.msra.mxu0 %v8132
        %8829 = vmatpush.bf16.msra.mxu0 %v8124
        %8830 = vmatpush.bf16.msra.mxu0 %v8116
        %8831 = vmatpush.bf16.msra.mxu0 %v8108
        %8832 = vmatmul.bf16.gmra.mxu0 %v6884
        %v8833 = vpop.f32.mrf.mxu0
        %v8834 = vadd.f32 %v8821, %v8833
        %v8835 = vpop.f32.mrf.mxu0
        %8836 = vdwg.mxu0
        %v8837 = vadd.f32 %v6873, %v8470
        %v8838 = vadd.f32 %v6874, %v8522
        %v8839 = vadd.f32 %v6875, %v8574
        %v8840 = vadd.f32 %v6876, %v8626
        %v8841 = vadd.f32 %v6877, %v8678
        %v8842 = vadd.f32 %v6878, %v8730
        %v8843 = vadd.f32 %v6879, %v8782
        %v8844 = vadd.f32 %v6880, %v8834
        %8845 = vst [vmem:[#allocation3] sm:$0xff] %v8837
        %8846 = vst [vmem:[#allocation3 + $0x8] sm:$0xff] %v8838
        %8847 = vst [vmem:[#allocation3 + $0x10] sm:$0xff] %v8839
        %8848 = vst [vmem:[#allocation3 + $0x18] sm:$0xff] %v8840
        %8849 = vst [vmem:[#allocation3 + $0x20] sm:$0xff] %v8841
        %8850 = vst [vmem:[#allocation3 + $0x28] sm:$0xff] %v8842
        %8851 = vst [vmem:[#allocation3 + $0x30] sm:$0xff] %v8843
        %8852 = vst [vmem:[#allocation3 + $0x38] sm:$0xff] %v8844
        %p8853 = scmp.eq.s32.totalorder %s32, 3
        // Predicated region
        $region121: #{policy_forward.1} parent=71 // pred_check
          %p8854 = pneg %p8853
        $region122: #{policy_forward.1} parent=71 // pred_check_branch
          %8856 = sbr.rel (%p8854) target = $region124
        $region123: #{policy_forward.1} parent=71 // pred_region
          %v8857 = vld [vmem:[#allocation3] sm:$0xff]
          %v8858 = vld [vmem:[#allocation3 + $0x8] sm:$0xff]
          %v8859 = vld [vmem:[#allocation3 + $0x10] sm:$0xff]
          %v8860 = vld [vmem:[#allocation3 + $0x18] sm:$0xff]
          %v8861 = vld [vmem:[#allocation3 + $0x20] sm:$0xff]
          %v8862 = vld [vmem:[#allocation3 + $0x28] sm:$0xff]
          %v8863 = vld [vmem:[#allocation3 + $0x30] sm:$0xff]
          %v8864 = vld [vmem:[#allocation3 + $0x38] sm:$0xff]
          %v8865 = vld [vmem:[#allocation18] sm:$0xff]
          %v8867 = vperm.slane %v8865, 0
          %v8868 = vperm.slane %v8865, 1
          %v8869 = vperm.slane %v8865, 2
          %v8870 = vperm.slane %v8865, 3
          %v8871 = vperm.slane %v8865, 4
          %v8872 = vperm.slane %v8865, 5
          %v8873 = vperm.slane %v8865, 6
          %v8874 = vperm.slane %v8865, 7
          %v8883 = vadd.f32 %v8857, %v8867
          %v8884 = vadd.f32 %v8858, %v8868
          %v8885 = vadd.f32 %v8859, %v8869
          %v8886 = vadd.f32 %v8860, %v8870
          %v8887 = vadd.f32 %v8861, %v8871
          %v8888 = vadd.f32 %v8862, %v8872
          %v8889 = vadd.f32 %v8863, %v8873
          %v8890 = vadd.f32 %v8864, %v8874
          %v8891 = vmax.f32 %v8883, 0.0
          %v8892 = vmax.f32 %v8884, 0.0
          %v8893 = vmax.f32 %v8885, 0.0
          %v8894 = vmax.f32 %v8886, 0.0
          %v8895 = vmax.f32 %v8887, 0.0
          %v8896 = vmax.f32 %v8888, 0.0
          %v8897 = vmax.f32 %v8889, 0.0
          %v8898 = vmax.f32 %v8890, 0.0
          %v8899 = vld [vmem:[#allocation19] sm:$0xff]
          %v8901 = vperm.slane %v8899, 0
          %v8902 = vperm.slane %v8899, 1
          %v8903 = vperm.slane %v8899, 2
          %v8904 = vperm.slane %v8899, 3
          %v8905 = vperm.slane %v8899, 4
          %v8906 = vperm.slane %v8899, 5
          %v8907 = vperm.slane %v8899, 6
          %v8908 = vperm.slane %v8899, 7
          %v8917 = vmul.f32 %v8891, %v8901
          %v8918 = vmul.f32 %v8892, %v8902
          %v8919 = vmul.f32 %v8893, %v8903
          %v8920 = vmul.f32 %v8894, %v8904
          %v8921 = vmul.f32 %v8895, %v8905
          %v8922 = vmul.f32 %v8896, %v8906
          %v8923 = vmul.f32 %v8897, %v8907
          %v8924 = vmul.f32 %v8898, %v8908
          %v8925 = vadd.f32 %v8917, %v8918
          %v8926 = vadd.f32 %v8925, %v8919
          %v8927 = vadd.f32 %v8926, %v8920
          %v8928 = vadd.f32 %v8927, %v8921
          %v8929 = vadd.f32 %v8928, %v8922
          %v8930 = vadd.f32 %v8929, %v8923
          %v8931 = vadd.f32 %v8930, %v8924
          %8932 = vadd.xlane.f32.xlu0 %v8931
          %v8933 = vpop.xlane.xlu0 %8932
          %v8934 = vld [vmem:[#allocation4] sm:$0x1]
          %v8936 = vperm.slane %v8934, 0
          %v8938 = vadd.f32 %v8933, %v8936
          %8940 = vset.pattern.permute.xlu0 0
          %8941 = vperm.xlu0 %8940, %v8938
          %v8942 = vpop.permute.xlu0 %8941
          %8944 = vst [vmem:[%s14] sm:$0xff] %v8942
        $region124: #{policy_forward.1} parent=71 // pred_fallthru
          _
        // Predicated region
        $region125: #{policy_forward.1} parent=71 // pred_check
          %p8945 = pneg %p333
        $region126: #{policy_forward.1} parent=71 // pred_check_branch
          %8947 = sbr.rel (%p8945) target = $region128
        $region127: #{policy_forward.1} parent=71 // pred_region
          _
        $region128: #{policy_forward.1} parent=71 // pred_fallthru
          _
        // Predicated region
        $region129: #{policy_forward.1} parent=71 // pred_check
          %p8948 = pneg %p354
        $region130: #{policy_forward.1} parent=71 // pred_check_branch
          %8950 = sbr.rel (%p8948) target = $region132
        $region131: #{policy_forward.1} parent=71 // pred_region
          _
        $region132: #{policy_forward.1} parent=71 // pred_fallthru
          _
        // Predicated region
        $region133: #{policy_forward.1} parent=71 // pred_check
          %p8951 = pneg %p333
        $region134: #{policy_forward.1} parent=71 // pred_check_branch
          %8953 = sbr.rel (%p8951) target = $region136
        $region135: #{policy_forward.1} parent=71 // pred_region
          _
        $region136: #{policy_forward.1} parent=71 // pred_fallthru
          _
        // Predicated region
        $region137: #{policy_forward.1} parent=71 // pred_check
          %p8954 = pneg %p354
        $region138: #{policy_forward.1} parent=71 // pred_check_branch
          %8956 = sbr.rel (%p8954) target = $region140
        $region139: #{policy_forward.1} parent=71 // pred_region
          _
        $region140: #{policy_forward.1} parent=71 // pred_fallthru
          _
      $region72: #{policy_forward.1} parent=5 // pred_fallthru
        _
      %p8957 = scmp.le.s32.totalorder 2, %s27
      // Predicated region
      $region141: #{policy_forward.1} parent=5 // pred_check
        %p8958 = pneg %p8957
      $region142: #{policy_forward.1} parent=5 // pred_check_branch
        %8960 = sbr.rel (%p8958) target = $region144
      $region143: #{policy_forward.1} parent=5 // pred_region
        %s8961 = ssub.s32 %s27, 2
      $region144: #{policy_forward.1} parent=5 // pred_fallthru
        _
    $region6: #{policy_forward.1} parent=1 // loop_footer
      %s31 = sadd.s32 1, %s27
    $region7: #{policy_forward.1} parent=1 // loop_footer_branch
      %26 = sbr.rel target = $region3
    $region8: #{policy_forward.1} parent=1 // loop_exit
      _
    %8962 = vsyncpa [#allocation6], 1
    %s8963 = scalar_lea.sflag [#allocation6], 1
    %8964 = vsyncpa %s8963, 1
    %8965 = vsyncpa [#allocation8], 1
    %8966 = vsyncpa [#allocation11], 1
    %8967 = vsyncpa [#allocation14], 1

</llo_original>
